<compile_context>
chip_gen: v5e
topology: v5e:2x2
jax: 0.10.0
libtpu: 0.0.40
codegen_flags: <defaults>
</compile_context>

<pallas_src>
import jax
import jax.numpy as jnp
from jax.experimental import pallas as pl
from jax.experimental.pallas import tpu as pltpu

NHID = 128      # fixed by Embedding(2, 128) in the module
NOUT = 8
NLAYER = 3
BN_EPS = 1e-5
LANE = 128      # TPU lane width (output padded to be lane-dense)


# --------------------------------------------------------------------------------------
# Fused kernel: 3 x (GCN layer + BN(folded) + ReLU + residual) + add-pool + output MLP
# --------------------------------------------------------------------------------------
def gnn_fused_kernel(x0_ref,      # [Np, H]   f32   initial node features (embedding out)
                     adj_ref,     # [Np, Np]  bf16  sym-normalized adjacency
                     pool_ref,    # [G, Np]   bf16  add-pooling (scatter) matrix
                     convw_ref,   # [L, H, H] bf16  conv weights with BN scale folded in
                     shift_ref,   # [L, 1, H] f32   folded BN shifts
                     w1_ref,      # [H, H]    bf16  output MLP linear-1 (obn scale folded)
                     b1_ref,      # [1, H]    f32   b1*obn_scale + obn_shift
                     w2_ref,      # [H, 128]  bf16  output MLP linear-2, padded to lane width
                     b2_ref,      # [1, 128]  f32   padded bias
                     out_ref,     # [G, 128]  f32   lane-dense output (valid cols: :NOUT)
                     x_scr):      # [Np, H]   f32   VMEM scratch: resident node features
    # Keep X resident in VMEM for the whole forward (no HBM round-trips per layer).
    x_scr[...] = x0_ref[...]

    nlayer = convw_ref.shape[0]
    for l in range(nlayer):                       # static unroll over layers
        xb = x_scr[...].astype(jnp.bfloat16)      # in-kernel cast, hidden under the dots
        # Aggregate: A_norm @ X   (bf16 operands, f32 MXU accumulation)
        ax = jnp.dot(adj_ref[...], xb, preferred_element_type=jnp.float32)
        # Transform: (A X) W'  (W' has gamma/sqrt(var+eps) folded into its columns)
        h = jnp.dot(ax.astype(jnp.bfloat16), convw_ref[l],
                    preferred_element_type=jnp.float32)
        # BN shift + ReLU + dropout(0) + residual, all in f32 on the VPU.
        h = jnp.maximum(h + shift_ref[l], 0.0)
        x_scr[...] = h + x_scr[...]

    # Readout epilogue: add pooling (dense one-hot matmul) + 2-layer MLP with folded BN.
    xb = x_scr[...].astype(jnp.bfloat16)
    pooled = jnp.dot(pool_ref[...], xb, preferred_element_type=jnp.float32)
    y = jnp.dot(pooled.astype(jnp.bfloat16), w1_ref[...],
                preferred_element_type=jnp.float32) + b1_ref[...]
    y = jnp.maximum(y, 0.0)                       # BN folded, ReLU
    y = jnp.dot(y.astype(jnp.bfloat16), w2_ref[...],
                preferred_element_type=jnp.float32) + b2_ref[...]
    out_ref[...] = y


def _vmem_limit_bytes(np_, h, g, nlayer):
    # Actual fused footprint (inputs + scratch + output), x2 for the (unused but
    # allocated) double buffers, plus a small compiler-scratch margin.
    need = (np_ * h * 4                # x0 f32
            + np_ * np_ * 2            # adj bf16
            + g * np_ * 2              # pool bf16
            + nlayer * h * h * 2       # conv weights bf16
            + nlayer * h * 4           # BN shifts f32
            + h * h * 2 + h * 4        # w1 / b1
            + h * LANE * 2 + LANE * 4  # w2 / b2 (lane-padded)
            + np_ * h * 4              # x scratch f32
            + g * LANE * 4)            # output f32
    return int(min(2 * need + (4 << 20), 40 << 20))   # cap safe even on v7x (64 MiB VMEM)


@jax.jit
def gnn_forward(x0, adj_bf, pool_bf, convW_f, bn_shift, w1_f, b1_f, w2_p, b2_p):
    """x0: [Np, H] f32 node features (embedding already selected). Returns [G, NOUT]."""
    Np, H = x0.shape
    G = pool_bf.shape[0]
    L = convW_f.shape[0]
    out_pad = pl.pallas_call(
        gnn_fused_kernel,
        out_shape=jax.ShapeDtypeStruct((G, LANE), jnp.float32),
        grid=(1,),                                     # single fused invocation
        in_specs=[
            pl.BlockSpec((Np, H), lambda i: (0, 0)),       # x0
            pl.BlockSpec((Np, Np), lambda i: (0, 0)),      # adj
            pl.BlockSpec((G, Np), lambda i: (0, 0)),       # pool
            pl.BlockSpec((L, H, H), lambda i: (0, 0, 0)),  # stacked conv weights
            pl.BlockSpec((L, 1, H), lambda i: (0, 0, 0)),  # stacked BN shifts
            pl.BlockSpec((H, H), lambda i: (0, 0)),        # w1
            pl.BlockSpec((1, H), lambda i: (0, 0)),        # b1
            pl.BlockSpec((H, LANE), lambda i: (0, 0)),     # w2 (lane-padded)
            pl.BlockSpec((1, LANE), lambda i: (0, 0)),     # b2 (lane-padded)
        ],
        out_specs=pl.BlockSpec((G, LANE), lambda i: (0, 0)),
        scratch_shapes=[pltpu.VMEM((Np, H), jnp.float32)],  # resident node features
        compiler_params=pltpu.CompilerParams(
            dimension_semantics=("arbitrary",),
            vmem_limit_bytes=_vmem_limit_bytes(Np, H, G, L)),
    )(x0, adj_bf, pool_bf, convW_f, bn_shift, w1_f, b1_f, w2_p, b2_p)
    return out_pad[:, :NOUT]                              # drop lane padding


# --------------------------------------------------------------------------------------
# Parameter / graph preparation (one-time constant folding, outside the kernel)
# --------------------------------------------------------------------------------------
def fold_bn(gamma, beta, running_mean, running_var, eps=BN_EPS):
    scale = gamma / jnp.sqrt(running_var + eps)
    shift = beta - running_mean * scale
    return scale, shift


def prepare_params(convW, bn_gamma, bn_beta, bn_mean, bn_var,
                   w1, b1, ogamma, obeta, omean, ovar, w2, b2):
    scale, shift = fold_bn(bn_gamma, bn_beta, bn_mean, bn_var)      # [L,1,H]
    convW_f = (convW * scale).astype(jnp.bfloat16)                  # fold BN scale into W cols
    oscale, oshift = fold_bn(ogamma, obeta, omean, ovar)            # [1,H]
    w1_f = (w1 * oscale).astype(jnp.bfloat16)
    b1_f = (b1 * oscale + oshift).astype(jnp.float32)
    w2_p = jnp.zeros((NHID, LANE), jnp.float32).at[:, :NOUT].set(w2).astype(jnp.bfloat16)
    b2_p = jnp.zeros((1, LANE), jnp.float32).at[:, :NOUT].set(b2)
    return convW_f, shift.astype(jnp.float32), w1_f, b1_f, w2_p, b2_p


def prepare_graph(labels, adj, pool, emb, pad_to=128):
    """Embedding select (glue) + pad node dim to a lane-friendly multiple."""
    N = adj.shape[0]
    Np = max(((N + pad_to - 1) // pad_to) * pad_to, pad_to)
    x0 = jnp.take(emb, labels.astype(jnp.int32), axis=0)            # Embedding(2, 128)
    if Np != N:                                                     # zero-padded nodes are
        x0 = jnp.pad(x0, ((0, Np - N), (0, 0)))                     # isolated (adj/pool zero)
        adj = jnp.pad(adj, ((0, Np - N), (0, Np - N)))
        pool = jnp.pad(pool, ((0, 0), (0, Np - N)))
    return x0.astype(jnp.float32), adj.astype(jnp.bfloat16), pool.astype(jnp.bfloat16)


# --------------------------------------------------------------------------------------
# Pure-JAX f32 reference (loose correctness check against the bf16 kernel)
# --------------------------------------------------------------------------------------
def reference_forward(labels, emb, adj, pool, convW, bn_gamma, bn_beta, bn_mean, bn_var,
                      w1, b1, ogamma, obeta, omean, ovar, w2, b2):
    scale, shift = fold_bn(bn_gamma, bn_beta, bn_mean, bn_var)
    oscale, oshift = fold_bn(ogamma, obeta, omean, ovar)
    x = emb[labels]
    for l in range(convW.shape[0]):
        h = adj @ (x @ convW[l])
        h = h * scale[l] + shift[l]
        h = jnp.maximum(h, 0.0)
        x = h + x
    pooled = pool @ x
    y = jnp.maximum((pooled @ w1 + b1) * oscale + oshift, 0.0)
    return y @ w2 + b2


# --------------------------------------------------------------------------------------
if __name__ == "__main__":
    key = jax.random.PRNGKey(0)
    ks = jax.random.split(key, 12)

    # Problem size: enough rows to fill the MXU; everything fits VMEM, one kernel launch.
    N, G = 512, 8
    n_edges = 4096

    # ---------------- synthetic graph data (deterministic) ----------------
    node_labels = jax.random.randint(ks[0], (N,), 0, 2)                 # data.x (binary)
    src = jax.random.randint(ks[1], (n_edges,), 0, N)
    dst = jax.random.randint(ks[2], (n_edges,), 0, N)
    A = jnp.zeros((N, N), jnp.float32).at[src, dst].set(1.0)
    A = jnp.maximum(A, A.T)                                             # undirected
    A = jnp.maximum(A, jnp.eye(N, dtype=jnp.float32))                   # self loops
    deg = A.sum(axis=1)
    d_inv_sqrt = 1.0 / jnp.sqrt(deg)
    adj_norm = d_inv_sqrt[:, None] * A * d_inv_sqrt[None, :]            # D^-1/2 (A+I) D^-1/2

    batch = jnp.repeat(jnp.arange(G), N // G)                           # data.batch
    pool = (batch[None, :] == jnp.arange(G)[:, None]).astype(jnp.float32)   # [G, N]

    # ---------------- deterministic parameter init ----------------
    emb = jax.random.normal(ks[3], (2, NHID), jnp.float32)              # Embedding(2, 128)

    lim = 1.0 / jnp.sqrt(jnp.float32(NHID))
    convW = jax.random.uniform(ks[4], (NLAYER, NHID, NHID), jnp.float32, -lim, lim)

    # BatchNorm1d(nhid) per layer, eval mode
    bn_gamma = jnp.ones((NLAYER, 1, NHID), jnp.float32)
    bn_beta = jnp.zeros((NLAYER, 1, NHID), jnp.float32)
    bn_mean = jnp.zeros((NLAYER, 1, NHID), jnp.float32)
    bn_var = jnp.ones((NLAYER, 1, NHID), jnp.float32)

    # output_encoder MLP: Linear(H,H) -> BN -> ReLU -> Linear(H,NOUT)
    w1 = jax.random.uniform(ks[5], (NHID, NHID), jnp.float32, -lim, lim)
    b1 = jax.random.uniform(ks[6], (1, NHID), jnp.float32, -lim, lim)
    ogamma = jnp.ones((1, NHID), jnp.float32)
    obeta = jnp.zeros((1, NHID), jnp.float32)
    omean = jnp.zeros((1, NHID), jnp.float32)
    ovar = jnp.ones((1, NHID), jnp.float32)
    w2 = jax.random.uniform(ks[7], (NHID, NOUT), jnp.float32, -lim, lim)
    b2 = jax.random.uniform(ks[8], (1, NOUT), jnp.float32, -lim, lim)

    # ---------------- one-time prep: fold BN, cast MXU operands to bf16 ----------------
    convW_f, bn_shift, w1_f, b1_f, w2_p, b2_p = prepare_params(
        convW, bn_gamma, bn_beta, bn_mean, bn_var,
        w1, b1, ogamma, obeta, omean, ovar, w2, b2)
    x0, adj_bf, pool_bf = prepare_graph(node_labels, adj_norm, pool, emb)

    # ---------------- run (single fused pallas_call) ----------------
    out = gnn_forward(x0, adj_bf, pool_bf, convW_f, bn_shift,
                      w1_f, b1_f, w2_p, b2_p)
    out = jax.block_until_ready(out)
    assert out.shape == (G, NOUT), out.shape
    assert bool(jnp.all(jnp.isfinite(out)))

    # ---------------- loose check vs f32 reference (bf16 MXU => ~1e-3 level deviation) --
    ref = reference_forward(node_labels, emb, adj_norm, pool, convW,
                            bn_gamma, bn_beta, bn_mean, bn_var,
                            w1, b1, ogamma, obeta, omean, ovar, w2, b2)
    err = float(jnp.max(jnp.abs(out - ref)))
    rel = err / (float(jnp.max(jnp.abs(ref))) + 1e-6)
    assert rel < 0.1, (err, rel)

    print("KERNEL_OK")
</pallas_src>

<mosaic_0001>
module attributes {stable_mosaic.version = 11 : i64} {
  func.func @gnn_fused_kernel(%arg0: i32, %arg1: memref<512x128xf32, #tpu.memory_space<vmem>>, %arg2: memref<512x512xbf16, #tpu.memory_space<vmem>>, %arg3: memref<8x512xbf16, #tpu.memory_space<vmem>>, %arg4: memref<3x128x128xbf16, #tpu.memory_space<vmem>>, %arg5: memref<3x1x128xf32, #tpu.memory_space<vmem>>, %arg6: memref<128x128xbf16, #tpu.memory_space<vmem>>, %arg7: memref<1x128xf32, #tpu.memory_space<vmem>>, %arg8: memref<128x128xbf16, #tpu.memory_space<vmem>>, %arg9: memref<1x128xf32, #tpu.memory_space<vmem>>, %arg10: memref<8x128xf32, #tpu.memory_space<vmem>>, %arg11: memref<512x128xf32, #tpu.memory_space<vmem>>) attributes {dimension_semantics = [#tpu.dimension_semantics<arbitrary>], iteration_bounds = array<i64: 1>, scalar_prefetch = 0 : i64, scratch_operands = 1 : i64, tpu.core_type = #tpu.core_type<tc>, window_params = [{pipeline_mode = #tpu.pipeline_mode<synchronous>, transform_indices = @transform_0, window_bounds = array<i64: 512, 128>}, {pipeline_mode = #tpu.pipeline_mode<synchronous>, transform_indices = @transform_1, window_bounds = array<i64: 512, 512>}, {pipeline_mode = #tpu.pipeline_mode<synchronous>, transform_indices = @transform_2, window_bounds = array<i64: 8, 512>}, {pipeline_mode = #tpu.pipeline_mode<synchronous>, transform_indices = @transform_3, window_bounds = array<i64: 3, 128, 128>}, {pipeline_mode = #tpu.pipeline_mode<synchronous>, transform_indices = @transform_4, window_bounds = array<i64: 3, 1, 128>}, {pipeline_mode = #tpu.pipeline_mode<synchronous>, transform_indices = @transform_5, window_bounds = array<i64: 128, 128>}, {pipeline_mode = #tpu.pipeline_mode<synchronous>, transform_indices = @transform_6, window_bounds = array<i64: 1, 128>}, {pipeline_mode = #tpu.pipeline_mode<synchronous>, transform_indices = @transform_7, window_bounds = array<i64: 128, 128>}, {pipeline_mode = #tpu.pipeline_mode<synchronous>, transform_indices = @transform_8, window_bounds = array<i64: 1, 128>}, {pipeline_mode = #tpu.pipeline_mode<synchronous>, transform_indices = @transform_9, window_bounds = array<i64: 8, 128>}]} {
    %c0 = arith.constant 0 : index
    %c0_0 = arith.constant 0 : index
    %0 = vector.load %arg1[%c0, %c0_0] : memref<512x128xf32, #tpu.memory_space<vmem>>, vector<512x128xf32>
    %c0_1 = arith.constant 0 : index
    %c0_2 = arith.constant 0 : index
    %1 = vector.load %arg11[%c0_1, %c0_2] : memref<512x128xf32, #tpu.memory_space<vmem>>, vector<512x128xf32>
    tpu.vector_store %arg11[%c0_1, %c0_2], %0 {strides = array<i32>} : memref<512x128xf32, #tpu.memory_space<vmem>>, vector<512x128xf32>,
    %c0_3 = arith.constant 0 : index
    %c0_4 = arith.constant 0 : index
    %2 = vector.load %arg11[%c0_3, %c0_4] : memref<512x128xf32, #tpu.memory_space<vmem>>, vector<512x128xf32>
    %3 = arith.truncf %2 : vector<512x128xf32> to vector<512x128xbf16>
    %c0_5 = arith.constant 0 : index
    %c0_6 = arith.constant 0 : index
    %4 = vector.load %arg2[%c0_5, %c0_6] : memref<512x512xbf16, #tpu.memory_space<vmem>>, vector<512x512xbf16>
    %cst = arith.constant dense<0.000000e+00> : vector<512x128xf32>
    %5 = tpu.matmul %4, %3, %cst {dimension_numbers = #tpu.dot_dimension_numbers<[1], [0], [0], [1], [0, 0, 1, 1], [], []>} : vector<512x512xbf16>, vector<512x128xbf16>, vector<512x128xf32> -> vector<512x128xf32>
    %6 = arith.truncf %5 : vector<512x128xf32> to vector<512x128xbf16>
    %c0_7 = arith.constant 0 : index
    %c0_8 = arith.constant 0 : index
    %c0_9 = arith.constant 0 : index
    %7 = vector.load %arg4[%c0_7, %c0_8, %c0_9] : memref<3x128x128xbf16, #tpu.memory_space<vmem>>, vector<1x128x128xbf16>
    %8 = vector.shape_cast %7 : vector<1x128x128xbf16> to vector<128x128xbf16>
    %cst_10 = arith.constant dense<0.000000e+00> : vector<512x128xf32>
    %9 = tpu.matmul %6, %8, %cst_10 {dimension_numbers = #tpu.dot_dimension_numbers<[1], [0], [0], [1], [0, 0, 1, 1], [], []>} : vector<512x128xbf16>, vector<128x128xbf16>, vector<512x128xf32> -> vector<512x128xf32>
    %c0_11 = arith.constant 0 : index
    %c0_12 = arith.constant 0 : index
    %c0_13 = arith.constant 0 : index
    %10 = vector.load %arg5[%c0_11, %c0_12, %c0_13] : memref<3x1x128xf32, #tpu.memory_space<vmem>>, vector<1x1x128xf32>
    %11 = vector.shape_cast %10 : vector<1x1x128xf32> to vector<1x128xf32>
    %12 = vector.broadcast %11 : vector<1x128xf32> to vector<512x128xf32>
    %13 = arith.addf %9, %12 : vector<512x128xf32>
    %cst_14 = arith.constant 0.000000e+00 : f32
    %14 = vector.broadcast %cst_14 : f32 to vector<512x128xf32>
    %15 = arith.maximumf %13, %14 : vector<512x128xf32>
    %c0_15 = arith.constant 0 : index
    %c0_16 = arith.constant 0 : index
    %16 = vector.load %arg11[%c0_15, %c0_16] : memref<512x128xf32, #tpu.memory_space<vmem>>, vector<512x128xf32>
    %17 = arith.addf %15, %16 : vector<512x128xf32>
    %c0_17 = arith.constant 0 : index
    %c0_18 = arith.constant 0 : index
    %18 = vector.load %arg11[%c0_17, %c0_18] : memref<512x128xf32, #tpu.memory_space<vmem>>, vector<512x128xf32>
    tpu.vector_store %arg11[%c0_17, %c0_18], %17 {strides = array<i32>} : memref<512x128xf32, #tpu.memory_space<vmem>>, vector<512x128xf32>,
    %c0_19 = arith.constant 0 : index
    %c0_20 = arith.constant 0 : index
    %19 = vector.load %arg11[%c0_19, %c0_20] : memref<512x128xf32, #tpu.memory_space<vmem>>, vector<512x128xf32>
    %20 = arith.truncf %19 : vector<512x128xf32> to vector<512x128xbf16>
    %c0_21 = arith.constant 0 : index
    %c0_22 = arith.constant 0 : index
    %21 = vector.load %arg2[%c0_21, %c0_22] : memref<512x512xbf16, #tpu.memory_space<vmem>>, vector<512x512xbf16>
    %cst_23 = arith.constant dense<0.000000e+00> : vector<512x128xf32>
    %22 = tpu.matmul %21, %20, %cst_23 {dimension_numbers = #tpu.dot_dimension_numbers<[1], [0], [0], [1], [0, 0, 1, 1], [], []>} : vector<512x512xbf16>, vector<512x128xbf16>, vector<512x128xf32> -> vector<512x128xf32>
    %23 = arith.truncf %22 : vector<512x128xf32> to vector<512x128xbf16>
    %c1 = arith.constant 1 : index
    %c0_24 = arith.constant 0 : index
    %c0_25 = arith.constant 0 : index
    %24 = vector.load %arg4[%c1, %c0_24, %c0_25] : memref<3x128x128xbf16, #tpu.memory_space<vmem>>, vector<1x128x128xbf16>
    %25 = vector.shape_cast %24 : vector<1x128x128xbf16> to vector<128x128xbf16>
    %cst_26 = arith.constant dense<0.000000e+00> : vector<512x128xf32>
    %26 = tpu.matmul %23, %25, %cst_26 {dimension_numbers = #tpu.dot_dimension_numbers<[1], [0], [0], [1], [0, 0, 1, 1], [], []>} : vector<512x128xbf16>, vector<128x128xbf16>, vector<512x128xf32> -> vector<512x128xf32>
    %c1_27 = arith.constant 1 : index
    %c0_28 = arith.constant 0 : index
    %c0_29 = arith.constant 0 : index
    %27 = vector.load %arg5[%c1_27, %c0_28, %c0_29] : memref<3x1x128xf32, #tpu.memory_space<vmem>>, vector<1x1x128xf32>
    %28 = vector.shape_cast %27 : vector<1x1x128xf32> to vector<1x128xf32>
    %29 = vector.broadcast %28 : vector<1x128xf32> to vector<512x128xf32>
    %30 = arith.addf %26, %29 : vector<512x128xf32>
    %cst_30 = arith.constant 0.000000e+00 : f32
    %31 = vector.broadcast %cst_30 : f32 to vector<512x128xf32>
    %32 = arith.maximumf %30, %31 : vector<512x128xf32>
    %c0_31 = arith.constant 0 : index
    %c0_32 = arith.constant 0 : index
    %33 = vector.load %arg11[%c0_31, %c0_32] : memref<512x128xf32, #tpu.memory_space<vmem>>, vector<512x128xf32>
    %34 = arith.addf %32, %33 : vector<512x128xf32>
    %c0_33 = arith.constant 0 : index
    %c0_34 = arith.constant 0 : index
    %35 = vector.load %arg11[%c0_33, %c0_34] : memref<512x128xf32, #tpu.memory_space<vmem>>, vector<512x128xf32>
    tpu.vector_store %arg11[%c0_33, %c0_34], %34 {strides = array<i32>} : memref<512x128xf32, #tpu.memory_space<vmem>>, vector<512x128xf32>,
    %c0_35 = arith.constant 0 : index
    %c0_36 = arith.constant 0 : index
    %36 = vector.load %arg11[%c0_35, %c0_36] : memref<512x128xf32, #tpu.memory_space<vmem>>, vector<512x128xf32>
    %37 = arith.truncf %36 : vector<512x128xf32> to vector<512x128xbf16>
    %c0_37 = arith.constant 0 : index
    %c0_38 = arith.constant 0 : index
    %38 = vector.load %arg2[%c0_37, %c0_38] : memref<512x512xbf16, #tpu.memory_space<vmem>>, vector<512x512xbf16>
    %cst_39 = arith.constant dense<0.000000e+00> : vector<512x128xf32>
    %39 = tpu.matmul %38, %37, %cst_39 {dimension_numbers = #tpu.dot_dimension_numbers<[1], [0], [0], [1], [0, 0, 1, 1], [], []>} : vector<512x512xbf16>, vector<512x128xbf16>, vector<512x128xf32> -> vector<512x128xf32>
    %40 = arith.truncf %39 : vector<512x128xf32> to vector<512x128xbf16>
    %c2 = arith.constant 2 : index
    %c0_40 = arith.constant 0 : index
    %c0_41 = arith.constant 0 : index
    %41 = vector.load %arg4[%c2, %c0_40, %c0_41] : memref<3x128x128xbf16, #tpu.memory_space<vmem>>, vector<1x128x128xbf16>
    %42 = vector.shape_cast %41 : vector<1x128x128xbf16> to vector<128x128xbf16>
    %cst_42 = arith.constant dense<0.000000e+00> : vector<512x128xf32>
    %43 = tpu.matmul %40, %42, %cst_42 {dimension_numbers = #tpu.dot_dimension_numbers<[1], [0], [0], [1], [0, 0, 1, 1], [], []>} : vector<512x128xbf16>, vector<128x128xbf16>, vector<512x128xf32> -> vector<512x128xf32>
    %c2_43 = arith.constant 2 : index
    %c0_44 = arith.constant 0 : index
    %c0_45 = arith.constant 0 : index
    %44 = vector.load %arg5[%c2_43, %c0_44, %c0_45] : memref<3x1x128xf32, #tpu.memory_space<vmem>>, vector<1x1x128xf32>
    %45 = vector.shape_cast %44 : vector<1x1x128xf32> to vector<1x128xf32>
    %46 = vector.broadcast %45 : vector<1x128xf32> to vector<512x128xf32>
    %47 = arith.addf %43, %46 : vector<512x128xf32>
    %cst_46 = arith.constant 0.000000e+00 : f32
    %48 = vector.broadcast %cst_46 : f32 to vector<512x128xf32>
    %49 = arith.maximumf %47, %48 : vector<512x128xf32>
    %c0_47 = arith.constant 0 : index
    %c0_48 = arith.constant 0 : index
    %50 = vector.load %arg11[%c0_47, %c0_48] : memref<512x128xf32, #tpu.memory_space<vmem>>, vector<512x128xf32>
    %51 = arith.addf %49, %50 : vector<512x128xf32>
    %c0_49 = arith.constant 0 : index
    %c0_50 = arith.constant 0 : index
    %52 = vector.load %arg11[%c0_49, %c0_50] : memref<512x128xf32, #tpu.memory_space<vmem>>, vector<512x128xf32>
    tpu.vector_store %arg11[%c0_49, %c0_50], %51 {strides = array<i32>} : memref<512x128xf32, #tpu.memory_space<vmem>>, vector<512x128xf32>,
    %c0_51 = arith.constant 0 : index
    %c0_52 = arith.constant 0 : index
    %53 = vector.load %arg11[%c0_51, %c0_52] : memref<512x128xf32, #tpu.memory_space<vmem>>, vector<512x128xf32>
    %54 = arith.truncf %53 : vector<512x128xf32> to vector<512x128xbf16>
    %c0_53 = arith.constant 0 : index
    %c0_54 = arith.constant 0 : index
    %55 = vector.load %arg3[%c0_53, %c0_54] : memref<8x512xbf16, #tpu.memory_space<vmem>>, vector<8x512xbf16>
    %cst_55 = arith.constant dense<0.000000e+00> : vector<8x128xf32>
    %56 = tpu.matmul %55, %54, %cst_55 {dimension_numbers = #tpu.dot_dimension_numbers<[1], [0], [0], [1], [0, 0, 1, 1], [], []>} : vector<8x512xbf16>, vector<512x128xbf16>, vector<8x128xf32> -> vector<8x128xf32>
    %57 = arith.truncf %56 : vector<8x128xf32> to vector<8x128xbf16>
    %c0_56 = arith.constant 0 : index
    %c0_57 = arith.constant 0 : index
    %58 = vector.load %arg6[%c0_56, %c0_57] : memref<128x128xbf16, #tpu.memory_space<vmem>>, vector<128x128xbf16>
    %cst_58 = arith.constant dense<0.000000e+00> : vector<8x128xf32>
    %59 = tpu.matmul %57, %58, %cst_58 {dimension_numbers = #tpu.dot_dimension_numbers<[1], [0], [0], [1], [0, 0, 1, 1], [], []>} : vector<8x128xbf16>, vector<128x128xbf16>, vector<8x128xf32> -> vector<8x128xf32>
    %c0_59 = arith.constant 0 : index
    %c0_60 = arith.constant 0 : index
    %60 = vector.load %arg7[%c0_59, %c0_60] : memref<1x128xf32, #tpu.memory_space<vmem>>, vector<1x128xf32>
    %61 = vector.broadcast %60 : vector<1x128xf32> to vector<8x128xf32>
    %62 = arith.addf %59, %61 : vector<8x128xf32>
    %cst_61 = arith.constant 0.000000e+00 : f32
    %63 = vector.broadcast %cst_61 : f32 to vector<8x128xf32>
    %64 = arith.maximumf %62, %63 : vector<8x128xf32>
    %65 = arith.truncf %64 : vector<8x128xf32> to vector<8x128xbf16>
    %c0_62 = arith.constant 0 : index
    %c0_63 = arith.constant 0 : index
    %66 = vector.load %arg8[%c0_62, %c0_63] : memref<128x128xbf16, #tpu.memory_space<vmem>>, vector<128x128xbf16>
    %cst_64 = arith.constant dense<0.000000e+00> : vector<8x128xf32>
    %67 = tpu.matmul %65, %66, %cst_64 {dimension_numbers = #tpu.dot_dimension_numbers<[1], [0], [0], [1], [0, 0, 1, 1], [], []>} : vector<8x128xbf16>, vector<128x128xbf16>, vector<8x128xf32> -> vector<8x128xf32>
    %c0_65 = arith.constant 0 : index
    %c0_66 = arith.constant 0 : index
    %68 = vector.load %arg9[%c0_65, %c0_66] : memref<1x128xf32, #tpu.memory_space<vmem>>, vector<1x128xf32>
    %69 = vector.broadcast %68 : vector<1x128xf32> to vector<8x128xf32>
    %70 = arith.addf %67, %69 : vector<8x128xf32>
    %c0_67 = arith.constant 0 : index
    %c0_68 = arith.constant 0 : index
    %71 = vector.load %arg10[%c0_67, %c0_68] : memref<8x128xf32, #tpu.memory_space<vmem>>, vector<8x128xf32>
    tpu.vector_store %arg10[%c0_67, %c0_68], %70 {strides = array<i32>} : memref<8x128xf32, #tpu.memory_space<vmem>>, vector<8x128xf32>,
    return
  }
  func.func @transform_0(%arg0: i32) -> (i32, i32) {
    %c0_i32 = arith.constant 0 : i32
    %c0_i32_0 = arith.constant 0 : i32
    %c0_i32_1 = arith.constant 0 : i32
    return %c0_i32, %c0_i32_0 : i32, i32
  }
  func.func @transform_1(%arg0: i32) -> (i32, i32) {
    %c0_i32 = arith.constant 0 : i32
    %c0_i32_0 = arith.constant 0 : i32
    %c0_i32_1 = arith.constant 0 : i32
    return %c0_i32, %c0_i32_0 : i32, i32
  }
  func.func @transform_2(%arg0: i32) -> (i32, i32) {
    %c0_i32 = arith.constant 0 : i32
    %c0_i32_0 = arith.constant 0 : i32
    %c0_i32_1 = arith.constant 0 : i32
    return %c0_i32, %c0_i32_0 : i32, i32
  }
  func.func @transform_3(%arg0: i32) -> (i32, i32, i32) {
    %c0_i32 = arith.constant 0 : i32
    %c0_i32_0 = arith.constant 0 : i32
    %c0_i32_1 = arith.constant 0 : i32
    %c0_i32_2 = arith.constant 0 : i32
    return %c0_i32, %c0_i32_0, %c0_i32_1 : i32, i32, i32
  }
  func.func @transform_4(%arg0: i32) -> (i32, i32, i32) {
    %c0_i32 = arith.constant 0 : i32
    %c0_i32_0 = arith.constant 0 : i32
    %c0_i32_1 = arith.constant 0 : i32
    %c0_i32_2 = arith.constant 0 : i32
    return %c0_i32, %c0_i32_0, %c0_i32_1 : i32, i32, i32
  }
  func.func @transform_5(%arg0: i32) -> (i32, i32) {
    %c0_i32 = arith.constant 0 : i32
    %c0_i32_0 = arith.constant 0 : i32
    %c0_i32_1 = arith.constant 0 : i32
    return %c0_i32, %c0_i32_0 : i32, i32
  }
  func.func @transform_6(%arg0: i32) -> (i32, i32) {
    %c0_i32 = arith.constant 0 : i32
    %c0_i32_0 = arith.constant 0 : i32
    %c0_i32_1 = arith.constant 0 : i32
    return %c0_i32, %c0_i32_0 : i32, i32
  }
  func.func @transform_7(%arg0: i32) -> (i32, i32) {
    %c0_i32 = arith.constant 0 : i32
    %c0_i32_0 = arith.constant 0 : i32
    %c0_i32_1 = arith.constant 0 : i32
    return %c0_i32, %c0_i32_0 : i32, i32
  }
  func.func @transform_8(%arg0: i32) -> (i32, i32) {
    %c0_i32 = arith.constant 0 : i32
    %c0_i32_0 = arith.constant 0 : i32
    %c0_i32_1 = arith.constant 0 : i32
    return %c0_i32, %c0_i32_0 : i32, i32
  }
  func.func @transform_9(%arg0: i32) -> (i32, i32) {
    %c0_i32 = arith.constant 0 : i32
    %c0_i32_0 = arith.constant 0 : i32
    %c0_i32_1 = arith.constant 0 : i32
    return %c0_i32, %c0_i32_0 : i32, i32
  }
}

</mosaic_0001>

<llo_original>
// kernel: gnn_forward.1
$region0: #{gnn_forward.1}
  #allocation0 [shape = 'u32[]', space=smem, size = 0x4, offset = 0x4, fixed_abs, tag = 'smem constant byte address 0x4 - core index']
  #allocation1 [shape = 'u32[72,128]{1,0:T(1,128)}', space=vmem, size = 0x9000, scoped, tag = 'internal scratch']
  #allocation2 [shape = 'f32[512,128]{1,0:T(8,128)}', space=vmem, size = 0x40000, scoped, tag = 'scratch operand']
  %s0 = inlined_call_operand.hbm [shape: f32[512,128], index: 0, kind: input, shape index: {}]
  %s1 = inlined_call_operand.hbm [shape: bf16[512,512], index: 1, kind: input, shape index: {}]
  %s2 = inlined_call_operand.hbm [shape: bf16[8,512], index: 2, kind: input, shape index: {}]
  %s3 = inlined_call_operand.hbm [shape: bf16[3,128,128], index: 3, kind: input, shape index: {}]
  %s4 = inlined_call_operand.vmem [shape: f32[3,1,128], index: 4, kind: input, shape index: {}]
  %s5 = inlined_call_operand.hbm [shape: bf16[128,128], index: 5, kind: input, shape index: {}]
  %s6 = inlined_call_operand.vmem [shape: f32[1,128], index: 6, kind: input, shape index: {}]
  %s7 = inlined_call_operand.hbm [shape: bf16[128,128], index: 7, kind: input, shape index: {}]
  %s8 = inlined_call_operand.vmem [shape: f32[1,128], index: 8, kind: input, shape index: {}]
  %s9 = inlined_call_operand.hbm [shape: f32[8,128], index: 9, kind: output, shape index: {}]
  %s10 = sld [smem:[#allocation0]]
  $region70: #{gnn_forward.1} parent=0
    _
  %s12 = ssub.s32 1, %s10
  %s13 = scalar_select 0, %s12, %s10
  $region1: #{gnn_forward.1} parent=0
    #allocation3 [shape = 'u8[262144]{0}', space=vmem, size = 0x40000, scoped, tag = 'input window, operand 0, single buffered']
    #allocation4 [shape = 's32[1]{0}', space=sflag, size = 0x4, scoped, tag = 'scoped memory for gnn_forward.1']
    #allocation5 [shape = 's32[1]{0}', space=sflag, size = 0x4, scoped, tag = 'scoped memory for gnn_forward.1']
    #allocation6 [shape = 'u8[524288]{0}', space=vmem, size = 0x80000, scoped, tag = 'input window, operand 1, single buffered']
    #allocation7 [shape = 's32[1]{0}', space=sflag, size = 0x4, scoped, tag = 'scoped memory for gnn_forward.1']
    #allocation8 [shape = 'u8[8192]{0}', space=vmem, size = 0x2000, scoped, tag = 'input window, operand 2, single buffered']
    #allocation9 [shape = 'u8[98304]{0}', space=vmem, size = 0x18000, scoped, tag = 'input window, operand 3, single buffered']
    #allocation10 [shape = 's32[1]{0}', space=sflag, size = 0x4, scoped, tag = 'scoped memory for gnn_forward.1']
    #allocation11 [shape = 'u8[32768]{0}', space=vmem, size = 0x8000, scoped, tag = 'input window, operand 5, single buffered']
    #allocation12 [shape = 'u8[32768]{0}', space=vmem, size = 0x8000, scoped, tag = 'input window, operand 7, single buffered']
    #allocation13 [shape = 's32[1]{0}', space=sflag, size = 0x4, scoped, tag = 'scoped memory for gnn_forward.1']
    #allocation14 [shape = 'u8[4096]{0}', space=vmem, size = 0x1000, scoped, tag = 'output window, operand 0, single buffered']
    %14 = vsyncpa [#allocation4], 0
    %15 = vsyncpa [#allocation7], 0
    %16 = vsyncpa [#allocation10], 0
    %17 = vsyncpa [#allocation13], 0
    %18 = vsyncpa [#allocation5], 0
    // Predicated region
    $region2: #{gnn_forward.1} parent=1 // pred_check
      _
    $region3: #{gnn_forward.1} parent=1 // pred_check_branch
      %20 = sbr.rel (0) target = $region5
    $region4: #{gnn_forward.1} parent=1 // pred_region
      %22 = vsyncadd [#allocation4], 0
      %s23 = sshll.u32 %s0, 4
      %s24 = int_to_ptr.hbm [resolvable:$true] %s23
      %s25 = sshll.u32 [#allocation3], 4
      %s26 = int_to_ptr.vmem [resolvable:$true] %s25
      %31 = dma.hbm_to_vmem [thread:$0]  %s24, 8192, %s26, [#allocation4], 128, 128, 8
    $region5: #{gnn_forward.1} parent=1 // pred_fallthru
      _
    // Predicated region
    $region6: #{gnn_forward.1} parent=1 // pred_check
      _
    $region7: #{gnn_forward.1} parent=1 // pred_check_branch
      %33 = sbr.rel (0) target = $region9
    $region8: #{gnn_forward.1} parent=1 // pred_region
      %35 = vsyncadd [#allocation7], 0
      %s36 = sshll.u32 %s1, 4
      %s37 = int_to_ptr.hbm [resolvable:$true] %s36
      %s38 = sshll.u32 [#allocation6], 4
      %s39 = int_to_ptr.vmem [resolvable:$true] %s38
      %44 = dma.hbm_to_vmem [thread:$0]  %s37, 16384, %s39, [#allocation7], 256, 256, 16
    $region9: #{gnn_forward.1} parent=1 // pred_fallthru
      _
    // Predicated region
    $region10: #{gnn_forward.1} parent=1 // pred_check
      _
    $region11: #{gnn_forward.1} parent=1 // pred_check_branch
      %46 = sbr.rel (0) target = $region13
    $region12: #{gnn_forward.1} parent=1 // pred_region
      %48 = vsyncadd [#allocation7], 0
      %s50 = sshll.u32 %s2, 4
      %s51 = int_to_ptr.hbm [resolvable:$true] %s50
      %s52 = sshll.u32 [#allocation8], 4
      %s53 = int_to_ptr.vmem [resolvable:$true] %s52
      %55 = dma.hbm_to_vmem [thread:$0]  %s51, 256, %s53, [#allocation7]
    $region13: #{gnn_forward.1} parent=1 // pred_fallthru
      _
    // Predicated region
    $region14: #{gnn_forward.1} parent=1 // pred_check
      _
    $region15: #{gnn_forward.1} parent=1 // pred_check_branch
      %57 = sbr.rel (0) target = $region17
    $region16: #{gnn_forward.1} parent=1 // pred_region
      %59 = vsyncadd [#allocation10], 0
      %s60 = sshll.u32 %s3, 4
      %s61 = int_to_ptr.hbm [resolvable:$true] %s60
      %s62 = sshll.u32 [#allocation9], 4
      %s63 = int_to_ptr.vmem [resolvable:$true] %s62
      %68 = dma.hbm_to_vmem [thread:$0]  %s61, 3072, %s63, [#allocation10], 64, 64, 4
    $region17: #{gnn_forward.1} parent=1 // pred_fallthru
      _
    // Predicated region
    $region18: #{gnn_forward.1} parent=1 // pred_check
      _
    $region19: #{gnn_forward.1} parent=1 // pred_check_branch
      %70 = sbr.rel (0) target = $region21
    $region20: #{gnn_forward.1} parent=1 // pred_region
      _
    $region21: #{gnn_forward.1} parent=1 // pred_fallthru
      _
    // Predicated region
    $region22: #{gnn_forward.1} parent=1 // pred_check
      _
    $region23: #{gnn_forward.1} parent=1 // pred_check_branch
      %72 = sbr.rel (0) target = $region25
    $region24: #{gnn_forward.1} parent=1 // pred_region
      %74 = vsyncadd [#allocation10], 0
      %s75 = sshll.u32 %s5, 4
      %s76 = int_to_ptr.hbm [resolvable:$true] %s75
      %s77 = sshll.u32 [#allocation11], 4
      %s78 = int_to_ptr.vmem [resolvable:$true] %s77
      %83 = dma.hbm_to_vmem [thread:$0]  %s76, 1024, %s78, [#allocation10], 64, 64, 4
    $region25: #{gnn_forward.1} parent=1 // pred_fallthru
      _
    // Predicated region
    $region26: #{gnn_forward.1} parent=1 // pred_check
      _
    $region27: #{gnn_forward.1} parent=1 // pred_check_branch
      %85 = sbr.rel (0) target = $region29
    $region28: #{gnn_forward.1} parent=1 // pred_region
      _
    $region29: #{gnn_forward.1} parent=1 // pred_fallthru
      _
    // Predicated region
    $region30: #{gnn_forward.1} parent=1 // pred_check
      _
    $region31: #{gnn_forward.1} parent=1 // pred_check_branch
      %87 = sbr.rel (0) target = $region33
    $region32: #{gnn_forward.1} parent=1 // pred_region
      %89 = vsyncadd [#allocation13], 0
      %s90 = sshll.u32 %s7, 4
      %s91 = int_to_ptr.hbm [resolvable:$true] %s90
      %s92 = sshll.u32 [#allocation12], 4
      %s93 = int_to_ptr.vmem [resolvable:$true] %s92
      %98 = dma.hbm_to_vmem [thread:$0]  %s91, 1024, %s93, [#allocation13], 64, 64, 4
    $region33: #{gnn_forward.1} parent=1 // pred_fallthru
      _
    // Predicated region
    $region34: #{gnn_forward.1} parent=1 // pred_check
      _
    $region35: #{gnn_forward.1} parent=1 // pred_check_branch
      %100 = sbr.rel (0) target = $region37
    $region36: #{gnn_forward.1} parent=1 // pred_region
      _
    $region37: #{gnn_forward.1} parent=1 // pred_fallthru
      _
    // Predicated region
    $region38: #{gnn_forward.1} parent=1 // pred_check
      _
    $region39: #{gnn_forward.1} parent=1 // pred_check_branch
      %102 = sbr.rel (0) target = $region41
    $region40: #{gnn_forward.1} parent=1 // pred_region
      %104 = dma.done [#allocation4], 8192
    $region41: #{gnn_forward.1} parent=1 // pred_fallthru
      _
    // Predicated region
    $region42: #{gnn_forward.1} parent=1 // pred_check
      _
    $region43: #{gnn_forward.1} parent=1 // pred_check_branch
      %106 = sbr.rel (0) target = $region45
    $region44: #{gnn_forward.1} parent=1 // pred_region
      %108 = dma.done [#allocation7], 16384
    $region45: #{gnn_forward.1} parent=1 // pred_fallthru
      _
    // Predicated region
    $region46: #{gnn_forward.1} parent=1 // pred_check
      _
    $region47: #{gnn_forward.1} parent=1 // pred_check_branch
      %110 = sbr.rel (0) target = $region49
    $region48: #{gnn_forward.1} parent=1 // pred_region
      %112 = dma.done [#allocation7], 256
    $region49: #{gnn_forward.1} parent=1 // pred_fallthru
      _
    // Predicated region
    $region50: #{gnn_forward.1} parent=1 // pred_check
      _
    $region51: #{gnn_forward.1} parent=1 // pred_check_branch
      %114 = sbr.rel (0) target = $region53
    $region52: #{gnn_forward.1} parent=1 // pred_region
      %116 = dma.done [#allocation10], 3072
    $region53: #{gnn_forward.1} parent=1 // pred_fallthru
      _
    // Predicated region
    $region54: #{gnn_forward.1} parent=1 // pred_check
      _
    $region55: #{gnn_forward.1} parent=1 // pred_check_branch
      %118 = sbr.rel (0) target = $region57
    $region56: #{gnn_forward.1} parent=1 // pred_region
      %120 = dma.done [#allocation10], 1024
    $region57: #{gnn_forward.1} parent=1 // pred_fallthru
      _
    // Predicated region
    $region58: #{gnn_forward.1} parent=1 // pred_check
      _
    $region59: #{gnn_forward.1} parent=1 // pred_check_branch
      %122 = sbr.rel (0) target = $region61
    $region60: #{gnn_forward.1} parent=1 // pred_region
      %124 = dma.done [#allocation13], 1024
    $region61: #{gnn_forward.1} parent=1 // pred_fallthru
      _
    %v125 = vld [vmem:[#allocation3] sm:$0xff]
    %v126 = vld [vmem:[#allocation3 + $0x8] sm:$0xff]
    %v127 = vld [vmem:[#allocation3 + $0x10] sm:$0xff]
    %v128 = vld [vmem:[#allocation3 + $0x18] sm:$0xff]
    %v129 = vld [vmem:[#allocation3 + $0x20] sm:$0xff]
    %v130 = vld [vmem:[#allocation3 + $0x28] sm:$0xff]
    %v131 = vld [vmem:[#allocation3 + $0x30] sm:$0xff]
    %v132 = vld [vmem:[#allocation3 + $0x38] sm:$0xff]
    %v133 = vld [vmem:[#allocation3 + $0x40] sm:$0xff]
    %v134 = vld [vmem:[#allocation3 + $0x48] sm:$0xff]
    %v135 = vld [vmem:[#allocation3 + $0x50] sm:$0xff]
    %v136 = vld [vmem:[#allocation3 + $0x58] sm:$0xff]
    %v137 = vld [vmem:[#allocation3 + $0x60] sm:$0xff]
    %v138 = vld [vmem:[#allocation3 + $0x68] sm:$0xff]
    %v139 = vld [vmem:[#allocation3 + $0x70] sm:$0xff]
    %v140 = vld [vmem:[#allocation3 + $0x78] sm:$0xff]
    %v141 = vld [vmem:[#allocation3 + $0x80] sm:$0xff]
    %v142 = vld [vmem:[#allocation3 + $0x88] sm:$0xff]
    %v143 = vld [vmem:[#allocation3 + $0x90] sm:$0xff]
    %v144 = vld [vmem:[#allocation3 + $0x98] sm:$0xff]
    %v145 = vld [vmem:[#allocation3 + $0xa0] sm:$0xff]
    %v146 = vld [vmem:[#allocation3 + $0xa8] sm:$0xff]
    %v147 = vld [vmem:[#allocation3 + $0xb0] sm:$0xff]
    %v148 = vld [vmem:[#allocation3 + $0xb8] sm:$0xff]
    %v149 = vld [vmem:[#allocation3 + $0xc0] sm:$0xff]
    %v150 = vld [vmem:[#allocation3 + $0xc8] sm:$0xff]
    %v151 = vld [vmem:[#allocation3 + $0xd0] sm:$0xff]
    %v152 = vld [vmem:[#allocation3 + $0xd8] sm:$0xff]
    %v153 = vld [vmem:[#allocation3 + $0xe0] sm:$0xff]
    %v154 = vld [vmem:[#allocation3 + $0xe8] sm:$0xff]
    %v155 = vld [vmem:[#allocation3 + $0xf0] sm:$0xff]
    %v156 = vld [vmem:[#allocation3 + $0xf8] sm:$0xff]
    %v157 = vld [vmem:[#allocation3 + $0x100] sm:$0xff]
    %v158 = vld [vmem:[#allocation3 + $0x108] sm:$0xff]
    %v159 = vld [vmem:[#allocation3 + $0x110] sm:$0xff]
    %v160 = vld [vmem:[#allocation3 + $0x118] sm:$0xff]
    %v161 = vld [vmem:[#allocation3 + $0x120] sm:$0xff]
    %v162 = vld [vmem:[#allocation3 + $0x128] sm:$0xff]
    %v163 = vld [vmem:[#allocation3 + $0x130] sm:$0xff]
    %v164 = vld [vmem:[#allocation3 + $0x138] sm:$0xff]
    %v165 = vld [vmem:[#allocation3 + $0x140] sm:$0xff]
    %v166 = vld [vmem:[#allocation3 + $0x148] sm:$0xff]
    %v167 = vld [vmem:[#allocation3 + $0x150] sm:$0xff]
    %v168 = vld [vmem:[#allocation3 + $0x158] sm:$0xff]
    %v169 = vld [vmem:[#allocation3 + $0x160] sm:$0xff]
    %v170 = vld [vmem:[#allocation3 + $0x168] sm:$0xff]
    %v171 = vld [vmem:[#allocation3 + $0x170] sm:$0xff]
    %v172 = vld [vmem:[#allocation3 + $0x178] sm:$0xff]
    %v173 = vld [vmem:[#allocation3 + $0x180] sm:$0xff]
    %v174 = vld [vmem:[#allocation3 + $0x188] sm:$0xff]
    %v175 = vld [vmem:[#allocation3 + $0x190] sm:$0xff]
    %v176 = vld [vmem:[#allocation3 + $0x198] sm:$0xff]
    %v177 = vld [vmem:[#allocation3 + $0x1a0] sm:$0xff]
    %v178 = vld [vmem:[#allocation3 + $0x1a8] sm:$0xff]
    %v179 = vld [vmem:[#allocation3 + $0x1b0] sm:$0xff]
    %v180 = vld [vmem:[#allocation3 + $0x1b8] sm:$0xff]
    %v181 = vld [vmem:[#allocation3 + $0x1c0] sm:$0xff]
    %v182 = vld [vmem:[#allocation3 + $0x1c8] sm:$0xff]
    %v183 = vld [vmem:[#allocation3 + $0x1d0] sm:$0xff]
    %v184 = vld [vmem:[#allocation3 + $0x1d8] sm:$0xff]
    %v185 = vld [vmem:[#allocation3 + $0x1e0] sm:$0xff]
    %v186 = vld [vmem:[#allocation3 + $0x1e8] sm:$0xff]
    %v187 = vld [vmem:[#allocation3 + $0x1f0] sm:$0xff]
    %v188 = vld [vmem:[#allocation3 + $0x1f8] sm:$0xff]
    %189 = vst [vmem:[#allocation2] sm:$0xff] %v125
    %190 = vst [vmem:[#allocation2 + $0x8] sm:$0xff] %v126
    %191 = vst [vmem:[#allocation2 + $0x10] sm:$0xff] %v127
    %192 = vst [vmem:[#allocation2 + $0x18] sm:$0xff] %v128
    %193 = vst [vmem:[#allocation2 + $0x20] sm:$0xff] %v129
    %194 = vst [vmem:[#allocation2 + $0x28] sm:$0xff] %v130
    %195 = vst [vmem:[#allocation2 + $0x30] sm:$0xff] %v131
    %196 = vst [vmem:[#allocation2 + $0x38] sm:$0xff] %v132
    %197 = vst [vmem:[#allocation2 + $0x40] sm:$0xff] %v133
    %198 = vst [vmem:[#allocation2 + $0x48] sm:$0xff] %v134
    %199 = vst [vmem:[#allocation2 + $0x50] sm:$0xff] %v135
    %200 = vst [vmem:[#allocation2 + $0x58] sm:$0xff] %v136
    %201 = vst [vmem:[#allocation2 + $0x60] sm:$0xff] %v137
    %202 = vst [vmem:[#allocation2 + $0x68] sm:$0xff] %v138
    %203 = vst [vmem:[#allocation2 + $0x70] sm:$0xff] %v139
    %204 = vst [vmem:[#allocation2 + $0x78] sm:$0xff] %v140
    %205 = vst [vmem:[#allocation2 + $0x80] sm:$0xff] %v141
    %206 = vst [vmem:[#allocation2 + $0x88] sm:$0xff] %v142
    %207 = vst [vmem:[#allocation2 + $0x90] sm:$0xff] %v143
    %208 = vst [vmem:[#allocation2 + $0x98] sm:$0xff] %v144
    %209 = vst [vmem:[#allocation2 + $0xa0] sm:$0xff] %v145
    %210 = vst [vmem:[#allocation2 + $0xa8] sm:$0xff] %v146
    %211 = vst [vmem:[#allocation2 + $0xb0] sm:$0xff] %v147
    %212 = vst [vmem:[#allocation2 + $0xb8] sm:$0xff] %v148
    %213 = vst [vmem:[#allocation2 + $0xc0] sm:$0xff] %v149
    %214 = vst [vmem:[#allocation2 + $0xc8] sm:$0xff] %v150
    %215 = vst [vmem:[#allocation2 + $0xd0] sm:$0xff] %v151
    %216 = vst [vmem:[#allocation2 + $0xd8] sm:$0xff] %v152
    %217 = vst [vmem:[#allocation2 + $0xe0] sm:$0xff] %v153
    %218 = vst [vmem:[#allocation2 + $0xe8] sm:$0xff] %v154
    %219 = vst [vmem:[#allocation2 + $0xf0] sm:$0xff] %v155
    %220 = vst [vmem:[#allocation2 + $0xf8] sm:$0xff] %v156
    %221 = vst [vmem:[#allocation2 + $0x100] sm:$0xff] %v157
    %222 = vst [vmem:[#allocation2 + $0x108] sm:$0xff] %v158
    %223 = vst [vmem:[#allocation2 + $0x110] sm:$0xff] %v159
    %224 = vst [vmem:[#allocation2 + $0x118] sm:$0xff] %v160
    %225 = vst [vmem:[#allocation2 + $0x120] sm:$0xff] %v161
    %226 = vst [vmem:[#allocation2 + $0x128] sm:$0xff] %v162
    %227 = vst [vmem:[#allocation2 + $0x130] sm:$0xff] %v163
    %228 = vst [vmem:[#allocation2 + $0x138] sm:$0xff] %v164
    %229 = vst [vmem:[#allocation2 + $0x140] sm:$0xff] %v165
    %230 = vst [vmem:[#allocation2 + $0x148] sm:$0xff] %v166
    %231 = vst [vmem:[#allocation2 + $0x150] sm:$0xff] %v167
    %232 = vst [vmem:[#allocation2 + $0x158] sm:$0xff] %v168
    %233 = vst [vmem:[#allocation2 + $0x160] sm:$0xff] %v169
    %234 = vst [vmem:[#allocation2 + $0x168] sm:$0xff] %v170
    %235 = vst [vmem:[#allocation2 + $0x170] sm:$0xff] %v171
    %236 = vst [vmem:[#allocation2 + $0x178] sm:$0xff] %v172
    %237 = vst [vmem:[#allocation2 + $0x180] sm:$0xff] %v173
    %238 = vst [vmem:[#allocation2 + $0x188] sm:$0xff] %v174
    %239 = vst [vmem:[#allocation2 + $0x190] sm:$0xff] %v175
    %240 = vst [vmem:[#allocation2 + $0x198] sm:$0xff] %v176
    %241 = vst [vmem:[#allocation2 + $0x1a0] sm:$0xff] %v177
    %242 = vst [vmem:[#allocation2 + $0x1a8] sm:$0xff] %v178
    %243 = vst [vmem:[#allocation2 + $0x1b0] sm:$0xff] %v179
    %244 = vst [vmem:[#allocation2 + $0x1b8] sm:$0xff] %v180
    %245 = vst [vmem:[#allocation2 + $0x1c0] sm:$0xff] %v181
    %246 = vst [vmem:[#allocation2 + $0x1c8] sm:$0xff] %v182
    %247 = vst [vmem:[#allocation2 + $0x1d0] sm:$0xff] %v183
    %248 = vst [vmem:[#allocation2 + $0x1d8] sm:$0xff] %v184
    %249 = vst [vmem:[#allocation2 + $0x1e0] sm:$0xff] %v185
    %250 = vst [vmem:[#allocation2 + $0x1e8] sm:$0xff] %v186
    %251 = vst [vmem:[#allocation2 + $0x1f0] sm:$0xff] %v187
    %252 = vst [vmem:[#allocation2 + $0x1f8] sm:$0xff] %v188
    %v253 = vld [vmem:[#allocation2] sm:$0xff]
    %v254 = vld [vmem:[#allocation2 + $0x8] sm:$0xff]
    %v255 = vld [vmem:[#allocation2 + $0x10] sm:$0xff]
    %v256 = vld [vmem:[#allocation2 + $0x18] sm:$0xff]
    %v257 = vld [vmem:[#allocation2 + $0x20] sm:$0xff]
    %v258 = vld [vmem:[#allocation2 + $0x28] sm:$0xff]
    %v259 = vld [vmem:[#allocation2 + $0x30] sm:$0xff]
    %v260 = vld [vmem:[#allocation2 + $0x38] sm:$0xff]
    %v261 = vld [vmem:[#allocation2 + $0x40] sm:$0xff]
    %v262 = vld [vmem:[#allocation2 + $0x48] sm:$0xff]
    %v263 = vld [vmem:[#allocation2 + $0x50] sm:$0xff]
    %v264 = vld [vmem:[#allocation2 + $0x58] sm:$0xff]
    %v265 = vld [vmem:[#allocation2 + $0x60] sm:$0xff]
    %v266 = vld [vmem:[#allocation2 + $0x68] sm:$0xff]
    %v267 = vld [vmem:[#allocation2 + $0x70] sm:$0xff]
    %v268 = vld [vmem:[#allocation2 + $0x78] sm:$0xff]
    %v269 = vld [vmem:[#allocation2 + $0x80] sm:$0xff]
    %v270 = vld [vmem:[#allocation2 + $0x88] sm:$0xff]
    %v271 = vld [vmem:[#allocation2 + $0x90] sm:$0xff]
    %v272 = vld [vmem:[#allocation2 + $0x98] sm:$0xff]
    %v273 = vld [vmem:[#allocation2 + $0xa0] sm:$0xff]
    %v274 = vld [vmem:[#allocation2 + $0xa8] sm:$0xff]
    %v275 = vld [vmem:[#allocation2 + $0xb0] sm:$0xff]
    %v276 = vld [vmem:[#allocation2 + $0xb8] sm:$0xff]
    %v277 = vld [vmem:[#allocation2 + $0xc0] sm:$0xff]
    %v278 = vld [vmem:[#allocation2 + $0xc8] sm:$0xff]
    %v279 = vld [vmem:[#allocation2 + $0xd0] sm:$0xff]
    %v280 = vld [vmem:[#allocation2 + $0xd8] sm:$0xff]
    %v281 = vld [vmem:[#allocation2 + $0xe0] sm:$0xff]
    %v282 = vld [vmem:[#allocation2 + $0xe8] sm:$0xff]
    %v283 = vld [vmem:[#allocation2 + $0xf0] sm:$0xff]
    %v284 = vld [vmem:[#allocation2 + $0xf8] sm:$0xff]
    %v285 = vld [vmem:[#allocation2 + $0x100] sm:$0xff]
    %v286 = vld [vmem:[#allocation2 + $0x108] sm:$0xff]
    %v287 = vld [vmem:[#allocation2 + $0x110] sm:$0xff]
    %v288 = vld [vmem:[#allocation2 + $0x118] sm:$0xff]
    %v289 = vld [vmem:[#allocation2 + $0x120] sm:$0xff]
    %v290 = vld [vmem:[#allocation2 + $0x128] sm:$0xff]
    %v291 = vld [vmem:[#allocation2 + $0x130] sm:$0xff]
    %v292 = vld [vmem:[#allocation2 + $0x138] sm:$0xff]
    %v293 = vld [vmem:[#allocation2 + $0x140] sm:$0xff]
    %v294 = vld [vmem:[#allocation2 + $0x148] sm:$0xff]
    %v295 = vld [vmem:[#allocation2 + $0x150] sm:$0xff]
    %v296 = vld [vmem:[#allocation2 + $0x158] sm:$0xff]
    %v297 = vld [vmem:[#allocation2 + $0x160] sm:$0xff]
    %v298 = vld [vmem:[#allocation2 + $0x168] sm:$0xff]
    %v299 = vld [vmem:[#allocation2 + $0x170] sm:$0xff]
    %v300 = vld [vmem:[#allocation2 + $0x178] sm:$0xff]
    %v301 = vld [vmem:[#allocation2 + $0x180] sm:$0xff]
    %v302 = vld [vmem:[#allocation2 + $0x188] sm:$0xff]
    %v303 = vld [vmem:[#allocation2 + $0x190] sm:$0xff]
    %v304 = vld [vmem:[#allocation2 + $0x198] sm:$0xff]
    %v305 = vld [vmem:[#allocation2 + $0x1a0] sm:$0xff]
    %v306 = vld [vmem:[#allocation2 + $0x1a8] sm:$0xff]
    %v307 = vld [vmem:[#allocation2 + $0x1b0] sm:$0xff]
    %v308 = vld [vmem:[#allocation2 + $0x1b8] sm:$0xff]
    %v309 = vld [vmem:[#allocation2 + $0x1c0] sm:$0xff]
    %v310 = vld [vmem:[#allocation2 + $0x1c8] sm:$0xff]
    %v311 = vld [vmem:[#allocation2 + $0x1d0] sm:$0xff]
    %v312 = vld [vmem:[#allocation2 + $0x1d8] sm:$0xff]
    %v313 = vld [vmem:[#allocation2 + $0x1e0] sm:$0xff]
    %v314 = vld [vmem:[#allocation2 + $0x1e8] sm:$0xff]
    %v315 = vld [vmem:[#allocation2 + $0x1f0] sm:$0xff]
    %v316 = vld [vmem:[#allocation2 + $0x1f8] sm:$0xff]
    %v317 = vpack.c.bf16 %v254, %v253
    %v318 = vpack.c.bf16 %v256, %v255
    %v319 = vpack.c.bf16 %v258, %v257
    %v320 = vpack.c.bf16 %v260, %v259
    %v321 = vpack.c.bf16 %v262, %v261
    %v322 = vpack.c.bf16 %v264, %v263
    %v323 = vpack.c.bf16 %v266, %v265
    %v324 = vpack.c.bf16 %v268, %v267
    %v325 = vpack.c.bf16 %v270, %v269
    %v326 = vpack.c.bf16 %v272, %v271
    %v327 = vpack.c.bf16 %v274, %v273
    %v328 = vpack.c.bf16 %v276, %v275
    %v329 = vpack.c.bf16 %v278, %v277
    %v330 = vpack.c.bf16 %v280, %v279
    %v331 = vpack.c.bf16 %v282, %v281
    %v332 = vpack.c.bf16 %v284, %v283
    %v333 = vpack.c.bf16 %v286, %v285
    %v334 = vpack.c.bf16 %v288, %v287
    %v335 = vpack.c.bf16 %v290, %v289
    %v336 = vpack.c.bf16 %v292, %v291
    %v337 = vpack.c.bf16 %v294, %v293
    %v338 = vpack.c.bf16 %v296, %v295
    %v339 = vpack.c.bf16 %v298, %v297
    %v340 = vpack.c.bf16 %v300, %v299
    %v341 = vpack.c.bf16 %v302, %v301
    %v342 = vpack.c.bf16 %v304, %v303
    %v343 = vpack.c.bf16 %v306, %v305
    %v344 = vpack.c.bf16 %v308, %v307
    %v345 = vpack.c.bf16 %v310, %v309
    %v346 = vpack.c.bf16 %v312, %v311
    %v347 = vpack.c.bf16 %v314, %v313
    %v348 = vpack.c.bf16 %v316, %v315
    %v349 = vld [vmem:[#allocation6] sm:$0xff]
    %v350 = vld [vmem:[#allocation6 + $0x8] sm:$0xff]
    %v351 = vld [vmem:[#allocation6 + $0x10] sm:$0xff]
    %v352 = vld [vmem:[#allocation6 + $0x18] sm:$0xff]
    %v353 = vld [vmem:[#allocation6 + $0x20] sm:$0xff]
    %v354 = vld [vmem:[#allocation6 + $0x28] sm:$0xff]
    %v355 = vld [vmem:[#allocation6 + $0x30] sm:$0xff]
    %v356 = vld [vmem:[#allocation6 + $0x38] sm:$0xff]
    %v357 = vld [vmem:[#allocation6 + $0x40] sm:$0xff]
    %v358 = vld [vmem:[#allocation6 + $0x48] sm:$0xff]
    %v359 = vld [vmem:[#allocation6 + $0x50] sm:$0xff]
    %v360 = vld [vmem:[#allocation6 + $0x58] sm:$0xff]
    %v361 = vld [vmem:[#allocation6 + $0x60] sm:$0xff]
    %v362 = vld [vmem:[#allocation6 + $0x68] sm:$0xff]
    %v363 = vld [vmem:[#allocation6 + $0x70] sm:$0xff]
    %v364 = vld [vmem:[#allocation6 + $0x78] sm:$0xff]
    %v365 = vld [vmem:[#allocation6 + $0x80] sm:$0xff]
    %v366 = vld [vmem:[#allocation6 + $0x88] sm:$0xff]
    %v367 = vld [vmem:[#allocation6 + $0x90] sm:$0xff]
    %v368 = vld [vmem:[#allocation6 + $0x98] sm:$0xff]
    %v369 = vld [vmem:[#allocation6 + $0xa0] sm:$0xff]
    %v370 = vld [vmem:[#allocation6 + $0xa8] sm:$0xff]
    %v371 = vld [vmem:[#allocation6 + $0xb0] sm:$0xff]
    %v372 = vld [vmem:[#allocation6 + $0xb8] sm:$0xff]
    %v373 = vld [vmem:[#allocation6 + $0xc0] sm:$0xff]
    %v374 = vld [vmem:[#allocation6 + $0xc8] sm:$0xff]
    %v375 = vld [vmem:[#allocation6 + $0xd0] sm:$0xff]
    %v376 = vld [vmem:[#allocation6 + $0xd8] sm:$0xff]
    %v377 = vld [vmem:[#allocation6 + $0xe0] sm:$0xff]
    %v378 = vld [vmem:[#allocation6 + $0xe8] sm:$0xff]
    %v379 = vld [vmem:[#allocation6 + $0xf0] sm:$0xff]
    %v380 = vld [vmem:[#allocation6 + $0xf8] sm:$0xff]
    %v381 = vld [vmem:[#allocation6 + $0x100] sm:$0xff]
    %v382 = vld [vmem:[#allocation6 + $0x108] sm:$0xff]
    %v383 = vld [vmem:[#allocation6 + $0x110] sm:$0xff]
    %v384 = vld [vmem:[#allocation6 + $0x118] sm:$0xff]
    %v385 = vld [vmem:[#allocation6 + $0x120] sm:$0xff]
    %v386 = vld [vmem:[#allocation6 + $0x128] sm:$0xff]
    %v387 = vld [vmem:[#allocation6 + $0x130] sm:$0xff]
    %v388 = vld [vmem:[#allocation6 + $0x138] sm:$0xff]
    %v389 = vld [vmem:[#allocation6 + $0x140] sm:$0xff]
    %v390 = vld [vmem:[#allocation6 + $0x148] sm:$0xff]
    %v391 = vld [vmem:[#allocation6 + $0x150] sm:$0xff]
    %v392 = vld [vmem:[#allocation6 + $0x158] sm:$0xff]
    %v393 = vld [vmem:[#allocation6 + $0x160] sm:$0xff]
    %v394 = vld [vmem:[#allocation6 + $0x168] sm:$0xff]
    %v395 = vld [vmem:[#allocation6 + $0x170] sm:$0xff]
    %v396 = vld [vmem:[#allocation6 + $0x178] sm:$0xff]
    %v397 = vld [vmem:[#allocation6 + $0x180] sm:$0xff]
    %v398 = vld [vmem:[#allocation6 + $0x188] sm:$0xff]
    %v399 = vld [vmem:[#allocation6 + $0x190] sm:$0xff]
    %v400 = vld [vmem:[#allocation6 + $0x198] sm:$0xff]
    %v401 = vld [vmem:[#allocation6 + $0x1a0] sm:$0xff]
    %v402 = vld [vmem:[#allocation6 + $0x1a8] sm:$0xff]
    %v403 = vld [vmem:[#allocation6 + $0x1b0] sm:$0xff]
    %v404 = vld [vmem:[#allocation6 + $0x1b8] sm:$0xff]
    %v405 = vld [vmem:[#allocation6 + $0x1c0] sm:$0xff]
    %v406 = vld [vmem:[#allocation6 + $0x1c8] sm:$0xff]
    %v407 = vld [vmem:[#allocation6 + $0x1d0] sm:$0xff]
    %v408 = vld [vmem:[#allocation6 + $0x1d8] sm:$0xff]
    %v409 = vld [vmem:[#allocation6 + $0x1e0] sm:$0xff]
    %v410 = vld [vmem:[#allocation6 + $0x1e8] sm:$0xff]
    %v411 = vld [vmem:[#allocation6 + $0x1f0] sm:$0xff]
    %v412 = vld [vmem:[#allocation6 + $0x1f8] sm:$0xff]
    %v413 = vld [vmem:[#allocation6 + $0x200] sm:$0xff]
    %v414 = vld [vmem:[#allocation6 + $0x208] sm:$0xff]
    %v415 = vld [vmem:[#allocation6 + $0x210] sm:$0xff]
    %v416 = vld [vmem:[#allocation6 + $0x218] sm:$0xff]
    %v417 = vld [vmem:[#allocation6 + $0x220] sm:$0xff]
    %v418 = vld [vmem:[#allocation6 + $0x228] sm:$0xff]
    %v419 = vld [vmem:[#allocation6 + $0x230] sm:$0xff]
    %v420 = vld [vmem:[#allocation6 + $0x238] sm:$0xff]
    %v421 = vld [vmem:[#allocation6 + $0x240] sm:$0xff]
    %v422 = vld [vmem:[#allocation6 + $0x248] sm:$0xff]
    %v423 = vld [vmem:[#allocation6 + $0x250] sm:$0xff]
    %v424 = vld [vmem:[#allocation6 + $0x258] sm:$0xff]
    %v425 = vld [vmem:[#allocation6 + $0x260] sm:$0xff]
    %v426 = vld [vmem:[#allocation6 + $0x268] sm:$0xff]
    %v427 = vld [vmem:[#allocation6 + $0x270] sm:$0xff]
    %v428 = vld [vmem:[#allocation6 + $0x278] sm:$0xff]
    %v429 = vld [vmem:[#allocation6 + $0x280] sm:$0xff]
    %v430 = vld [vmem:[#allocation6 + $0x288] sm:$0xff]
    %v431 = vld [vmem:[#allocation6 + $0x290] sm:$0xff]
    %v432 = vld [vmem:[#allocation6 + $0x298] sm:$0xff]
    %v433 = vld [vmem:[#allocation6 + $0x2a0] sm:$0xff]
    %v434 = vld [vmem:[#allocation6 + $0x2a8] sm:$0xff]
    %v435 = vld [vmem:[#allocation6 + $0x2b0] sm:$0xff]
    %v436 = vld [vmem:[#allocation6 + $0x2b8] sm:$0xff]
    %v437 = vld [vmem:[#allocation6 + $0x2c0] sm:$0xff]
    %v438 = vld [vmem:[#allocation6 + $0x2c8] sm:$0xff]
    %v439 = vld [vmem:[#allocation6 + $0x2d0] sm:$0xff]
    %v440 = vld [vmem:[#allocation6 + $0x2d8] sm:$0xff]
    %v441 = vld [vmem:[#allocation6 + $0x2e0] sm:$0xff]
    %v442 = vld [vmem:[#allocation6 + $0x2e8] sm:$0xff]
    %v443 = vld [vmem:[#allocation6 + $0x2f0] sm:$0xff]
    %v444 = vld [vmem:[#allocation6 + $0x2f8] sm:$0xff]
    %v445 = vld [vmem:[#allocation6 + $0x300] sm:$0xff]
    %v446 = vld [vmem:[#allocation6 + $0x308] sm:$0xff]
    %v447 = vld [vmem:[#allocation6 + $0x310] sm:$0xff]
    %v448 = vld [vmem:[#allocation6 + $0x318] sm:$0xff]
    %v449 = vld [vmem:[#allocation6 + $0x320] sm:$0xff]
    %v450 = vld [vmem:[#allocation6 + $0x328] sm:$0xff]
    %v451 = vld [vmem:[#allocation6 + $0x330] sm:$0xff]
    %v452 = vld [vmem:[#allocation6 + $0x338] sm:$0xff]
    %v453 = vld [vmem:[#allocation6 + $0x340] sm:$0xff]
    %v454 = vld [vmem:[#allocation6 + $0x348] sm:$0xff]
    %v455 = vld [vmem:[#allocation6 + $0x350] sm:$0xff]
    %v456 = vld [vmem:[#allocation6 + $0x358] sm:$0xff]
    %v457 = vld [vmem:[#allocation6 + $0x360] sm:$0xff]
    %v458 = vld [vmem:[#allocation6 + $0x368] sm:$0xff]
    %v459 = vld [vmem:[#allocation6 + $0x370] sm:$0xff]
    %v460 = vld [vmem:[#allocation6 + $0x378] sm:$0xff]
    %v461 = vld [vmem:[#allocation6 + $0x380] sm:$0xff]
    %v462 = vld [vmem:[#allocation6 + $0x388] sm:$0xff]
    %v463 = vld [vmem:[#allocation6 + $0x390] sm:$0xff]
    %v464 = vld [vmem:[#allocation6 + $0x398] sm:$0xff]
    %v465 = vld [vmem:[#allocation6 + $0x3a0] sm:$0xff]
    %v466 = vld [vmem:[#allocation6 + $0x3a8] sm:$0xff]
    %v467 = vld [vmem:[#allocation6 + $0x3b0] sm:$0xff]
    %v468 = vld [vmem:[#allocation6 + $0x3b8] sm:$0xff]
    %v469 = vld [vmem:[#allocation6 + $0x3c0] sm:$0xff]
    %v470 = vld [vmem:[#allocation6 + $0x3c8] sm:$0xff]
    %v471 = vld [vmem:[#allocation6 + $0x3d0] sm:$0xff]
    %v472 = vld [vmem:[#allocation6 + $0x3d8] sm:$0xff]
    %v473 = vld [vmem:[#allocation6 + $0x3e0] sm:$0xff]
    %v474 = vld [vmem:[#allocation6 + $0x3e8] sm:$0xff]
    %v475 = vld [vmem:[#allocation6 + $0x3f0] sm:$0xff]
    %v476 = vld [vmem:[#allocation6 + $0x3f8] sm:$0xff]
    %v605 = vunpack.c.l.b16 %v349
    %v606 = vunpack.c.h.b16 %v349
    %v607 = vunpack.c.l.b16 %v350
    %v608 = vunpack.c.h.b16 %v350
    %v609 = vunpack.c.l.b16 %v351
    %v610 = vunpack.c.h.b16 %v351
    %v611 = vunpack.c.l.b16 %v352
    %v612 = vunpack.c.h.b16 %v352
    %v613 = vunpack.c.l.b16 %v353
    %v614 = vunpack.c.h.b16 %v353
    %v615 = vunpack.c.l.b16 %v354
    %v616 = vunpack.c.h.b16 %v354
    %v617 = vunpack.c.l.b16 %v355
    %v618 = vunpack.c.h.b16 %v355
    %v619 = vunpack.c.l.b16 %v356
    %v620 = vunpack.c.h.b16 %v356
    %v621 = vunpack.c.l.b16 %v357
    %v622 = vunpack.c.h.b16 %v357
    %v623 = vunpack.c.l.b16 %v358
    %v624 = vunpack.c.h.b16 %v358
    %v625 = vunpack.c.l.b16 %v359
    %v626 = vunpack.c.h.b16 %v359
    %v627 = vunpack.c.l.b16 %v360
    %v628 = vunpack.c.h.b16 %v360
    %v629 = vunpack.c.l.b16 %v361
    %v630 = vunpack.c.h.b16 %v361
    %v631 = vunpack.c.l.b16 %v362
    %v632 = vunpack.c.h.b16 %v362
    %v633 = vunpack.c.l.b16 %v363
    %v634 = vunpack.c.h.b16 %v363
    %v635 = vunpack.c.l.b16 %v364
    %v636 = vunpack.c.h.b16 %v364
    %v637 = vunpack.c.l.b16 %v365
    %v638 = vunpack.c.h.b16 %v365
    %v639 = vunpack.c.l.b16 %v366
    %v640 = vunpack.c.h.b16 %v366
    %v641 = vunpack.c.l.b16 %v367
    %v642 = vunpack.c.h.b16 %v367
    %v643 = vunpack.c.l.b16 %v368
    %v644 = vunpack.c.h.b16 %v368
    %v645 = vunpack.c.l.b16 %v369
    %v646 = vunpack.c.h.b16 %v369
    %v647 = vunpack.c.l.b16 %v370
    %v648 = vunpack.c.h.b16 %v370
    %v649 = vunpack.c.l.b16 %v371
    %v650 = vunpack.c.h.b16 %v371
    %v651 = vunpack.c.l.b16 %v372
    %v652 = vunpack.c.h.b16 %v372
    %v653 = vunpack.c.l.b16 %v373
    %v654 = vunpack.c.h.b16 %v373
    %v655 = vunpack.c.l.b16 %v374
    %v656 = vunpack.c.h.b16 %v374
    %v657 = vunpack.c.l.b16 %v375
    %v658 = vunpack.c.h.b16 %v375
    %v659 = vunpack.c.l.b16 %v376
    %v660 = vunpack.c.h.b16 %v376
    %v661 = vunpack.c.l.b16 %v377
    %v662 = vunpack.c.h.b16 %v377
    %v663 = vunpack.c.l.b16 %v378
    %v664 = vunpack.c.h.b16 %v378
    %v665 = vunpack.c.l.b16 %v379
    %v666 = vunpack.c.h.b16 %v379
    %v667 = vunpack.c.l.b16 %v380
    %v668 = vunpack.c.h.b16 %v380
    %v669 = vunpack.c.l.b16 %v381
    %v670 = vunpack.c.h.b16 %v381
    %v671 = vunpack.c.l.b16 %v382
    %v672 = vunpack.c.h.b16 %v382
    %v673 = vunpack.c.l.b16 %v383
    %v674 = vunpack.c.h.b16 %v383
    %v675 = vunpack.c.l.b16 %v384
    %v676 = vunpack.c.h.b16 %v384
    %v677 = vunpack.c.l.b16 %v385
    %v678 = vunpack.c.h.b16 %v385
    %v679 = vunpack.c.l.b16 %v386
    %v680 = vunpack.c.h.b16 %v386
    %v681 = vunpack.c.l.b16 %v387
    %v682 = vunpack.c.h.b16 %v387
    %v683 = vunpack.c.l.b16 %v388
    %v684 = vunpack.c.h.b16 %v388
    %v685 = vunpack.c.l.b16 %v389
    %v686 = vunpack.c.h.b16 %v389
    %v687 = vunpack.c.l.b16 %v390
    %v688 = vunpack.c.h.b16 %v390
    %v689 = vunpack.c.l.b16 %v391
    %v690 = vunpack.c.h.b16 %v391
    %v691 = vunpack.c.l.b16 %v392
    %v692 = vunpack.c.h.b16 %v392
    %v693 = vunpack.c.l.b16 %v393
    %v694 = vunpack.c.h.b16 %v393
    %v695 = vunpack.c.l.b16 %v394
    %v696 = vunpack.c.h.b16 %v394
    %v697 = vunpack.c.l.b16 %v395
    %v698 = vunpack.c.h.b16 %v395
    %v699 = vunpack.c.l.b16 %v396
    %v700 = vunpack.c.h.b16 %v396
    %v701 = vunpack.c.l.b16 %v397
    %v702 = vunpack.c.h.b16 %v397
    %v703 = vunpack.c.l.b16 %v398
    %v704 = vunpack.c.h.b16 %v398
    %v705 = vunpack.c.l.b16 %v399
    %v706 = vunpack.c.h.b16 %v399
    %v707 = vunpack.c.l.b16 %v400
    %v708 = vunpack.c.h.b16 %v400
    %v709 = vunpack.c.l.b16 %v401
    %v710 = vunpack.c.h.b16 %v401
    %v711 = vunpack.c.l.b16 %v402
    %v712 = vunpack.c.h.b16 %v402
    %v713 = vunpack.c.l.b16 %v403
    %v714 = vunpack.c.h.b16 %v403
    %v715 = vunpack.c.l.b16 %v404
    %v716 = vunpack.c.h.b16 %v404
    %v717 = vunpack.c.l.b16 %v405
    %v718 = vunpack.c.h.b16 %v405
    %v719 = vunpack.c.l.b16 %v406
    %v720 = vunpack.c.h.b16 %v406
    %v721 = vunpack.c.l.b16 %v407
    %v722 = vunpack.c.h.b16 %v407
    %v723 = vunpack.c.l.b16 %v408
    %v724 = vunpack.c.h.b16 %v408
    %v725 = vunpack.c.l.b16 %v409
    %v726 = vunpack.c.h.b16 %v409
    %v727 = vunpack.c.l.b16 %v410
    %v728 = vunpack.c.h.b16 %v410
    %v729 = vunpack.c.l.b16 %v411
    %v730 = vunpack.c.h.b16 %v411
    %v731 = vunpack.c.l.b16 %v412
    %v732 = vunpack.c.h.b16 %v412
    %v733 = vunpack.c.l.b16 %v413
    %v734 = vunpack.c.h.b16 %v413
    %v735 = vunpack.c.l.b16 %v414
    %v736 = vunpack.c.h.b16 %v414
    %v737 = vunpack.c.l.b16 %v415
    %v738 = vunpack.c.h.b16 %v415
    %v739 = vunpack.c.l.b16 %v416
    %v740 = vunpack.c.h.b16 %v416
    %v741 = vunpack.c.l.b16 %v417
    %v742 = vunpack.c.h.b16 %v417
    %v743 = vunpack.c.l.b16 %v418
    %v744 = vunpack.c.h.b16 %v418
    %v745 = vunpack.c.l.b16 %v419
    %v746 = vunpack.c.h.b16 %v419
    %v747 = vunpack.c.l.b16 %v420
    %v748 = vunpack.c.h.b16 %v420
    %v749 = vunpack.c.l.b16 %v421
    %v750 = vunpack.c.h.b16 %v421
    %v751 = vunpack.c.l.b16 %v422
    %v752 = vunpack.c.h.b16 %v422
    %v753 = vunpack.c.l.b16 %v423
    %v754 = vunpack.c.h.b16 %v423
    %v755 = vunpack.c.l.b16 %v424
    %v756 = vunpack.c.h.b16 %v424
    %v757 = vunpack.c.l.b16 %v425
    %v758 = vunpack.c.h.b16 %v425
    %v759 = vunpack.c.l.b16 %v426
    %v760 = vunpack.c.h.b16 %v426
    %v761 = vunpack.c.l.b16 %v427
    %v762 = vunpack.c.h.b16 %v427
    %v763 = vunpack.c.l.b16 %v428
    %v764 = vunpack.c.h.b16 %v428
    %v765 = vunpack.c.l.b16 %v429
    %v766 = vunpack.c.h.b16 %v429
    %v767 = vunpack.c.l.b16 %v430
    %v768 = vunpack.c.h.b16 %v430
    %v769 = vunpack.c.l.b16 %v431
    %v770 = vunpack.c.h.b16 %v431
    %v771 = vunpack.c.l.b16 %v432
    %v772 = vunpack.c.h.b16 %v432
    %v773 = vunpack.c.l.b16 %v433
    %v774 = vunpack.c.h.b16 %v433
    %v775 = vunpack.c.l.b16 %v434
    %v776 = vunpack.c.h.b16 %v434
    %v777 = vunpack.c.l.b16 %v435
    %v778 = vunpack.c.h.b16 %v435
    %v779 = vunpack.c.l.b16 %v436
    %v780 = vunpack.c.h.b16 %v436
    %v781 = vunpack.c.l.b16 %v437
    %v782 = vunpack.c.h.b16 %v437
    %v783 = vunpack.c.l.b16 %v438
    %v784 = vunpack.c.h.b16 %v438
    %v785 = vunpack.c.l.b16 %v439
    %v786 = vunpack.c.h.b16 %v439
    %v787 = vunpack.c.l.b16 %v440
    %v788 = vunpack.c.h.b16 %v440
    %v789 = vunpack.c.l.b16 %v441
    %v790 = vunpack.c.h.b16 %v441
    %v791 = vunpack.c.l.b16 %v442
    %v792 = vunpack.c.h.b16 %v442
    %v793 = vunpack.c.l.b16 %v443
    %v794 = vunpack.c.h.b16 %v443
    %v795 = vunpack.c.l.b16 %v444
    %v796 = vunpack.c.h.b16 %v444
    %v797 = vunpack.c.l.b16 %v445
    %v798 = vunpack.c.h.b16 %v445
    %v799 = vunpack.c.l.b16 %v446
    %v800 = vunpack.c.h.b16 %v446
    %v801 = vunpack.c.l.b16 %v447
    %v802 = vunpack.c.h.b16 %v447
    %v803 = vunpack.c.l.b16 %v448
    %v804 = vunpack.c.h.b16 %v448
    %v805 = vunpack.c.l.b16 %v449
    %v806 = vunpack.c.h.b16 %v449
    %v807 = vunpack.c.l.b16 %v450
    %v808 = vunpack.c.h.b16 %v450
    %v809 = vunpack.c.l.b16 %v451
    %v810 = vunpack.c.h.b16 %v451
    %v811 = vunpack.c.l.b16 %v452
    %v812 = vunpack.c.h.b16 %v452
    %v813 = vunpack.c.l.b16 %v453
    %v814 = vunpack.c.h.b16 %v453
    %v815 = vunpack.c.l.b16 %v454
    %v816 = vunpack.c.h.b16 %v454
    %v817 = vunpack.c.l.b16 %v455
    %v818 = vunpack.c.h.b16 %v455
    %v819 = vunpack.c.l.b16 %v456
    %v820 = vunpack.c.h.b16 %v456
    %v821 = vunpack.c.l.b16 %v457
    %v822 = vunpack.c.h.b16 %v457
    %v823 = vunpack.c.l.b16 %v458
    %v824 = vunpack.c.h.b16 %v458
    %v825 = vunpack.c.l.b16 %v459
    %v826 = vunpack.c.h.b16 %v459
    %v827 = vunpack.c.l.b16 %v460
    %v828 = vunpack.c.h.b16 %v460
    %v829 = vunpack.c.l.b16 %v461
    %v830 = vunpack.c.h.b16 %v461
    %v831 = vunpack.c.l.b16 %v462
    %v832 = vunpack.c.h.b16 %v462
    %v833 = vunpack.c.l.b16 %v463
    %v834 = vunpack.c.h.b16 %v463
    %v835 = vunpack.c.l.b16 %v464
    %v836 = vunpack.c.h.b16 %v464
    %v837 = vunpack.c.l.b16 %v465
    %v838 = vunpack.c.h.b16 %v465
    %v839 = vunpack.c.l.b16 %v466
    %v840 = vunpack.c.h.b16 %v466
    %v841 = vunpack.c.l.b16 %v467
    %v842 = vunpack.c.h.b16 %v467
    %v843 = vunpack.c.l.b16 %v468
    %v844 = vunpack.c.h.b16 %v468
    %v845 = vunpack.c.l.b16 %v469
    %v846 = vunpack.c.h.b16 %v469
    %v847 = vunpack.c.l.b16 %v470
    %v848 = vunpack.c.h.b16 %v470
    %v849 = vunpack.c.l.b16 %v471
    %v850 = vunpack.c.h.b16 %v471
    %v851 = vunpack.c.l.b16 %v472
    %v852 = vunpack.c.h.b16 %v472
    %v853 = vunpack.c.l.b16 %v473
    %v854 = vunpack.c.h.b16 %v473
    %v855 = vunpack.c.l.b16 %v474
    %v856 = vunpack.c.h.b16 %v474
    %v857 = vunpack.c.l.b16 %v475
    %v858 = vunpack.c.h.b16 %v475
    %v859 = vunpack.c.l.b16 %v476
    %v860 = vunpack.c.h.b16 %v476
    %v861 = vpack.c.b16 %v609, %v605
    %v862 = vpack.c.b16 %v610, %v606
    %v863 = vpack.c.b16 %v611, %v607
    %v864 = vpack.c.b16 %v612, %v608
    %v865 = vpack.c.b16 %v617, %v613
    %v866 = vpack.c.b16 %v618, %v614
    %v867 = vpack.c.b16 %v619, %v615
    %v868 = vpack.c.b16 %v620, %v616
    %v869 = vpack.c.b16 %v625, %v621
    %v870 = vpack.c.b16 %v626, %v622
    %v871 = vpack.c.b16 %v627, %v623
    %v872 = vpack.c.b16 %v628, %v624
    %v873 = vpack.c.b16 %v633, %v629
    %v874 = vpack.c.b16 %v634, %v630
    %v875 = vpack.c.b16 %v635, %v631
    %v876 = vpack.c.b16 %v636, %v632
    %v877 = vpack.c.b16 %v641, %v637
    %v878 = vpack.c.b16 %v642, %v638
    %v879 = vpack.c.b16 %v643, %v639
    %v880 = vpack.c.b16 %v644, %v640
    %v881 = vpack.c.b16 %v649, %v645
    %v882 = vpack.c.b16 %v650, %v646
    %v883 = vpack.c.b16 %v651, %v647
    %v884 = vpack.c.b16 %v652, %v648
    %v885 = vpack.c.b16 %v657, %v653
    %v886 = vpack.c.b16 %v658, %v654
    %v887 = vpack.c.b16 %v659, %v655
    %v888 = vpack.c.b16 %v660, %v656
    %v889 = vpack.c.b16 %v665, %v661
    %v890 = vpack.c.b16 %v666, %v662
    %v891 = vpack.c.b16 %v667, %v663
    %v892 = vpack.c.b16 %v668, %v664
    %v893 = vpack.c.b16 %v673, %v669
    %v894 = vpack.c.b16 %v674, %v670
    %v895 = vpack.c.b16 %v675, %v671
    %v896 = vpack.c.b16 %v676, %v672
    %v897 = vpack.c.b16 %v681, %v677
    %v898 = vpack.c.b16 %v682, %v678
    %v899 = vpack.c.b16 %v683, %v679
    %v900 = vpack.c.b16 %v684, %v680
    %v901 = vpack.c.b16 %v689, %v685
    %v902 = vpack.c.b16 %v690, %v686
    %v903 = vpack.c.b16 %v691, %v687
    %v904 = vpack.c.b16 %v692, %v688
    %v905 = vpack.c.b16 %v697, %v693
    %v906 = vpack.c.b16 %v698, %v694
    %v907 = vpack.c.b16 %v699, %v695
    %v908 = vpack.c.b16 %v700, %v696
    %v909 = vpack.c.b16 %v705, %v701
    %v910 = vpack.c.b16 %v706, %v702
    %v911 = vpack.c.b16 %v707, %v703
    %v912 = vpack.c.b16 %v708, %v704
    %v913 = vpack.c.b16 %v713, %v709
    %v914 = vpack.c.b16 %v714, %v710
    %v915 = vpack.c.b16 %v715, %v711
    %v916 = vpack.c.b16 %v716, %v712
    %v917 = vpack.c.b16 %v721, %v717
    %v918 = vpack.c.b16 %v722, %v718
    %v919 = vpack.c.b16 %v723, %v719
    %v920 = vpack.c.b16 %v724, %v720
    %v921 = vpack.c.b16 %v729, %v725
    %v922 = vpack.c.b16 %v730, %v726
    %v923 = vpack.c.b16 %v731, %v727
    %v924 = vpack.c.b16 %v732, %v728
    %v925 = vpack.c.b16 %v737, %v733
    %v926 = vpack.c.b16 %v738, %v734
    %v927 = vpack.c.b16 %v739, %v735
    %v928 = vpack.c.b16 %v740, %v736
    %v929 = vpack.c.b16 %v745, %v741
    %v930 = vpack.c.b16 %v746, %v742
    %v931 = vpack.c.b16 %v747, %v743
    %v932 = vpack.c.b16 %v748, %v744
    %v933 = vpack.c.b16 %v753, %v749
    %v934 = vpack.c.b16 %v754, %v750
    %v935 = vpack.c.b16 %v755, %v751
    %v936 = vpack.c.b16 %v756, %v752
    %v937 = vpack.c.b16 %v761, %v757
    %v938 = vpack.c.b16 %v762, %v758
    %v939 = vpack.c.b16 %v763, %v759
    %v940 = vpack.c.b16 %v764, %v760
    %v941 = vpack.c.b16 %v769, %v765
    %v942 = vpack.c.b16 %v770, %v766
    %v943 = vpack.c.b16 %v771, %v767
    %v944 = vpack.c.b16 %v772, %v768
    %v945 = vpack.c.b16 %v777, %v773
    %v946 = vpack.c.b16 %v778, %v774
    %v947 = vpack.c.b16 %v779, %v775
    %v948 = vpack.c.b16 %v780, %v776
    %v949 = vpack.c.b16 %v785, %v781
    %v950 = vpack.c.b16 %v786, %v782
    %v951 = vpack.c.b16 %v787, %v783
    %v952 = vpack.c.b16 %v788, %v784
    %v953 = vpack.c.b16 %v793, %v789
    %v954 = vpack.c.b16 %v794, %v790
    %v955 = vpack.c.b16 %v795, %v791
    %v956 = vpack.c.b16 %v796, %v792
    %v957 = vpack.c.b16 %v801, %v797
    %v958 = vpack.c.b16 %v802, %v798
    %v959 = vpack.c.b16 %v803, %v799
    %v960 = vpack.c.b16 %v804, %v800
    %v961 = vpack.c.b16 %v809, %v805
    %v962 = vpack.c.b16 %v810, %v806
    %v963 = vpack.c.b16 %v811, %v807
    %v964 = vpack.c.b16 %v812, %v808
    %v965 = vpack.c.b16 %v817, %v813
    %v966 = vpack.c.b16 %v818, %v814
    %v967 = vpack.c.b16 %v819, %v815
    %v968 = vpack.c.b16 %v820, %v816
    %v969 = vpack.c.b16 %v825, %v821
    %v970 = vpack.c.b16 %v826, %v822
    %v971 = vpack.c.b16 %v827, %v823
    %v972 = vpack.c.b16 %v828, %v824
    %v973 = vpack.c.b16 %v833, %v829
    %v974 = vpack.c.b16 %v834, %v830
    %v975 = vpack.c.b16 %v835, %v831
    %v976 = vpack.c.b16 %v836, %v832
    %v977 = vpack.c.b16 %v841, %v837
    %v978 = vpack.c.b16 %v842, %v838
    %v979 = vpack.c.b16 %v843, %v839
    %v980 = vpack.c.b16 %v844, %v840
    %v981 = vpack.c.b16 %v849, %v845
    %v982 = vpack.c.b16 %v850, %v846
    %v983 = vpack.c.b16 %v851, %v847
    %v984 = vpack.c.b16 %v852, %v848
    %v985 = vpack.c.b16 %v857, %v853
    %v986 = vpack.c.b16 %v858, %v854
    %v987 = vpack.c.b16 %v859, %v855
    %v988 = vpack.c.b16 %v860, %v856
    %1117 = vmatpush.bf16.msra.mxu0 %v324
    %1118 = vmatpush.bf16.msra.mxu0 %v323
    %1119 = vmatpush.bf16.msra.mxu0 %v322
    %1120 = vmatpush.bf16.msra.mxu0 %v321
    %1121 = vmatpush.bf16.msra.mxu0 %v320
    %1122 = vmatpush.bf16.msra.mxu0 %v319
    %1123 = vmatpush.bf16.msra.mxu0 %v318
    %1124 = vmatpush.bf16.msra.mxu0 %v317
    %1125 = vmatmul.bf16.gmra.mxu0 %v861
    %v1126 = vpop.f32.mrf.mxu0
    %v1127 = vadd.f32 0.0, %v1126
    %v1128 = vpop.f32.mrf.mxu0
    %v1129 = vadd.f32 0.0, %v1128
    %1130 = vmatmul.bf16.gmra.mxu0 %v865
    %v1131 = vpop.f32.mrf.mxu0
    %v1132 = vadd.f32 0.0, %v1131
    %v1133 = vpop.f32.mrf.mxu0
    %v1134 = vadd.f32 0.0, %v1133
    %1135 = vmatmul.bf16.gmra.mxu0 %v869
    %v1136 = vpop.f32.mrf.mxu0
    %v1137 = vadd.f32 0.0, %v1136
    %v1138 = vpop.f32.mrf.mxu0
    %v1139 = vadd.f32 0.0, %v1138
    %1140 = vmatmul.bf16.gmra.mxu0 %v873
    %v1141 = vpop.f32.mrf.mxu0
    %v1142 = vadd.f32 0.0, %v1141
    %v1143 = vpop.f32.mrf.mxu0
    %v1144 = vadd.f32 0.0, %v1143
    %1145 = vmatmul.bf16.gmra.mxu0 %v877
    %v1146 = vpop.f32.mrf.mxu0
    %v1147 = vadd.f32 0.0, %v1146
    %v1148 = vpop.f32.mrf.mxu0
    %v1149 = vadd.f32 0.0, %v1148
    %1150 = vmatmul.bf16.gmra.mxu0 %v881
    %v1151 = vpop.f32.mrf.mxu0
    %v1152 = vadd.f32 0.0, %v1151
    %v1153 = vpop.f32.mrf.mxu0
    %v1154 = vadd.f32 0.0, %v1153
    %1155 = vmatmul.bf16.gmra.mxu0 %v885
    %v1156 = vpop.f32.mrf.mxu0
    %v1157 = vadd.f32 0.0, %v1156
    %v1158 = vpop.f32.mrf.mxu0
    %v1159 = vadd.f32 0.0, %v1158
    %1160 = vmatmul.bf16.gmra.mxu0 %v889
    %v1161 = vpop.f32.mrf.mxu0
    %v1162 = vadd.f32 0.0, %v1161
    %v1163 = vpop.f32.mrf.mxu0
    %v1164 = vadd.f32 0.0, %v1163
    %1165 = vmatmul.bf16.gmra.mxu0 %v893
    %v1166 = vpop.f32.mrf.mxu0
    %v1167 = vadd.f32 0.0, %v1166
    %v1168 = vpop.f32.mrf.mxu0
    %v1169 = vadd.f32 0.0, %v1168
    %1170 = vmatmul.bf16.gmra.mxu0 %v897
    %v1171 = vpop.f32.mrf.mxu0
    %v1172 = vadd.f32 0.0, %v1171
    %v1173 = vpop.f32.mrf.mxu0
    %v1174 = vadd.f32 0.0, %v1173
    %1175 = vmatmul.bf16.gmra.mxu0 %v901
    %v1176 = vpop.f32.mrf.mxu0
    %v1177 = vadd.f32 0.0, %v1176
    %v1178 = vpop.f32.mrf.mxu0
    %v1179 = vadd.f32 0.0, %v1178
    %1180 = vmatmul.bf16.gmra.mxu0 %v905
    %v1181 = vpop.f32.mrf.mxu0
    %v1182 = vadd.f32 0.0, %v1181
    %v1183 = vpop.f32.mrf.mxu0
    %v1184 = vadd.f32 0.0, %v1183
    %1185 = vmatmul.bf16.gmra.mxu0 %v909
    %v1186 = vpop.f32.mrf.mxu0
    %v1187 = vadd.f32 0.0, %v1186
    %v1188 = vpop.f32.mrf.mxu0
    %v1189 = vadd.f32 0.0, %v1188
    %1190 = vmatmul.bf16.gmra.mxu0 %v913
    %v1191 = vpop.f32.mrf.mxu0
    %v1192 = vadd.f32 0.0, %v1191
    %v1193 = vpop.f32.mrf.mxu0
    %v1194 = vadd.f32 0.0, %v1193
    %1195 = vmatmul.bf16.gmra.mxu0 %v917
    %v1196 = vpop.f32.mrf.mxu0
    %v1197 = vadd.f32 0.0, %v1196
    %v1198 = vpop.f32.mrf.mxu0
    %v1199 = vadd.f32 0.0, %v1198
    %1200 = vmatmul.bf16.gmra.mxu0 %v921
    %v1201 = vpop.f32.mrf.mxu0
    %v1202 = vadd.f32 0.0, %v1201
    %v1203 = vpop.f32.mrf.mxu0
    %v1204 = vadd.f32 0.0, %v1203
    %1205 = vmatmul.bf16.gmra.mxu0 %v925
    %v1206 = vpop.f32.mrf.mxu0
    %v1207 = vadd.f32 0.0, %v1206
    %v1208 = vpop.f32.mrf.mxu0
    %v1209 = vadd.f32 0.0, %v1208
    %1210 = vmatmul.bf16.gmra.mxu0 %v929
    %v1211 = vpop.f32.mrf.mxu0
    %v1212 = vadd.f32 0.0, %v1211
    %v1213 = vpop.f32.mrf.mxu0
    %v1214 = vadd.f32 0.0, %v1213
    %1215 = vmatmul.bf16.gmra.mxu0 %v933
    %v1216 = vpop.f32.mrf.mxu0
    %v1217 = vadd.f32 0.0, %v1216
    %v1218 = vpop.f32.mrf.mxu0
    %v1219 = vadd.f32 0.0, %v1218
    %1220 = vmatmul.bf16.gmra.mxu0 %v937
    %v1221 = vpop.f32.mrf.mxu0
    %v1222 = vadd.f32 0.0, %v1221
    %v1223 = vpop.f32.mrf.mxu0
    %v1224 = vadd.f32 0.0, %v1223
    %1225 = vmatmul.bf16.gmra.mxu0 %v941
    %v1226 = vpop.f32.mrf.mxu0
    %v1227 = vadd.f32 0.0, %v1226
    %v1228 = vpop.f32.mrf.mxu0
    %v1229 = vadd.f32 0.0, %v1228
    %1230 = vmatmul.bf16.gmra.mxu0 %v945
    %v1231 = vpop.f32.mrf.mxu0
    %v1232 = vadd.f32 0.0, %v1231
    %v1233 = vpop.f32.mrf.mxu0
    %v1234 = vadd.f32 0.0, %v1233
    %1235 = vmatmul.bf16.gmra.mxu0 %v949
    %v1236 = vpop.f32.mrf.mxu0
    %v1237 = vadd.f32 0.0, %v1236
    %v1238 = vpop.f32.mrf.mxu0
    %v1239 = vadd.f32 0.0, %v1238
    %1240 = vmatmul.bf16.gmra.mxu0 %v953
    %v1241 = vpop.f32.mrf.mxu0
    %v1242 = vadd.f32 0.0, %v1241
    %v1243 = vpop.f32.mrf.mxu0
    %v1244 = vadd.f32 0.0, %v1243
    %1245 = vmatmul.bf16.gmra.mxu0 %v957
    %v1246 = vpop.f32.mrf.mxu0
    %v1247 = vadd.f32 0.0, %v1246
    %v1248 = vpop.f32.mrf.mxu0
    %v1249 = vadd.f32 0.0, %v1248
    %1250 = vmatmul.bf16.gmra.mxu0 %v961
    %v1251 = vpop.f32.mrf.mxu0
    %v1252 = vadd.f32 0.0, %v1251
    %v1253 = vpop.f32.mrf.mxu0
    %v1254 = vadd.f32 0.0, %v1253
    %1255 = vmatmul.bf16.gmra.mxu0 %v965
    %v1256 = vpop.f32.mrf.mxu0
    %v1257 = vadd.f32 0.0, %v1256
    %v1258 = vpop.f32.mrf.mxu0
    %v1259 = vadd.f32 0.0, %v1258
    %1260 = vmatmul.bf16.gmra.mxu0 %v969
    %v1261 = vpop.f32.mrf.mxu0
    %v1262 = vadd.f32 0.0, %v1261
    %v1263 = vpop.f32.mrf.mxu0
    %v1264 = vadd.f32 0.0, %v1263
    %1265 = vmatmul.bf16.gmra.mxu0 %v973
    %v1266 = vpop.f32.mrf.mxu0
    %v1267 = vadd.f32 0.0, %v1266
    %v1268 = vpop.f32.mrf.mxu0
    %v1269 = vadd.f32 0.0, %v1268
    %1270 = vmatmul.bf16.gmra.mxu0 %v977
    %v1271 = vpop.f32.mrf.mxu0
    %v1272 = vadd.f32 0.0, %v1271
    %v1273 = vpop.f32.mrf.mxu0
    %v1274 = vadd.f32 0.0, %v1273
    %1275 = vmatmul.bf16.gmra.mxu0 %v981
    %v1276 = vpop.f32.mrf.mxu0
    %v1277 = vadd.f32 0.0, %v1276
    %v1278 = vpop.f32.mrf.mxu0
    %v1279 = vadd.f32 0.0, %v1278
    %1280 = vmatmul.bf16.gmra.mxu0 %v985
    %v1281 = vpop.f32.mrf.mxu0
    %v1282 = vadd.f32 0.0, %v1281
    %v1283 = vpop.f32.mrf.mxu0
    %v1284 = vadd.f32 0.0, %v1283
    %1285 = vdwg.mxu0
    %1286 = vmatpush.bf16.msra.mxu0 %v332
    %1287 = vmatpush.bf16.msra.mxu0 %v331
    %1288 = vmatpush.bf16.msra.mxu0 %v330
    %1289 = vmatpush.bf16.msra.mxu0 %v329
    %1290 = vmatpush.bf16.msra.mxu0 %v328
    %1291 = vmatpush.bf16.msra.mxu0 %v327
    %1292 = vmatpush.bf16.msra.mxu0 %v326
    %1293 = vmatpush.bf16.msra.mxu0 %v325
    %1294 = vmatmul.bf16.gmra.mxu0 %v862
    %v1295 = vpop.f32.mrf.mxu0
    %v1296 = vadd.f32 %v1127, %v1295
    %v1297 = vpop.f32.mrf.mxu0
    %v1298 = vadd.f32 %v1129, %v1297
    %1299 = vmatmul.bf16.gmra.mxu0 %v866
    %v1300 = vpop.f32.mrf.mxu0
    %v1301 = vadd.f32 %v1132, %v1300
    %v1302 = vpop.f32.mrf.mxu0
    %v1303 = vadd.f32 %v1134, %v1302
    %1304 = vmatmul.bf16.gmra.mxu0 %v870
    %v1305 = vpop.f32.mrf.mxu0
    %v1306 = vadd.f32 %v1137, %v1305
    %v1307 = vpop.f32.mrf.mxu0
    %v1308 = vadd.f32 %v1139, %v1307
    %1309 = vmatmul.bf16.gmra.mxu0 %v874
    %v1310 = vpop.f32.mrf.mxu0
    %v1311 = vadd.f32 %v1142, %v1310
    %v1312 = vpop.f32.mrf.mxu0
    %v1313 = vadd.f32 %v1144, %v1312
    %1314 = vmatmul.bf16.gmra.mxu0 %v878
    %v1315 = vpop.f32.mrf.mxu0
    %v1316 = vadd.f32 %v1147, %v1315
    %v1317 = vpop.f32.mrf.mxu0
    %v1318 = vadd.f32 %v1149, %v1317
    %1319 = vmatmul.bf16.gmra.mxu0 %v882
    %v1320 = vpop.f32.mrf.mxu0
    %v1321 = vadd.f32 %v1152, %v1320
    %v1322 = vpop.f32.mrf.mxu0
    %v1323 = vadd.f32 %v1154, %v1322
    %1324 = vmatmul.bf16.gmra.mxu0 %v886
    %v1325 = vpop.f32.mrf.mxu0
    %v1326 = vadd.f32 %v1157, %v1325
    %v1327 = vpop.f32.mrf.mxu0
    %v1328 = vadd.f32 %v1159, %v1327
    %1329 = vmatmul.bf16.gmra.mxu0 %v890
    %v1330 = vpop.f32.mrf.mxu0
    %v1331 = vadd.f32 %v1162, %v1330
    %v1332 = vpop.f32.mrf.mxu0
    %v1333 = vadd.f32 %v1164, %v1332
    %1334 = vmatmul.bf16.gmra.mxu0 %v894
    %v1335 = vpop.f32.mrf.mxu0
    %v1336 = vadd.f32 %v1167, %v1335
    %v1337 = vpop.f32.mrf.mxu0
    %v1338 = vadd.f32 %v1169, %v1337
    %1339 = vmatmul.bf16.gmra.mxu0 %v898
    %v1340 = vpop.f32.mrf.mxu0
    %v1341 = vadd.f32 %v1172, %v1340
    %v1342 = vpop.f32.mrf.mxu0
    %v1343 = vadd.f32 %v1174, %v1342
    %1344 = vmatmul.bf16.gmra.mxu0 %v902
    %v1345 = vpop.f32.mrf.mxu0
    %v1346 = vadd.f32 %v1177, %v1345
    %v1347 = vpop.f32.mrf.mxu0
    %v1348 = vadd.f32 %v1179, %v1347
    %1349 = vmatmul.bf16.gmra.mxu0 %v906
    %v1350 = vpop.f32.mrf.mxu0
    %v1351 = vadd.f32 %v1182, %v1350
    %v1352 = vpop.f32.mrf.mxu0
    %v1353 = vadd.f32 %v1184, %v1352
    %1354 = vmatmul.bf16.gmra.mxu0 %v910
    %v1355 = vpop.f32.mrf.mxu0
    %v1356 = vadd.f32 %v1187, %v1355
    %v1357 = vpop.f32.mrf.mxu0
    %v1358 = vadd.f32 %v1189, %v1357
    %1359 = vmatmul.bf16.gmra.mxu0 %v914
    %v1360 = vpop.f32.mrf.mxu0
    %v1361 = vadd.f32 %v1192, %v1360
    %v1362 = vpop.f32.mrf.mxu0
    %v1363 = vadd.f32 %v1194, %v1362
    %1364 = vmatmul.bf16.gmra.mxu0 %v918
    %v1365 = vpop.f32.mrf.mxu0
    %v1366 = vadd.f32 %v1197, %v1365
    %v1367 = vpop.f32.mrf.mxu0
    %v1368 = vadd.f32 %v1199, %v1367
    %1369 = vmatmul.bf16.gmra.mxu0 %v922
    %v1370 = vpop.f32.mrf.mxu0
    %v1371 = vadd.f32 %v1202, %v1370
    %v1372 = vpop.f32.mrf.mxu0
    %v1373 = vadd.f32 %v1204, %v1372
    %1374 = vmatmul.bf16.gmra.mxu0 %v926
    %v1375 = vpop.f32.mrf.mxu0
    %v1376 = vadd.f32 %v1207, %v1375
    %v1377 = vpop.f32.mrf.mxu0
    %v1378 = vadd.f32 %v1209, %v1377
    %1379 = vmatmul.bf16.gmra.mxu0 %v930
    %v1380 = vpop.f32.mrf.mxu0
    %v1381 = vadd.f32 %v1212, %v1380
    %v1382 = vpop.f32.mrf.mxu0
    %v1383 = vadd.f32 %v1214, %v1382
    %1384 = vmatmul.bf16.gmra.mxu0 %v934
    %v1385 = vpop.f32.mrf.mxu0
    %v1386 = vadd.f32 %v1217, %v1385
    %v1387 = vpop.f32.mrf.mxu0
    %v1388 = vadd.f32 %v1219, %v1387
    %1389 = vmatmul.bf16.gmra.mxu0 %v938
    %v1390 = vpop.f32.mrf.mxu0
    %v1391 = vadd.f32 %v1222, %v1390
    %v1392 = vpop.f32.mrf.mxu0
    %v1393 = vadd.f32 %v1224, %v1392
    %1394 = vmatmul.bf16.gmra.mxu0 %v942
    %v1395 = vpop.f32.mrf.mxu0
    %v1396 = vadd.f32 %v1227, %v1395
    %v1397 = vpop.f32.mrf.mxu0
    %v1398 = vadd.f32 %v1229, %v1397
    %1399 = vmatmul.bf16.gmra.mxu0 %v946
    %v1400 = vpop.f32.mrf.mxu0
    %v1401 = vadd.f32 %v1232, %v1400
    %v1402 = vpop.f32.mrf.mxu0
    %v1403 = vadd.f32 %v1234, %v1402
    %1404 = vmatmul.bf16.gmra.mxu0 %v950
    %v1405 = vpop.f32.mrf.mxu0
    %v1406 = vadd.f32 %v1237, %v1405
    %v1407 = vpop.f32.mrf.mxu0
    %v1408 = vadd.f32 %v1239, %v1407
    %1409 = vmatmul.bf16.gmra.mxu0 %v954
    %v1410 = vpop.f32.mrf.mxu0
    %v1411 = vadd.f32 %v1242, %v1410
    %v1412 = vpop.f32.mrf.mxu0
    %v1413 = vadd.f32 %v1244, %v1412
    %1414 = vmatmul.bf16.gmra.mxu0 %v958
    %v1415 = vpop.f32.mrf.mxu0
    %v1416 = vadd.f32 %v1247, %v1415
    %v1417 = vpop.f32.mrf.mxu0
    %v1418 = vadd.f32 %v1249, %v1417
    %1419 = vmatmul.bf16.gmra.mxu0 %v962
    %v1420 = vpop.f32.mrf.mxu0
    %v1421 = vadd.f32 %v1252, %v1420
    %v1422 = vpop.f32.mrf.mxu0
    %v1423 = vadd.f32 %v1254, %v1422
    %1424 = vmatmul.bf16.gmra.mxu0 %v966
    %v1425 = vpop.f32.mrf.mxu0
    %v1426 = vadd.f32 %v1257, %v1425
    %v1427 = vpop.f32.mrf.mxu0
    %v1428 = vadd.f32 %v1259, %v1427
    %1429 = vmatmul.bf16.gmra.mxu0 %v970
    %v1430 = vpop.f32.mrf.mxu0
    %v1431 = vadd.f32 %v1262, %v1430
    %v1432 = vpop.f32.mrf.mxu0
    %v1433 = vadd.f32 %v1264, %v1432
    %1434 = vmatmul.bf16.gmra.mxu0 %v974
    %v1435 = vpop.f32.mrf.mxu0
    %v1436 = vadd.f32 %v1267, %v1435
    %v1437 = vpop.f32.mrf.mxu0
    %v1438 = vadd.f32 %v1269, %v1437
    %1439 = vmatmul.bf16.gmra.mxu0 %v978
    %v1440 = vpop.f32.mrf.mxu0
    %v1441 = vadd.f32 %v1272, %v1440
    %v1442 = vpop.f32.mrf.mxu0
    %v1443 = vadd.f32 %v1274, %v1442
    %1444 = vmatmul.bf16.gmra.mxu0 %v982
    %v1445 = vpop.f32.mrf.mxu0
    %v1446 = vadd.f32 %v1277, %v1445
    %v1447 = vpop.f32.mrf.mxu0
    %v1448 = vadd.f32 %v1279, %v1447
    %1449 = vmatmul.bf16.gmra.mxu0 %v986
    %v1450 = vpop.f32.mrf.mxu0
    %v1451 = vadd.f32 %v1282, %v1450
    %v1452 = vpop.f32.mrf.mxu0
    %v1453 = vadd.f32 %v1284, %v1452
    %1454 = vdwg.mxu0
    %1455 = vmatpush.bf16.msra.mxu0 %v340
    %1456 = vmatpush.bf16.msra.mxu0 %v339
    %1457 = vmatpush.bf16.msra.mxu0 %v338
    %1458 = vmatpush.bf16.msra.mxu0 %v337
    %1459 = vmatpush.bf16.msra.mxu0 %v336
    %1460 = vmatpush.bf16.msra.mxu0 %v335
    %1461 = vmatpush.bf16.msra.mxu0 %v334
    %1462 = vmatpush.bf16.msra.mxu0 %v333
    %1463 = vmatmul.bf16.gmra.mxu0 %v863
    %v1464 = vpop.f32.mrf.mxu0
    %v1465 = vadd.f32 %v1296, %v1464
    %v1466 = vpop.f32.mrf.mxu0
    %v1467 = vadd.f32 %v1298, %v1466
    %1468 = vmatmul.bf16.gmra.mxu0 %v867
    %v1469 = vpop.f32.mrf.mxu0
    %v1470 = vadd.f32 %v1301, %v1469
    %v1471 = vpop.f32.mrf.mxu0
    %v1472 = vadd.f32 %v1303, %v1471
    %1473 = vmatmul.bf16.gmra.mxu0 %v871
    %v1474 = vpop.f32.mrf.mxu0
    %v1475 = vadd.f32 %v1306, %v1474
    %v1476 = vpop.f32.mrf.mxu0
    %v1477 = vadd.f32 %v1308, %v1476
    %1478 = vmatmul.bf16.gmra.mxu0 %v875
    %v1479 = vpop.f32.mrf.mxu0
    %v1480 = vadd.f32 %v1311, %v1479
    %v1481 = vpop.f32.mrf.mxu0
    %v1482 = vadd.f32 %v1313, %v1481
    %1483 = vmatmul.bf16.gmra.mxu0 %v879
    %v1484 = vpop.f32.mrf.mxu0
    %v1485 = vadd.f32 %v1316, %v1484
    %v1486 = vpop.f32.mrf.mxu0
    %v1487 = vadd.f32 %v1318, %v1486
    %1488 = vmatmul.bf16.gmra.mxu0 %v883
    %v1489 = vpop.f32.mrf.mxu0
    %v1490 = vadd.f32 %v1321, %v1489
    %v1491 = vpop.f32.mrf.mxu0
    %v1492 = vadd.f32 %v1323, %v1491
    %1493 = vmatmul.bf16.gmra.mxu0 %v887
    %v1494 = vpop.f32.mrf.mxu0
    %v1495 = vadd.f32 %v1326, %v1494
    %v1496 = vpop.f32.mrf.mxu0
    %v1497 = vadd.f32 %v1328, %v1496
    %1498 = vmatmul.bf16.gmra.mxu0 %v891
    %v1499 = vpop.f32.mrf.mxu0
    %v1500 = vadd.f32 %v1331, %v1499
    %v1501 = vpop.f32.mrf.mxu0
    %v1502 = vadd.f32 %v1333, %v1501
    %1503 = vmatmul.bf16.gmra.mxu0 %v895
    %v1504 = vpop.f32.mrf.mxu0
    %v1505 = vadd.f32 %v1336, %v1504
    %v1506 = vpop.f32.mrf.mxu0
    %v1507 = vadd.f32 %v1338, %v1506
    %1508 = vmatmul.bf16.gmra.mxu0 %v899
    %v1509 = vpop.f32.mrf.mxu0
    %v1510 = vadd.f32 %v1341, %v1509
    %v1511 = vpop.f32.mrf.mxu0
    %v1512 = vadd.f32 %v1343, %v1511
    %1513 = vmatmul.bf16.gmra.mxu0 %v903
    %v1514 = vpop.f32.mrf.mxu0
    %v1515 = vadd.f32 %v1346, %v1514
    %v1516 = vpop.f32.mrf.mxu0
    %v1517 = vadd.f32 %v1348, %v1516
    %1518 = vmatmul.bf16.gmra.mxu0 %v907
    %v1519 = vpop.f32.mrf.mxu0
    %v1520 = vadd.f32 %v1351, %v1519
    %v1521 = vpop.f32.mrf.mxu0
    %v1522 = vadd.f32 %v1353, %v1521
    %1523 = vmatmul.bf16.gmra.mxu0 %v911
    %v1524 = vpop.f32.mrf.mxu0
    %v1525 = vadd.f32 %v1356, %v1524
    %v1526 = vpop.f32.mrf.mxu0
    %v1527 = vadd.f32 %v1358, %v1526
    %1528 = vmatmul.bf16.gmra.mxu0 %v915
    %v1529 = vpop.f32.mrf.mxu0
    %v1530 = vadd.f32 %v1361, %v1529
    %v1531 = vpop.f32.mrf.mxu0
    %v1532 = vadd.f32 %v1363, %v1531
    %1533 = vmatmul.bf16.gmra.mxu0 %v919
    %v1534 = vpop.f32.mrf.mxu0
    %v1535 = vadd.f32 %v1366, %v1534
    %v1536 = vpop.f32.mrf.mxu0
    %v1537 = vadd.f32 %v1368, %v1536
    %1538 = vmatmul.bf16.gmra.mxu0 %v923
    %v1539 = vpop.f32.mrf.mxu0
    %v1540 = vadd.f32 %v1371, %v1539
    %v1541 = vpop.f32.mrf.mxu0
    %v1542 = vadd.f32 %v1373, %v1541
    %1543 = vmatmul.bf16.gmra.mxu0 %v927
    %v1544 = vpop.f32.mrf.mxu0
    %v1545 = vadd.f32 %v1376, %v1544
    %v1546 = vpop.f32.mrf.mxu0
    %v1547 = vadd.f32 %v1378, %v1546
    %1548 = vmatmul.bf16.gmra.mxu0 %v931
    %v1549 = vpop.f32.mrf.mxu0
    %v1550 = vadd.f32 %v1381, %v1549
    %v1551 = vpop.f32.mrf.mxu0
    %v1552 = vadd.f32 %v1383, %v1551
    %1553 = vmatmul.bf16.gmra.mxu0 %v935
    %v1554 = vpop.f32.mrf.mxu0
    %v1555 = vadd.f32 %v1386, %v1554
    %v1556 = vpop.f32.mrf.mxu0
    %v1557 = vadd.f32 %v1388, %v1556
    %1558 = vmatmul.bf16.gmra.mxu0 %v939
    %v1559 = vpop.f32.mrf.mxu0
    %v1560 = vadd.f32 %v1391, %v1559
    %v1561 = vpop.f32.mrf.mxu0
    %v1562 = vadd.f32 %v1393, %v1561
    %1563 = vmatmul.bf16.gmra.mxu0 %v943
    %v1564 = vpop.f32.mrf.mxu0
    %v1565 = vadd.f32 %v1396, %v1564
    %v1566 = vpop.f32.mrf.mxu0
    %v1567 = vadd.f32 %v1398, %v1566
    %1568 = vmatmul.bf16.gmra.mxu0 %v947
    %v1569 = vpop.f32.mrf.mxu0
    %v1570 = vadd.f32 %v1401, %v1569
    %v1571 = vpop.f32.mrf.mxu0
    %v1572 = vadd.f32 %v1403, %v1571
    %1573 = vmatmul.bf16.gmra.mxu0 %v951
    %v1574 = vpop.f32.mrf.mxu0
    %v1575 = vadd.f32 %v1406, %v1574
    %v1576 = vpop.f32.mrf.mxu0
    %v1577 = vadd.f32 %v1408, %v1576
    %1578 = vmatmul.bf16.gmra.mxu0 %v955
    %v1579 = vpop.f32.mrf.mxu0
    %v1580 = vadd.f32 %v1411, %v1579
    %v1581 = vpop.f32.mrf.mxu0
    %v1582 = vadd.f32 %v1413, %v1581
    %1583 = vmatmul.bf16.gmra.mxu0 %v959
    %v1584 = vpop.f32.mrf.mxu0
    %v1585 = vadd.f32 %v1416, %v1584
    %v1586 = vpop.f32.mrf.mxu0
    %v1587 = vadd.f32 %v1418, %v1586
    %1588 = vmatmul.bf16.gmra.mxu0 %v963
    %v1589 = vpop.f32.mrf.mxu0
    %v1590 = vadd.f32 %v1421, %v1589
    %v1591 = vpop.f32.mrf.mxu0
    %v1592 = vadd.f32 %v1423, %v1591
    %1593 = vmatmul.bf16.gmra.mxu0 %v967
    %v1594 = vpop.f32.mrf.mxu0
    %v1595 = vadd.f32 %v1426, %v1594
    %v1596 = vpop.f32.mrf.mxu0
    %v1597 = vadd.f32 %v1428, %v1596
    %1598 = vmatmul.bf16.gmra.mxu0 %v971
    %v1599 = vpop.f32.mrf.mxu0
    %v1600 = vadd.f32 %v1431, %v1599
    %v1601 = vpop.f32.mrf.mxu0
    %v1602 = vadd.f32 %v1433, %v1601
    %1603 = vmatmul.bf16.gmra.mxu0 %v975
    %v1604 = vpop.f32.mrf.mxu0
    %v1605 = vadd.f32 %v1436, %v1604
    %v1606 = vpop.f32.mrf.mxu0
    %v1607 = vadd.f32 %v1438, %v1606
    %1608 = vmatmul.bf16.gmra.mxu0 %v979
    %v1609 = vpop.f32.mrf.mxu0
    %v1610 = vadd.f32 %v1441, %v1609
    %v1611 = vpop.f32.mrf.mxu0
    %v1612 = vadd.f32 %v1443, %v1611
    %1613 = vmatmul.bf16.gmra.mxu0 %v983
    %v1614 = vpop.f32.mrf.mxu0
    %v1615 = vadd.f32 %v1446, %v1614
    %v1616 = vpop.f32.mrf.mxu0
    %v1617 = vadd.f32 %v1448, %v1616
    %1618 = vmatmul.bf16.gmra.mxu0 %v987
    %v1619 = vpop.f32.mrf.mxu0
    %v1620 = vadd.f32 %v1451, %v1619
    %v1621 = vpop.f32.mrf.mxu0
    %v1622 = vadd.f32 %v1453, %v1621
    %1623 = vdwg.mxu0
    %1624 = vmatpush.bf16.msra.mxu0 %v348
    %1625 = vmatpush.bf16.msra.mxu0 %v347
    %1626 = vmatpush.bf16.msra.mxu0 %v346
    %1627 = vmatpush.bf16.msra.mxu0 %v345
    %1628 = vmatpush.bf16.msra.mxu0 %v344
    %1629 = vmatpush.bf16.msra.mxu0 %v343
    %1630 = vmatpush.bf16.msra.mxu0 %v342
    %1631 = vmatpush.bf16.msra.mxu0 %v341
    %1632 = vmatmul.bf16.gmra.mxu0 %v864
    %v1633 = vpop.f32.mrf.mxu0
    %v1634 = vadd.f32 %v1465, %v1633
    %v1635 = vpop.f32.mrf.mxu0
    %v1636 = vadd.f32 %v1467, %v1635
    %1637 = vmatmul.bf16.gmra.mxu0 %v868
    %v1638 = vpop.f32.mrf.mxu0
    %v1639 = vadd.f32 %v1470, %v1638
    %v1640 = vpop.f32.mrf.mxu0
    %v1641 = vadd.f32 %v1472, %v1640
    %1642 = vmatmul.bf16.gmra.mxu0 %v872
    %v1643 = vpop.f32.mrf.mxu0
    %v1644 = vadd.f32 %v1475, %v1643
    %v1645 = vpop.f32.mrf.mxu0
    %v1646 = vadd.f32 %v1477, %v1645
    %1647 = vmatmul.bf16.gmra.mxu0 %v876
    %v1648 = vpop.f32.mrf.mxu0
    %v1649 = vadd.f32 %v1480, %v1648
    %v1650 = vpop.f32.mrf.mxu0
    %v1651 = vadd.f32 %v1482, %v1650
    %1652 = vmatmul.bf16.gmra.mxu0 %v880
    %v1653 = vpop.f32.mrf.mxu0
    %v1654 = vadd.f32 %v1485, %v1653
    %v1655 = vpop.f32.mrf.mxu0
    %v1656 = vadd.f32 %v1487, %v1655
    %1657 = vmatmul.bf16.gmra.mxu0 %v884
    %v1658 = vpop.f32.mrf.mxu0
    %v1659 = vadd.f32 %v1490, %v1658
    %v1660 = vpop.f32.mrf.mxu0
    %v1661 = vadd.f32 %v1492, %v1660
    %1662 = vmatmul.bf16.gmra.mxu0 %v888
    %v1663 = vpop.f32.mrf.mxu0
    %v1664 = vadd.f32 %v1495, %v1663
    %v1665 = vpop.f32.mrf.mxu0
    %v1666 = vadd.f32 %v1497, %v1665
    %1667 = vmatmul.bf16.gmra.mxu0 %v892
    %v1668 = vpop.f32.mrf.mxu0
    %v1669 = vadd.f32 %v1500, %v1668
    %v1670 = vpop.f32.mrf.mxu0
    %v1671 = vadd.f32 %v1502, %v1670
    %1672 = vmatmul.bf16.gmra.mxu0 %v896
    %v1673 = vpop.f32.mrf.mxu0
    %v1674 = vadd.f32 %v1505, %v1673
    %v1675 = vpop.f32.mrf.mxu0
    %v1676 = vadd.f32 %v1507, %v1675
    %1677 = vmatmul.bf16.gmra.mxu0 %v900
    %v1678 = vpop.f32.mrf.mxu0
    %v1679 = vadd.f32 %v1510, %v1678
    %v1680 = vpop.f32.mrf.mxu0
    %v1681 = vadd.f32 %v1512, %v1680
    %1682 = vmatmul.bf16.gmra.mxu0 %v904
    %v1683 = vpop.f32.mrf.mxu0
    %v1684 = vadd.f32 %v1515, %v1683
    %v1685 = vpop.f32.mrf.mxu0
    %v1686 = vadd.f32 %v1517, %v1685
    %1687 = vmatmul.bf16.gmra.mxu0 %v908
    %v1688 = vpop.f32.mrf.mxu0
    %v1689 = vadd.f32 %v1520, %v1688
    %v1690 = vpop.f32.mrf.mxu0
    %v1691 = vadd.f32 %v1522, %v1690
    %1692 = vmatmul.bf16.gmra.mxu0 %v912
    %v1693 = vpop.f32.mrf.mxu0
    %v1694 = vadd.f32 %v1525, %v1693
    %v1695 = vpop.f32.mrf.mxu0
    %v1696 = vadd.f32 %v1527, %v1695
    %1697 = vmatmul.bf16.gmra.mxu0 %v916
    %v1698 = vpop.f32.mrf.mxu0
    %v1699 = vadd.f32 %v1530, %v1698
    %v1700 = vpop.f32.mrf.mxu0
    %v1701 = vadd.f32 %v1532, %v1700
    %1702 = vmatmul.bf16.gmra.mxu0 %v920
    %v1703 = vpop.f32.mrf.mxu0
    %v1704 = vadd.f32 %v1535, %v1703
    %v1705 = vpop.f32.mrf.mxu0
    %v1706 = vadd.f32 %v1537, %v1705
    %1707 = vmatmul.bf16.gmra.mxu0 %v924
    %v1708 = vpop.f32.mrf.mxu0
    %v1709 = vadd.f32 %v1540, %v1708
    %v1710 = vpop.f32.mrf.mxu0
    %v1711 = vadd.f32 %v1542, %v1710
    %1712 = vmatmul.bf16.gmra.mxu0 %v928
    %v1713 = vpop.f32.mrf.mxu0
    %v1714 = vadd.f32 %v1545, %v1713
    %v1715 = vpop.f32.mrf.mxu0
    %v1716 = vadd.f32 %v1547, %v1715
    %1717 = vmatmul.bf16.gmra.mxu0 %v932
    %v1718 = vpop.f32.mrf.mxu0
    %v1719 = vadd.f32 %v1550, %v1718
    %v1720 = vpop.f32.mrf.mxu0
    %v1721 = vadd.f32 %v1552, %v1720
    %1722 = vmatmul.bf16.gmra.mxu0 %v936
    %v1723 = vpop.f32.mrf.mxu0
    %v1724 = vadd.f32 %v1555, %v1723
    %v1725 = vpop.f32.mrf.mxu0
    %v1726 = vadd.f32 %v1557, %v1725
    %1727 = vmatmul.bf16.gmra.mxu0 %v940
    %v1728 = vpop.f32.mrf.mxu0
    %v1729 = vadd.f32 %v1560, %v1728
    %v1730 = vpop.f32.mrf.mxu0
    %v1731 = vadd.f32 %v1562, %v1730
    %1732 = vmatmul.bf16.gmra.mxu0 %v944
    %v1733 = vpop.f32.mrf.mxu0
    %v1734 = vadd.f32 %v1565, %v1733
    %v1735 = vpop.f32.mrf.mxu0
    %v1736 = vadd.f32 %v1567, %v1735
    %1737 = vmatmul.bf16.gmra.mxu0 %v948
    %v1738 = vpop.f32.mrf.mxu0
    %v1739 = vadd.f32 %v1570, %v1738
    %v1740 = vpop.f32.mrf.mxu0
    %v1741 = vadd.f32 %v1572, %v1740
    %1742 = vmatmul.bf16.gmra.mxu0 %v952
    %v1743 = vpop.f32.mrf.mxu0
    %v1744 = vadd.f32 %v1575, %v1743
    %v1745 = vpop.f32.mrf.mxu0
    %v1746 = vadd.f32 %v1577, %v1745
    %1747 = vmatmul.bf16.gmra.mxu0 %v956
    %v1748 = vpop.f32.mrf.mxu0
    %v1749 = vadd.f32 %v1580, %v1748
    %v1750 = vpop.f32.mrf.mxu0
    %v1751 = vadd.f32 %v1582, %v1750
    %1752 = vmatmul.bf16.gmra.mxu0 %v960
    %v1753 = vpop.f32.mrf.mxu0
    %v1754 = vadd.f32 %v1585, %v1753
    %v1755 = vpop.f32.mrf.mxu0
    %v1756 = vadd.f32 %v1587, %v1755
    %1757 = vmatmul.bf16.gmra.mxu0 %v964
    %v1758 = vpop.f32.mrf.mxu0
    %v1759 = vadd.f32 %v1590, %v1758
    %v1760 = vpop.f32.mrf.mxu0
    %v1761 = vadd.f32 %v1592, %v1760
    %1762 = vmatmul.bf16.gmra.mxu0 %v968
    %v1763 = vpop.f32.mrf.mxu0
    %v1764 = vadd.f32 %v1595, %v1763
    %v1765 = vpop.f32.mrf.mxu0
    %v1766 = vadd.f32 %v1597, %v1765
    %1767 = vmatmul.bf16.gmra.mxu0 %v972
    %v1768 = vpop.f32.mrf.mxu0
    %v1769 = vadd.f32 %v1600, %v1768
    %v1770 = vpop.f32.mrf.mxu0
    %v1771 = vadd.f32 %v1602, %v1770
    %1772 = vmatmul.bf16.gmra.mxu0 %v976
    %v1773 = vpop.f32.mrf.mxu0
    %v1774 = vadd.f32 %v1605, %v1773
    %v1775 = vpop.f32.mrf.mxu0
    %v1776 = vadd.f32 %v1607, %v1775
    %1777 = vmatmul.bf16.gmra.mxu0 %v980
    %v1778 = vpop.f32.mrf.mxu0
    %v1779 = vadd.f32 %v1610, %v1778
    %v1780 = vpop.f32.mrf.mxu0
    %v1781 = vadd.f32 %v1612, %v1780
    %1782 = vmatmul.bf16.gmra.mxu0 %v984
    %v1783 = vpop.f32.mrf.mxu0
    %v1784 = vadd.f32 %v1615, %v1783
    %v1785 = vpop.f32.mrf.mxu0
    %v1786 = vadd.f32 %v1617, %v1785
    %1787 = vmatmul.bf16.gmra.mxu0 %v988
    %v1788 = vpop.f32.mrf.mxu0
    %v1789 = vadd.f32 %v1620, %v1788
    %v1790 = vpop.f32.mrf.mxu0
    %v1791 = vadd.f32 %v1622, %v1790
    %1792 = vdwg.mxu0
    %v1793 = vpack.c.bf16 %v1636, %v1634
    %v1794 = vpack.c.bf16 %v1641, %v1639
    %v1795 = vpack.c.bf16 %v1646, %v1644
    %v1796 = vpack.c.bf16 %v1651, %v1649
    %v1797 = vpack.c.bf16 %v1656, %v1654
    %v1798 = vpack.c.bf16 %v1661, %v1659
    %v1799 = vpack.c.bf16 %v1666, %v1664
    %v1800 = vpack.c.bf16 %v1671, %v1669
    %v1801 = vpack.c.bf16 %v1676, %v1674
    %v1802 = vpack.c.bf16 %v1681, %v1679
    %v1803 = vpack.c.bf16 %v1686, %v1684
    %v1804 = vpack.c.bf16 %v1691, %v1689
    %v1805 = vpack.c.bf16 %v1696, %v1694
    %v1806 = vpack.c.bf16 %v1701, %v1699
    %v1807 = vpack.c.bf16 %v1706, %v1704
    %v1808 = vpack.c.bf16 %v1711, %v1709
    %v1809 = vpack.c.bf16 %v1716, %v1714
    %v1810 = vpack.c.bf16 %v1721, %v1719
    %v1811 = vpack.c.bf16 %v1726, %v1724
    %v1812 = vpack.c.bf16 %v1731, %v1729
    %v1813 = vpack.c.bf16 %v1736, %v1734
    %v1814 = vpack.c.bf16 %v1741, %v1739
    %v1815 = vpack.c.bf16 %v1746, %v1744
    %v1816 = vpack.c.bf16 %v1751, %v1749
    %v1817 = vpack.c.bf16 %v1756, %v1754
    %v1818 = vpack.c.bf16 %v1761, %v1759
    %v1819 = vpack.c.bf16 %v1766, %v1764
    %v1820 = vpack.c.bf16 %v1771, %v1769
    %v1821 = vpack.c.bf16 %v1776, %v1774
    %v1822 = vpack.c.bf16 %v1781, %v1779
    %v1823 = vpack.c.bf16 %v1786, %v1784
    %v1824 = vpack.c.bf16 %v1791, %v1789
    %v1825 = vld [vmem:[#allocation9] sm:$0xf]
    %v1826 = vld [vmem:[#allocation9 + $0x4] sm:$0xf]
    %v1827 = vld [vmem:[#allocation9 + $0x8] sm:$0xf]
    %v1828 = vld [vmem:[#allocation9 + $0xc] sm:$0xf]
    %v1829 = vld [vmem:[#allocation9 + $0x10] sm:$0xf]
    %v1830 = vld [vmem:[#allocation9 + $0x14] sm:$0xf]
    %v1831 = vld [vmem:[#allocation9 + $0x18] sm:$0xf]
    %v1832 = vld [vmem:[#allocation9 + $0x1c] sm:$0xf]
    %v1833 = vld [vmem:[#allocation9 + $0x20] sm:$0xf]
    %v1834 = vld [vmem:[#allocation9 + $0x24] sm:$0xf]
    %v1835 = vld [vmem:[#allocation9 + $0x28] sm:$0xf]
    %v1836 = vld [vmem:[#allocation9 + $0x2c] sm:$0xf]
    %v1837 = vld [vmem:[#allocation9 + $0x30] sm:$0xf]
    %v1838 = vld [vmem:[#allocation9 + $0x34] sm:$0xf]
    %v1839 = vld [vmem:[#allocation9 + $0x38] sm:$0xf]
    %v1840 = vld [vmem:[#allocation9 + $0x3c] sm:$0xf]
    %v1841 = vld [vmem:[%s4] sm:$0x1]
    %v1843 = vperm.slane %v1841, 0
    %v1861 = vunpack.c.l.b16 %v1825
    %v1862 = vunpack.c.l.b16 %v1826
    %v1863 = vunpack.c.l.b16 %v1827
    %v1864 = vunpack.c.l.b16 %v1828
    %v1865 = vunpack.c.l.b16 %v1829
    %v1866 = vunpack.c.l.b16 %v1830
    %v1867 = vunpack.c.l.b16 %v1831
    %v1868 = vunpack.c.l.b16 %v1832
    %v1869 = vunpack.c.l.b16 %v1833
    %v1870 = vunpack.c.l.b16 %v1834
    %v1871 = vunpack.c.l.b16 %v1835
    %v1872 = vunpack.c.l.b16 %v1836
    %v1873 = vunpack.c.l.b16 %v1837
    %v1874 = vunpack.c.l.b16 %v1838
    %v1875 = vunpack.c.l.b16 %v1839
    %v1876 = vunpack.c.l.b16 %v1840
    %v1877 = vpack.c.b16 %v1862, %v1861
    %v1878 = vpack.c.b16 %v1864, %v1863
    %v1879 = vpack.c.b16 %v1866, %v1865
    %v1880 = vpack.c.b16 %v1868, %v1867
    %v1881 = vpack.c.b16 %v1870, %v1869
    %v1882 = vpack.c.b16 %v1872, %v1871
    %v1883 = vpack.c.b16 %v1874, %v1873
    %v1884 = vpack.c.b16 %v1876, %v1875
    %1893 = vmatpush.bf16.msra.mxu0 %v1884
    %1894 = vmatpush.bf16.msra.mxu0 %v1883
    %1895 = vmatpush.bf16.msra.mxu0 %v1882
    %1896 = vmatpush.bf16.msra.mxu0 %v1881
    %1897 = vmatpush.bf16.msra.mxu0 %v1880
    %1898 = vmatpush.bf16.msra.mxu0 %v1879
    %1899 = vmatpush.bf16.msra.mxu0 %v1878
    %1900 = vmatpush.bf16.msra.mxu0 %v1877
    %1901 = vmatmul.bf16.gmra.mxu0 %v1793
    %v1902 = vpop.f32.mrf.mxu0
    %v1903 = vadd.f32 %v1843, %v1902
    %v1904 = vpop.f32.mrf.mxu0
    %v1905 = vadd.f32 %v1843, %v1904
    %1906 = vmatmul.bf16.gmra.mxu0 %v1794
    %v1907 = vpop.f32.mrf.mxu0
    %v1908 = vadd.f32 %v1843, %v1907
    %v1909 = vpop.f32.mrf.mxu0
    %v1910 = vadd.f32 %v1843, %v1909
    %1911 = vmatmul.bf16.gmra.mxu0 %v1795
    %v1912 = vpop.f32.mrf.mxu0
    %v1913 = vadd.f32 %v1843, %v1912
    %v1914 = vpop.f32.mrf.mxu0
    %v1915 = vadd.f32 %v1843, %v1914
    %1916 = vmatmul.bf16.gmra.mxu0 %v1796
    %v1917 = vpop.f32.mrf.mxu0
    %v1918 = vadd.f32 %v1843, %v1917
    %v1919 = vpop.f32.mrf.mxu0
    %v1920 = vadd.f32 %v1843, %v1919
    %1921 = vmatmul.bf16.gmra.mxu0 %v1797
    %v1922 = vpop.f32.mrf.mxu0
    %v1923 = vadd.f32 %v1843, %v1922
    %v1924 = vpop.f32.mrf.mxu0
    %v1925 = vadd.f32 %v1843, %v1924
    %1926 = vmatmul.bf16.gmra.mxu0 %v1798
    %v1927 = vpop.f32.mrf.mxu0
    %v1928 = vadd.f32 %v1843, %v1927
    %v1929 = vpop.f32.mrf.mxu0
    %v1930 = vadd.f32 %v1843, %v1929
    %1931 = vmatmul.bf16.gmra.mxu0 %v1799
    %v1932 = vpop.f32.mrf.mxu0
    %v1933 = vadd.f32 %v1843, %v1932
    %v1934 = vpop.f32.mrf.mxu0
    %v1935 = vadd.f32 %v1843, %v1934
    %1936 = vmatmul.bf16.gmra.mxu0 %v1800
    %v1937 = vpop.f32.mrf.mxu0
    %v1938 = vadd.f32 %v1843, %v1937
    %v1939 = vpop.f32.mrf.mxu0
    %v1940 = vadd.f32 %v1843, %v1939
    %1941 = vmatmul.bf16.gmra.mxu0 %v1801
    %v1942 = vpop.f32.mrf.mxu0
    %v1943 = vadd.f32 %v1843, %v1942
    %v1944 = vpop.f32.mrf.mxu0
    %v1945 = vadd.f32 %v1843, %v1944
    %1946 = vmatmul.bf16.gmra.mxu0 %v1802
    %v1947 = vpop.f32.mrf.mxu0
    %v1948 = vadd.f32 %v1843, %v1947
    %v1949 = vpop.f32.mrf.mxu0
    %v1950 = vadd.f32 %v1843, %v1949
    %1951 = vmatmul.bf16.gmra.mxu0 %v1803
    %v1952 = vpop.f32.mrf.mxu0
    %v1953 = vadd.f32 %v1843, %v1952
    %v1954 = vpop.f32.mrf.mxu0
    %v1955 = vadd.f32 %v1843, %v1954
    %1956 = vmatmul.bf16.gmra.mxu0 %v1804
    %v1957 = vpop.f32.mrf.mxu0
    %v1958 = vadd.f32 %v1843, %v1957
    %v1959 = vpop.f32.mrf.mxu0
    %v1960 = vadd.f32 %v1843, %v1959
    %1961 = vmatmul.bf16.gmra.mxu0 %v1805
    %v1962 = vpop.f32.mrf.mxu0
    %v1963 = vadd.f32 %v1843, %v1962
    %v1964 = vpop.f32.mrf.mxu0
    %v1965 = vadd.f32 %v1843, %v1964
    %1966 = vmatmul.bf16.gmra.mxu0 %v1806
    %v1967 = vpop.f32.mrf.mxu0
    %v1968 = vadd.f32 %v1843, %v1967
    %v1969 = vpop.f32.mrf.mxu0
    %v1970 = vadd.f32 %v1843, %v1969
    %1971 = vmatmul.bf16.gmra.mxu0 %v1807
    %v1972 = vpop.f32.mrf.mxu0
    %v1973 = vadd.f32 %v1843, %v1972
    %v1974 = vpop.f32.mrf.mxu0
    %v1975 = vadd.f32 %v1843, %v1974
    %1976 = vmatmul.bf16.gmra.mxu0 %v1808
    %v1977 = vpop.f32.mrf.mxu0
    %v1978 = vadd.f32 %v1843, %v1977
    %v1979 = vpop.f32.mrf.mxu0
    %v1980 = vadd.f32 %v1843, %v1979
    %1981 = vmatmul.bf16.gmra.mxu0 %v1809
    %v1982 = vpop.f32.mrf.mxu0
    %v1983 = vadd.f32 %v1843, %v1982
    %v1984 = vpop.f32.mrf.mxu0
    %v1985 = vadd.f32 %v1843, %v1984
    %1986 = vmatmul.bf16.gmra.mxu0 %v1810
    %v1987 = vpop.f32.mrf.mxu0
    %v1988 = vadd.f32 %v1843, %v1987
    %v1989 = vpop.f32.mrf.mxu0
    %v1990 = vadd.f32 %v1843, %v1989
    %1991 = vmatmul.bf16.gmra.mxu0 %v1811
    %v1992 = vpop.f32.mrf.mxu0
    %v1993 = vadd.f32 %v1843, %v1992
    %v1994 = vpop.f32.mrf.mxu0
    %v1995 = vadd.f32 %v1843, %v1994
    %1996 = vmatmul.bf16.gmra.mxu0 %v1812
    %v1997 = vpop.f32.mrf.mxu0
    %v1998 = vadd.f32 %v1843, %v1997
    %v1999 = vpop.f32.mrf.mxu0
    %v2000 = vadd.f32 %v1843, %v1999
    %2001 = vmatmul.bf16.gmra.mxu0 %v1813
    %v2002 = vpop.f32.mrf.mxu0
    %v2003 = vadd.f32 %v1843, %v2002
    %v2004 = vpop.f32.mrf.mxu0
    %v2005 = vadd.f32 %v1843, %v2004
    %2006 = vmatmul.bf16.gmra.mxu0 %v1814
    %v2007 = vpop.f32.mrf.mxu0
    %v2008 = vadd.f32 %v1843, %v2007
    %v2009 = vpop.f32.mrf.mxu0
    %v2010 = vadd.f32 %v1843, %v2009
    %2011 = vmatmul.bf16.gmra.mxu0 %v1815
    %v2012 = vpop.f32.mrf.mxu0
    %v2013 = vadd.f32 %v1843, %v2012
    %v2014 = vpop.f32.mrf.mxu0
    %v2015 = vadd.f32 %v1843, %v2014
    %2016 = vmatmul.bf16.gmra.mxu0 %v1816
    %v2017 = vpop.f32.mrf.mxu0
    %v2018 = vadd.f32 %v1843, %v2017
    %v2019 = vpop.f32.mrf.mxu0
    %v2020 = vadd.f32 %v1843, %v2019
    %2021 = vmatmul.bf16.gmra.mxu0 %v1817
    %v2022 = vpop.f32.mrf.mxu0
    %v2023 = vadd.f32 %v1843, %v2022
    %v2024 = vpop.f32.mrf.mxu0
    %v2025 = vadd.f32 %v1843, %v2024
    %2026 = vmatmul.bf16.gmra.mxu0 %v1818
    %v2027 = vpop.f32.mrf.mxu0
    %v2028 = vadd.f32 %v1843, %v2027
    %v2029 = vpop.f32.mrf.mxu0
    %v2030 = vadd.f32 %v1843, %v2029
    %2031 = vmatmul.bf16.gmra.mxu0 %v1819
    %v2032 = vpop.f32.mrf.mxu0
    %v2033 = vadd.f32 %v1843, %v2032
    %v2034 = vpop.f32.mrf.mxu0
    %v2035 = vadd.f32 %v1843, %v2034
    %2036 = vmatmul.bf16.gmra.mxu0 %v1820
    %v2037 = vpop.f32.mrf.mxu0
    %v2038 = vadd.f32 %v1843, %v2037
    %v2039 = vpop.f32.mrf.mxu0
    %v2040 = vadd.f32 %v1843, %v2039
    %2041 = vmatmul.bf16.gmra.mxu0 %v1821
    %v2042 = vpop.f32.mrf.mxu0
    %v2043 = vadd.f32 %v1843, %v2042
    %v2044 = vpop.f32.mrf.mxu0
    %v2045 = vadd.f32 %v1843, %v2044
    %2046 = vmatmul.bf16.gmra.mxu0 %v1822
    %v2047 = vpop.f32.mrf.mxu0
    %v2048 = vadd.f32 %v1843, %v2047
    %v2049 = vpop.f32.mrf.mxu0
    %v2050 = vadd.f32 %v1843, %v2049
    %2051 = vmatmul.bf16.gmra.mxu0 %v1823
    %v2052 = vpop.f32.mrf.mxu0
    %v2053 = vadd.f32 %v1843, %v2052
    %v2054 = vpop.f32.mrf.mxu0
    %v2055 = vadd.f32 %v1843, %v2054
    %2056 = vmatmul.bf16.gmra.mxu0 %v1824
    %v2057 = vpop.f32.mrf.mxu0
    %v2058 = vadd.f32 %v1843, %v2057
    %v2059 = vpop.f32.mrf.mxu0
    %v2060 = vadd.f32 %v1843, %v2059
    %2061 = vdwg.mxu0
    %v2062 = vmax.f32 %v1903, 0.0
    %v2063 = vmax.f32 %v1905, 0.0
    %v2064 = vmax.f32 %v1908, 0.0
    %v2065 = vmax.f32 %v1910, 0.0
    %v2066 = vmax.f32 %v1913, 0.0
    %v2067 = vmax.f32 %v1915, 0.0
    %v2068 = vmax.f32 %v1918, 0.0
    %v2069 = vmax.f32 %v1920, 0.0
    %v2070 = vmax.f32 %v1923, 0.0
    %v2071 = vmax.f32 %v1925, 0.0
    %v2072 = vmax.f32 %v1928, 0.0
    %v2073 = vmax.f32 %v1930, 0.0
    %v2074 = vmax.f32 %v1933, 0.0
    %v2075 = vmax.f32 %v1935, 0.0
    %v2076 = vmax.f32 %v1938, 0.0
    %v2077 = vmax.f32 %v1940, 0.0
    %v2078 = vmax.f32 %v1943, 0.0
    %v2079 = vmax.f32 %v1945, 0.0
    %v2080 = vmax.f32 %v1948, 0.0
    %v2081 = vmax.f32 %v1950, 0.0
    %v2082 = vmax.f32 %v1953, 0.0
    %v2083 = vmax.f32 %v1955, 0.0
    %v2084 = vmax.f32 %v1958, 0.0
    %v2085 = vmax.f32 %v1960, 0.0
    %v2086 = vmax.f32 %v1963, 0.0
    %v2087 = vmax.f32 %v1965, 0.0
    %v2088 = vmax.f32 %v1968, 0.0
    %v2089 = vmax.f32 %v1970, 0.0
    %v2090 = vmax.f32 %v1973, 0.0
    %v2091 = vmax.f32 %v1975, 0.0
    %v2092 = vmax.f32 %v1978, 0.0
    %v2093 = vmax.f32 %v1980, 0.0
    %v2094 = vmax.f32 %v1983, 0.0
    %v2095 = vmax.f32 %v1985, 0.0
    %v2096 = vmax.f32 %v1988, 0.0
    %v2097 = vmax.f32 %v1990, 0.0
    %v2098 = vmax.f32 %v1993, 0.0
    %v2099 = vmax.f32 %v1995, 0.0
    %v2100 = vmax.f32 %v1998, 0.0
    %v2101 = vmax.f32 %v2000, 0.0
    %v2102 = vmax.f32 %v2003, 0.0
    %v2103 = vmax.f32 %v2005, 0.0
    %v2104 = vmax.f32 %v2008, 0.0
    %v2105 = vmax.f32 %v2010, 0.0
    %v2106 = vmax.f32 %v2013, 0.0
    %v2107 = vmax.f32 %v2015, 0.0
    %v2108 = vmax.f32 %v2018, 0.0
    %v2109 = vmax.f32 %v2020, 0.0
    %v2110 = vmax.f32 %v2023, 0.0
    %v2111 = vmax.f32 %v2025, 0.0
    %v2112 = vmax.f32 %v2028, 0.0
    %v2113 = vmax.f32 %v2030, 0.0
    %v2114 = vmax.f32 %v2033, 0.0
    %v2115 = vmax.f32 %v2035, 0.0
    %v2116 = vmax.f32 %v2038, 0.0
    %v2117 = vmax.f32 %v2040, 0.0
    %v2118 = vmax.f32 %v2043, 0.0
    %v2119 = vmax.f32 %v2045, 0.0
    %v2120 = vmax.f32 %v2048, 0.0
    %v2121 = vmax.f32 %v2050, 0.0
    %v2122 = vmax.f32 %v2053, 0.0
    %v2123 = vmax.f32 %v2055, 0.0
    %v2124 = vmax.f32 %v2058, 0.0
    %v2125 = vmax.f32 %v2060, 0.0
    %v2126 = vadd.f32 %v2062, %v253
    %v2127 = vadd.f32 %v2063, %v254
    %v2128 = vadd.f32 %v2064, %v255
    %v2129 = vadd.f32 %v2065, %v256
    %v2130 = vadd.f32 %v2066, %v257
    %v2131 = vadd.f32 %v2067, %v258
    %v2132 = vadd.f32 %v2068, %v259
    %v2133 = vadd.f32 %v2069, %v260
    %v2134 = vadd.f32 %v2070, %v261
    %v2135 = vadd.f32 %v2071, %v262
    %v2136 = vadd.f32 %v2072, %v263
    %v2137 = vadd.f32 %v2073, %v264
    %v2138 = vadd.f32 %v2074, %v265
    %v2139 = vadd.f32 %v2075, %v266
    %v2140 = vadd.f32 %v2076, %v267
    %v2141 = vadd.f32 %v2077, %v268
    %v2142 = vadd.f32 %v2078, %v269
    %v2143 = vadd.f32 %v2079, %v270
    %v2144 = vadd.f32 %v2080, %v271
    %v2145 = vadd.f32 %v2081, %v272
    %v2146 = vadd.f32 %v2082, %v273
    %v2147 = vadd.f32 %v2083, %v274
    %v2148 = vadd.f32 %v2084, %v275
    %v2149 = vadd.f32 %v2085, %v276
    %v2150 = vadd.f32 %v2086, %v277
    %v2151 = vadd.f32 %v2087, %v278
    %v2152 = vadd.f32 %v2088, %v279
    %v2153 = vadd.f32 %v2089, %v280
    %v2154 = vadd.f32 %v2090, %v281
    %v2155 = vadd.f32 %v2091, %v282
    %v2156 = vadd.f32 %v2092, %v283
    %v2157 = vadd.f32 %v2093, %v284
    %v2158 = vadd.f32 %v2094, %v285
    %v2159 = vadd.f32 %v2095, %v286
    %v2160 = vadd.f32 %v2096, %v287
    %v2161 = vadd.f32 %v2097, %v288
    %v2162 = vadd.f32 %v2098, %v289
    %v2163 = vadd.f32 %v2099, %v290
    %v2164 = vadd.f32 %v2100, %v291
    %v2165 = vadd.f32 %v2101, %v292
    %v2166 = vadd.f32 %v2102, %v293
    %v2167 = vadd.f32 %v2103, %v294
    %v2168 = vadd.f32 %v2104, %v295
    %v2169 = vadd.f32 %v2105, %v296
    %v2170 = vadd.f32 %v2106, %v297
    %v2171 = vadd.f32 %v2107, %v298
    %v2172 = vadd.f32 %v2108, %v299
    %v2173 = vadd.f32 %v2109, %v300
    %v2174 = vadd.f32 %v2110, %v301
    %v2175 = vadd.f32 %v2111, %v302
    %v2176 = vadd.f32 %v2112, %v303
    %v2177 = vadd.f32 %v2113, %v304
    %v2178 = vadd.f32 %v2114, %v305
    %v2179 = vadd.f32 %v2115, %v306
    %v2180 = vadd.f32 %v2116, %v307
    %v2181 = vadd.f32 %v2117, %v308
    %v2182 = vadd.f32 %v2118, %v309
    %v2183 = vadd.f32 %v2119, %v310
    %v2184 = vadd.f32 %v2120, %v311
    %v2185 = vadd.f32 %v2121, %v312
    %v2186 = vadd.f32 %v2122, %v313
    %v2187 = vadd.f32 %v2123, %v314
    %v2188 = vadd.f32 %v2124, %v315
    %v2189 = vadd.f32 %v2125, %v316
    %2190 = vst [vmem:[#allocation2] sm:$0xff] %v2126
    %2191 = vst [vmem:[#allocation2 + $0x8] sm:$0xff] %v2127
    %2192 = vst [vmem:[#allocation2 + $0x10] sm:$0xff] %v2128
    %2193 = vst [vmem:[#allocation2 + $0x18] sm:$0xff] %v2129
    %2194 = vst [vmem:[#allocation2 + $0x20] sm:$0xff] %v2130
    %2195 = vst [vmem:[#allocation2 + $0x28] sm:$0xff] %v2131
    %2196 = vst [vmem:[#allocation2 + $0x30] sm:$0xff] %v2132
    %2197 = vst [vmem:[#allocation2 + $0x38] sm:$0xff] %v2133
    %2198 = vst [vmem:[#allocation2 + $0x40] sm:$0xff] %v2134
    %2199 = vst [vmem:[#allocation2 + $0x48] sm:$0xff] %v2135
    %2200 = vst [vmem:[#allocation2 + $0x50] sm:$0xff] %v2136
    %2201 = vst [vmem:[#allocation2 + $0x58] sm:$0xff] %v2137
    %2202 = vst [vmem:[#allocation2 + $0x60] sm:$0xff] %v2138
    %2203 = vst [vmem:[#allocation2 + $0x68] sm:$0xff] %v2139
    %2204 = vst [vmem:[#allocation2 + $0x70] sm:$0xff] %v2140
    %2205 = vst [vmem:[#allocation2 + $0x78] sm:$0xff] %v2141
    %2206 = vst [vmem:[#allocation2 + $0x80] sm:$0xff] %v2142
    %2207 = vst [vmem:[#allocation2 + $0x88] sm:$0xff] %v2143
    %2208 = vst [vmem:[#allocation2 + $0x90] sm:$0xff] %v2144
    %2209 = vst [vmem:[#allocation2 + $0x98] sm:$0xff] %v2145
    %2210 = vst [vmem:[#allocation2 + $0xa0] sm:$0xff] %v2146
    %2211 = vst [vmem:[#allocation2 + $0xa8] sm:$0xff] %v2147
    %2212 = vst [vmem:[#allocation2 + $0xb0] sm:$0xff] %v2148
    %2213 = vst [vmem:[#allocation2 + $0xb8] sm:$0xff] %v2149
    %2214 = vst [vmem:[#allocation2 + $0xc0] sm:$0xff] %v2150
    %2215 = vst [vmem:[#allocation2 + $0xc8] sm:$0xff] %v2151
    %2216 = vst [vmem:[#allocation2 + $0xd0] sm:$0xff] %v2152
    %2217 = vst [vmem:[#allocation2 + $0xd8] sm:$0xff] %v2153
    %2218 = vst [vmem:[#allocation2 + $0xe0] sm:$0xff] %v2154
    %2219 = vst [vmem:[#allocation2 + $0xe8] sm:$0xff] %v2155
    %2220 = vst [vmem:[#allocation2 + $0xf0] sm:$0xff] %v2156
    %2221 = vst [vmem:[#allocation2 + $0xf8] sm:$0xff] %v2157
    %2222 = vst [vmem:[#allocation2 + $0x100] sm:$0xff] %v2158
    %2223 = vst [vmem:[#allocation2 + $0x108] sm:$0xff] %v2159
    %2224 = vst [vmem:[#allocation2 + $0x110] sm:$0xff] %v2160
    %2225 = vst [vmem:[#allocation2 + $0x118] sm:$0xff] %v2161
    %2226 = vst [vmem:[#allocation2 + $0x120] sm:$0xff] %v2162
    %2227 = vst [vmem:[#allocation2 + $0x128] sm:$0xff] %v2163
    %2228 = vst [vmem:[#allocation2 + $0x130] sm:$0xff] %v2164
    %2229 = vst [vmem:[#allocation2 + $0x138] sm:$0xff] %v2165
    %2230 = vst [vmem:[#allocation2 + $0x140] sm:$0xff] %v2166
    %2231 = vst [vmem:[#allocation2 + $0x148] sm:$0xff] %v2167
    %2232 = vst [vmem:[#allocation2 + $0x150] sm:$0xff] %v2168
    %2233 = vst [vmem:[#allocation2 + $0x158] sm:$0xff] %v2169
    %2234 = vst [vmem:[#allocation2 + $0x160] sm:$0xff] %v2170
    %2235 = vst [vmem:[#allocation2 + $0x168] sm:$0xff] %v2171
    %2236 = vst [vmem:[#allocation2 + $0x170] sm:$0xff] %v2172
    %2237 = vst [vmem:[#allocation2 + $0x178] sm:$0xff] %v2173
    %2238 = vst [vmem:[#allocation2 + $0x180] sm:$0xff] %v2174
    %2239 = vst [vmem:[#allocation2 + $0x188] sm:$0xff] %v2175
    %2240 = vst [vmem:[#allocation2 + $0x190] sm:$0xff] %v2176
    %2241 = vst [vmem:[#allocation2 + $0x198] sm:$0xff] %v2177
    %2242 = vst [vmem:[#allocation2 + $0x1a0] sm:$0xff] %v2178
    %2243 = vst [vmem:[#allocation2 + $0x1a8] sm:$0xff] %v2179
    %2244 = vst [vmem:[#allocation2 + $0x1b0] sm:$0xff] %v2180
    %2245 = vst [vmem:[#allocation2 + $0x1b8] sm:$0xff] %v2181
    %2246 = vst [vmem:[#allocation2 + $0x1c0] sm:$0xff] %v2182
    %2247 = vst [vmem:[#allocation2 + $0x1c8] sm:$0xff] %v2183
    %2248 = vst [vmem:[#allocation2 + $0x1d0] sm:$0xff] %v2184
    %2249 = vst [vmem:[#allocation2 + $0x1d8] sm:$0xff] %v2185
    %2250 = vst [vmem:[#allocation2 + $0x1e0] sm:$0xff] %v2186
    %2251 = vst [vmem:[#allocation2 + $0x1e8] sm:$0xff] %v2187
    %2252 = vst [vmem:[#allocation2 + $0x1f0] sm:$0xff] %v2188
    %2253 = vst [vmem:[#allocation2 + $0x1f8] sm:$0xff] %v2189
    %v2254 = vld [vmem:[#allocation2] sm:$0xff]
    %v2255 = vld [vmem:[#allocation2 + $0x8] sm:$0xff]
    %v2256 = vld [vmem:[#allocation2 + $0x10] sm:$0xff]
    %v2257 = vld [vmem:[#allocation2 + $0x18] sm:$0xff]
    %v2258 = vld [vmem:[#allocation2 + $0x20] sm:$0xff]
    %v2259 = vld [vmem:[#allocation2 + $0x28] sm:$0xff]
    %v2260 = vld [vmem:[#allocation2 + $0x30] sm:$0xff]
    %v2261 = vld [vmem:[#allocation2 + $0x38] sm:$0xff]
    %v2262 = vld [vmem:[#allocation2 + $0x40] sm:$0xff]
    %v2263 = vld [vmem:[#allocation2 + $0x48] sm:$0xff]
    %v2264 = vld [vmem:[#allocation2 + $0x50] sm:$0xff]
    %v2265 = vld [vmem:[#allocation2 + $0x58] sm:$0xff]
    %v2266 = vld [vmem:[#allocation2 + $0x60] sm:$0xff]
    %v2267 = vld [vmem:[#allocation2 + $0x68] sm:$0xff]
    %v2268 = vld [vmem:[#allocation2 + $0x70] sm:$0xff]
    %v2269 = vld [vmem:[#allocation2 + $0x78] sm:$0xff]
    %v2270 = vld [vmem:[#allocation2 + $0x80] sm:$0xff]
    %v2271 = vld [vmem:[#allocation2 + $0x88] sm:$0xff]
    %v2272 = vld [vmem:[#allocation2 + $0x90] sm:$0xff]
    %v2273 = vld [vmem:[#allocation2 + $0x98] sm:$0xff]
    %v2274 = vld [vmem:[#allocation2 + $0xa0] sm:$0xff]
    %v2275 = vld [vmem:[#allocation2 + $0xa8] sm:$0xff]
    %v2276 = vld [vmem:[#allocation2 + $0xb0] sm:$0xff]
    %v2277 = vld [vmem:[#allocation2 + $0xb8] sm:$0xff]
    %v2278 = vld [vmem:[#allocation2 + $0xc0] sm:$0xff]
    %v2279 = vld [vmem:[#allocation2 + $0xc8] sm:$0xff]
    %v2280 = vld [vmem:[#allocation2 + $0xd0] sm:$0xff]
    %v2281 = vld [vmem:[#allocation2 + $0xd8] sm:$0xff]
    %v2282 = vld [vmem:[#allocation2 + $0xe0] sm:$0xff]
    %v2283 = vld [vmem:[#allocation2 + $0xe8] sm:$0xff]
    %v2284 = vld [vmem:[#allocation2 + $0xf0] sm:$0xff]
    %v2285 = vld [vmem:[#allocation2 + $0xf8] sm:$0xff]
    %v2286 = vld [vmem:[#allocation2 + $0x100] sm:$0xff]
    %v2287 = vld [vmem:[#allocation2 + $0x108] sm:$0xff]
    %v2288 = vld [vmem:[#allocation2 + $0x110] sm:$0xff]
    %v2289 = vld [vmem:[#allocation2 + $0x118] sm:$0xff]
    %v2290 = vld [vmem:[#allocation2 + $0x120] sm:$0xff]
    %v2291 = vld [vmem:[#allocation2 + $0x128] sm:$0xff]
    %v2292 = vld [vmem:[#allocation2 + $0x130] sm:$0xff]
    %v2293 = vld [vmem:[#allocation2 + $0x138] sm:$0xff]
    %v2294 = vld [vmem:[#allocation2 + $0x140] sm:$0xff]
    %v2295 = vld [vmem:[#allocation2 + $0x148] sm:$0xff]
    %v2296 = vld [vmem:[#allocation2 + $0x150] sm:$0xff]
    %v2297 = vld [vmem:[#allocation2 + $0x158] sm:$0xff]
    %v2298 = vld [vmem:[#allocation2 + $0x160] sm:$0xff]
    %v2299 = vld [vmem:[#allocation2 + $0x168] sm:$0xff]
    %v2300 = vld [vmem:[#allocation2 + $0x170] sm:$0xff]
    %v2301 = vld [vmem:[#allocation2 + $0x178] sm:$0xff]
    %v2302 = vld [vmem:[#allocation2 + $0x180] sm:$0xff]
    %v2303 = vld [vmem:[#allocation2 + $0x188] sm:$0xff]
    %v2304 = vld [vmem:[#allocation2 + $0x190] sm:$0xff]
    %v2305 = vld [vmem:[#allocation2 + $0x198] sm:$0xff]
    %v2306 = vld [vmem:[#allocation2 + $0x1a0] sm:$0xff]
    %v2307 = vld [vmem:[#allocation2 + $0x1a8] sm:$0xff]
    %v2308 = vld [vmem:[#allocation2 + $0x1b0] sm:$0xff]
    %v2309 = vld [vmem:[#allocation2 + $0x1b8] sm:$0xff]
    %v2310 = vld [vmem:[#allocation2 + $0x1c0] sm:$0xff]
    %v2311 = vld [vmem:[#allocation2 + $0x1c8] sm:$0xff]
    %v2312 = vld [vmem:[#allocation2 + $0x1d0] sm:$0xff]
    %v2313 = vld [vmem:[#allocation2 + $0x1d8] sm:$0xff]
    %v2314 = vld [vmem:[#allocation2 + $0x1e0] sm:$0xff]
    %v2315 = vld [vmem:[#allocation2 + $0x1e8] sm:$0xff]
    %v2316 = vld [vmem:[#allocation2 + $0x1f0] sm:$0xff]
    %v2317 = vld [vmem:[#allocation2 + $0x1f8] sm:$0xff]
    %v2318 = vpack.c.bf16 %v2255, %v2254
    %v2319 = vpack.c.bf16 %v2257, %v2256
    %v2320 = vpack.c.bf16 %v2259, %v2258
    %v2321 = vpack.c.bf16 %v2261, %v2260
    %v2322 = vpack.c.bf16 %v2263, %v2262
    %v2323 = vpack.c.bf16 %v2265, %v2264
    %v2324 = vpack.c.bf16 %v2267, %v2266
    %v2325 = vpack.c.bf16 %v2269, %v2268
    %v2326 = vpack.c.bf16 %v2271, %v2270
    %v2327 = vpack.c.bf16 %v2273, %v2272
    %v2328 = vpack.c.bf16 %v2275, %v2274
    %v2329 = vpack.c.bf16 %v2277, %v2276
    %v2330 = vpack.c.bf16 %v2279, %v2278
    %v2331 = vpack.c.bf16 %v2281, %v2280
    %v2332 = vpack.c.bf16 %v2283, %v2282
    %v2333 = vpack.c.bf16 %v2285, %v2284
    %v2334 = vpack.c.bf16 %v2287, %v2286
    %v2335 = vpack.c.bf16 %v2289, %v2288
    %v2336 = vpack.c.bf16 %v2291, %v2290
    %v2337 = vpack.c.bf16 %v2293, %v2292
    %v2338 = vpack.c.bf16 %v2295, %v2294
    %v2339 = vpack.c.bf16 %v2297, %v2296
    %v2340 = vpack.c.bf16 %v2299, %v2298
    %v2341 = vpack.c.bf16 %v2301, %v2300
    %v2342 = vpack.c.bf16 %v2303, %v2302
    %v2343 = vpack.c.bf16 %v2305, %v2304
    %v2344 = vpack.c.bf16 %v2307, %v2306
    %v2345 = vpack.c.bf16 %v2309, %v2308
    %v2346 = vpack.c.bf16 %v2311, %v2310
    %v2347 = vpack.c.bf16 %v2313, %v2312
    %v2348 = vpack.c.bf16 %v2315, %v2314
    %v2349 = vpack.c.bf16 %v2317, %v2316
    %v2350 = vld [vmem:[#allocation6] sm:$0xff]
    %v2351 = vld [vmem:[#allocation6 + $0x8] sm:$0xff]
    %v2352 = vld [vmem:[#allocation6 + $0x10] sm:$0xff]
    %v2353 = vld [vmem:[#allocation6 + $0x18] sm:$0xff]
    %v2354 = vld [vmem:[#allocation6 + $0x20] sm:$0xff]
    %v2355 = vld [vmem:[#allocation6 + $0x28] sm:$0xff]
    %v2356 = vld [vmem:[#allocation6 + $0x30] sm:$0xff]
    %v2357 = vld [vmem:[#allocation6 + $0x38] sm:$0xff]
    %v2358 = vld [vmem:[#allocation6 + $0x40] sm:$0xff]
    %v2359 = vld [vmem:[#allocation6 + $0x48] sm:$0xff]
    %v2360 = vld [vmem:[#allocation6 + $0x50] sm:$0xff]
    %v2361 = vld [vmem:[#allocation6 + $0x58] sm:$0xff]
    %v2362 = vld [vmem:[#allocation6 + $0x60] sm:$0xff]
    %v2363 = vld [vmem:[#allocation6 + $0x68] sm:$0xff]
    %v2364 = vld [vmem:[#allocation6 + $0x70] sm:$0xff]
    %v2365 = vld [vmem:[#allocation6 + $0x78] sm:$0xff]
    %v2366 = vld [vmem:[#allocation6 + $0x80] sm:$0xff]
    %v2367 = vld [vmem:[#allocation6 + $0x88] sm:$0xff]
    %v2368 = vld [vmem:[#allocation6 + $0x90] sm:$0xff]
    %v2369 = vld [vmem:[#allocation6 + $0x98] sm:$0xff]
    %v2370 = vld [vmem:[#allocation6 + $0xa0] sm:$0xff]
    %v2371 = vld [vmem:[#allocation6 + $0xa8] sm:$0xff]
    %v2372 = vld [vmem:[#allocation6 + $0xb0] sm:$0xff]
    %v2373 = vld [vmem:[#allocation6 + $0xb8] sm:$0xff]
    %v2374 = vld [vmem:[#allocation6 + $0xc0] sm:$0xff]
    %v2375 = vld [vmem:[#allocation6 + $0xc8] sm:$0xff]
    %v2376 = vld [vmem:[#allocation6 + $0xd0] sm:$0xff]
    %v2377 = vld [vmem:[#allocation6 + $0xd8] sm:$0xff]
    %v2378 = vld [vmem:[#allocation6 + $0xe0] sm:$0xff]
    %v2379 = vld [vmem:[#allocation6 + $0xe8] sm:$0xff]
    %v2380 = vld [vmem:[#allocation6 + $0xf0] sm:$0xff]
    %v2381 = vld [vmem:[#allocation6 + $0xf8] sm:$0xff]
    %v2382 = vld [vmem:[#allocation6 + $0x100] sm:$0xff]
    %v2383 = vld [vmem:[#allocation6 + $0x108] sm:$0xff]
    %v2384 = vld [vmem:[#allocation6 + $0x110] sm:$0xff]
    %v2385 = vld [vmem:[#allocation6 + $0x118] sm:$0xff]
    %v2386 = vld [vmem:[#allocation6 + $0x120] sm:$0xff]
    %v2387 = vld [vmem:[#allocation6 + $0x128] sm:$0xff]
    %v2388 = vld [vmem:[#allocation6 + $0x130] sm:$0xff]
    %v2389 = vld [vmem:[#allocation6 + $0x138] sm:$0xff]
    %v2390 = vld [vmem:[#allocation6 + $0x140] sm:$0xff]
    %v2391 = vld [vmem:[#allocation6 + $0x148] sm:$0xff]
    %v2392 = vld [vmem:[#allocation6 + $0x150] sm:$0xff]
    %v2393 = vld [vmem:[#allocation6 + $0x158] sm:$0xff]
    %v2394 = vld [vmem:[#allocation6 + $0x160] sm:$0xff]
    %v2395 = vld [vmem:[#allocation6 + $0x168] sm:$0xff]
    %v2396 = vld [vmem:[#allocation6 + $0x170] sm:$0xff]
    %v2397 = vld [vmem:[#allocation6 + $0x178] sm:$0xff]
    %v2398 = vld [vmem:[#allocation6 + $0x180] sm:$0xff]
    %v2399 = vld [vmem:[#allocation6 + $0x188] sm:$0xff]
    %v2400 = vld [vmem:[#allocation6 + $0x190] sm:$0xff]
    %v2401 = vld [vmem:[#allocation6 + $0x198] sm:$0xff]
    %v2402 = vld [vmem:[#allocation6 + $0x1a0] sm:$0xff]
    %v2403 = vld [vmem:[#allocation6 + $0x1a8] sm:$0xff]
    %v2404 = vld [vmem:[#allocation6 + $0x1b0] sm:$0xff]
    %v2405 = vld [vmem:[#allocation6 + $0x1b8] sm:$0xff]
    %v2406 = vld [vmem:[#allocation6 + $0x1c0] sm:$0xff]
    %v2407 = vld [vmem:[#allocation6 + $0x1c8] sm:$0xff]
    %v2408 = vld [vmem:[#allocation6 + $0x1d0] sm:$0xff]
    %v2409 = vld [vmem:[#allocation6 + $0x1d8] sm:$0xff]
    %v2410 = vld [vmem:[#allocation6 + $0x1e0] sm:$0xff]
    %v2411 = vld [vmem:[#allocation6 + $0x1e8] sm:$0xff]
    %v2412 = vld [vmem:[#allocation6 + $0x1f0] sm:$0xff]
    %v2413 = vld [vmem:[#allocation6 + $0x1f8] sm:$0xff]
    %v2414 = vld [vmem:[#allocation6 + $0x200] sm:$0xff]
    %v2415 = vld [vmem:[#allocation6 + $0x208] sm:$0xff]
    %v2416 = vld [vmem:[#allocation6 + $0x210] sm:$0xff]
    %v2417 = vld [vmem:[#allocation6 + $0x218] sm:$0xff]
    %v2418 = vld [vmem:[#allocation6 + $0x220] sm:$0xff]
    %v2419 = vld [vmem:[#allocation6 + $0x228] sm:$0xff]
    %v2420 = vld [vmem:[#allocation6 + $0x230] sm:$0xff]
    %v2421 = vld [vmem:[#allocation6 + $0x238] sm:$0xff]
    %v2422 = vld [vmem:[#allocation6 + $0x240] sm:$0xff]
    %v2423 = vld [vmem:[#allocation6 + $0x248] sm:$0xff]
    %v2424 = vld [vmem:[#allocation6 + $0x250] sm:$0xff]
    %v2425 = vld [vmem:[#allocation6 + $0x258] sm:$0xff]
    %v2426 = vld [vmem:[#allocation6 + $0x260] sm:$0xff]
    %v2427 = vld [vmem:[#allocation6 + $0x268] sm:$0xff]
    %v2428 = vld [vmem:[#allocation6 + $0x270] sm:$0xff]
    %v2429 = vld [vmem:[#allocation6 + $0x278] sm:$0xff]
    %v2430 = vld [vmem:[#allocation6 + $0x280] sm:$0xff]
    %v2431 = vld [vmem:[#allocation6 + $0x288] sm:$0xff]
    %v2432 = vld [vmem:[#allocation6 + $0x290] sm:$0xff]
    %v2433 = vld [vmem:[#allocation6 + $0x298] sm:$0xff]
    %v2434 = vld [vmem:[#allocation6 + $0x2a0] sm:$0xff]
    %v2435 = vld [vmem:[#allocation6 + $0x2a8] sm:$0xff]
    %v2436 = vld [vmem:[#allocation6 + $0x2b0] sm:$0xff]
    %v2437 = vld [vmem:[#allocation6 + $0x2b8] sm:$0xff]
    %v2438 = vld [vmem:[#allocation6 + $0x2c0] sm:$0xff]
    %v2439 = vld [vmem:[#allocation6 + $0x2c8] sm:$0xff]
    %v2440 = vld [vmem:[#allocation6 + $0x2d0] sm:$0xff]
    %v2441 = vld [vmem:[#allocation6 + $0x2d8] sm:$0xff]
    %v2442 = vld [vmem:[#allocation6 + $0x2e0] sm:$0xff]
    %v2443 = vld [vmem:[#allocation6 + $0x2e8] sm:$0xff]
    %v2444 = vld [vmem:[#allocation6 + $0x2f0] sm:$0xff]
    %v2445 = vld [vmem:[#allocation6 + $0x2f8] sm:$0xff]
    %v2446 = vld [vmem:[#allocation6 + $0x300] sm:$0xff]
    %v2447 = vld [vmem:[#allocation6 + $0x308] sm:$0xff]
    %v2448 = vld [vmem:[#allocation6 + $0x310] sm:$0xff]
    %v2449 = vld [vmem:[#allocation6 + $0x318] sm:$0xff]
    %v2450 = vld [vmem:[#allocation6 + $0x320] sm:$0xff]
    %v2451 = vld [vmem:[#allocation6 + $0x328] sm:$0xff]
    %v2452 = vld [vmem:[#allocation6 + $0x330] sm:$0xff]
    %v2453 = vld [vmem:[#allocation6 + $0x338] sm:$0xff]
    %v2454 = vld [vmem:[#allocation6 + $0x340] sm:$0xff]
    %v2455 = vld [vmem:[#allocation6 + $0x348] sm:$0xff]
    %v2456 = vld [vmem:[#allocation6 + $0x350] sm:$0xff]
    %v2457 = vld [vmem:[#allocation6 + $0x358] sm:$0xff]
    %v2458 = vld [vmem:[#allocation6 + $0x360] sm:$0xff]
    %v2459 = vld [vmem:[#allocation6 + $0x368] sm:$0xff]
    %v2460 = vld [vmem:[#allocation6 + $0x370] sm:$0xff]
    %v2461 = vld [vmem:[#allocation6 + $0x378] sm:$0xff]
    %v2462 = vld [vmem:[#allocation6 + $0x380] sm:$0xff]
    %v2463 = vld [vmem:[#allocation6 + $0x388] sm:$0xff]
    %v2464 = vld [vmem:[#allocation6 + $0x390] sm:$0xff]
    %v2465 = vld [vmem:[#allocation6 + $0x398] sm:$0xff]
    %v2466 = vld [vmem:[#allocation6 + $0x3a0] sm:$0xff]
    %v2467 = vld [vmem:[#allocation6 + $0x3a8] sm:$0xff]
    %v2468 = vld [vmem:[#allocation6 + $0x3b0] sm:$0xff]
    %v2469 = vld [vmem:[#allocation6 + $0x3b8] sm:$0xff]
    %v2470 = vld [vmem:[#allocation6 + $0x3c0] sm:$0xff]
    %v2471 = vld [vmem:[#allocation6 + $0x3c8] sm:$0xff]
    %v2472 = vld [vmem:[#allocation6 + $0x3d0] sm:$0xff]
    %v2473 = vld [vmem:[#allocation6 + $0x3d8] sm:$0xff]
    %v2474 = vld [vmem:[#allocation6 + $0x3e0] sm:$0xff]
    %v2475 = vld [vmem:[#allocation6 + $0x3e8] sm:$0xff]
    %v2476 = vld [vmem:[#allocation6 + $0x3f0] sm:$0xff]
    %v2477 = vld [vmem:[#allocation6 + $0x3f8] sm:$0xff]
    %v2606 = vunpack.c.l.b16 %v2350
    %v2607 = vunpack.c.h.b16 %v2350
    %v2608 = vunpack.c.l.b16 %v2351
    %v2609 = vunpack.c.h.b16 %v2351
    %v2610 = vunpack.c.l.b16 %v2352
    %v2611 = vunpack.c.h.b16 %v2352
    %v2612 = vunpack.c.l.b16 %v2353
    %v2613 = vunpack.c.h.b16 %v2353
    %v2614 = vunpack.c.l.b16 %v2354
    %v2615 = vunpack.c.h.b16 %v2354
    %v2616 = vunpack.c.l.b16 %v2355
    %v2617 = vunpack.c.h.b16 %v2355
    %v2618 = vunpack.c.l.b16 %v2356
    %v2619 = vunpack.c.h.b16 %v2356
    %v2620 = vunpack.c.l.b16 %v2357
    %v2621 = vunpack.c.h.b16 %v2357
    %v2622 = vunpack.c.l.b16 %v2358
    %v2623 = vunpack.c.h.b16 %v2358
    %v2624 = vunpack.c.l.b16 %v2359
    %v2625 = vunpack.c.h.b16 %v2359
    %v2626 = vunpack.c.l.b16 %v2360
    %v2627 = vunpack.c.h.b16 %v2360
    %v2628 = vunpack.c.l.b16 %v2361
    %v2629 = vunpack.c.h.b16 %v2361
    %v2630 = vunpack.c.l.b16 %v2362
    %v2631 = vunpack.c.h.b16 %v2362
    %v2632 = vunpack.c.l.b16 %v2363
    %v2633 = vunpack.c.h.b16 %v2363
    %v2634 = vunpack.c.l.b16 %v2364
    %v2635 = vunpack.c.h.b16 %v2364
    %v2636 = vunpack.c.l.b16 %v2365
    %v2637 = vunpack.c.h.b16 %v2365
    %v2638 = vunpack.c.l.b16 %v2366
    %v2639 = vunpack.c.h.b16 %v2366
    %v2640 = vunpack.c.l.b16 %v2367
    %v2641 = vunpack.c.h.b16 %v2367
    %v2642 = vunpack.c.l.b16 %v2368
    %v2643 = vunpack.c.h.b16 %v2368
    %v2644 = vunpack.c.l.b16 %v2369
    %v2645 = vunpack.c.h.b16 %v2369
    %v2646 = vunpack.c.l.b16 %v2370
    %v2647 = vunpack.c.h.b16 %v2370
    %v2648 = vunpack.c.l.b16 %v2371
    %v2649 = vunpack.c.h.b16 %v2371
    %v2650 = vunpack.c.l.b16 %v2372
    %v2651 = vunpack.c.h.b16 %v2372
    %v2652 = vunpack.c.l.b16 %v2373
    %v2653 = vunpack.c.h.b16 %v2373
    %v2654 = vunpack.c.l.b16 %v2374
    %v2655 = vunpack.c.h.b16 %v2374
    %v2656 = vunpack.c.l.b16 %v2375
    %v2657 = vunpack.c.h.b16 %v2375
    %v2658 = vunpack.c.l.b16 %v2376
    %v2659 = vunpack.c.h.b16 %v2376
    %v2660 = vunpack.c.l.b16 %v2377
    %v2661 = vunpack.c.h.b16 %v2377
    %v2662 = vunpack.c.l.b16 %v2378
    %v2663 = vunpack.c.h.b16 %v2378
    %v2664 = vunpack.c.l.b16 %v2379
    %v2665 = vunpack.c.h.b16 %v2379
    %v2666 = vunpack.c.l.b16 %v2380
    %v2667 = vunpack.c.h.b16 %v2380
    %v2668 = vunpack.c.l.b16 %v2381
    %v2669 = vunpack.c.h.b16 %v2381
    %v2670 = vunpack.c.l.b16 %v2382
    %v2671 = vunpack.c.h.b16 %v2382
    %v2672 = vunpack.c.l.b16 %v2383
    %v2673 = vunpack.c.h.b16 %v2383
    %v2674 = vunpack.c.l.b16 %v2384
    %v2675 = vunpack.c.h.b16 %v2384
    %v2676 = vunpack.c.l.b16 %v2385
    %v2677 = vunpack.c.h.b16 %v2385
    %v2678 = vunpack.c.l.b16 %v2386
    %v2679 = vunpack.c.h.b16 %v2386
    %v2680 = vunpack.c.l.b16 %v2387
    %v2681 = vunpack.c.h.b16 %v2387
    %v2682 = vunpack.c.l.b16 %v2388
    %v2683 = vunpack.c.h.b16 %v2388
    %v2684 = vunpack.c.l.b16 %v2389
    %v2685 = vunpack.c.h.b16 %v2389
    %v2686 = vunpack.c.l.b16 %v2390
    %v2687 = vunpack.c.h.b16 %v2390
    %v2688 = vunpack.c.l.b16 %v2391
    %v2689 = vunpack.c.h.b16 %v2391
    %v2690 = vunpack.c.l.b16 %v2392
    %v2691 = vunpack.c.h.b16 %v2392
    %v2692 = vunpack.c.l.b16 %v2393
    %v2693 = vunpack.c.h.b16 %v2393
    %v2694 = vunpack.c.l.b16 %v2394
    %v2695 = vunpack.c.h.b16 %v2394
    %v2696 = vunpack.c.l.b16 %v2395
    %v2697 = vunpack.c.h.b16 %v2395
    %v2698 = vunpack.c.l.b16 %v2396
    %v2699 = vunpack.c.h.b16 %v2396
    %v2700 = vunpack.c.l.b16 %v2397
    %v2701 = vunpack.c.h.b16 %v2397
    %v2702 = vunpack.c.l.b16 %v2398
    %v2703 = vunpack.c.h.b16 %v2398
    %v2704 = vunpack.c.l.b16 %v2399
    %v2705 = vunpack.c.h.b16 %v2399
    %v2706 = vunpack.c.l.b16 %v2400
    %v2707 = vunpack.c.h.b16 %v2400
    %v2708 = vunpack.c.l.b16 %v2401
    %v2709 = vunpack.c.h.b16 %v2401
    %v2710 = vunpack.c.l.b16 %v2402
    %v2711 = vunpack.c.h.b16 %v2402
    %v2712 = vunpack.c.l.b16 %v2403
    %v2713 = vunpack.c.h.b16 %v2403
    %v2714 = vunpack.c.l.b16 %v2404
    %v2715 = vunpack.c.h.b16 %v2404
    %v2716 = vunpack.c.l.b16 %v2405
    %v2717 = vunpack.c.h.b16 %v2405
    %v2718 = vunpack.c.l.b16 %v2406
    %v2719 = vunpack.c.h.b16 %v2406
    %v2720 = vunpack.c.l.b16 %v2407
    %v2721 = vunpack.c.h.b16 %v2407
    %v2722 = vunpack.c.l.b16 %v2408
    %v2723 = vunpack.c.h.b16 %v2408
    %v2724 = vunpack.c.l.b16 %v2409
    %v2725 = vunpack.c.h.b16 %v2409
    %v2726 = vunpack.c.l.b16 %v2410
    %v2727 = vunpack.c.h.b16 %v2410
    %v2728 = vunpack.c.l.b16 %v2411
    %v2729 = vunpack.c.h.b16 %v2411
    %v2730 = vunpack.c.l.b16 %v2412
    %v2731 = vunpack.c.h.b16 %v2412
    %v2732 = vunpack.c.l.b16 %v2413
    %v2733 = vunpack.c.h.b16 %v2413
    %v2734 = vunpack.c.l.b16 %v2414
    %v2735 = vunpack.c.h.b16 %v2414
    %v2736 = vunpack.c.l.b16 %v2415
    %v2737 = vunpack.c.h.b16 %v2415
    %v2738 = vunpack.c.l.b16 %v2416
    %v2739 = vunpack.c.h.b16 %v2416
    %v2740 = vunpack.c.l.b16 %v2417
    %v2741 = vunpack.c.h.b16 %v2417
    %v2742 = vunpack.c.l.b16 %v2418
    %v2743 = vunpack.c.h.b16 %v2418
    %v2744 = vunpack.c.l.b16 %v2419
    %v2745 = vunpack.c.h.b16 %v2419
    %v2746 = vunpack.c.l.b16 %v2420
    %v2747 = vunpack.c.h.b16 %v2420
    %v2748 = vunpack.c.l.b16 %v2421
    %v2749 = vunpack.c.h.b16 %v2421
    %v2750 = vunpack.c.l.b16 %v2422
    %v2751 = vunpack.c.h.b16 %v2422
    %v2752 = vunpack.c.l.b16 %v2423
    %v2753 = vunpack.c.h.b16 %v2423
    %v2754 = vunpack.c.l.b16 %v2424
    %v2755 = vunpack.c.h.b16 %v2424
    %v2756 = vunpack.c.l.b16 %v2425
    %v2757 = vunpack.c.h.b16 %v2425
    %v2758 = vunpack.c.l.b16 %v2426
    %v2759 = vunpack.c.h.b16 %v2426
    %v2760 = vunpack.c.l.b16 %v2427
    %v2761 = vunpack.c.h.b16 %v2427
    %v2762 = vunpack.c.l.b16 %v2428
    %v2763 = vunpack.c.h.b16 %v2428
    %v2764 = vunpack.c.l.b16 %v2429
    %v2765 = vunpack.c.h.b16 %v2429
    %v2766 = vunpack.c.l.b16 %v2430
    %v2767 = vunpack.c.h.b16 %v2430
    %v2768 = vunpack.c.l.b16 %v2431
    %v2769 = vunpack.c.h.b16 %v2431
    %v2770 = vunpack.c.l.b16 %v2432
    %v2771 = vunpack.c.h.b16 %v2432
    %v2772 = vunpack.c.l.b16 %v2433
    %v2773 = vunpack.c.h.b16 %v2433
    %v2774 = vunpack.c.l.b16 %v2434
    %v2775 = vunpack.c.h.b16 %v2434
    %v2776 = vunpack.c.l.b16 %v2435
    %v2777 = vunpack.c.h.b16 %v2435
    %v2778 = vunpack.c.l.b16 %v2436
    %v2779 = vunpack.c.h.b16 %v2436
    %v2780 = vunpack.c.l.b16 %v2437
    %v2781 = vunpack.c.h.b16 %v2437
    %v2782 = vunpack.c.l.b16 %v2438
    %v2783 = vunpack.c.h.b16 %v2438
    %v2784 = vunpack.c.l.b16 %v2439
    %v2785 = vunpack.c.h.b16 %v2439
    %v2786 = vunpack.c.l.b16 %v2440
    %v2787 = vunpack.c.h.b16 %v2440
    %v2788 = vunpack.c.l.b16 %v2441
    %v2789 = vunpack.c.h.b16 %v2441
    %v2790 = vunpack.c.l.b16 %v2442
    %v2791 = vunpack.c.h.b16 %v2442
    %v2792 = vunpack.c.l.b16 %v2443
    %v2793 = vunpack.c.h.b16 %v2443
    %v2794 = vunpack.c.l.b16 %v2444
    %v2795 = vunpack.c.h.b16 %v2444
    %v2796 = vunpack.c.l.b16 %v2445
    %v2797 = vunpack.c.h.b16 %v2445
    %v2798 = vunpack.c.l.b16 %v2446
    %v2799 = vunpack.c.h.b16 %v2446
    %v2800 = vunpack.c.l.b16 %v2447
    %v2801 = vunpack.c.h.b16 %v2447
    %v2802 = vunpack.c.l.b16 %v2448
    %v2803 = vunpack.c.h.b16 %v2448
    %v2804 = vunpack.c.l.b16 %v2449
    %v2805 = vunpack.c.h.b16 %v2449
    %v2806 = vunpack.c.l.b16 %v2450
    %v2807 = vunpack.c.h.b16 %v2450
    %v2808 = vunpack.c.l.b16 %v2451
    %v2809 = vunpack.c.h.b16 %v2451
    %v2810 = vunpack.c.l.b16 %v2452
    %v2811 = vunpack.c.h.b16 %v2452
    %v2812 = vunpack.c.l.b16 %v2453
    %v2813 = vunpack.c.h.b16 %v2453
    %v2814 = vunpack.c.l.b16 %v2454
    %v2815 = vunpack.c.h.b16 %v2454
    %v2816 = vunpack.c.l.b16 %v2455
    %v2817 = vunpack.c.h.b16 %v2455
    %v2818 = vunpack.c.l.b16 %v2456
    %v2819 = vunpack.c.h.b16 %v2456
    %v2820 = vunpack.c.l.b16 %v2457
    %v2821 = vunpack.c.h.b16 %v2457
    %v2822 = vunpack.c.l.b16 %v2458
    %v2823 = vunpack.c.h.b16 %v2458
    %v2824 = vunpack.c.l.b16 %v2459
    %v2825 = vunpack.c.h.b16 %v2459
    %v2826 = vunpack.c.l.b16 %v2460
    %v2827 = vunpack.c.h.b16 %v2460
    %v2828 = vunpack.c.l.b16 %v2461
    %v2829 = vunpack.c.h.b16 %v2461
    %v2830 = vunpack.c.l.b16 %v2462
    %v2831 = vunpack.c.h.b16 %v2462
    %v2832 = vunpack.c.l.b16 %v2463
    %v2833 = vunpack.c.h.b16 %v2463
    %v2834 = vunpack.c.l.b16 %v2464
    %v2835 = vunpack.c.h.b16 %v2464
    %v2836 = vunpack.c.l.b16 %v2465
    %v2837 = vunpack.c.h.b16 %v2465
    %v2838 = vunpack.c.l.b16 %v2466
    %v2839 = vunpack.c.h.b16 %v2466
    %v2840 = vunpack.c.l.b16 %v2467
    %v2841 = vunpack.c.h.b16 %v2467
    %v2842 = vunpack.c.l.b16 %v2468
    %v2843 = vunpack.c.h.b16 %v2468
    %v2844 = vunpack.c.l.b16 %v2469
    %v2845 = vunpack.c.h.b16 %v2469
    %v2846 = vunpack.c.l.b16 %v2470
    %v2847 = vunpack.c.h.b16 %v2470
    %v2848 = vunpack.c.l.b16 %v2471
    %v2849 = vunpack.c.h.b16 %v2471
    %v2850 = vunpack.c.l.b16 %v2472
    %v2851 = vunpack.c.h.b16 %v2472
    %v2852 = vunpack.c.l.b16 %v2473
    %v2853 = vunpack.c.h.b16 %v2473
    %v2854 = vunpack.c.l.b16 %v2474
    %v2855 = vunpack.c.h.b16 %v2474
    %v2856 = vunpack.c.l.b16 %v2475
    %v2857 = vunpack.c.h.b16 %v2475
    %v2858 = vunpack.c.l.b16 %v2476
    %v2859 = vunpack.c.h.b16 %v2476
    %v2860 = vunpack.c.l.b16 %v2477
    %v2861 = vunpack.c.h.b16 %v2477
    %v2862 = vpack.c.b16 %v2610, %v2606
    %v2863 = vpack.c.b16 %v2611, %v2607
    %v2864 = vpack.c.b16 %v2612, %v2608
    %v2865 = vpack.c.b16 %v2613, %v2609
    %v2866 = vpack.c.b16 %v2618, %v2614
    %v2867 = vpack.c.b16 %v2619, %v2615
    %v2868 = vpack.c.b16 %v2620, %v2616
    %v2869 = vpack.c.b16 %v2621, %v2617
    %v2870 = vpack.c.b16 %v2626, %v2622
    %v2871 = vpack.c.b16 %v2627, %v2623
    %v2872 = vpack.c.b16 %v2628, %v2624
    %v2873 = vpack.c.b16 %v2629, %v2625
    %v2874 = vpack.c.b16 %v2634, %v2630
    %v2875 = vpack.c.b16 %v2635, %v2631
    %v2876 = vpack.c.b16 %v2636, %v2632
    %v2877 = vpack.c.b16 %v2637, %v2633
    %v2878 = vpack.c.b16 %v2642, %v2638
    %v2879 = vpack.c.b16 %v2643, %v2639
    %v2880 = vpack.c.b16 %v2644, %v2640
    %v2881 = vpack.c.b16 %v2645, %v2641
    %v2882 = vpack.c.b16 %v2650, %v2646
    %v2883 = vpack.c.b16 %v2651, %v2647
    %v2884 = vpack.c.b16 %v2652, %v2648
    %v2885 = vpack.c.b16 %v2653, %v2649
    %v2886 = vpack.c.b16 %v2658, %v2654
    %v2887 = vpack.c.b16 %v2659, %v2655
    %v2888 = vpack.c.b16 %v2660, %v2656
    %v2889 = vpack.c.b16 %v2661, %v2657
    %v2890 = vpack.c.b16 %v2666, %v2662
    %v2891 = vpack.c.b16 %v2667, %v2663
    %v2892 = vpack.c.b16 %v2668, %v2664
    %v2893 = vpack.c.b16 %v2669, %v2665
    %v2894 = vpack.c.b16 %v2674, %v2670
    %v2895 = vpack.c.b16 %v2675, %v2671
    %v2896 = vpack.c.b16 %v2676, %v2672
    %v2897 = vpack.c.b16 %v2677, %v2673
    %v2898 = vpack.c.b16 %v2682, %v2678
    %v2899 = vpack.c.b16 %v2683, %v2679
    %v2900 = vpack.c.b16 %v2684, %v2680
    %v2901 = vpack.c.b16 %v2685, %v2681
    %v2902 = vpack.c.b16 %v2690, %v2686
    %v2903 = vpack.c.b16 %v2691, %v2687
    %v2904 = vpack.c.b16 %v2692, %v2688
    %v2905 = vpack.c.b16 %v2693, %v2689
    %v2906 = vpack.c.b16 %v2698, %v2694
    %v2907 = vpack.c.b16 %v2699, %v2695
    %v2908 = vpack.c.b16 %v2700, %v2696
    %v2909 = vpack.c.b16 %v2701, %v2697
    %v2910 = vpack.c.b16 %v2706, %v2702
    %v2911 = vpack.c.b16 %v2707, %v2703
    %v2912 = vpack.c.b16 %v2708, %v2704
    %v2913 = vpack.c.b16 %v2709, %v2705
    %v2914 = vpack.c.b16 %v2714, %v2710
    %v2915 = vpack.c.b16 %v2715, %v2711
    %v2916 = vpack.c.b16 %v2716, %v2712
    %v2917 = vpack.c.b16 %v2717, %v2713
    %v2918 = vpack.c.b16 %v2722, %v2718
    %v2919 = vpack.c.b16 %v2723, %v2719
    %v2920 = vpack.c.b16 %v2724, %v2720
    %v2921 = vpack.c.b16 %v2725, %v2721
    %v2922 = vpack.c.b16 %v2730, %v2726
    %v2923 = vpack.c.b16 %v2731, %v2727
    %v2924 = vpack.c.b16 %v2732, %v2728
    %v2925 = vpack.c.b16 %v2733, %v2729
    %v2926 = vpack.c.b16 %v2738, %v2734
    %v2927 = vpack.c.b16 %v2739, %v2735
    %v2928 = vpack.c.b16 %v2740, %v2736
    %v2929 = vpack.c.b16 %v2741, %v2737
    %v2930 = vpack.c.b16 %v2746, %v2742
    %v2931 = vpack.c.b16 %v2747, %v2743
    %v2932 = vpack.c.b16 %v2748, %v2744
    %v2933 = vpack.c.b16 %v2749, %v2745
    %v2934 = vpack.c.b16 %v2754, %v2750
    %v2935 = vpack.c.b16 %v2755, %v2751
    %v2936 = vpack.c.b16 %v2756, %v2752
    %v2937 = vpack.c.b16 %v2757, %v2753
    %v2938 = vpack.c.b16 %v2762, %v2758
    %v2939 = vpack.c.b16 %v2763, %v2759
    %v2940 = vpack.c.b16 %v2764, %v2760
    %v2941 = vpack.c.b16 %v2765, %v2761
    %v2942 = vpack.c.b16 %v2770, %v2766
    %v2943 = vpack.c.b16 %v2771, %v2767
    %v2944 = vpack.c.b16 %v2772, %v2768
    %v2945 = vpack.c.b16 %v2773, %v2769
    %v2946 = vpack.c.b16 %v2778, %v2774
    %v2947 = vpack.c.b16 %v2779, %v2775
    %v2948 = vpack.c.b16 %v2780, %v2776
    %v2949 = vpack.c.b16 %v2781, %v2777
    %v2950 = vpack.c.b16 %v2786, %v2782
    %v2951 = vpack.c.b16 %v2787, %v2783
    %v2952 = vpack.c.b16 %v2788, %v2784
    %v2953 = vpack.c.b16 %v2789, %v2785
    %v2954 = vpack.c.b16 %v2794, %v2790
    %v2955 = vpack.c.b16 %v2795, %v2791
    %v2956 = vpack.c.b16 %v2796, %v2792
    %v2957 = vpack.c.b16 %v2797, %v2793
    %v2958 = vpack.c.b16 %v2802, %v2798
    %v2959 = vpack.c.b16 %v2803, %v2799
    %v2960 = vpack.c.b16 %v2804, %v2800
    %v2961 = vpack.c.b16 %v2805, %v2801
    %v2962 = vpack.c.b16 %v2810, %v2806
    %v2963 = vpack.c.b16 %v2811, %v2807
    %v2964 = vpack.c.b16 %v2812, %v2808
    %v2965 = vpack.c.b16 %v2813, %v2809
    %v2966 = vpack.c.b16 %v2818, %v2814
    %v2967 = vpack.c.b16 %v2819, %v2815
    %v2968 = vpack.c.b16 %v2820, %v2816
    %v2969 = vpack.c.b16 %v2821, %v2817
    %v2970 = vpack.c.b16 %v2826, %v2822
    %v2971 = vpack.c.b16 %v2827, %v2823
    %v2972 = vpack.c.b16 %v2828, %v2824
    %v2973 = vpack.c.b16 %v2829, %v2825
    %v2974 = vpack.c.b16 %v2834, %v2830
    %v2975 = vpack.c.b16 %v2835, %v2831
    %v2976 = vpack.c.b16 %v2836, %v2832
    %v2977 = vpack.c.b16 %v2837, %v2833
    %v2978 = vpack.c.b16 %v2842, %v2838
    %v2979 = vpack.c.b16 %v2843, %v2839
    %v2980 = vpack.c.b16 %v2844, %v2840
    %v2981 = vpack.c.b16 %v2845, %v2841
    %v2982 = vpack.c.b16 %v2850, %v2846
    %v2983 = vpack.c.b16 %v2851, %v2847
    %v2984 = vpack.c.b16 %v2852, %v2848
    %v2985 = vpack.c.b16 %v2853, %v2849
    %v2986 = vpack.c.b16 %v2858, %v2854
    %v2987 = vpack.c.b16 %v2859, %v2855
    %v2988 = vpack.c.b16 %v2860, %v2856
    %v2989 = vpack.c.b16 %v2861, %v2857
    %3118 = vmatpush.bf16.msra.mxu0 %v2325
    %3119 = vmatpush.bf16.msra.mxu0 %v2324
    %3120 = vmatpush.bf16.msra.mxu0 %v2323
    %3121 = vmatpush.bf16.msra.mxu0 %v2322
    %3122 = vmatpush.bf16.msra.mxu0 %v2321
    %3123 = vmatpush.bf16.msra.mxu0 %v2320
    %3124 = vmatpush.bf16.msra.mxu0 %v2319
    %3125 = vmatpush.bf16.msra.mxu0 %v2318
    %3126 = vmatmul.bf16.gmra.mxu0 %v2862
    %v3127 = vpop.f32.mrf.mxu0
    %v3128 = vadd.f32 0.0, %v3127
    %v3129 = vpop.f32.mrf.mxu0
    %v3130 = vadd.f32 0.0, %v3129
    %3131 = vmatmul.bf16.gmra.mxu0 %v2866
    %v3132 = vpop.f32.mrf.mxu0
    %v3133 = vadd.f32 0.0, %v3132
    %v3134 = vpop.f32.mrf.mxu0
    %v3135 = vadd.f32 0.0, %v3134
    %3136 = vmatmul.bf16.gmra.mxu0 %v2870
    %v3137 = vpop.f32.mrf.mxu0
    %v3138 = vadd.f32 0.0, %v3137
    %v3139 = vpop.f32.mrf.mxu0
    %v3140 = vadd.f32 0.0, %v3139
    %3141 = vmatmul.bf16.gmra.mxu0 %v2874
    %v3142 = vpop.f32.mrf.mxu0
    %v3143 = vadd.f32 0.0, %v3142
    %v3144 = vpop.f32.mrf.mxu0
    %v3145 = vadd.f32 0.0, %v3144
    %3146 = vmatmul.bf16.gmra.mxu0 %v2878
    %v3147 = vpop.f32.mrf.mxu0
    %v3148 = vadd.f32 0.0, %v3147
    %v3149 = vpop.f32.mrf.mxu0
    %v3150 = vadd.f32 0.0, %v3149
    %3151 = vmatmul.bf16.gmra.mxu0 %v2882
    %v3152 = vpop.f32.mrf.mxu0
    %v3153 = vadd.f32 0.0, %v3152
    %v3154 = vpop.f32.mrf.mxu0
    %v3155 = vadd.f32 0.0, %v3154
    %3156 = vmatmul.bf16.gmra.mxu0 %v2886
    %v3157 = vpop.f32.mrf.mxu0
    %v3158 = vadd.f32 0.0, %v3157
    %v3159 = vpop.f32.mrf.mxu0
    %v3160 = vadd.f32 0.0, %v3159
    %3161 = vmatmul.bf16.gmra.mxu0 %v2890
    %v3162 = vpop.f32.mrf.mxu0
    %v3163 = vadd.f32 0.0, %v3162
    %v3164 = vpop.f32.mrf.mxu0
    %v3165 = vadd.f32 0.0, %v3164
    %3166 = vmatmul.bf16.gmra.mxu0 %v2894
    %v3167 = vpop.f32.mrf.mxu0
    %v3168 = vadd.f32 0.0, %v3167
    %v3169 = vpop.f32.mrf.mxu0
    %v3170 = vadd.f32 0.0, %v3169
    %3171 = vmatmul.bf16.gmra.mxu0 %v2898
    %v3172 = vpop.f32.mrf.mxu0
    %v3173 = vadd.f32 0.0, %v3172
    %v3174 = vpop.f32.mrf.mxu0
    %v3175 = vadd.f32 0.0, %v3174
    %3176 = vmatmul.bf16.gmra.mxu0 %v2902
    %v3177 = vpop.f32.mrf.mxu0
    %v3178 = vadd.f32 0.0, %v3177
    %v3179 = vpop.f32.mrf.mxu0
    %v3180 = vadd.f32 0.0, %v3179
    %3181 = vmatmul.bf16.gmra.mxu0 %v2906
    %v3182 = vpop.f32.mrf.mxu0
    %v3183 = vadd.f32 0.0, %v3182
    %v3184 = vpop.f32.mrf.mxu0
    %v3185 = vadd.f32 0.0, %v3184
    %3186 = vmatmul.bf16.gmra.mxu0 %v2910
    %v3187 = vpop.f32.mrf.mxu0
    %v3188 = vadd.f32 0.0, %v3187
    %v3189 = vpop.f32.mrf.mxu0
    %v3190 = vadd.f32 0.0, %v3189
    %3191 = vmatmul.bf16.gmra.mxu0 %v2914
    %v3192 = vpop.f32.mrf.mxu0
    %v3193 = vadd.f32 0.0, %v3192
    %v3194 = vpop.f32.mrf.mxu0
    %v3195 = vadd.f32 0.0, %v3194
    %3196 = vmatmul.bf16.gmra.mxu0 %v2918
    %v3197 = vpop.f32.mrf.mxu0
    %v3198 = vadd.f32 0.0, %v3197
    %v3199 = vpop.f32.mrf.mxu0
    %v3200 = vadd.f32 0.0, %v3199
    %3201 = vmatmul.bf16.gmra.mxu0 %v2922
    %v3202 = vpop.f32.mrf.mxu0
    %v3203 = vadd.f32 0.0, %v3202
    %v3204 = vpop.f32.mrf.mxu0
    %v3205 = vadd.f32 0.0, %v3204
    %3206 = vmatmul.bf16.gmra.mxu0 %v2926
    %v3207 = vpop.f32.mrf.mxu0
    %v3208 = vadd.f32 0.0, %v3207
    %v3209 = vpop.f32.mrf.mxu0
    %v3210 = vadd.f32 0.0, %v3209
    %3211 = vmatmul.bf16.gmra.mxu0 %v2930
    %v3212 = vpop.f32.mrf.mxu0
    %v3213 = vadd.f32 0.0, %v3212
    %v3214 = vpop.f32.mrf.mxu0
    %v3215 = vadd.f32 0.0, %v3214
    %3216 = vmatmul.bf16.gmra.mxu0 %v2934
    %v3217 = vpop.f32.mrf.mxu0
    %v3218 = vadd.f32 0.0, %v3217
    %v3219 = vpop.f32.mrf.mxu0
    %v3220 = vadd.f32 0.0, %v3219
    %3221 = vmatmul.bf16.gmra.mxu0 %v2938
    %v3222 = vpop.f32.mrf.mxu0
    %v3223 = vadd.f32 0.0, %v3222
    %v3224 = vpop.f32.mrf.mxu0
    %v3225 = vadd.f32 0.0, %v3224
    %3226 = vmatmul.bf16.gmra.mxu0 %v2942
    %v3227 = vpop.f32.mrf.mxu0
    %v3228 = vadd.f32 0.0, %v3227
    %v3229 = vpop.f32.mrf.mxu0
    %v3230 = vadd.f32 0.0, %v3229
    %3231 = vmatmul.bf16.gmra.mxu0 %v2946
    %v3232 = vpop.f32.mrf.mxu0
    %v3233 = vadd.f32 0.0, %v3232
    %v3234 = vpop.f32.mrf.mxu0
    %v3235 = vadd.f32 0.0, %v3234
    %3236 = vmatmul.bf16.gmra.mxu0 %v2950
    %v3237 = vpop.f32.mrf.mxu0
    %v3238 = vadd.f32 0.0, %v3237
    %v3239 = vpop.f32.mrf.mxu0
    %v3240 = vadd.f32 0.0, %v3239
    %3241 = vmatmul.bf16.gmra.mxu0 %v2954
    %v3242 = vpop.f32.mrf.mxu0
    %v3243 = vadd.f32 0.0, %v3242
    %v3244 = vpop.f32.mrf.mxu0
    %v3245 = vadd.f32 0.0, %v3244
    %3246 = vmatmul.bf16.gmra.mxu0 %v2958
    %v3247 = vpop.f32.mrf.mxu0
    %v3248 = vadd.f32 0.0, %v3247
    %v3249 = vpop.f32.mrf.mxu0
    %v3250 = vadd.f32 0.0, %v3249
    %3251 = vmatmul.bf16.gmra.mxu0 %v2962
    %v3252 = vpop.f32.mrf.mxu0
    %v3253 = vadd.f32 0.0, %v3252
    %v3254 = vpop.f32.mrf.mxu0
    %v3255 = vadd.f32 0.0, %v3254
    %3256 = vmatmul.bf16.gmra.mxu0 %v2966
    %v3257 = vpop.f32.mrf.mxu0
    %v3258 = vadd.f32 0.0, %v3257
    %v3259 = vpop.f32.mrf.mxu0
    %v3260 = vadd.f32 0.0, %v3259
    %3261 = vmatmul.bf16.gmra.mxu0 %v2970
    %v3262 = vpop.f32.mrf.mxu0
    %v3263 = vadd.f32 0.0, %v3262
    %v3264 = vpop.f32.mrf.mxu0
    %v3265 = vadd.f32 0.0, %v3264
    %3266 = vmatmul.bf16.gmra.mxu0 %v2974
    %v3267 = vpop.f32.mrf.mxu0
    %v3268 = vadd.f32 0.0, %v3267
    %v3269 = vpop.f32.mrf.mxu0
    %v3270 = vadd.f32 0.0, %v3269
    %3271 = vmatmul.bf16.gmra.mxu0 %v2978
    %v3272 = vpop.f32.mrf.mxu0
    %v3273 = vadd.f32 0.0, %v3272
    %v3274 = vpop.f32.mrf.mxu0
    %v3275 = vadd.f32 0.0, %v3274
    %3276 = vmatmul.bf16.gmra.mxu0 %v2982
    %v3277 = vpop.f32.mrf.mxu0
    %v3278 = vadd.f32 0.0, %v3277
    %v3279 = vpop.f32.mrf.mxu0
    %v3280 = vadd.f32 0.0, %v3279
    %3281 = vmatmul.bf16.gmra.mxu0 %v2986
    %v3282 = vpop.f32.mrf.mxu0
    %v3283 = vadd.f32 0.0, %v3282
    %v3284 = vpop.f32.mrf.mxu0
    %v3285 = vadd.f32 0.0, %v3284
    %3286 = vdwg.mxu0
    %3287 = vmatpush.bf16.msra.mxu0 %v2333
    %3288 = vmatpush.bf16.msra.mxu0 %v2332
    %3289 = vmatpush.bf16.msra.mxu0 %v2331
    %3290 = vmatpush.bf16.msra.mxu0 %v2330
    %3291 = vmatpush.bf16.msra.mxu0 %v2329
    %3292 = vmatpush.bf16.msra.mxu0 %v2328
    %3293 = vmatpush.bf16.msra.mxu0 %v2327
    %3294 = vmatpush.bf16.msra.mxu0 %v2326
    %3295 = vmatmul.bf16.gmra.mxu0 %v2863
    %v3296 = vpop.f32.mrf.mxu0
    %v3297 = vadd.f32 %v3128, %v3296
    %v3298 = vpop.f32.mrf.mxu0
    %v3299 = vadd.f32 %v3130, %v3298
    %3300 = vmatmul.bf16.gmra.mxu0 %v2867
    %v3301 = vpop.f32.mrf.mxu0
    %v3302 = vadd.f32 %v3133, %v3301
    %v3303 = vpop.f32.mrf.mxu0
    %v3304 = vadd.f32 %v3135, %v3303
    %3305 = vmatmul.bf16.gmra.mxu0 %v2871
    %v3306 = vpop.f32.mrf.mxu0
    %v3307 = vadd.f32 %v3138, %v3306
    %v3308 = vpop.f32.mrf.mxu0
    %v3309 = vadd.f32 %v3140, %v3308
    %3310 = vmatmul.bf16.gmra.mxu0 %v2875
    %v3311 = vpop.f32.mrf.mxu0
    %v3312 = vadd.f32 %v3143, %v3311
    %v3313 = vpop.f32.mrf.mxu0
    %v3314 = vadd.f32 %v3145, %v3313
    %3315 = vmatmul.bf16.gmra.mxu0 %v2879
    %v3316 = vpop.f32.mrf.mxu0
    %v3317 = vadd.f32 %v3148, %v3316
    %v3318 = vpop.f32.mrf.mxu0
    %v3319 = vadd.f32 %v3150, %v3318
    %3320 = vmatmul.bf16.gmra.mxu0 %v2883
    %v3321 = vpop.f32.mrf.mxu0
    %v3322 = vadd.f32 %v3153, %v3321
    %v3323 = vpop.f32.mrf.mxu0
    %v3324 = vadd.f32 %v3155, %v3323
    %3325 = vmatmul.bf16.gmra.mxu0 %v2887
    %v3326 = vpop.f32.mrf.mxu0
    %v3327 = vadd.f32 %v3158, %v3326
    %v3328 = vpop.f32.mrf.mxu0
    %v3329 = vadd.f32 %v3160, %v3328
    %3330 = vmatmul.bf16.gmra.mxu0 %v2891
    %v3331 = vpop.f32.mrf.mxu0
    %v3332 = vadd.f32 %v3163, %v3331
    %v3333 = vpop.f32.mrf.mxu0
    %v3334 = vadd.f32 %v3165, %v3333
    %3335 = vmatmul.bf16.gmra.mxu0 %v2895
    %v3336 = vpop.f32.mrf.mxu0
    %v3337 = vadd.f32 %v3168, %v3336
    %v3338 = vpop.f32.mrf.mxu0
    %v3339 = vadd.f32 %v3170, %v3338
    %3340 = vmatmul.bf16.gmra.mxu0 %v2899
    %v3341 = vpop.f32.mrf.mxu0
    %v3342 = vadd.f32 %v3173, %v3341
    %v3343 = vpop.f32.mrf.mxu0
    %v3344 = vadd.f32 %v3175, %v3343
    %3345 = vmatmul.bf16.gmra.mxu0 %v2903
    %v3346 = vpop.f32.mrf.mxu0
    %v3347 = vadd.f32 %v3178, %v3346
    %v3348 = vpop.f32.mrf.mxu0
    %v3349 = vadd.f32 %v3180, %v3348
    %3350 = vmatmul.bf16.gmra.mxu0 %v2907
    %v3351 = vpop.f32.mrf.mxu0
    %v3352 = vadd.f32 %v3183, %v3351
    %v3353 = vpop.f32.mrf.mxu0
    %v3354 = vadd.f32 %v3185, %v3353
    %3355 = vmatmul.bf16.gmra.mxu0 %v2911
    %v3356 = vpop.f32.mrf.mxu0
    %v3357 = vadd.f32 %v3188, %v3356
    %v3358 = vpop.f32.mrf.mxu0
    %v3359 = vadd.f32 %v3190, %v3358
    %3360 = vmatmul.bf16.gmra.mxu0 %v2915
    %v3361 = vpop.f32.mrf.mxu0
    %v3362 = vadd.f32 %v3193, %v3361
    %v3363 = vpop.f32.mrf.mxu0
    %v3364 = vadd.f32 %v3195, %v3363
    %3365 = vmatmul.bf16.gmra.mxu0 %v2919
    %v3366 = vpop.f32.mrf.mxu0
    %v3367 = vadd.f32 %v3198, %v3366
    %v3368 = vpop.f32.mrf.mxu0
    %v3369 = vadd.f32 %v3200, %v3368
    %3370 = vmatmul.bf16.gmra.mxu0 %v2923
    %v3371 = vpop.f32.mrf.mxu0
    %v3372 = vadd.f32 %v3203, %v3371
    %v3373 = vpop.f32.mrf.mxu0
    %v3374 = vadd.f32 %v3205, %v3373
    %3375 = vmatmul.bf16.gmra.mxu0 %v2927
    %v3376 = vpop.f32.mrf.mxu0
    %v3377 = vadd.f32 %v3208, %v3376
    %v3378 = vpop.f32.mrf.mxu0
    %v3379 = vadd.f32 %v3210, %v3378
    %3380 = vmatmul.bf16.gmra.mxu0 %v2931
    %v3381 = vpop.f32.mrf.mxu0
    %v3382 = vadd.f32 %v3213, %v3381
    %v3383 = vpop.f32.mrf.mxu0
    %v3384 = vadd.f32 %v3215, %v3383
    %3385 = vmatmul.bf16.gmra.mxu0 %v2935
    %v3386 = vpop.f32.mrf.mxu0
    %v3387 = vadd.f32 %v3218, %v3386
    %v3388 = vpop.f32.mrf.mxu0
    %v3389 = vadd.f32 %v3220, %v3388
    %3390 = vmatmul.bf16.gmra.mxu0 %v2939
    %v3391 = vpop.f32.mrf.mxu0
    %v3392 = vadd.f32 %v3223, %v3391
    %v3393 = vpop.f32.mrf.mxu0
    %v3394 = vadd.f32 %v3225, %v3393
    %3395 = vmatmul.bf16.gmra.mxu0 %v2943
    %v3396 = vpop.f32.mrf.mxu0
    %v3397 = vadd.f32 %v3228, %v3396
    %v3398 = vpop.f32.mrf.mxu0
    %v3399 = vadd.f32 %v3230, %v3398
    %3400 = vmatmul.bf16.gmra.mxu0 %v2947
    %v3401 = vpop.f32.mrf.mxu0
    %v3402 = vadd.f32 %v3233, %v3401
    %v3403 = vpop.f32.mrf.mxu0
    %v3404 = vadd.f32 %v3235, %v3403
    %3405 = vmatmul.bf16.gmra.mxu0 %v2951
    %v3406 = vpop.f32.mrf.mxu0
    %v3407 = vadd.f32 %v3238, %v3406
    %v3408 = vpop.f32.mrf.mxu0
    %v3409 = vadd.f32 %v3240, %v3408
    %3410 = vmatmul.bf16.gmra.mxu0 %v2955
    %v3411 = vpop.f32.mrf.mxu0
    %v3412 = vadd.f32 %v3243, %v3411
    %v3413 = vpop.f32.mrf.mxu0
    %v3414 = vadd.f32 %v3245, %v3413
    %3415 = vmatmul.bf16.gmra.mxu0 %v2959
    %v3416 = vpop.f32.mrf.mxu0
    %v3417 = vadd.f32 %v3248, %v3416
    %v3418 = vpop.f32.mrf.mxu0
    %v3419 = vadd.f32 %v3250, %v3418
    %3420 = vmatmul.bf16.gmra.mxu0 %v2963
    %v3421 = vpop.f32.mrf.mxu0
    %v3422 = vadd.f32 %v3253, %v3421
    %v3423 = vpop.f32.mrf.mxu0
    %v3424 = vadd.f32 %v3255, %v3423
    %3425 = vmatmul.bf16.gmra.mxu0 %v2967
    %v3426 = vpop.f32.mrf.mxu0
    %v3427 = vadd.f32 %v3258, %v3426
    %v3428 = vpop.f32.mrf.mxu0
    %v3429 = vadd.f32 %v3260, %v3428
    %3430 = vmatmul.bf16.gmra.mxu0 %v2971
    %v3431 = vpop.f32.mrf.mxu0
    %v3432 = vadd.f32 %v3263, %v3431
    %v3433 = vpop.f32.mrf.mxu0
    %v3434 = vadd.f32 %v3265, %v3433
    %3435 = vmatmul.bf16.gmra.mxu0 %v2975
    %v3436 = vpop.f32.mrf.mxu0
    %v3437 = vadd.f32 %v3268, %v3436
    %v3438 = vpop.f32.mrf.mxu0
    %v3439 = vadd.f32 %v3270, %v3438
    %3440 = vmatmul.bf16.gmra.mxu0 %v2979
    %v3441 = vpop.f32.mrf.mxu0
    %v3442 = vadd.f32 %v3273, %v3441
    %v3443 = vpop.f32.mrf.mxu0
    %v3444 = vadd.f32 %v3275, %v3443
    %3445 = vmatmul.bf16.gmra.mxu0 %v2983
    %v3446 = vpop.f32.mrf.mxu0
    %v3447 = vadd.f32 %v3278, %v3446
    %v3448 = vpop.f32.mrf.mxu0
    %v3449 = vadd.f32 %v3280, %v3448
    %3450 = vmatmul.bf16.gmra.mxu0 %v2987
    %v3451 = vpop.f32.mrf.mxu0
    %v3452 = vadd.f32 %v3283, %v3451
    %v3453 = vpop.f32.mrf.mxu0
    %v3454 = vadd.f32 %v3285, %v3453
    %3455 = vdwg.mxu0
    %3456 = vmatpush.bf16.msra.mxu0 %v2341
    %3457 = vmatpush.bf16.msra.mxu0 %v2340
    %3458 = vmatpush.bf16.msra.mxu0 %v2339
    %3459 = vmatpush.bf16.msra.mxu0 %v2338
    %3460 = vmatpush.bf16.msra.mxu0 %v2337
    %3461 = vmatpush.bf16.msra.mxu0 %v2336
    %3462 = vmatpush.bf16.msra.mxu0 %v2335
    %3463 = vmatpush.bf16.msra.mxu0 %v2334
    %3464 = vmatmul.bf16.gmra.mxu0 %v2864
    %v3465 = vpop.f32.mrf.mxu0
    %v3466 = vadd.f32 %v3297, %v3465
    %v3467 = vpop.f32.mrf.mxu0
    %v3468 = vadd.f32 %v3299, %v3467
    %3469 = vmatmul.bf16.gmra.mxu0 %v2868
    %v3470 = vpop.f32.mrf.mxu0
    %v3471 = vadd.f32 %v3302, %v3470
    %v3472 = vpop.f32.mrf.mxu0
    %v3473 = vadd.f32 %v3304, %v3472
    %3474 = vmatmul.bf16.gmra.mxu0 %v2872
    %v3475 = vpop.f32.mrf.mxu0
    %v3476 = vadd.f32 %v3307, %v3475
    %v3477 = vpop.f32.mrf.mxu0
    %v3478 = vadd.f32 %v3309, %v3477
    %3479 = vmatmul.bf16.gmra.mxu0 %v2876
    %v3480 = vpop.f32.mrf.mxu0
    %v3481 = vadd.f32 %v3312, %v3480
    %v3482 = vpop.f32.mrf.mxu0
    %v3483 = vadd.f32 %v3314, %v3482
    %3484 = vmatmul.bf16.gmra.mxu0 %v2880
    %v3485 = vpop.f32.mrf.mxu0
    %v3486 = vadd.f32 %v3317, %v3485
    %v3487 = vpop.f32.mrf.mxu0
    %v3488 = vadd.f32 %v3319, %v3487
    %3489 = vmatmul.bf16.gmra.mxu0 %v2884
    %v3490 = vpop.f32.mrf.mxu0
    %v3491 = vadd.f32 %v3322, %v3490
    %v3492 = vpop.f32.mrf.mxu0
    %v3493 = vadd.f32 %v3324, %v3492
    %3494 = vmatmul.bf16.gmra.mxu0 %v2888
    %v3495 = vpop.f32.mrf.mxu0
    %v3496 = vadd.f32 %v3327, %v3495
    %v3497 = vpop.f32.mrf.mxu0
    %v3498 = vadd.f32 %v3329, %v3497
    %3499 = vmatmul.bf16.gmra.mxu0 %v2892
    %v3500 = vpop.f32.mrf.mxu0
    %v3501 = vadd.f32 %v3332, %v3500
    %v3502 = vpop.f32.mrf.mxu0
    %v3503 = vadd.f32 %v3334, %v3502
    %3504 = vmatmul.bf16.gmra.mxu0 %v2896
    %v3505 = vpop.f32.mrf.mxu0
    %v3506 = vadd.f32 %v3337, %v3505
    %v3507 = vpop.f32.mrf.mxu0
    %v3508 = vadd.f32 %v3339, %v3507
    %3509 = vmatmul.bf16.gmra.mxu0 %v2900
    %v3510 = vpop.f32.mrf.mxu0
    %v3511 = vadd.f32 %v3342, %v3510
    %v3512 = vpop.f32.mrf.mxu0
    %v3513 = vadd.f32 %v3344, %v3512
    %3514 = vmatmul.bf16.gmra.mxu0 %v2904
    %v3515 = vpop.f32.mrf.mxu0
    %v3516 = vadd.f32 %v3347, %v3515
    %v3517 = vpop.f32.mrf.mxu0
    %v3518 = vadd.f32 %v3349, %v3517
    %3519 = vmatmul.bf16.gmra.mxu0 %v2908
    %v3520 = vpop.f32.mrf.mxu0
    %v3521 = vadd.f32 %v3352, %v3520
    %v3522 = vpop.f32.mrf.mxu0
    %v3523 = vadd.f32 %v3354, %v3522
    %3524 = vmatmul.bf16.gmra.mxu0 %v2912
    %v3525 = vpop.f32.mrf.mxu0
    %v3526 = vadd.f32 %v3357, %v3525
    %v3527 = vpop.f32.mrf.mxu0
    %v3528 = vadd.f32 %v3359, %v3527
    %3529 = vmatmul.bf16.gmra.mxu0 %v2916
    %v3530 = vpop.f32.mrf.mxu0
    %v3531 = vadd.f32 %v3362, %v3530
    %v3532 = vpop.f32.mrf.mxu0
    %v3533 = vadd.f32 %v3364, %v3532
    %3534 = vmatmul.bf16.gmra.mxu0 %v2920
    %v3535 = vpop.f32.mrf.mxu0
    %v3536 = vadd.f32 %v3367, %v3535
    %v3537 = vpop.f32.mrf.mxu0
    %v3538 = vadd.f32 %v3369, %v3537
    %3539 = vmatmul.bf16.gmra.mxu0 %v2924
    %v3540 = vpop.f32.mrf.mxu0
    %v3541 = vadd.f32 %v3372, %v3540
    %v3542 = vpop.f32.mrf.mxu0
    %v3543 = vadd.f32 %v3374, %v3542
    %3544 = vmatmul.bf16.gmra.mxu0 %v2928
    %v3545 = vpop.f32.mrf.mxu0
    %v3546 = vadd.f32 %v3377, %v3545
    %v3547 = vpop.f32.mrf.mxu0
    %v3548 = vadd.f32 %v3379, %v3547
    %3549 = vmatmul.bf16.gmra.mxu0 %v2932
    %v3550 = vpop.f32.mrf.mxu0
    %v3551 = vadd.f32 %v3382, %v3550
    %v3552 = vpop.f32.mrf.mxu0
    %v3553 = vadd.f32 %v3384, %v3552
    %3554 = vmatmul.bf16.gmra.mxu0 %v2936
    %v3555 = vpop.f32.mrf.mxu0
    %v3556 = vadd.f32 %v3387, %v3555
    %v3557 = vpop.f32.mrf.mxu0
    %v3558 = vadd.f32 %v3389, %v3557
    %3559 = vmatmul.bf16.gmra.mxu0 %v2940
    %v3560 = vpop.f32.mrf.mxu0
    %v3561 = vadd.f32 %v3392, %v3560
    %v3562 = vpop.f32.mrf.mxu0
    %v3563 = vadd.f32 %v3394, %v3562
    %3564 = vmatmul.bf16.gmra.mxu0 %v2944
    %v3565 = vpop.f32.mrf.mxu0
    %v3566 = vadd.f32 %v3397, %v3565
    %v3567 = vpop.f32.mrf.mxu0
    %v3568 = vadd.f32 %v3399, %v3567
    %3569 = vmatmul.bf16.gmra.mxu0 %v2948
    %v3570 = vpop.f32.mrf.mxu0
    %v3571 = vadd.f32 %v3402, %v3570
    %v3572 = vpop.f32.mrf.mxu0
    %v3573 = vadd.f32 %v3404, %v3572
    %3574 = vmatmul.bf16.gmra.mxu0 %v2952
    %v3575 = vpop.f32.mrf.mxu0
    %v3576 = vadd.f32 %v3407, %v3575
    %v3577 = vpop.f32.mrf.mxu0
    %v3578 = vadd.f32 %v3409, %v3577
    %3579 = vmatmul.bf16.gmra.mxu0 %v2956
    %v3580 = vpop.f32.mrf.mxu0
    %v3581 = vadd.f32 %v3412, %v3580
    %v3582 = vpop.f32.mrf.mxu0
    %v3583 = vadd.f32 %v3414, %v3582
    %3584 = vmatmul.bf16.gmra.mxu0 %v2960
    %v3585 = vpop.f32.mrf.mxu0
    %v3586 = vadd.f32 %v3417, %v3585
    %v3587 = vpop.f32.mrf.mxu0
    %v3588 = vadd.f32 %v3419, %v3587
    %3589 = vmatmul.bf16.gmra.mxu0 %v2964
    %v3590 = vpop.f32.mrf.mxu0
    %v3591 = vadd.f32 %v3422, %v3590
    %v3592 = vpop.f32.mrf.mxu0
    %v3593 = vadd.f32 %v3424, %v3592
    %3594 = vmatmul.bf16.gmra.mxu0 %v2968
    %v3595 = vpop.f32.mrf.mxu0
    %v3596 = vadd.f32 %v3427, %v3595
    %v3597 = vpop.f32.mrf.mxu0
    %v3598 = vadd.f32 %v3429, %v3597
    %3599 = vmatmul.bf16.gmra.mxu0 %v2972
    %v3600 = vpop.f32.mrf.mxu0
    %v3601 = vadd.f32 %v3432, %v3600
    %v3602 = vpop.f32.mrf.mxu0
    %v3603 = vadd.f32 %v3434, %v3602
    %3604 = vmatmul.bf16.gmra.mxu0 %v2976
    %v3605 = vpop.f32.mrf.mxu0
    %v3606 = vadd.f32 %v3437, %v3605
    %v3607 = vpop.f32.mrf.mxu0
    %v3608 = vadd.f32 %v3439, %v3607
    %3609 = vmatmul.bf16.gmra.mxu0 %v2980
    %v3610 = vpop.f32.mrf.mxu0
    %v3611 = vadd.f32 %v3442, %v3610
    %v3612 = vpop.f32.mrf.mxu0
    %v3613 = vadd.f32 %v3444, %v3612
    %3614 = vmatmul.bf16.gmra.mxu0 %v2984
    %v3615 = vpop.f32.mrf.mxu0
    %v3616 = vadd.f32 %v3447, %v3615
    %v3617 = vpop.f32.mrf.mxu0
    %v3618 = vadd.f32 %v3449, %v3617
    %3619 = vmatmul.bf16.gmra.mxu0 %v2988
    %v3620 = vpop.f32.mrf.mxu0
    %v3621 = vadd.f32 %v3452, %v3620
    %v3622 = vpop.f32.mrf.mxu0
    %v3623 = vadd.f32 %v3454, %v3622
    %3624 = vdwg.mxu0
    %3625 = vmatpush.bf16.msra.mxu0 %v2349
    %3626 = vmatpush.bf16.msra.mxu0 %v2348
    %3627 = vmatpush.bf16.msra.mxu0 %v2347
    %3628 = vmatpush.bf16.msra.mxu0 %v2346
    %3629 = vmatpush.bf16.msra.mxu0 %v2345
    %3630 = vmatpush.bf16.msra.mxu0 %v2344
    %3631 = vmatpush.bf16.msra.mxu0 %v2343
    %3632 = vmatpush.bf16.msra.mxu0 %v2342
    %3633 = vmatmul.bf16.gmra.mxu0 %v2865
    %v3634 = vpop.f32.mrf.mxu0
    %v3635 = vadd.f32 %v3466, %v3634
    %v3636 = vpop.f32.mrf.mxu0
    %v3637 = vadd.f32 %v3468, %v3636
    %3638 = vmatmul.bf16.gmra.mxu0 %v2869
    %v3639 = vpop.f32.mrf.mxu0
    %v3640 = vadd.f32 %v3471, %v3639
    %v3641 = vpop.f32.mrf.mxu0
    %v3642 = vadd.f32 %v3473, %v3641
    %3643 = vmatmul.bf16.gmra.mxu0 %v2873
    %v3644 = vpop.f32.mrf.mxu0
    %v3645 = vadd.f32 %v3476, %v3644
    %v3646 = vpop.f32.mrf.mxu0
    %v3647 = vadd.f32 %v3478, %v3646
    %3648 = vmatmul.bf16.gmra.mxu0 %v2877
    %v3649 = vpop.f32.mrf.mxu0
    %v3650 = vadd.f32 %v3481, %v3649
    %v3651 = vpop.f32.mrf.mxu0
    %v3652 = vadd.f32 %v3483, %v3651
    %3653 = vmatmul.bf16.gmra.mxu0 %v2881
    %v3654 = vpop.f32.mrf.mxu0
    %v3655 = vadd.f32 %v3486, %v3654
    %v3656 = vpop.f32.mrf.mxu0
    %v3657 = vadd.f32 %v3488, %v3656
    %3658 = vmatmul.bf16.gmra.mxu0 %v2885
    %v3659 = vpop.f32.mrf.mxu0
    %v3660 = vadd.f32 %v3491, %v3659
    %v3661 = vpop.f32.mrf.mxu0
    %v3662 = vadd.f32 %v3493, %v3661
    %3663 = vmatmul.bf16.gmra.mxu0 %v2889
    %v3664 = vpop.f32.mrf.mxu0
    %v3665 = vadd.f32 %v3496, %v3664
    %v3666 = vpop.f32.mrf.mxu0
    %v3667 = vadd.f32 %v3498, %v3666
    %3668 = vmatmul.bf16.gmra.mxu0 %v2893
    %v3669 = vpop.f32.mrf.mxu0
    %v3670 = vadd.f32 %v3501, %v3669
    %v3671 = vpop.f32.mrf.mxu0
    %v3672 = vadd.f32 %v3503, %v3671
    %3673 = vmatmul.bf16.gmra.mxu0 %v2897
    %v3674 = vpop.f32.mrf.mxu0
    %v3675 = vadd.f32 %v3506, %v3674
    %v3676 = vpop.f32.mrf.mxu0
    %v3677 = vadd.f32 %v3508, %v3676
    %3678 = vmatmul.bf16.gmra.mxu0 %v2901
    %v3679 = vpop.f32.mrf.mxu0
    %v3680 = vadd.f32 %v3511, %v3679
    %v3681 = vpop.f32.mrf.mxu0
    %v3682 = vadd.f32 %v3513, %v3681
    %3683 = vmatmul.bf16.gmra.mxu0 %v2905
    %v3684 = vpop.f32.mrf.mxu0
    %v3685 = vadd.f32 %v3516, %v3684
    %v3686 = vpop.f32.mrf.mxu0
    %v3687 = vadd.f32 %v3518, %v3686
    %3688 = vmatmul.bf16.gmra.mxu0 %v2909
    %v3689 = vpop.f32.mrf.mxu0
    %v3690 = vadd.f32 %v3521, %v3689
    %v3691 = vpop.f32.mrf.mxu0
    %v3692 = vadd.f32 %v3523, %v3691
    %3693 = vmatmul.bf16.gmra.mxu0 %v2913
    %v3694 = vpop.f32.mrf.mxu0
    %v3695 = vadd.f32 %v3526, %v3694
    %v3696 = vpop.f32.mrf.mxu0
    %v3697 = vadd.f32 %v3528, %v3696
    %3698 = vmatmul.bf16.gmra.mxu0 %v2917
    %v3699 = vpop.f32.mrf.mxu0
    %v3700 = vadd.f32 %v3531, %v3699
    %v3701 = vpop.f32.mrf.mxu0
    %v3702 = vadd.f32 %v3533, %v3701
    %3703 = vmatmul.bf16.gmra.mxu0 %v2921
    %v3704 = vpop.f32.mrf.mxu0
    %v3705 = vadd.f32 %v3536, %v3704
    %v3706 = vpop.f32.mrf.mxu0
    %v3707 = vadd.f32 %v3538, %v3706
    %3708 = vmatmul.bf16.gmra.mxu0 %v2925
    %v3709 = vpop.f32.mrf.mxu0
    %v3710 = vadd.f32 %v3541, %v3709
    %v3711 = vpop.f32.mrf.mxu0
    %v3712 = vadd.f32 %v3543, %v3711
    %3713 = vmatmul.bf16.gmra.mxu0 %v2929
    %v3714 = vpop.f32.mrf.mxu0
    %v3715 = vadd.f32 %v3546, %v3714
    %v3716 = vpop.f32.mrf.mxu0
    %v3717 = vadd.f32 %v3548, %v3716
    %3718 = vmatmul.bf16.gmra.mxu0 %v2933
    %v3719 = vpop.f32.mrf.mxu0
    %v3720 = vadd.f32 %v3551, %v3719
    %v3721 = vpop.f32.mrf.mxu0
    %v3722 = vadd.f32 %v3553, %v3721
    %3723 = vmatmul.bf16.gmra.mxu0 %v2937
    %v3724 = vpop.f32.mrf.mxu0
    %v3725 = vadd.f32 %v3556, %v3724
    %v3726 = vpop.f32.mrf.mxu0
    %v3727 = vadd.f32 %v3558, %v3726
    %3728 = vmatmul.bf16.gmra.mxu0 %v2941
    %v3729 = vpop.f32.mrf.mxu0
    %v3730 = vadd.f32 %v3561, %v3729
    %v3731 = vpop.f32.mrf.mxu0
    %v3732 = vadd.f32 %v3563, %v3731
    %3733 = vmatmul.bf16.gmra.mxu0 %v2945
    %v3734 = vpop.f32.mrf.mxu0
    %v3735 = vadd.f32 %v3566, %v3734
    %v3736 = vpop.f32.mrf.mxu0
    %v3737 = vadd.f32 %v3568, %v3736
    %3738 = vmatmul.bf16.gmra.mxu0 %v2949
    %v3739 = vpop.f32.mrf.mxu0
    %v3740 = vadd.f32 %v3571, %v3739
    %v3741 = vpop.f32.mrf.mxu0
    %v3742 = vadd.f32 %v3573, %v3741
    %3743 = vmatmul.bf16.gmra.mxu0 %v2953
    %v3744 = vpop.f32.mrf.mxu0
    %v3745 = vadd.f32 %v3576, %v3744
    %v3746 = vpop.f32.mrf.mxu0
    %v3747 = vadd.f32 %v3578, %v3746
    %3748 = vmatmul.bf16.gmra.mxu0 %v2957
    %v3749 = vpop.f32.mrf.mxu0
    %v3750 = vadd.f32 %v3581, %v3749
    %v3751 = vpop.f32.mrf.mxu0
    %v3752 = vadd.f32 %v3583, %v3751
    %3753 = vmatmul.bf16.gmra.mxu0 %v2961
    %v3754 = vpop.f32.mrf.mxu0
    %v3755 = vadd.f32 %v3586, %v3754
    %v3756 = vpop.f32.mrf.mxu0
    %v3757 = vadd.f32 %v3588, %v3756
    %3758 = vmatmul.bf16.gmra.mxu0 %v2965
    %v3759 = vpop.f32.mrf.mxu0
    %v3760 = vadd.f32 %v3591, %v3759
    %v3761 = vpop.f32.mrf.mxu0
    %v3762 = vadd.f32 %v3593, %v3761
    %3763 = vmatmul.bf16.gmra.mxu0 %v2969
    %v3764 = vpop.f32.mrf.mxu0
    %v3765 = vadd.f32 %v3596, %v3764
    %v3766 = vpop.f32.mrf.mxu0
    %v3767 = vadd.f32 %v3598, %v3766
    %3768 = vmatmul.bf16.gmra.mxu0 %v2973
    %v3769 = vpop.f32.mrf.mxu0
    %v3770 = vadd.f32 %v3601, %v3769
    %v3771 = vpop.f32.mrf.mxu0
    %v3772 = vadd.f32 %v3603, %v3771
    %3773 = vmatmul.bf16.gmra.mxu0 %v2977
    %v3774 = vpop.f32.mrf.mxu0
    %v3775 = vadd.f32 %v3606, %v3774
    %v3776 = vpop.f32.mrf.mxu0
    %v3777 = vadd.f32 %v3608, %v3776
    %3778 = vmatmul.bf16.gmra.mxu0 %v2981
    %v3779 = vpop.f32.mrf.mxu0
    %v3780 = vadd.f32 %v3611, %v3779
    %v3781 = vpop.f32.mrf.mxu0
    %v3782 = vadd.f32 %v3613, %v3781
    %3783 = vmatmul.bf16.gmra.mxu0 %v2985
    %v3784 = vpop.f32.mrf.mxu0
    %v3785 = vadd.f32 %v3616, %v3784
    %v3786 = vpop.f32.mrf.mxu0
    %v3787 = vadd.f32 %v3618, %v3786
    %3788 = vmatmul.bf16.gmra.mxu0 %v2989
    %v3789 = vpop.f32.mrf.mxu0
    %v3790 = vadd.f32 %v3621, %v3789
    %v3791 = vpop.f32.mrf.mxu0
    %v3792 = vadd.f32 %v3623, %v3791
    %3793 = vdwg.mxu0
    %v3794 = vpack.c.bf16 %v3637, %v3635
    %v3795 = vpack.c.bf16 %v3642, %v3640
    %v3796 = vpack.c.bf16 %v3647, %v3645
    %v3797 = vpack.c.bf16 %v3652, %v3650
    %v3798 = vpack.c.bf16 %v3657, %v3655
    %v3799 = vpack.c.bf16 %v3662, %v3660
    %v3800 = vpack.c.bf16 %v3667, %v3665
    %v3801 = vpack.c.bf16 %v3672, %v3670
    %v3802 = vpack.c.bf16 %v3677, %v3675
    %v3803 = vpack.c.bf16 %v3682, %v3680
    %v3804 = vpack.c.bf16 %v3687, %v3685
    %v3805 = vpack.c.bf16 %v3692, %v3690
    %v3806 = vpack.c.bf16 %v3697, %v3695
    %v3807 = vpack.c.bf16 %v3702, %v3700
    %v3808 = vpack.c.bf16 %v3707, %v3705
    %v3809 = vpack.c.bf16 %v3712, %v3710
    %v3810 = vpack.c.bf16 %v3717, %v3715
    %v3811 = vpack.c.bf16 %v3722, %v3720
    %v3812 = vpack.c.bf16 %v3727, %v3725
    %v3813 = vpack.c.bf16 %v3732, %v3730
    %v3814 = vpack.c.bf16 %v3737, %v3735
    %v3815 = vpack.c.bf16 %v3742, %v3740
    %v3816 = vpack.c.bf16 %v3747, %v3745
    %v3817 = vpack.c.bf16 %v3752, %v3750
    %v3818 = vpack.c.bf16 %v3757, %v3755
    %v3819 = vpack.c.bf16 %v3762, %v3760
    %v3820 = vpack.c.bf16 %v3767, %v3765
    %v3821 = vpack.c.bf16 %v3772, %v3770
    %v3822 = vpack.c.bf16 %v3777, %v3775
    %v3823 = vpack.c.bf16 %v3782, %v3780
    %v3824 = vpack.c.bf16 %v3787, %v3785
    %v3825 = vpack.c.bf16 %v3792, %v3790
    %s3826 = scalar_lea.vmem [#allocation9], 64
    %v3827 = vld [vmem:[%s3826] sm:$0xf]
    %v3828 = vld [vmem:[%s3826 + $0x4] sm:$0xf]
    %v3829 = vld [vmem:[%s3826 + $0x8] sm:$0xf]
    %v3830 = vld [vmem:[%s3826 + $0xc] sm:$0xf]
    %v3831 = vld [vmem:[%s3826 + $0x10] sm:$0xf]
    %v3832 = vld [vmem:[%s3826 + $0x14] sm:$0xf]
    %v3833 = vld [vmem:[%s3826 + $0x18] sm:$0xf]
    %v3834 = vld [vmem:[%s3826 + $0x1c] sm:$0xf]
    %v3835 = vld [vmem:[%s3826 + $0x20] sm:$0xf]
    %v3836 = vld [vmem:[%s3826 + $0x24] sm:$0xf]
    %v3837 = vld [vmem:[%s3826 + $0x28] sm:$0xf]
    %v3838 = vld [vmem:[%s3826 + $0x2c] sm:$0xf]
    %v3839 = vld [vmem:[%s3826 + $0x30] sm:$0xf]
    %v3840 = vld [vmem:[%s3826 + $0x34] sm:$0xf]
    %v3841 = vld [vmem:[%s3826 + $0x38] sm:$0xf]
    %v3842 = vld [vmem:[%s3826 + $0x3c] sm:$0xf]
    %s3843 = scalar_lea.vmem %s4, 1
    %v3844 = vld [vmem:[%s3843] sm:$0x1]
    %v3846 = vperm.slane %v3844, 0
    %v3864 = vunpack.c.l.b16 %v3827
    %v3865 = vunpack.c.l.b16 %v3828
    %v3866 = vunpack.c.l.b16 %v3829
    %v3867 = vunpack.c.l.b16 %v3830
    %v3868 = vunpack.c.l.b16 %v3831
    %v3869 = vunpack.c.l.b16 %v3832
    %v3870 = vunpack.c.l.b16 %v3833
    %v3871 = vunpack.c.l.b16 %v3834
    %v3872 = vunpack.c.l.b16 %v3835
    %v3873 = vunpack.c.l.b16 %v3836
    %v3874 = vunpack.c.l.b16 %v3837
    %v3875 = vunpack.c.l.b16 %v3838
    %v3876 = vunpack.c.l.b16 %v3839
    %v3877 = vunpack.c.l.b16 %v3840
    %v3878 = vunpack.c.l.b16 %v3841
    %v3879 = vunpack.c.l.b16 %v3842
    %v3880 = vpack.c.b16 %v3865, %v3864
    %v3881 = vpack.c.b16 %v3867, %v3866
    %v3882 = vpack.c.b16 %v3869, %v3868
    %v3883 = vpack.c.b16 %v3871, %v3870
    %v3884 = vpack.c.b16 %v3873, %v3872
    %v3885 = vpack.c.b16 %v3875, %v3874
    %v3886 = vpack.c.b16 %v3877, %v3876
    %v3887 = vpack.c.b16 %v3879, %v3878
    %3896 = vmatpush.bf16.msra.mxu0 %v3887
    %3897 = vmatpush.bf16.msra.mxu0 %v3886
    %3898 = vmatpush.bf16.msra.mxu0 %v3885
    %3899 = vmatpush.bf16.msra.mxu0 %v3884
    %3900 = vmatpush.bf16.msra.mxu0 %v3883
    %3901 = vmatpush.bf16.msra.mxu0 %v3882
    %3902 = vmatpush.bf16.msra.mxu0 %v3881
    %3903 = vmatpush.bf16.msra.mxu0 %v3880
    %3904 = vmatmul.bf16.gmra.mxu0 %v3794
    %v3905 = vpop.f32.mrf.mxu0
    %v3906 = vadd.f32 %v3846, %v3905
    %v3907 = vpop.f32.mrf.mxu0
    %v3908 = vadd.f32 %v3846, %v3907
    %3909 = vmatmul.bf16.gmra.mxu0 %v3795
    %v3910 = vpop.f32.mrf.mxu0
    %v3911 = vadd.f32 %v3846, %v3910
    %v3912 = vpop.f32.mrf.mxu0
    %v3913 = vadd.f32 %v3846, %v3912
    %3914 = vmatmul.bf16.gmra.mxu0 %v3796
    %v3915 = vpop.f32.mrf.mxu0
    %v3916 = vadd.f32 %v3846, %v3915
    %v3917 = vpop.f32.mrf.mxu0
    %v3918 = vadd.f32 %v3846, %v3917
    %3919 = vmatmul.bf16.gmra.mxu0 %v3797
    %v3920 = vpop.f32.mrf.mxu0
    %v3921 = vadd.f32 %v3846, %v3920
    %v3922 = vpop.f32.mrf.mxu0
    %v3923 = vadd.f32 %v3846, %v3922
    %3924 = vmatmul.bf16.gmra.mxu0 %v3798
    %v3925 = vpop.f32.mrf.mxu0
    %v3926 = vadd.f32 %v3846, %v3925
    %v3927 = vpop.f32.mrf.mxu0
    %v3928 = vadd.f32 %v3846, %v3927
    %3929 = vmatmul.bf16.gmra.mxu0 %v3799
    %v3930 = vpop.f32.mrf.mxu0
    %v3931 = vadd.f32 %v3846, %v3930
    %v3932 = vpop.f32.mrf.mxu0
    %v3933 = vadd.f32 %v3846, %v3932
    %3934 = vmatmul.bf16.gmra.mxu0 %v3800
    %v3935 = vpop.f32.mrf.mxu0
    %v3936 = vadd.f32 %v3846, %v3935
    %v3937 = vpop.f32.mrf.mxu0
    %v3938 = vadd.f32 %v3846, %v3937
    %3939 = vmatmul.bf16.gmra.mxu0 %v3801
    %v3940 = vpop.f32.mrf.mxu0
    %v3941 = vadd.f32 %v3846, %v3940
    %v3942 = vpop.f32.mrf.mxu0
    %v3943 = vadd.f32 %v3846, %v3942
    %3944 = vmatmul.bf16.gmra.mxu0 %v3802
    %v3945 = vpop.f32.mrf.mxu0
    %v3946 = vadd.f32 %v3846, %v3945
    %v3947 = vpop.f32.mrf.mxu0
    %v3948 = vadd.f32 %v3846, %v3947
    %3949 = vmatmul.bf16.gmra.mxu0 %v3803
    %v3950 = vpop.f32.mrf.mxu0
    %v3951 = vadd.f32 %v3846, %v3950
    %v3952 = vpop.f32.mrf.mxu0
    %v3953 = vadd.f32 %v3846, %v3952
    %3954 = vmatmul.bf16.gmra.mxu0 %v3804
    %v3955 = vpop.f32.mrf.mxu0
    %v3956 = vadd.f32 %v3846, %v3955
    %v3957 = vpop.f32.mrf.mxu0
    %v3958 = vadd.f32 %v3846, %v3957
    %3959 = vmatmul.bf16.gmra.mxu0 %v3805
    %v3960 = vpop.f32.mrf.mxu0
    %v3961 = vadd.f32 %v3846, %v3960
    %v3962 = vpop.f32.mrf.mxu0
    %v3963 = vadd.f32 %v3846, %v3962
    %3964 = vmatmul.bf16.gmra.mxu0 %v3806
    %v3965 = vpop.f32.mrf.mxu0
    %v3966 = vadd.f32 %v3846, %v3965
    %v3967 = vpop.f32.mrf.mxu0
    %v3968 = vadd.f32 %v3846, %v3967
    %3969 = vmatmul.bf16.gmra.mxu0 %v3807
    %v3970 = vpop.f32.mrf.mxu0
    %v3971 = vadd.f32 %v3846, %v3970
    %v3972 = vpop.f32.mrf.mxu0
    %v3973 = vadd.f32 %v3846, %v3972
    %3974 = vmatmul.bf16.gmra.mxu0 %v3808
    %v3975 = vpop.f32.mrf.mxu0
    %v3976 = vadd.f32 %v3846, %v3975
    %v3977 = vpop.f32.mrf.mxu0
    %v3978 = vadd.f32 %v3846, %v3977
    %3979 = vmatmul.bf16.gmra.mxu0 %v3809
    %v3980 = vpop.f32.mrf.mxu0
    %v3981 = vadd.f32 %v3846, %v3980
    %v3982 = vpop.f32.mrf.mxu0
    %v3983 = vadd.f32 %v3846, %v3982
    %3984 = vmatmul.bf16.gmra.mxu0 %v3810
    %v3985 = vpop.f32.mrf.mxu0
    %v3986 = vadd.f32 %v3846, %v3985
    %v3987 = vpop.f32.mrf.mxu0
    %v3988 = vadd.f32 %v3846, %v3987
    %3989 = vmatmul.bf16.gmra.mxu0 %v3811
    %v3990 = vpop.f32.mrf.mxu0
    %v3991 = vadd.f32 %v3846, %v3990
    %v3992 = vpop.f32.mrf.mxu0
    %v3993 = vadd.f32 %v3846, %v3992
    %3994 = vmatmul.bf16.gmra.mxu0 %v3812
    %v3995 = vpop.f32.mrf.mxu0
    %v3996 = vadd.f32 %v3846, %v3995
    %v3997 = vpop.f32.mrf.mxu0
    %v3998 = vadd.f32 %v3846, %v3997
    %3999 = vmatmul.bf16.gmra.mxu0 %v3813
    %v4000 = vpop.f32.mrf.mxu0
    %v4001 = vadd.f32 %v3846, %v4000
    %v4002 = vpop.f32.mrf.mxu0
    %v4003 = vadd.f32 %v3846, %v4002
    %4004 = vmatmul.bf16.gmra.mxu0 %v3814
    %v4005 = vpop.f32.mrf.mxu0
    %v4006 = vadd.f32 %v3846, %v4005
    %v4007 = vpop.f32.mrf.mxu0
    %v4008 = vadd.f32 %v3846, %v4007
    %4009 = vmatmul.bf16.gmra.mxu0 %v3815
    %v4010 = vpop.f32.mrf.mxu0
    %v4011 = vadd.f32 %v3846, %v4010
    %v4012 = vpop.f32.mrf.mxu0
    %v4013 = vadd.f32 %v3846, %v4012
    %4014 = vmatmul.bf16.gmra.mxu0 %v3816
    %v4015 = vpop.f32.mrf.mxu0
    %v4016 = vadd.f32 %v3846, %v4015
    %v4017 = vpop.f32.mrf.mxu0
    %v4018 = vadd.f32 %v3846, %v4017
    %4019 = vmatmul.bf16.gmra.mxu0 %v3817
    %v4020 = vpop.f32.mrf.mxu0
    %v4021 = vadd.f32 %v3846, %v4020
    %v4022 = vpop.f32.mrf.mxu0
    %v4023 = vadd.f32 %v3846, %v4022
    %4024 = vmatmul.bf16.gmra.mxu0 %v3818
    %v4025 = vpop.f32.mrf.mxu0
    %v4026 = vadd.f32 %v3846, %v4025
    %v4027 = vpop.f32.mrf.mxu0
    %v4028 = vadd.f32 %v3846, %v4027
    %4029 = vmatmul.bf16.gmra.mxu0 %v3819
    %v4030 = vpop.f32.mrf.mxu0
    %v4031 = vadd.f32 %v3846, %v4030
    %v4032 = vpop.f32.mrf.mxu0
    %v4033 = vadd.f32 %v3846, %v4032
    %4034 = vmatmul.bf16.gmra.mxu0 %v3820
    %v4035 = vpop.f32.mrf.mxu0
    %v4036 = vadd.f32 %v3846, %v4035
    %v4037 = vpop.f32.mrf.mxu0
    %v4038 = vadd.f32 %v3846, %v4037
    %4039 = vmatmul.bf16.gmra.mxu0 %v3821
    %v4040 = vpop.f32.mrf.mxu0
    %v4041 = vadd.f32 %v3846, %v4040
    %v4042 = vpop.f32.mrf.mxu0
    %v4043 = vadd.f32 %v3846, %v4042
    %4044 = vmatmul.bf16.gmra.mxu0 %v3822
    %v4045 = vpop.f32.mrf.mxu0
    %v4046 = vadd.f32 %v3846, %v4045
    %v4047 = vpop.f32.mrf.mxu0
    %v4048 = vadd.f32 %v3846, %v4047
    %4049 = vmatmul.bf16.gmra.mxu0 %v3823
    %v4050 = vpop.f32.mrf.mxu0
    %v4051 = vadd.f32 %v3846, %v4050
    %v4052 = vpop.f32.mrf.mxu0
    %v4053 = vadd.f32 %v3846, %v4052
    %4054 = vmatmul.bf16.gmra.mxu0 %v3824
    %v4055 = vpop.f32.mrf.mxu0
    %v4056 = vadd.f32 %v3846, %v4055
    %v4057 = vpop.f32.mrf.mxu0
    %v4058 = vadd.f32 %v3846, %v4057
    %4059 = vmatmul.bf16.gmra.mxu0 %v3825
    %v4060 = vpop.f32.mrf.mxu0
    %v4061 = vadd.f32 %v3846, %v4060
    %v4062 = vpop.f32.mrf.mxu0
    %v4063 = vadd.f32 %v3846, %v4062
    %4064 = vdwg.mxu0
    %v4065 = vmax.f32 %v3906, 0.0
    %v4066 = vmax.f32 %v3908, 0.0
    %v4067 = vmax.f32 %v3911, 0.0
    %v4068 = vmax.f32 %v3913, 0.0
    %v4069 = vmax.f32 %v3916, 0.0
    %v4070 = vmax.f32 %v3918, 0.0
    %v4071 = vmax.f32 %v3921, 0.0
    %v4072 = vmax.f32 %v3923, 0.0
    %v4073 = vmax.f32 %v3926, 0.0
    %v4074 = vmax.f32 %v3928, 0.0
    %v4075 = vmax.f32 %v3931, 0.0
    %v4076 = vmax.f32 %v3933, 0.0
    %v4077 = vmax.f32 %v3936, 0.0
    %v4078 = vmax.f32 %v3938, 0.0
    %v4079 = vmax.f32 %v3941, 0.0
    %v4080 = vmax.f32 %v3943, 0.0
    %v4081 = vmax.f32 %v3946, 0.0
    %v4082 = vmax.f32 %v3948, 0.0
    %v4083 = vmax.f32 %v3951, 0.0
    %v4084 = vmax.f32 %v3953, 0.0
    %v4085 = vmax.f32 %v3956, 0.0
    %v4086 = vmax.f32 %v3958, 0.0
    %v4087 = vmax.f32 %v3961, 0.0
    %v4088 = vmax.f32 %v3963, 0.0
    %v4089 = vmax.f32 %v3966, 0.0
    %v4090 = vmax.f32 %v3968, 0.0
    %v4091 = vmax.f32 %v3971, 0.0
    %v4092 = vmax.f32 %v3973, 0.0
    %v4093 = vmax.f32 %v3976, 0.0
    %v4094 = vmax.f32 %v3978, 0.0
    %v4095 = vmax.f32 %v3981, 0.0
    %v4096 = vmax.f32 %v3983, 0.0
    %v4097 = vmax.f32 %v3986, 0.0
    %v4098 = vmax.f32 %v3988, 0.0
    %v4099 = vmax.f32 %v3991, 0.0
    %v4100 = vmax.f32 %v3993, 0.0
    %v4101 = vmax.f32 %v3996, 0.0
    %v4102 = vmax.f32 %v3998, 0.0
    %v4103 = vmax.f32 %v4001, 0.0
    %v4104 = vmax.f32 %v4003, 0.0
    %v4105 = vmax.f32 %v4006, 0.0
    %v4106 = vmax.f32 %v4008, 0.0
    %v4107 = vmax.f32 %v4011, 0.0
    %v4108 = vmax.f32 %v4013, 0.0
    %v4109 = vmax.f32 %v4016, 0.0
    %v4110 = vmax.f32 %v4018, 0.0
    %v4111 = vmax.f32 %v4021, 0.0
    %v4112 = vmax.f32 %v4023, 0.0
    %v4113 = vmax.f32 %v4026, 0.0
    %v4114 = vmax.f32 %v4028, 0.0
    %v4115 = vmax.f32 %v4031, 0.0
    %v4116 = vmax.f32 %v4033, 0.0
    %v4117 = vmax.f32 %v4036, 0.0
    %v4118 = vmax.f32 %v4038, 0.0
    %v4119 = vmax.f32 %v4041, 0.0
    %v4120 = vmax.f32 %v4043, 0.0
    %v4121 = vmax.f32 %v4046, 0.0
    %v4122 = vmax.f32 %v4048, 0.0
    %v4123 = vmax.f32 %v4051, 0.0
    %v4124 = vmax.f32 %v4053, 0.0
    %v4125 = vmax.f32 %v4056, 0.0
    %v4126 = vmax.f32 %v4058, 0.0
    %v4127 = vmax.f32 %v4061, 0.0
    %v4128 = vmax.f32 %v4063, 0.0
    %v4129 = vadd.f32 %v4065, %v2254
    %v4130 = vadd.f32 %v4066, %v2255
    %v4131 = vadd.f32 %v4067, %v2256
    %v4132 = vadd.f32 %v4068, %v2257
    %v4133 = vadd.f32 %v4069, %v2258
    %v4134 = vadd.f32 %v4070, %v2259
    %v4135 = vadd.f32 %v4071, %v2260
    %v4136 = vadd.f32 %v4072, %v2261
    %v4137 = vadd.f32 %v4073, %v2262
    %v4138 = vadd.f32 %v4074, %v2263
    %v4139 = vadd.f32 %v4075, %v2264
    %v4140 = vadd.f32 %v4076, %v2265
    %v4141 = vadd.f32 %v4077, %v2266
    %v4142 = vadd.f32 %v4078, %v2267
    %v4143 = vadd.f32 %v4079, %v2268
    %v4144 = vadd.f32 %v4080, %v2269
    %v4145 = vadd.f32 %v4081, %v2270
    %v4146 = vadd.f32 %v4082, %v2271
    %v4147 = vadd.f32 %v4083, %v2272
    %v4148 = vadd.f32 %v4084, %v2273
    %v4149 = vadd.f32 %v4085, %v2274
    %v4150 = vadd.f32 %v4086, %v2275
    %v4151 = vadd.f32 %v4087, %v2276
    %v4152 = vadd.f32 %v4088, %v2277
    %v4153 = vadd.f32 %v4089, %v2278
    %v4154 = vadd.f32 %v4090, %v2279
    %v4155 = vadd.f32 %v4091, %v2280
    %v4156 = vadd.f32 %v4092, %v2281
    %v4157 = vadd.f32 %v4093, %v2282
    %v4158 = vadd.f32 %v4094, %v2283
    %v4159 = vadd.f32 %v4095, %v2284
    %v4160 = vadd.f32 %v4096, %v2285
    %v4161 = vadd.f32 %v4097, %v2286
    %v4162 = vadd.f32 %v4098, %v2287
    %v4163 = vadd.f32 %v4099, %v2288
    %v4164 = vadd.f32 %v4100, %v2289
    %v4165 = vadd.f32 %v4101, %v2290
    %v4166 = vadd.f32 %v4102, %v2291
    %v4167 = vadd.f32 %v4103, %v2292
    %v4168 = vadd.f32 %v4104, %v2293
    %v4169 = vadd.f32 %v4105, %v2294
    %v4170 = vadd.f32 %v4106, %v2295
    %v4171 = vadd.f32 %v4107, %v2296
    %v4172 = vadd.f32 %v4108, %v2297
    %v4173 = vadd.f32 %v4109, %v2298
    %v4174 = vadd.f32 %v4110, %v2299
    %v4175 = vadd.f32 %v4111, %v2300
    %v4176 = vadd.f32 %v4112, %v2301
    %v4177 = vadd.f32 %v4113, %v2302
    %v4178 = vadd.f32 %v4114, %v2303
    %v4179 = vadd.f32 %v4115, %v2304
    %v4180 = vadd.f32 %v4116, %v2305
    %v4181 = vadd.f32 %v4117, %v2306
    %v4182 = vadd.f32 %v4118, %v2307
    %v4183 = vadd.f32 %v4119, %v2308
    %v4184 = vadd.f32 %v4120, %v2309
    %v4185 = vadd.f32 %v4121, %v2310
    %v4186 = vadd.f32 %v4122, %v2311
    %v4187 = vadd.f32 %v4123, %v2312
    %v4188 = vadd.f32 %v4124, %v2313
    %v4189 = vadd.f32 %v4125, %v2314
    %v4190 = vadd.f32 %v4126, %v2315
    %v4191 = vadd.f32 %v4127, %v2316
    %v4192 = vadd.f32 %v4128, %v2317
    %4193 = vst [vmem:[#allocation2] sm:$0xff] %v4129
    %4194 = vst [vmem:[#allocation2 + $0x8] sm:$0xff] %v4130
    %4195 = vst [vmem:[#allocation2 + $0x10] sm:$0xff] %v4131
    %4196 = vst [vmem:[#allocation2 + $0x18] sm:$0xff] %v4132
    %4197 = vst [vmem:[#allocation2 + $0x20] sm:$0xff] %v4133
    %4198 = vst [vmem:[#allocation2 + $0x28] sm:$0xff] %v4134
    %4199 = vst [vmem:[#allocation2 + $0x30] sm:$0xff] %v4135
    %4200 = vst [vmem:[#allocation2 + $0x38] sm:$0xff] %v4136
    %4201 = vst [vmem:[#allocation2 + $0x40] sm:$0xff] %v4137
    %4202 = vst [vmem:[#allocation2 + $0x48] sm:$0xff] %v4138
    %4203 = vst [vmem:[#allocation2 + $0x50] sm:$0xff] %v4139
    %4204 = vst [vmem:[#allocation2 + $0x58] sm:$0xff] %v4140
    %4205 = vst [vmem:[#allocation2 + $0x60] sm:$0xff] %v4141
    %4206 = vst [vmem:[#allocation2 + $0x68] sm:$0xff] %v4142
    %4207 = vst [vmem:[#allocation2 + $0x70] sm:$0xff] %v4143
    %4208 = vst [vmem:[#allocation2 + $0x78] sm:$0xff] %v4144
    %4209 = vst [vmem:[#allocation2 + $0x80] sm:$0xff] %v4145
    %4210 = vst [vmem:[#allocation2 + $0x88] sm:$0xff] %v4146
    %4211 = vst [vmem:[#allocation2 + $0x90] sm:$0xff] %v4147
    %4212 = vst [vmem:[#allocation2 + $0x98] sm:$0xff] %v4148
    %4213 = vst [vmem:[#allocation2 + $0xa0] sm:$0xff] %v4149
    %4214 = vst [vmem:[#allocation2 + $0xa8] sm:$0xff] %v4150
    %4215 = vst [vmem:[#allocation2 + $0xb0] sm:$0xff] %v4151
    %4216 = vst [vmem:[#allocation2 + $0xb8] sm:$0xff] %v4152
    %4217 = vst [vmem:[#allocation2 + $0xc0] sm:$0xff] %v4153
    %4218 = vst [vmem:[#allocation2 + $0xc8] sm:$0xff] %v4154
    %4219 = vst [vmem:[#allocation2 + $0xd0] sm:$0xff] %v4155
    %4220 = vst [vmem:[#allocation2 + $0xd8] sm:$0xff] %v4156
    %4221 = vst [vmem:[#allocation2 + $0xe0] sm:$0xff] %v4157
    %4222 = vst [vmem:[#allocation2 + $0xe8] sm:$0xff] %v4158
    %4223 = vst [vmem:[#allocation2 + $0xf0] sm:$0xff] %v4159
    %4224 = vst [vmem:[#allocation2 + $0xf8] sm:$0xff] %v4160
    %4225 = vst [vmem:[#allocation2 + $0x100] sm:$0xff] %v4161
    %4226 = vst [vmem:[#allocation2 + $0x108] sm:$0xff] %v4162
    %4227 = vst [vmem:[#allocation2 + $0x110] sm:$0xff] %v4163
    %4228 = vst [vmem:[#allocation2 + $0x118] sm:$0xff] %v4164
    %4229 = vst [vmem:[#allocation2 + $0x120] sm:$0xff] %v4165
    %4230 = vst [vmem:[#allocation2 + $0x128] sm:$0xff] %v4166
    %4231 = vst [vmem:[#allocation2 + $0x130] sm:$0xff] %v4167
    %4232 = vst [vmem:[#allocation2 + $0x138] sm:$0xff] %v4168
    %4233 = vst [vmem:[#allocation2 + $0x140] sm:$0xff] %v4169
    %4234 = vst [vmem:[#allocation2 + $0x148] sm:$0xff] %v4170
    %4235 = vst [vmem:[#allocation2 + $0x150] sm:$0xff] %v4171
    %4236 = vst [vmem:[#allocation2 + $0x158] sm:$0xff] %v4172
    %4237 = vst [vmem:[#allocation2 + $0x160] sm:$0xff] %v4173
    %4238 = vst [vmem:[#allocation2 + $0x168] sm:$0xff] %v4174
    %4239 = vst [vmem:[#allocation2 + $0x170] sm:$0xff] %v4175
    %4240 = vst [vmem:[#allocation2 + $0x178] sm:$0xff] %v4176
    %4241 = vst [vmem:[#allocation2 + $0x180] sm:$0xff] %v4177
    %4242 = vst [vmem:[#allocation2 + $0x188] sm:$0xff] %v4178
    %4243 = vst [vmem:[#allocation2 + $0x190] sm:$0xff] %v4179
    %4244 = vst [vmem:[#allocation2 + $0x198] sm:$0xff] %v4180
    %4245 = vst [vmem:[#allocation2 + $0x1a0] sm:$0xff] %v4181
    %4246 = vst [vmem:[#allocation2 + $0x1a8] sm:$0xff] %v4182
    %4247 = vst [vmem:[#allocation2 + $0x1b0] sm:$0xff] %v4183
    %4248 = vst [vmem:[#allocation2 + $0x1b8] sm:$0xff] %v4184
    %4249 = vst [vmem:[#allocation2 + $0x1c0] sm:$0xff] %v4185
    %4250 = vst [vmem:[#allocation2 + $0x1c8] sm:$0xff] %v4186
    %4251 = vst [vmem:[#allocation2 + $0x1d0] sm:$0xff] %v4187
    %4252 = vst [vmem:[#allocation2 + $0x1d8] sm:$0xff] %v4188
    %4253 = vst [vmem:[#allocation2 + $0x1e0] sm:$0xff] %v4189
    %4254 = vst [vmem:[#allocation2 + $0x1e8] sm:$0xff] %v4190
    %4255 = vst [vmem:[#allocation2 + $0x1f0] sm:$0xff] %v4191
    %4256 = vst [vmem:[#allocation2 + $0x1f8] sm:$0xff] %v4192
    %v4257 = vld [vmem:[#allocation2] sm:$0xff]
    %v4258 = vld [vmem:[#allocation2 + $0x8] sm:$0xff]
    %v4259 = vld [vmem:[#allocation2 + $0x10] sm:$0xff]
    %v4260 = vld [vmem:[#allocation2 + $0x18] sm:$0xff]
    %v4261 = vld [vmem:[#allocation2 + $0x20] sm:$0xff]
    %v4262 = vld [vmem:[#allocation2 + $0x28] sm:$0xff]
    %v4263 = vld [vmem:[#allocation2 + $0x30] sm:$0xff]
    %v4264 = vld [vmem:[#allocation2 + $0x38] sm:$0xff]
    %v4265 = vld [vmem:[#allocation2 + $0x40] sm:$0xff]
    %v4266 = vld [vmem:[#allocation2 + $0x48] sm:$0xff]
    %v4267 = vld [vmem:[#allocation2 + $0x50] sm:$0xff]
    %v4268 = vld [vmem:[#allocation2 + $0x58] sm:$0xff]
    %v4269 = vld [vmem:[#allocation2 + $0x60] sm:$0xff]
    %v4270 = vld [vmem:[#allocation2 + $0x68] sm:$0xff]
    %v4271 = vld [vmem:[#allocation2 + $0x70] sm:$0xff]
    %v4272 = vld [vmem:[#allocation2 + $0x78] sm:$0xff]
    %v4273 = vld [vmem:[#allocation2 + $0x80] sm:$0xff]
    %v4274 = vld [vmem:[#allocation2 + $0x88] sm:$0xff]
    %v4275 = vld [vmem:[#allocation2 + $0x90] sm:$0xff]
    %v4276 = vld [vmem:[#allocation2 + $0x98] sm:$0xff]
    %v4277 = vld [vmem:[#allocation2 + $0xa0] sm:$0xff]
    %v4278 = vld [vmem:[#allocation2 + $0xa8] sm:$0xff]
    %v4279 = vld [vmem:[#allocation2 + $0xb0] sm:$0xff]
    %v4280 = vld [vmem:[#allocation2 + $0xb8] sm:$0xff]
    %v4281 = vld [vmem:[#allocation2 + $0xc0] sm:$0xff]
    %v4282 = vld [vmem:[#allocation2 + $0xc8] sm:$0xff]
    %v4283 = vld [vmem:[#allocation2 + $0xd0] sm:$0xff]
    %v4284 = vld [vmem:[#allocation2 + $0xd8] sm:$0xff]
    %v4285 = vld [vmem:[#allocation2 + $0xe0] sm:$0xff]
    %v4286 = vld [vmem:[#allocation2 + $0xe8] sm:$0xff]
    %v4287 = vld [vmem:[#allocation2 + $0xf0] sm:$0xff]
    %v4288 = vld [vmem:[#allocation2 + $0xf8] sm:$0xff]
    %v4289 = vld [vmem:[#allocation2 + $0x100] sm:$0xff]
    %v4290 = vld [vmem:[#allocation2 + $0x108] sm:$0xff]
    %v4291 = vld [vmem:[#allocation2 + $0x110] sm:$0xff]
    %v4292 = vld [vmem:[#allocation2 + $0x118] sm:$0xff]
    %v4293 = vld [vmem:[#allocation2 + $0x120] sm:$0xff]
    %v4294 = vld [vmem:[#allocation2 + $0x128] sm:$0xff]
    %v4295 = vld [vmem:[#allocation2 + $0x130] sm:$0xff]
    %v4296 = vld [vmem:[#allocation2 + $0x138] sm:$0xff]
    %v4297 = vld [vmem:[#allocation2 + $0x140] sm:$0xff]
    %v4298 = vld [vmem:[#allocation2 + $0x148] sm:$0xff]
    %v4299 = vld [vmem:[#allocation2 + $0x150] sm:$0xff]
    %v4300 = vld [vmem:[#allocation2 + $0x158] sm:$0xff]
    %v4301 = vld [vmem:[#allocation2 + $0x160] sm:$0xff]
    %v4302 = vld [vmem:[#allocation2 + $0x168] sm:$0xff]
    %v4303 = vld [vmem:[#allocation2 + $0x170] sm:$0xff]
    %v4304 = vld [vmem:[#allocation2 + $0x178] sm:$0xff]
    %v4305 = vld [vmem:[#allocation2 + $0x180] sm:$0xff]
    %v4306 = vld [vmem:[#allocation2 + $0x188] sm:$0xff]
    %v4307 = vld [vmem:[#allocation2 + $0x190] sm:$0xff]
    %v4308 = vld [vmem:[#allocation2 + $0x198] sm:$0xff]
    %v4309 = vld [vmem:[#allocation2 + $0x1a0] sm:$0xff]
    %v4310 = vld [vmem:[#allocation2 + $0x1a8] sm:$0xff]
    %v4311 = vld [vmem:[#allocation2 + $0x1b0] sm:$0xff]
    %v4312 = vld [vmem:[#allocation2 + $0x1b8] sm:$0xff]
    %v4313 = vld [vmem:[#allocation2 + $0x1c0] sm:$0xff]
    %v4314 = vld [vmem:[#allocation2 + $0x1c8] sm:$0xff]
    %v4315 = vld [vmem:[#allocation2 + $0x1d0] sm:$0xff]
    %v4316 = vld [vmem:[#allocation2 + $0x1d8] sm:$0xff]
    %v4317 = vld [vmem:[#allocation2 + $0x1e0] sm:$0xff]
    %v4318 = vld [vmem:[#allocation2 + $0x1e8] sm:$0xff]
    %v4319 = vld [vmem:[#allocation2 + $0x1f0] sm:$0xff]
    %v4320 = vld [vmem:[#allocation2 + $0x1f8] sm:$0xff]
    %v4321 = vpack.c.bf16 %v4258, %v4257
    %v4322 = vpack.c.bf16 %v4260, %v4259
    %v4323 = vpack.c.bf16 %v4262, %v4261
    %v4324 = vpack.c.bf16 %v4264, %v4263
    %v4325 = vpack.c.bf16 %v4266, %v4265
    %v4326 = vpack.c.bf16 %v4268, %v4267
    %v4327 = vpack.c.bf16 %v4270, %v4269
    %v4328 = vpack.c.bf16 %v4272, %v4271
    %v4329 = vpack.c.bf16 %v4274, %v4273
    %v4330 = vpack.c.bf16 %v4276, %v4275
    %v4331 = vpack.c.bf16 %v4278, %v4277
    %v4332 = vpack.c.bf16 %v4280, %v4279
    %v4333 = vpack.c.bf16 %v4282, %v4281
    %v4334 = vpack.c.bf16 %v4284, %v4283
    %v4335 = vpack.c.bf16 %v4286, %v4285
    %v4336 = vpack.c.bf16 %v4288, %v4287
    %v4337 = vpack.c.bf16 %v4290, %v4289
    %v4338 = vpack.c.bf16 %v4292, %v4291
    %v4339 = vpack.c.bf16 %v4294, %v4293
    %v4340 = vpack.c.bf16 %v4296, %v4295
    %v4341 = vpack.c.bf16 %v4298, %v4297
    %v4342 = vpack.c.bf16 %v4300, %v4299
    %v4343 = vpack.c.bf16 %v4302, %v4301
    %v4344 = vpack.c.bf16 %v4304, %v4303
    %v4345 = vpack.c.bf16 %v4306, %v4305
    %v4346 = vpack.c.bf16 %v4308, %v4307
    %v4347 = vpack.c.bf16 %v4310, %v4309
    %v4348 = vpack.c.bf16 %v4312, %v4311
    %v4349 = vpack.c.bf16 %v4314, %v4313
    %v4350 = vpack.c.bf16 %v4316, %v4315
    %v4351 = vpack.c.bf16 %v4318, %v4317
    %v4352 = vpack.c.bf16 %v4320, %v4319
    %v4353 = vld [vmem:[#allocation6] sm:$0xff]
    %v4354 = vld [vmem:[#allocation6 + $0x8] sm:$0xff]
    %v4355 = vld [vmem:[#allocation6 + $0x10] sm:$0xff]
    %v4356 = vld [vmem:[#allocation6 + $0x18] sm:$0xff]
    %v4357 = vld [vmem:[#allocation6 + $0x20] sm:$0xff]
    %v4358 = vld [vmem:[#allocation6 + $0x28] sm:$0xff]
    %v4359 = vld [vmem:[#allocation6 + $0x30] sm:$0xff]
    %v4360 = vld [vmem:[#allocation6 + $0x38] sm:$0xff]
    %v4361 = vld [vmem:[#allocation6 + $0x40] sm:$0xff]
    %v4362 = vld [vmem:[#allocation6 + $0x48] sm:$0xff]
    %v4363 = vld [vmem:[#allocation6 + $0x50] sm:$0xff]
    %v4364 = vld [vmem:[#allocation6 + $0x58] sm:$0xff]
    %v4365 = vld [vmem:[#allocation6 + $0x60] sm:$0xff]
    %v4366 = vld [vmem:[#allocation6 + $0x68] sm:$0xff]
    %v4367 = vld [vmem:[#allocation6 + $0x70] sm:$0xff]
    %v4368 = vld [vmem:[#allocation6 + $0x78] sm:$0xff]
    %v4369 = vld [vmem:[#allocation6 + $0x80] sm:$0xff]
    %v4370 = vld [vmem:[#allocation6 + $0x88] sm:$0xff]
    %v4371 = vld [vmem:[#allocation6 + $0x90] sm:$0xff]
    %v4372 = vld [vmem:[#allocation6 + $0x98] sm:$0xff]
    %v4373 = vld [vmem:[#allocation6 + $0xa0] sm:$0xff]
    %v4374 = vld [vmem:[#allocation6 + $0xa8] sm:$0xff]
    %v4375 = vld [vmem:[#allocation6 + $0xb0] sm:$0xff]
    %v4376 = vld [vmem:[#allocation6 + $0xb8] sm:$0xff]
    %v4377 = vld [vmem:[#allocation6 + $0xc0] sm:$0xff]
    %v4378 = vld [vmem:[#allocation6 + $0xc8] sm:$0xff]
    %v4379 = vld [vmem:[#allocation6 + $0xd0] sm:$0xff]
    %v4380 = vld [vmem:[#allocation6 + $0xd8] sm:$0xff]
    %v4381 = vld [vmem:[#allocation6 + $0xe0] sm:$0xff]
    %v4382 = vld [vmem:[#allocation6 + $0xe8] sm:$0xff]
    %v4383 = vld [vmem:[#allocation6 + $0xf0] sm:$0xff]
    %v4384 = vld [vmem:[#allocation6 + $0xf8] sm:$0xff]
    %v4385 = vld [vmem:[#allocation6 + $0x100] sm:$0xff]
    %v4386 = vld [vmem:[#allocation6 + $0x108] sm:$0xff]
    %v4387 = vld [vmem:[#allocation6 + $0x110] sm:$0xff]
    %v4388 = vld [vmem:[#allocation6 + $0x118] sm:$0xff]
    %v4389 = vld [vmem:[#allocation6 + $0x120] sm:$0xff]
    %v4390 = vld [vmem:[#allocation6 + $0x128] sm:$0xff]
    %v4391 = vld [vmem:[#allocation6 + $0x130] sm:$0xff]
    %v4392 = vld [vmem:[#allocation6 + $0x138] sm:$0xff]
    %v4393 = vld [vmem:[#allocation6 + $0x140] sm:$0xff]
    %v4394 = vld [vmem:[#allocation6 + $0x148] sm:$0xff]
    %v4395 = vld [vmem:[#allocation6 + $0x150] sm:$0xff]
    %v4396 = vld [vmem:[#allocation6 + $0x158] sm:$0xff]
    %v4397 = vld [vmem:[#allocation6 + $0x160] sm:$0xff]
    %v4398 = vld [vmem:[#allocation6 + $0x168] sm:$0xff]
    %v4399 = vld [vmem:[#allocation6 + $0x170] sm:$0xff]
    %v4400 = vld [vmem:[#allocation6 + $0x178] sm:$0xff]
    %v4401 = vld [vmem:[#allocation6 + $0x180] sm:$0xff]
    %v4402 = vld [vmem:[#allocation6 + $0x188] sm:$0xff]
    %v4403 = vld [vmem:[#allocation6 + $0x190] sm:$0xff]
    %v4404 = vld [vmem:[#allocation6 + $0x198] sm:$0xff]
    %v4405 = vld [vmem:[#allocation6 + $0x1a0] sm:$0xff]
    %v4406 = vld [vmem:[#allocation6 + $0x1a8] sm:$0xff]
    %v4407 = vld [vmem:[#allocation6 + $0x1b0] sm:$0xff]
    %v4408 = vld [vmem:[#allocation6 + $0x1b8] sm:$0xff]
    %v4409 = vld [vmem:[#allocation6 + $0x1c0] sm:$0xff]
    %v4410 = vld [vmem:[#allocation6 + $0x1c8] sm:$0xff]
    %v4411 = vld [vmem:[#allocation6 + $0x1d0] sm:$0xff]
    %v4412 = vld [vmem:[#allocation6 + $0x1d8] sm:$0xff]
    %v4413 = vld [vmem:[#allocation6 + $0x1e0] sm:$0xff]
    %v4414 = vld [vmem:[#allocation6 + $0x1e8] sm:$0xff]
    %v4415 = vld [vmem:[#allocation6 + $0x1f0] sm:$0xff]
    %v4416 = vld [vmem:[#allocation6 + $0x1f8] sm:$0xff]
    %v4417 = vld [vmem:[#allocation6 + $0x200] sm:$0xff]
    %v4418 = vld [vmem:[#allocation6 + $0x208] sm:$0xff]
    %v4419 = vld [vmem:[#allocation6 + $0x210] sm:$0xff]
    %v4420 = vld [vmem:[#allocation6 + $0x218] sm:$0xff]
    %v4421 = vld [vmem:[#allocation6 + $0x220] sm:$0xff]
    %v4422 = vld [vmem:[#allocation6 + $0x228] sm:$0xff]
    %v4423 = vld [vmem:[#allocation6 + $0x230] sm:$0xff]
    %v4424 = vld [vmem:[#allocation6 + $0x238] sm:$0xff]
    %v4425 = vld [vmem:[#allocation6 + $0x240] sm:$0xff]
    %v4426 = vld [vmem:[#allocation6 + $0x248] sm:$0xff]
    %v4427 = vld [vmem:[#allocation6 + $0x250] sm:$0xff]
    %v4428 = vld [vmem:[#allocation6 + $0x258] sm:$0xff]
    %v4429 = vld [vmem:[#allocation6 + $0x260] sm:$0xff]
    %v4430 = vld [vmem:[#allocation6 + $0x268] sm:$0xff]
    %v4431 = vld [vmem:[#allocation6 + $0x270] sm:$0xff]
    %v4432 = vld [vmem:[#allocation6 + $0x278] sm:$0xff]
    %v4433 = vld [vmem:[#allocation6 + $0x280] sm:$0xff]
    %v4434 = vld [vmem:[#allocation6 + $0x288] sm:$0xff]
    %v4435 = vld [vmem:[#allocation6 + $0x290] sm:$0xff]
    %v4436 = vld [vmem:[#allocation6 + $0x298] sm:$0xff]
    %v4437 = vld [vmem:[#allocation6 + $0x2a0] sm:$0xff]
    %v4438 = vld [vmem:[#allocation6 + $0x2a8] sm:$0xff]
    %v4439 = vld [vmem:[#allocation6 + $0x2b0] sm:$0xff]
    %v4440 = vld [vmem:[#allocation6 + $0x2b8] sm:$0xff]
    %v4441 = vld [vmem:[#allocation6 + $0x2c0] sm:$0xff]
    %v4442 = vld [vmem:[#allocation6 + $0x2c8] sm:$0xff]
    %v4443 = vld [vmem:[#allocation6 + $0x2d0] sm:$0xff]
    %v4444 = vld [vmem:[#allocation6 + $0x2d8] sm:$0xff]
    %v4445 = vld [vmem:[#allocation6 + $0x2e0] sm:$0xff]
    %v4446 = vld [vmem:[#allocation6 + $0x2e8] sm:$0xff]
    %v4447 = vld [vmem:[#allocation6 + $0x2f0] sm:$0xff]
    %v4448 = vld [vmem:[#allocation6 + $0x2f8] sm:$0xff]
    %v4449 = vld [vmem:[#allocation6 + $0x300] sm:$0xff]
    %v4450 = vld [vmem:[#allocation6 + $0x308] sm:$0xff]
    %v4451 = vld [vmem:[#allocation6 + $0x310] sm:$0xff]
    %v4452 = vld [vmem:[#allocation6 + $0x318] sm:$0xff]
    %v4453 = vld [vmem:[#allocation6 + $0x320] sm:$0xff]
    %v4454 = vld [vmem:[#allocation6 + $0x328] sm:$0xff]
    %v4455 = vld [vmem:[#allocation6 + $0x330] sm:$0xff]
    %v4456 = vld [vmem:[#allocation6 + $0x338] sm:$0xff]
    %v4457 = vld [vmem:[#allocation6 + $0x340] sm:$0xff]
    %v4458 = vld [vmem:[#allocation6 + $0x348] sm:$0xff]
    %v4459 = vld [vmem:[#allocation6 + $0x350] sm:$0xff]
    %v4460 = vld [vmem:[#allocation6 + $0x358] sm:$0xff]
    %v4461 = vld [vmem:[#allocation6 + $0x360] sm:$0xff]
    %v4462 = vld [vmem:[#allocation6 + $0x368] sm:$0xff]
    %v4463 = vld [vmem:[#allocation6 + $0x370] sm:$0xff]
    %v4464 = vld [vmem:[#allocation6 + $0x378] sm:$0xff]
    %v4465 = vld [vmem:[#allocation6 + $0x380] sm:$0xff]
    %v4466 = vld [vmem:[#allocation6 + $0x388] sm:$0xff]
    %v4467 = vld [vmem:[#allocation6 + $0x390] sm:$0xff]
    %v4468 = vld [vmem:[#allocation6 + $0x398] sm:$0xff]
    %v4469 = vld [vmem:[#allocation6 + $0x3a0] sm:$0xff]
    %v4470 = vld [vmem:[#allocation6 + $0x3a8] sm:$0xff]
    %v4471 = vld [vmem:[#allocation6 + $0x3b0] sm:$0xff]
    %v4472 = vld [vmem:[#allocation6 + $0x3b8] sm:$0xff]
    %v4473 = vld [vmem:[#allocation6 + $0x3c0] sm:$0xff]
    %v4474 = vld [vmem:[#allocation6 + $0x3c8] sm:$0xff]
    %v4475 = vld [vmem:[#allocation6 + $0x3d0] sm:$0xff]
    %v4476 = vld [vmem:[#allocation6 + $0x3d8] sm:$0xff]
    %v4477 = vld [vmem:[#allocation6 + $0x3e0] sm:$0xff]
    %v4478 = vld [vmem:[#allocation6 + $0x3e8] sm:$0xff]
    %v4479 = vld [vmem:[#allocation6 + $0x3f0] sm:$0xff]
    %v4480 = vld [vmem:[#allocation6 + $0x3f8] sm:$0xff]
    %v4609 = vunpack.c.l.b16 %v4353
    %v4610 = vunpack.c.h.b16 %v4353
    %v4611 = vunpack.c.l.b16 %v4354
    %v4612 = vunpack.c.h.b16 %v4354
    %v4613 = vunpack.c.l.b16 %v4355
    %v4614 = vunpack.c.h.b16 %v4355
    %v4615 = vunpack.c.l.b16 %v4356
    %v4616 = vunpack.c.h.b16 %v4356
    %v4617 = vunpack.c.l.b16 %v4357
    %v4618 = vunpack.c.h.b16 %v4357
    %v4619 = vunpack.c.l.b16 %v4358
    %v4620 = vunpack.c.h.b16 %v4358
    %v4621 = vunpack.c.l.b16 %v4359
    %v4622 = vunpack.c.h.b16 %v4359
    %v4623 = vunpack.c.l.b16 %v4360
    %v4624 = vunpack.c.h.b16 %v4360
    %v4625 = vunpack.c.l.b16 %v4361
    %v4626 = vunpack.c.h.b16 %v4361
    %v4627 = vunpack.c.l.b16 %v4362
    %v4628 = vunpack.c.h.b16 %v4362
    %v4629 = vunpack.c.l.b16 %v4363
    %v4630 = vunpack.c.h.b16 %v4363
    %v4631 = vunpack.c.l.b16 %v4364
    %v4632 = vunpack.c.h.b16 %v4364
    %v4633 = vunpack.c.l.b16 %v4365
    %v4634 = vunpack.c.h.b16 %v4365
    %v4635 = vunpack.c.l.b16 %v4366
    %v4636 = vunpack.c.h.b16 %v4366
    %v4637 = vunpack.c.l.b16 %v4367
    %v4638 = vunpack.c.h.b16 %v4367
    %v4639 = vunpack.c.l.b16 %v4368
    %v4640 = vunpack.c.h.b16 %v4368
    %v4641 = vunpack.c.l.b16 %v4369
    %v4642 = vunpack.c.h.b16 %v4369
    %v4643 = vunpack.c.l.b16 %v4370
    %v4644 = vunpack.c.h.b16 %v4370
    %v4645 = vunpack.c.l.b16 %v4371
    %v4646 = vunpack.c.h.b16 %v4371
    %v4647 = vunpack.c.l.b16 %v4372
    %v4648 = vunpack.c.h.b16 %v4372
    %v4649 = vunpack.c.l.b16 %v4373
    %v4650 = vunpack.c.h.b16 %v4373
    %v4651 = vunpack.c.l.b16 %v4374
    %v4652 = vunpack.c.h.b16 %v4374
    %v4653 = vunpack.c.l.b16 %v4375
    %v4654 = vunpack.c.h.b16 %v4375
    %v4655 = vunpack.c.l.b16 %v4376
    %v4656 = vunpack.c.h.b16 %v4376
    %v4657 = vunpack.c.l.b16 %v4377
    %v4658 = vunpack.c.h.b16 %v4377
    %v4659 = vunpack.c.l.b16 %v4378
    %v4660 = vunpack.c.h.b16 %v4378
    %v4661 = vunpack.c.l.b16 %v4379
    %v4662 = vunpack.c.h.b16 %v4379
    %v4663 = vunpack.c.l.b16 %v4380
    %v4664 = vunpack.c.h.b16 %v4380
    %v4665 = vunpack.c.l.b16 %v4381
    %v4666 = vunpack.c.h.b16 %v4381
    %v4667 = vunpack.c.l.b16 %v4382
    %v4668 = vunpack.c.h.b16 %v4382
    %v4669 = vunpack.c.l.b16 %v4383
    %v4670 = vunpack.c.h.b16 %v4383
    %v4671 = vunpack.c.l.b16 %v4384
    %v4672 = vunpack.c.h.b16 %v4384
    %v4673 = vunpack.c.l.b16 %v4385
    %v4674 = vunpack.c.h.b16 %v4385
    %v4675 = vunpack.c.l.b16 %v4386
    %v4676 = vunpack.c.h.b16 %v4386
    %v4677 = vunpack.c.l.b16 %v4387
    %v4678 = vunpack.c.h.b16 %v4387
    %v4679 = vunpack.c.l.b16 %v4388
    %v4680 = vunpack.c.h.b16 %v4388
    %v4681 = vunpack.c.l.b16 %v4389
    %v4682 = vunpack.c.h.b16 %v4389
    %v4683 = vunpack.c.l.b16 %v4390
    %v4684 = vunpack.c.h.b16 %v4390
    %v4685 = vunpack.c.l.b16 %v4391
    %v4686 = vunpack.c.h.b16 %v4391
    %v4687 = vunpack.c.l.b16 %v4392
    %v4688 = vunpack.c.h.b16 %v4392
    %v4689 = vunpack.c.l.b16 %v4393
    %v4690 = vunpack.c.h.b16 %v4393
    %v4691 = vunpack.c.l.b16 %v4394
    %v4692 = vunpack.c.h.b16 %v4394
    %v4693 = vunpack.c.l.b16 %v4395
    %v4694 = vunpack.c.h.b16 %v4395
    %v4695 = vunpack.c.l.b16 %v4396
    %v4696 = vunpack.c.h.b16 %v4396
    %v4697 = vunpack.c.l.b16 %v4397
    %v4698 = vunpack.c.h.b16 %v4397
    %v4699 = vunpack.c.l.b16 %v4398
    %v4700 = vunpack.c.h.b16 %v4398
    %v4701 = vunpack.c.l.b16 %v4399
    %v4702 = vunpack.c.h.b16 %v4399
    %v4703 = vunpack.c.l.b16 %v4400
    %v4704 = vunpack.c.h.b16 %v4400
    %v4705 = vunpack.c.l.b16 %v4401
    %v4706 = vunpack.c.h.b16 %v4401
    %v4707 = vunpack.c.l.b16 %v4402
    %v4708 = vunpack.c.h.b16 %v4402
    %v4709 = vunpack.c.l.b16 %v4403
    %v4710 = vunpack.c.h.b16 %v4403
    %v4711 = vunpack.c.l.b16 %v4404
    %v4712 = vunpack.c.h.b16 %v4404
    %v4713 = vunpack.c.l.b16 %v4405
    %v4714 = vunpack.c.h.b16 %v4405
    %v4715 = vunpack.c.l.b16 %v4406
    %v4716 = vunpack.c.h.b16 %v4406
    %v4717 = vunpack.c.l.b16 %v4407
    %v4718 = vunpack.c.h.b16 %v4407
    %v4719 = vunpack.c.l.b16 %v4408
    %v4720 = vunpack.c.h.b16 %v4408
    %v4721 = vunpack.c.l.b16 %v4409
    %v4722 = vunpack.c.h.b16 %v4409
    %v4723 = vunpack.c.l.b16 %v4410
    %v4724 = vunpack.c.h.b16 %v4410
    %v4725 = vunpack.c.l.b16 %v4411
    %v4726 = vunpack.c.h.b16 %v4411
    %v4727 = vunpack.c.l.b16 %v4412
    %v4728 = vunpack.c.h.b16 %v4412
    %v4729 = vunpack.c.l.b16 %v4413
    %v4730 = vunpack.c.h.b16 %v4413
    %v4731 = vunpack.c.l.b16 %v4414
    %v4732 = vunpack.c.h.b16 %v4414
    %v4733 = vunpack.c.l.b16 %v4415
    %v4734 = vunpack.c.h.b16 %v4415
    %v4735 = vunpack.c.l.b16 %v4416
    %v4736 = vunpack.c.h.b16 %v4416
    %v4737 = vunpack.c.l.b16 %v4417
    %v4738 = vunpack.c.h.b16 %v4417
    %v4739 = vunpack.c.l.b16 %v4418
    %v4740 = vunpack.c.h.b16 %v4418
    %v4741 = vunpack.c.l.b16 %v4419
    %v4742 = vunpack.c.h.b16 %v4419
    %v4743 = vunpack.c.l.b16 %v4420
    %v4744 = vunpack.c.h.b16 %v4420
    %v4745 = vunpack.c.l.b16 %v4421
    %v4746 = vunpack.c.h.b16 %v4421
    %v4747 = vunpack.c.l.b16 %v4422
    %v4748 = vunpack.c.h.b16 %v4422
    %v4749 = vunpack.c.l.b16 %v4423
    %v4750 = vunpack.c.h.b16 %v4423
    %v4751 = vunpack.c.l.b16 %v4424
    %v4752 = vunpack.c.h.b16 %v4424
    %v4753 = vunpack.c.l.b16 %v4425
    %v4754 = vunpack.c.h.b16 %v4425
    %v4755 = vunpack.c.l.b16 %v4426
    %v4756 = vunpack.c.h.b16 %v4426
    %v4757 = vunpack.c.l.b16 %v4427
    %v4758 = vunpack.c.h.b16 %v4427
    %v4759 = vunpack.c.l.b16 %v4428
    %v4760 = vunpack.c.h.b16 %v4428
    %v4761 = vunpack.c.l.b16 %v4429
    %v4762 = vunpack.c.h.b16 %v4429
    %v4763 = vunpack.c.l.b16 %v4430
    %v4764 = vunpack.c.h.b16 %v4430
    %v4765 = vunpack.c.l.b16 %v4431
    %v4766 = vunpack.c.h.b16 %v4431
    %v4767 = vunpack.c.l.b16 %v4432
    %v4768 = vunpack.c.h.b16 %v4432
    %v4769 = vunpack.c.l.b16 %v4433
    %v4770 = vunpack.c.h.b16 %v4433
    %v4771 = vunpack.c.l.b16 %v4434
    %v4772 = vunpack.c.h.b16 %v4434
    %v4773 = vunpack.c.l.b16 %v4435
    %v4774 = vunpack.c.h.b16 %v4435
    %v4775 = vunpack.c.l.b16 %v4436
    %v4776 = vunpack.c.h.b16 %v4436
    %v4777 = vunpack.c.l.b16 %v4437
    %v4778 = vunpack.c.h.b16 %v4437
    %v4779 = vunpack.c.l.b16 %v4438
    %v4780 = vunpack.c.h.b16 %v4438
    %v4781 = vunpack.c.l.b16 %v4439
    %v4782 = vunpack.c.h.b16 %v4439
    %v4783 = vunpack.c.l.b16 %v4440
    %v4784 = vunpack.c.h.b16 %v4440
    %v4785 = vunpack.c.l.b16 %v4441
    %v4786 = vunpack.c.h.b16 %v4441
    %v4787 = vunpack.c.l.b16 %v4442
    %v4788 = vunpack.c.h.b16 %v4442
    %v4789 = vunpack.c.l.b16 %v4443
    %v4790 = vunpack.c.h.b16 %v4443
    %v4791 = vunpack.c.l.b16 %v4444
    %v4792 = vunpack.c.h.b16 %v4444
    %v4793 = vunpack.c.l.b16 %v4445
    %v4794 = vunpack.c.h.b16 %v4445
    %v4795 = vunpack.c.l.b16 %v4446
    %v4796 = vunpack.c.h.b16 %v4446
    %v4797 = vunpack.c.l.b16 %v4447
    %v4798 = vunpack.c.h.b16 %v4447
    %v4799 = vunpack.c.l.b16 %v4448
    %v4800 = vunpack.c.h.b16 %v4448
    %v4801 = vunpack.c.l.b16 %v4449
    %v4802 = vunpack.c.h.b16 %v4449
    %v4803 = vunpack.c.l.b16 %v4450
    %v4804 = vunpack.c.h.b16 %v4450
    %v4805 = vunpack.c.l.b16 %v4451
    %v4806 = vunpack.c.h.b16 %v4451
    %v4807 = vunpack.c.l.b16 %v4452
    %v4808 = vunpack.c.h.b16 %v4452
    %v4809 = vunpack.c.l.b16 %v4453
    %v4810 = vunpack.c.h.b16 %v4453
    %v4811 = vunpack.c.l.b16 %v4454
    %v4812 = vunpack.c.h.b16 %v4454
    %v4813 = vunpack.c.l.b16 %v4455
    %v4814 = vunpack.c.h.b16 %v4455
    %v4815 = vunpack.c.l.b16 %v4456
    %v4816 = vunpack.c.h.b16 %v4456
    %v4817 = vunpack.c.l.b16 %v4457
    %v4818 = vunpack.c.h.b16 %v4457
    %v4819 = vunpack.c.l.b16 %v4458
    %v4820 = vunpack.c.h.b16 %v4458
    %v4821 = vunpack.c.l.b16 %v4459
    %v4822 = vunpack.c.h.b16 %v4459
    %v4823 = vunpack.c.l.b16 %v4460
    %v4824 = vunpack.c.h.b16 %v4460
    %v4825 = vunpack.c.l.b16 %v4461
    %v4826 = vunpack.c.h.b16 %v4461
    %v4827 = vunpack.c.l.b16 %v4462
    %v4828 = vunpack.c.h.b16 %v4462
    %v4829 = vunpack.c.l.b16 %v4463
    %v4830 = vunpack.c.h.b16 %v4463
    %v4831 = vunpack.c.l.b16 %v4464
    %v4832 = vunpack.c.h.b16 %v4464
    %v4833 = vunpack.c.l.b16 %v4465
    %v4834 = vunpack.c.h.b16 %v4465
    %v4835 = vunpack.c.l.b16 %v4466
    %v4836 = vunpack.c.h.b16 %v4466
    %v4837 = vunpack.c.l.b16 %v4467
    %v4838 = vunpack.c.h.b16 %v4467
    %v4839 = vunpack.c.l.b16 %v4468
    %v4840 = vunpack.c.h.b16 %v4468
    %v4841 = vunpack.c.l.b16 %v4469
    %v4842 = vunpack.c.h.b16 %v4469
    %v4843 = vunpack.c.l.b16 %v4470
    %v4844 = vunpack.c.h.b16 %v4470
    %v4845 = vunpack.c.l.b16 %v4471
    %v4846 = vunpack.c.h.b16 %v4471
    %v4847 = vunpack.c.l.b16 %v4472
    %v4848 = vunpack.c.h.b16 %v4472
    %v4849 = vunpack.c.l.b16 %v4473
    %v4850 = vunpack.c.h.b16 %v4473
    %v4851 = vunpack.c.l.b16 %v4474
    %v4852 = vunpack.c.h.b16 %v4474
    %v4853 = vunpack.c.l.b16 %v4475
    %v4854 = vunpack.c.h.b16 %v4475
    %v4855 = vunpack.c.l.b16 %v4476
    %v4856 = vunpack.c.h.b16 %v4476
    %v4857 = vunpack.c.l.b16 %v4477
    %v4858 = vunpack.c.h.b16 %v4477
    %v4859 = vunpack.c.l.b16 %v4478
    %v4860 = vunpack.c.h.b16 %v4478
    %v4861 = vunpack.c.l.b16 %v4479
    %v4862 = vunpack.c.h.b16 %v4479
    %v4863 = vunpack.c.l.b16 %v4480
    %v4864 = vunpack.c.h.b16 %v4480
    %v4865 = vpack.c.b16 %v4613, %v4609
    %v4866 = vpack.c.b16 %v4614, %v4610
    %v4867 = vpack.c.b16 %v4615, %v4611
    %v4868 = vpack.c.b16 %v4616, %v4612
    %v4869 = vpack.c.b16 %v4621, %v4617
    %v4870 = vpack.c.b16 %v4622, %v4618
    %v4871 = vpack.c.b16 %v4623, %v4619
    %v4872 = vpack.c.b16 %v4624, %v4620
    %v4873 = vpack.c.b16 %v4629, %v4625
    %v4874 = vpack.c.b16 %v4630, %v4626
    %v4875 = vpack.c.b16 %v4631, %v4627
    %v4876 = vpack.c.b16 %v4632, %v4628
    %v4877 = vpack.c.b16 %v4637, %v4633
    %v4878 = vpack.c.b16 %v4638, %v4634
    %v4879 = vpack.c.b16 %v4639, %v4635
    %v4880 = vpack.c.b16 %v4640, %v4636
    %v4881 = vpack.c.b16 %v4645, %v4641
    %v4882 = vpack.c.b16 %v4646, %v4642
    %v4883 = vpack.c.b16 %v4647, %v4643
    %v4884 = vpack.c.b16 %v4648, %v4644
    %v4885 = vpack.c.b16 %v4653, %v4649
    %v4886 = vpack.c.b16 %v4654, %v4650
    %v4887 = vpack.c.b16 %v4655, %v4651
    %v4888 = vpack.c.b16 %v4656, %v4652
    %v4889 = vpack.c.b16 %v4661, %v4657
    %v4890 = vpack.c.b16 %v4662, %v4658
    %v4891 = vpack.c.b16 %v4663, %v4659
    %v4892 = vpack.c.b16 %v4664, %v4660
    %v4893 = vpack.c.b16 %v4669, %v4665
    %v4894 = vpack.c.b16 %v4670, %v4666
    %v4895 = vpack.c.b16 %v4671, %v4667
    %v4896 = vpack.c.b16 %v4672, %v4668
    %v4897 = vpack.c.b16 %v4677, %v4673
    %v4898 = vpack.c.b16 %v4678, %v4674
    %v4899 = vpack.c.b16 %v4679, %v4675
    %v4900 = vpack.c.b16 %v4680, %v4676
    %v4901 = vpack.c.b16 %v4685, %v4681
    %v4902 = vpack.c.b16 %v4686, %v4682
    %v4903 = vpack.c.b16 %v4687, %v4683
    %v4904 = vpack.c.b16 %v4688, %v4684
    %v4905 = vpack.c.b16 %v4693, %v4689
    %v4906 = vpack.c.b16 %v4694, %v4690
    %v4907 = vpack.c.b16 %v4695, %v4691
    %v4908 = vpack.c.b16 %v4696, %v4692
    %v4909 = vpack.c.b16 %v4701, %v4697
    %v4910 = vpack.c.b16 %v4702, %v4698
    %v4911 = vpack.c.b16 %v4703, %v4699
    %v4912 = vpack.c.b16 %v4704, %v4700
    %v4913 = vpack.c.b16 %v4709, %v4705
    %v4914 = vpack.c.b16 %v4710, %v4706
    %v4915 = vpack.c.b16 %v4711, %v4707
    %v4916 = vpack.c.b16 %v4712, %v4708
    %v4917 = vpack.c.b16 %v4717, %v4713
    %v4918 = vpack.c.b16 %v4718, %v4714
    %v4919 = vpack.c.b16 %v4719, %v4715
    %v4920 = vpack.c.b16 %v4720, %v4716
    %v4921 = vpack.c.b16 %v4725, %v4721
    %v4922 = vpack.c.b16 %v4726, %v4722
    %v4923 = vpack.c.b16 %v4727, %v4723
    %v4924 = vpack.c.b16 %v4728, %v4724
    %v4925 = vpack.c.b16 %v4733, %v4729
    %v4926 = vpack.c.b16 %v4734, %v4730
    %v4927 = vpack.c.b16 %v4735, %v4731
    %v4928 = vpack.c.b16 %v4736, %v4732
    %v4929 = vpack.c.b16 %v4741, %v4737
    %v4930 = vpack.c.b16 %v4742, %v4738
    %v4931 = vpack.c.b16 %v4743, %v4739
    %v4932 = vpack.c.b16 %v4744, %v4740
    %v4933 = vpack.c.b16 %v4749, %v4745
    %v4934 = vpack.c.b16 %v4750, %v4746
    %v4935 = vpack.c.b16 %v4751, %v4747
    %v4936 = vpack.c.b16 %v4752, %v4748
    %v4937 = vpack.c.b16 %v4757, %v4753
    %v4938 = vpack.c.b16 %v4758, %v4754
    %v4939 = vpack.c.b16 %v4759, %v4755
    %v4940 = vpack.c.b16 %v4760, %v4756
    %v4941 = vpack.c.b16 %v4765, %v4761
    %v4942 = vpack.c.b16 %v4766, %v4762
    %v4943 = vpack.c.b16 %v4767, %v4763
    %v4944 = vpack.c.b16 %v4768, %v4764
    %v4945 = vpack.c.b16 %v4773, %v4769
    %v4946 = vpack.c.b16 %v4774, %v4770
    %v4947 = vpack.c.b16 %v4775, %v4771
    %v4948 = vpack.c.b16 %v4776, %v4772
    %v4949 = vpack.c.b16 %v4781, %v4777
    %v4950 = vpack.c.b16 %v4782, %v4778
    %v4951 = vpack.c.b16 %v4783, %v4779
    %v4952 = vpack.c.b16 %v4784, %v4780
    %v4953 = vpack.c.b16 %v4789, %v4785
    %v4954 = vpack.c.b16 %v4790, %v4786
    %v4955 = vpack.c.b16 %v4791, %v4787
    %v4956 = vpack.c.b16 %v4792, %v4788
    %v4957 = vpack.c.b16 %v4797, %v4793
    %v4958 = vpack.c.b16 %v4798, %v4794
    %v4959 = vpack.c.b16 %v4799, %v4795
    %v4960 = vpack.c.b16 %v4800, %v4796
    %v4961 = vpack.c.b16 %v4805, %v4801
    %v4962 = vpack.c.b16 %v4806, %v4802
    %v4963 = vpack.c.b16 %v4807, %v4803
    %v4964 = vpack.c.b16 %v4808, %v4804
    %v4965 = vpack.c.b16 %v4813, %v4809
    %v4966 = vpack.c.b16 %v4814, %v4810
    %v4967 = vpack.c.b16 %v4815, %v4811
    %v4968 = vpack.c.b16 %v4816, %v4812
    %v4969 = vpack.c.b16 %v4821, %v4817
    %v4970 = vpack.c.b16 %v4822, %v4818
    %v4971 = vpack.c.b16 %v4823, %v4819
    %v4972 = vpack.c.b16 %v4824, %v4820
    %v4973 = vpack.c.b16 %v4829, %v4825
    %v4974 = vpack.c.b16 %v4830, %v4826
    %v4975 = vpack.c.b16 %v4831, %v4827
    %v4976 = vpack.c.b16 %v4832, %v4828
    %v4977 = vpack.c.b16 %v4837, %v4833
    %v4978 = vpack.c.b16 %v4838, %v4834
    %v4979 = vpack.c.b16 %v4839, %v4835
    %v4980 = vpack.c.b16 %v4840, %v4836
    %v4981 = vpack.c.b16 %v4845, %v4841
    %v4982 = vpack.c.b16 %v4846, %v4842
    %v4983 = vpack.c.b16 %v4847, %v4843
    %v4984 = vpack.c.b16 %v4848, %v4844
    %v4985 = vpack.c.b16 %v4853, %v4849
    %v4986 = vpack.c.b16 %v4854, %v4850
    %v4987 = vpack.c.b16 %v4855, %v4851
    %v4988 = vpack.c.b16 %v4856, %v4852
    %v4989 = vpack.c.b16 %v4861, %v4857
    %v4990 = vpack.c.b16 %v4862, %v4858
    %v4991 = vpack.c.b16 %v4863, %v4859
    %v4992 = vpack.c.b16 %v4864, %v4860
    %5121 = vmatpush.bf16.msra.mxu0 %v4328
    %5122 = vmatpush.bf16.msra.mxu0 %v4327
    %5123 = vmatpush.bf16.msra.mxu0 %v4326
    %5124 = vmatpush.bf16.msra.mxu0 %v4325
    %5125 = vmatpush.bf16.msra.mxu0 %v4324
    %5126 = vmatpush.bf16.msra.mxu0 %v4323
    %5127 = vmatpush.bf16.msra.mxu0 %v4322
    %5128 = vmatpush.bf16.msra.mxu0 %v4321
    %5129 = vmatmul.bf16.gmra.mxu0 %v4865
    %v5130 = vpop.f32.mrf.mxu0
    %v5131 = vadd.f32 0.0, %v5130
    %v5132 = vpop.f32.mrf.mxu0
    %v5133 = vadd.f32 0.0, %v5132
    %5134 = vmatmul.bf16.gmra.mxu0 %v4869
    %v5135 = vpop.f32.mrf.mxu0
    %v5136 = vadd.f32 0.0, %v5135
    %v5137 = vpop.f32.mrf.mxu0
    %v5138 = vadd.f32 0.0, %v5137
    %5139 = vmatmul.bf16.gmra.mxu0 %v4873
    %v5140 = vpop.f32.mrf.mxu0
    %v5141 = vadd.f32 0.0, %v5140
    %v5142 = vpop.f32.mrf.mxu0
    %v5143 = vadd.f32 0.0, %v5142
    %5144 = vmatmul.bf16.gmra.mxu0 %v4877
    %v5145 = vpop.f32.mrf.mxu0
    %v5146 = vadd.f32 0.0, %v5145
    %v5147 = vpop.f32.mrf.mxu0
    %v5148 = vadd.f32 0.0, %v5147
    %5149 = vmatmul.bf16.gmra.mxu0 %v4881
    %v5150 = vpop.f32.mrf.mxu0
    %v5151 = vadd.f32 0.0, %v5150
    %v5152 = vpop.f32.mrf.mxu0
    %v5153 = vadd.f32 0.0, %v5152
    %5154 = vmatmul.bf16.gmra.mxu0 %v4885
    %v5155 = vpop.f32.mrf.mxu0
    %v5156 = vadd.f32 0.0, %v5155
    %v5157 = vpop.f32.mrf.mxu0
    %v5158 = vadd.f32 0.0, %v5157
    %5159 = vmatmul.bf16.gmra.mxu0 %v4889
    %v5160 = vpop.f32.mrf.mxu0
    %v5161 = vadd.f32 0.0, %v5160
    %v5162 = vpop.f32.mrf.mxu0
    %v5163 = vadd.f32 0.0, %v5162
    %5164 = vmatmul.bf16.gmra.mxu0 %v4893
    %v5165 = vpop.f32.mrf.mxu0
    %v5166 = vadd.f32 0.0, %v5165
    %v5167 = vpop.f32.mrf.mxu0
    %v5168 = vadd.f32 0.0, %v5167
    %5169 = vmatmul.bf16.gmra.mxu0 %v4897
    %v5170 = vpop.f32.mrf.mxu0
    %v5171 = vadd.f32 0.0, %v5170
    %v5172 = vpop.f32.mrf.mxu0
    %v5173 = vadd.f32 0.0, %v5172
    %5174 = vmatmul.bf16.gmra.mxu0 %v4901
    %v5175 = vpop.f32.mrf.mxu0
    %v5176 = vadd.f32 0.0, %v5175
    %v5177 = vpop.f32.mrf.mxu0
    %v5178 = vadd.f32 0.0, %v5177
    %5179 = vmatmul.bf16.gmra.mxu0 %v4905
    %v5180 = vpop.f32.mrf.mxu0
    %v5181 = vadd.f32 0.0, %v5180
    %v5182 = vpop.f32.mrf.mxu0
    %v5183 = vadd.f32 0.0, %v5182
    %5184 = vmatmul.bf16.gmra.mxu0 %v4909
    %v5185 = vpop.f32.mrf.mxu0
    %v5186 = vadd.f32 0.0, %v5185
    %v5187 = vpop.f32.mrf.mxu0
    %v5188 = vadd.f32 0.0, %v5187
    %5189 = vmatmul.bf16.gmra.mxu0 %v4913
    %v5190 = vpop.f32.mrf.mxu0
    %v5191 = vadd.f32 0.0, %v5190
    %v5192 = vpop.f32.mrf.mxu0
    %v5193 = vadd.f32 0.0, %v5192
    %5194 = vmatmul.bf16.gmra.mxu0 %v4917
    %v5195 = vpop.f32.mrf.mxu0
    %v5196 = vadd.f32 0.0, %v5195
    %v5197 = vpop.f32.mrf.mxu0
    %v5198 = vadd.f32 0.0, %v5197
    %5199 = vmatmul.bf16.gmra.mxu0 %v4921
    %v5200 = vpop.f32.mrf.mxu0
    %v5201 = vadd.f32 0.0, %v5200
    %v5202 = vpop.f32.mrf.mxu0
    %v5203 = vadd.f32 0.0, %v5202
    %5204 = vmatmul.bf16.gmra.mxu0 %v4925
    %v5205 = vpop.f32.mrf.mxu0
    %v5206 = vadd.f32 0.0, %v5205
    %v5207 = vpop.f32.mrf.mxu0
    %v5208 = vadd.f32 0.0, %v5207
    %5209 = vmatmul.bf16.gmra.mxu0 %v4929
    %v5210 = vpop.f32.mrf.mxu0
    %v5211 = vadd.f32 0.0, %v5210
    %v5212 = vpop.f32.mrf.mxu0
    %v5213 = vadd.f32 0.0, %v5212
    %5214 = vmatmul.bf16.gmra.mxu0 %v4933
    %v5215 = vpop.f32.mrf.mxu0
    %v5216 = vadd.f32 0.0, %v5215
    %v5217 = vpop.f32.mrf.mxu0
    %v5218 = vadd.f32 0.0, %v5217
    %5219 = vmatmul.bf16.gmra.mxu0 %v4937
    %v5220 = vpop.f32.mrf.mxu0
    %v5221 = vadd.f32 0.0, %v5220
    %v5222 = vpop.f32.mrf.mxu0
    %v5223 = vadd.f32 0.0, %v5222
    %5224 = vmatmul.bf16.gmra.mxu0 %v4941
    %v5225 = vpop.f32.mrf.mxu0
    %v5226 = vadd.f32 0.0, %v5225
    %v5227 = vpop.f32.mrf.mxu0
    %v5228 = vadd.f32 0.0, %v5227
    %5229 = vmatmul.bf16.gmra.mxu0 %v4945
    %v5230 = vpop.f32.mrf.mxu0
    %v5231 = vadd.f32 0.0, %v5230
    %v5232 = vpop.f32.mrf.mxu0
    %v5233 = vadd.f32 0.0, %v5232
    %5234 = vmatmul.bf16.gmra.mxu0 %v4949
    %v5235 = vpop.f32.mrf.mxu0
    %v5236 = vadd.f32 0.0, %v5235
    %v5237 = vpop.f32.mrf.mxu0
    %v5238 = vadd.f32 0.0, %v5237
    %5239 = vmatmul.bf16.gmra.mxu0 %v4953
    %v5240 = vpop.f32.mrf.mxu0
    %v5241 = vadd.f32 0.0, %v5240
    %v5242 = vpop.f32.mrf.mxu0
    %v5243 = vadd.f32 0.0, %v5242
    %5244 = vmatmul.bf16.gmra.mxu0 %v4957
    %v5245 = vpop.f32.mrf.mxu0
    %v5246 = vadd.f32 0.0, %v5245
    %v5247 = vpop.f32.mrf.mxu0
    %v5248 = vadd.f32 0.0, %v5247
    %5249 = vmatmul.bf16.gmra.mxu0 %v4961
    %v5250 = vpop.f32.mrf.mxu0
    %v5251 = vadd.f32 0.0, %v5250
    %v5252 = vpop.f32.mrf.mxu0
    %v5253 = vadd.f32 0.0, %v5252
    %5254 = vmatmul.bf16.gmra.mxu0 %v4965
    %v5255 = vpop.f32.mrf.mxu0
    %v5256 = vadd.f32 0.0, %v5255
    %v5257 = vpop.f32.mrf.mxu0
    %v5258 = vadd.f32 0.0, %v5257
    %5259 = vmatmul.bf16.gmra.mxu0 %v4969
    %v5260 = vpop.f32.mrf.mxu0
    %v5261 = vadd.f32 0.0, %v5260
    %v5262 = vpop.f32.mrf.mxu0
    %v5263 = vadd.f32 0.0, %v5262
    %5264 = vmatmul.bf16.gmra.mxu0 %v4973
    %v5265 = vpop.f32.mrf.mxu0
    %v5266 = vadd.f32 0.0, %v5265
    %v5267 = vpop.f32.mrf.mxu0
    %v5268 = vadd.f32 0.0, %v5267
    %5269 = vmatmul.bf16.gmra.mxu0 %v4977
    %v5270 = vpop.f32.mrf.mxu0
    %v5271 = vadd.f32 0.0, %v5270
    %v5272 = vpop.f32.mrf.mxu0
    %v5273 = vadd.f32 0.0, %v5272
    %5274 = vmatmul.bf16.gmra.mxu0 %v4981
    %v5275 = vpop.f32.mrf.mxu0
    %v5276 = vadd.f32 0.0, %v5275
    %v5277 = vpop.f32.mrf.mxu0
    %v5278 = vadd.f32 0.0, %v5277
    %5279 = vmatmul.bf16.gmra.mxu0 %v4985
    %v5280 = vpop.f32.mrf.mxu0
    %v5281 = vadd.f32 0.0, %v5280
    %v5282 = vpop.f32.mrf.mxu0
    %v5283 = vadd.f32 0.0, %v5282
    %5284 = vmatmul.bf16.gmra.mxu0 %v4989
    %v5285 = vpop.f32.mrf.mxu0
    %v5286 = vadd.f32 0.0, %v5285
    %v5287 = vpop.f32.mrf.mxu0
    %v5288 = vadd.f32 0.0, %v5287
    %5289 = vdwg.mxu0
    %5290 = vmatpush.bf16.msra.mxu0 %v4336
    %5291 = vmatpush.bf16.msra.mxu0 %v4335
    %5292 = vmatpush.bf16.msra.mxu0 %v4334
    %5293 = vmatpush.bf16.msra.mxu0 %v4333
    %5294 = vmatpush.bf16.msra.mxu0 %v4332
    %5295 = vmatpush.bf16.msra.mxu0 %v4331
    %5296 = vmatpush.bf16.msra.mxu0 %v4330
    %5297 = vmatpush.bf16.msra.mxu0 %v4329
    %5298 = vmatmul.bf16.gmra.mxu0 %v4866
    %v5299 = vpop.f32.mrf.mxu0
    %v5300 = vadd.f32 %v5131, %v5299
    %v5301 = vpop.f32.mrf.mxu0
    %v5302 = vadd.f32 %v5133, %v5301
    %5303 = vmatmul.bf16.gmra.mxu0 %v4870
    %v5304 = vpop.f32.mrf.mxu0
    %v5305 = vadd.f32 %v5136, %v5304
    %v5306 = vpop.f32.mrf.mxu0
    %v5307 = vadd.f32 %v5138, %v5306
    %5308 = vmatmul.bf16.gmra.mxu0 %v4874
    %v5309 = vpop.f32.mrf.mxu0
    %v5310 = vadd.f32 %v5141, %v5309
    %v5311 = vpop.f32.mrf.mxu0
    %v5312 = vadd.f32 %v5143, %v5311
    %5313 = vmatmul.bf16.gmra.mxu0 %v4878
    %v5314 = vpop.f32.mrf.mxu0
    %v5315 = vadd.f32 %v5146, %v5314
    %v5316 = vpop.f32.mrf.mxu0
    %v5317 = vadd.f32 %v5148, %v5316
    %5318 = vmatmul.bf16.gmra.mxu0 %v4882
    %v5319 = vpop.f32.mrf.mxu0
    %v5320 = vadd.f32 %v5151, %v5319
    %v5321 = vpop.f32.mrf.mxu0
    %v5322 = vadd.f32 %v5153, %v5321
    %5323 = vmatmul.bf16.gmra.mxu0 %v4886
    %v5324 = vpop.f32.mrf.mxu0
    %v5325 = vadd.f32 %v5156, %v5324
    %v5326 = vpop.f32.mrf.mxu0
    %v5327 = vadd.f32 %v5158, %v5326
    %5328 = vmatmul.bf16.gmra.mxu0 %v4890
    %v5329 = vpop.f32.mrf.mxu0
    %v5330 = vadd.f32 %v5161, %v5329
    %v5331 = vpop.f32.mrf.mxu0
    %v5332 = vadd.f32 %v5163, %v5331
    %5333 = vmatmul.bf16.gmra.mxu0 %v4894
    %v5334 = vpop.f32.mrf.mxu0
    %v5335 = vadd.f32 %v5166, %v5334
    %v5336 = vpop.f32.mrf.mxu0
    %v5337 = vadd.f32 %v5168, %v5336
    %5338 = vmatmul.bf16.gmra.mxu0 %v4898
    %v5339 = vpop.f32.mrf.mxu0
    %v5340 = vadd.f32 %v5171, %v5339
    %v5341 = vpop.f32.mrf.mxu0
    %v5342 = vadd.f32 %v5173, %v5341
    %5343 = vmatmul.bf16.gmra.mxu0 %v4902
    %v5344 = vpop.f32.mrf.mxu0
    %v5345 = vadd.f32 %v5176, %v5344
    %v5346 = vpop.f32.mrf.mxu0
    %v5347 = vadd.f32 %v5178, %v5346
    %5348 = vmatmul.bf16.gmra.mxu0 %v4906
    %v5349 = vpop.f32.mrf.mxu0
    %v5350 = vadd.f32 %v5181, %v5349
    %v5351 = vpop.f32.mrf.mxu0
    %v5352 = vadd.f32 %v5183, %v5351
    %5353 = vmatmul.bf16.gmra.mxu0 %v4910
    %v5354 = vpop.f32.mrf.mxu0
    %v5355 = vadd.f32 %v5186, %v5354
    %v5356 = vpop.f32.mrf.mxu0
    %v5357 = vadd.f32 %v5188, %v5356
    %5358 = vmatmul.bf16.gmra.mxu0 %v4914
    %v5359 = vpop.f32.mrf.mxu0
    %v5360 = vadd.f32 %v5191, %v5359
    %v5361 = vpop.f32.mrf.mxu0
    %v5362 = vadd.f32 %v5193, %v5361
    %5363 = vmatmul.bf16.gmra.mxu0 %v4918
    %v5364 = vpop.f32.mrf.mxu0
    %v5365 = vadd.f32 %v5196, %v5364
    %v5366 = vpop.f32.mrf.mxu0
    %v5367 = vadd.f32 %v5198, %v5366
    %5368 = vmatmul.bf16.gmra.mxu0 %v4922
    %v5369 = vpop.f32.mrf.mxu0
    %v5370 = vadd.f32 %v5201, %v5369
    %v5371 = vpop.f32.mrf.mxu0
    %v5372 = vadd.f32 %v5203, %v5371
    %5373 = vmatmul.bf16.gmra.mxu0 %v4926
    %v5374 = vpop.f32.mrf.mxu0
    %v5375 = vadd.f32 %v5206, %v5374
    %v5376 = vpop.f32.mrf.mxu0
    %v5377 = vadd.f32 %v5208, %v5376
    %5378 = vmatmul.bf16.gmra.mxu0 %v4930
    %v5379 = vpop.f32.mrf.mxu0
    %v5380 = vadd.f32 %v5211, %v5379
    %v5381 = vpop.f32.mrf.mxu0
    %v5382 = vadd.f32 %v5213, %v5381
    %5383 = vmatmul.bf16.gmra.mxu0 %v4934
    %v5384 = vpop.f32.mrf.mxu0
    %v5385 = vadd.f32 %v5216, %v5384
    %v5386 = vpop.f32.mrf.mxu0
    %v5387 = vadd.f32 %v5218, %v5386
    %5388 = vmatmul.bf16.gmra.mxu0 %v4938
    %v5389 = vpop.f32.mrf.mxu0
    %v5390 = vadd.f32 %v5221, %v5389
    %v5391 = vpop.f32.mrf.mxu0
    %v5392 = vadd.f32 %v5223, %v5391
    %5393 = vmatmul.bf16.gmra.mxu0 %v4942
    %v5394 = vpop.f32.mrf.mxu0
    %v5395 = vadd.f32 %v5226, %v5394
    %v5396 = vpop.f32.mrf.mxu0
    %v5397 = vadd.f32 %v5228, %v5396
    %5398 = vmatmul.bf16.gmra.mxu0 %v4946
    %v5399 = vpop.f32.mrf.mxu0
    %v5400 = vadd.f32 %v5231, %v5399
    %v5401 = vpop.f32.mrf.mxu0
    %v5402 = vadd.f32 %v5233, %v5401
    %5403 = vmatmul.bf16.gmra.mxu0 %v4950
    %v5404 = vpop.f32.mrf.mxu0
    %v5405 = vadd.f32 %v5236, %v5404
    %v5406 = vpop.f32.mrf.mxu0
    %v5407 = vadd.f32 %v5238, %v5406
    %5408 = vmatmul.bf16.gmra.mxu0 %v4954
    %v5409 = vpop.f32.mrf.mxu0
    %v5410 = vadd.f32 %v5241, %v5409
    %v5411 = vpop.f32.mrf.mxu0
    %v5412 = vadd.f32 %v5243, %v5411
    %5413 = vmatmul.bf16.gmra.mxu0 %v4958
    %v5414 = vpop.f32.mrf.mxu0
    %v5415 = vadd.f32 %v5246, %v5414
    %v5416 = vpop.f32.mrf.mxu0
    %v5417 = vadd.f32 %v5248, %v5416
    %5418 = vmatmul.bf16.gmra.mxu0 %v4962
    %v5419 = vpop.f32.mrf.mxu0
    %v5420 = vadd.f32 %v5251, %v5419
    %v5421 = vpop.f32.mrf.mxu0
    %v5422 = vadd.f32 %v5253, %v5421
    %5423 = vmatmul.bf16.gmra.mxu0 %v4966
    %v5424 = vpop.f32.mrf.mxu0
    %v5425 = vadd.f32 %v5256, %v5424
    %v5426 = vpop.f32.mrf.mxu0
    %v5427 = vadd.f32 %v5258, %v5426
    %5428 = vmatmul.bf16.gmra.mxu0 %v4970
    %v5429 = vpop.f32.mrf.mxu0
    %v5430 = vadd.f32 %v5261, %v5429
    %v5431 = vpop.f32.mrf.mxu0
    %v5432 = vadd.f32 %v5263, %v5431
    %5433 = vmatmul.bf16.gmra.mxu0 %v4974
    %v5434 = vpop.f32.mrf.mxu0
    %v5435 = vadd.f32 %v5266, %v5434
    %v5436 = vpop.f32.mrf.mxu0
    %v5437 = vadd.f32 %v5268, %v5436
    %5438 = vmatmul.bf16.gmra.mxu0 %v4978
    %v5439 = vpop.f32.mrf.mxu0
    %v5440 = vadd.f32 %v5271, %v5439
    %v5441 = vpop.f32.mrf.mxu0
    %v5442 = vadd.f32 %v5273, %v5441
    %5443 = vmatmul.bf16.gmra.mxu0 %v4982
    %v5444 = vpop.f32.mrf.mxu0
    %v5445 = vadd.f32 %v5276, %v5444
    %v5446 = vpop.f32.mrf.mxu0
    %v5447 = vadd.f32 %v5278, %v5446
    %5448 = vmatmul.bf16.gmra.mxu0 %v4986
    %v5449 = vpop.f32.mrf.mxu0
    %v5450 = vadd.f32 %v5281, %v5449
    %v5451 = vpop.f32.mrf.mxu0
    %v5452 = vadd.f32 %v5283, %v5451
    %5453 = vmatmul.bf16.gmra.mxu0 %v4990
    %v5454 = vpop.f32.mrf.mxu0
    %v5455 = vadd.f32 %v5286, %v5454
    %v5456 = vpop.f32.mrf.mxu0
    %v5457 = vadd.f32 %v5288, %v5456
    %5458 = vdwg.mxu0
    %5459 = vmatpush.bf16.msra.mxu0 %v4344
    %5460 = vmatpush.bf16.msra.mxu0 %v4343
    %5461 = vmatpush.bf16.msra.mxu0 %v4342
    %5462 = vmatpush.bf16.msra.mxu0 %v4341
    %5463 = vmatpush.bf16.msra.mxu0 %v4340
    %5464 = vmatpush.bf16.msra.mxu0 %v4339
    %5465 = vmatpush.bf16.msra.mxu0 %v4338
    %5466 = vmatpush.bf16.msra.mxu0 %v4337
    %5467 = vmatmul.bf16.gmra.mxu0 %v4867
    %v5468 = vpop.f32.mrf.mxu0
    %v5469 = vadd.f32 %v5300, %v5468
    %v5470 = vpop.f32.mrf.mxu0
    %v5471 = vadd.f32 %v5302, %v5470
    %5472 = vmatmul.bf16.gmra.mxu0 %v4871
    %v5473 = vpop.f32.mrf.mxu0
    %v5474 = vadd.f32 %v5305, %v5473
    %v5475 = vpop.f32.mrf.mxu0
    %v5476 = vadd.f32 %v5307, %v5475
    %5477 = vmatmul.bf16.gmra.mxu0 %v4875
    %v5478 = vpop.f32.mrf.mxu0
    %v5479 = vadd.f32 %v5310, %v5478
    %v5480 = vpop.f32.mrf.mxu0
    %v5481 = vadd.f32 %v5312, %v5480
    %5482 = vmatmul.bf16.gmra.mxu0 %v4879
    %v5483 = vpop.f32.mrf.mxu0
    %v5484 = vadd.f32 %v5315, %v5483
    %v5485 = vpop.f32.mrf.mxu0
    %v5486 = vadd.f32 %v5317, %v5485
    %5487 = vmatmul.bf16.gmra.mxu0 %v4883
    %v5488 = vpop.f32.mrf.mxu0
    %v5489 = vadd.f32 %v5320, %v5488
    %v5490 = vpop.f32.mrf.mxu0
    %v5491 = vadd.f32 %v5322, %v5490
    %5492 = vmatmul.bf16.gmra.mxu0 %v4887
    %v5493 = vpop.f32.mrf.mxu0
    %v5494 = vadd.f32 %v5325, %v5493
    %v5495 = vpop.f32.mrf.mxu0
    %v5496 = vadd.f32 %v5327, %v5495
    %5497 = vmatmul.bf16.gmra.mxu0 %v4891
    %v5498 = vpop.f32.mrf.mxu0
    %v5499 = vadd.f32 %v5330, %v5498
    %v5500 = vpop.f32.mrf.mxu0
    %v5501 = vadd.f32 %v5332, %v5500
    %5502 = vmatmul.bf16.gmra.mxu0 %v4895
    %v5503 = vpop.f32.mrf.mxu0
    %v5504 = vadd.f32 %v5335, %v5503
    %v5505 = vpop.f32.mrf.mxu0
    %v5506 = vadd.f32 %v5337, %v5505
    %5507 = vmatmul.bf16.gmra.mxu0 %v4899
    %v5508 = vpop.f32.mrf.mxu0
    %v5509 = vadd.f32 %v5340, %v5508
    %v5510 = vpop.f32.mrf.mxu0
    %v5511 = vadd.f32 %v5342, %v5510
    %5512 = vmatmul.bf16.gmra.mxu0 %v4903
    %v5513 = vpop.f32.mrf.mxu0
    %v5514 = vadd.f32 %v5345, %v5513
    %v5515 = vpop.f32.mrf.mxu0
    %v5516 = vadd.f32 %v5347, %v5515
    %5517 = vmatmul.bf16.gmra.mxu0 %v4907
    %v5518 = vpop.f32.mrf.mxu0
    %v5519 = vadd.f32 %v5350, %v5518
    %v5520 = vpop.f32.mrf.mxu0
    %v5521 = vadd.f32 %v5352, %v5520
    %5522 = vmatmul.bf16.gmra.mxu0 %v4911
    %v5523 = vpop.f32.mrf.mxu0
    %v5524 = vadd.f32 %v5355, %v5523
    %v5525 = vpop.f32.mrf.mxu0
    %v5526 = vadd.f32 %v5357, %v5525
    %5527 = vmatmul.bf16.gmra.mxu0 %v4915
    %v5528 = vpop.f32.mrf.mxu0
    %v5529 = vadd.f32 %v5360, %v5528
    %v5530 = vpop.f32.mrf.mxu0
    %v5531 = vadd.f32 %v5362, %v5530
    %5532 = vmatmul.bf16.gmra.mxu0 %v4919
    %v5533 = vpop.f32.mrf.mxu0
    %v5534 = vadd.f32 %v5365, %v5533
    %v5535 = vpop.f32.mrf.mxu0
    %v5536 = vadd.f32 %v5367, %v5535
    %5537 = vmatmul.bf16.gmra.mxu0 %v4923
    %v5538 = vpop.f32.mrf.mxu0
    %v5539 = vadd.f32 %v5370, %v5538
    %v5540 = vpop.f32.mrf.mxu0
    %v5541 = vadd.f32 %v5372, %v5540
    %5542 = vmatmul.bf16.gmra.mxu0 %v4927
    %v5543 = vpop.f32.mrf.mxu0
    %v5544 = vadd.f32 %v5375, %v5543
    %v5545 = vpop.f32.mrf.mxu0
    %v5546 = vadd.f32 %v5377, %v5545
    %5547 = vmatmul.bf16.gmra.mxu0 %v4931
    %v5548 = vpop.f32.mrf.mxu0
    %v5549 = vadd.f32 %v5380, %v5548
    %v5550 = vpop.f32.mrf.mxu0
    %v5551 = vadd.f32 %v5382, %v5550
    %5552 = vmatmul.bf16.gmra.mxu0 %v4935
    %v5553 = vpop.f32.mrf.mxu0
    %v5554 = vadd.f32 %v5385, %v5553
    %v5555 = vpop.f32.mrf.mxu0
    %v5556 = vadd.f32 %v5387, %v5555
    %5557 = vmatmul.bf16.gmra.mxu0 %v4939
    %v5558 = vpop.f32.mrf.mxu0
    %v5559 = vadd.f32 %v5390, %v5558
    %v5560 = vpop.f32.mrf.mxu0
    %v5561 = vadd.f32 %v5392, %v5560
    %5562 = vmatmul.bf16.gmra.mxu0 %v4943
    %v5563 = vpop.f32.mrf.mxu0
    %v5564 = vadd.f32 %v5395, %v5563
    %v5565 = vpop.f32.mrf.mxu0
    %v5566 = vadd.f32 %v5397, %v5565
    %5567 = vmatmul.bf16.gmra.mxu0 %v4947
    %v5568 = vpop.f32.mrf.mxu0
    %v5569 = vadd.f32 %v5400, %v5568
    %v5570 = vpop.f32.mrf.mxu0
    %v5571 = vadd.f32 %v5402, %v5570
    %5572 = vmatmul.bf16.gmra.mxu0 %v4951
    %v5573 = vpop.f32.mrf.mxu0
    %v5574 = vadd.f32 %v5405, %v5573
    %v5575 = vpop.f32.mrf.mxu0
    %v5576 = vadd.f32 %v5407, %v5575
    %5577 = vmatmul.bf16.gmra.mxu0 %v4955
    %v5578 = vpop.f32.mrf.mxu0
    %v5579 = vadd.f32 %v5410, %v5578
    %v5580 = vpop.f32.mrf.mxu0
    %v5581 = vadd.f32 %v5412, %v5580
    %5582 = vmatmul.bf16.gmra.mxu0 %v4959
    %v5583 = vpop.f32.mrf.mxu0
    %v5584 = vadd.f32 %v5415, %v5583
    %v5585 = vpop.f32.mrf.mxu0
    %v5586 = vadd.f32 %v5417, %v5585
    %5587 = vmatmul.bf16.gmra.mxu0 %v4963
    %v5588 = vpop.f32.mrf.mxu0
    %v5589 = vadd.f32 %v5420, %v5588
    %v5590 = vpop.f32.mrf.mxu0
    %v5591 = vadd.f32 %v5422, %v5590
    %5592 = vmatmul.bf16.gmra.mxu0 %v4967
    %v5593 = vpop.f32.mrf.mxu0
    %v5594 = vadd.f32 %v5425, %v5593
    %v5595 = vpop.f32.mrf.mxu0
    %v5596 = vadd.f32 %v5427, %v5595
    %5597 = vmatmul.bf16.gmra.mxu0 %v4971
    %v5598 = vpop.f32.mrf.mxu0
    %v5599 = vadd.f32 %v5430, %v5598
    %v5600 = vpop.f32.mrf.mxu0
    %v5601 = vadd.f32 %v5432, %v5600
    %5602 = vmatmul.bf16.gmra.mxu0 %v4975
    %v5603 = vpop.f32.mrf.mxu0
    %v5604 = vadd.f32 %v5435, %v5603
    %v5605 = vpop.f32.mrf.mxu0
    %v5606 = vadd.f32 %v5437, %v5605
    %5607 = vmatmul.bf16.gmra.mxu0 %v4979
    %v5608 = vpop.f32.mrf.mxu0
    %v5609 = vadd.f32 %v5440, %v5608
    %v5610 = vpop.f32.mrf.mxu0
    %v5611 = vadd.f32 %v5442, %v5610
    %5612 = vmatmul.bf16.gmra.mxu0 %v4983
    %v5613 = vpop.f32.mrf.mxu0
    %v5614 = vadd.f32 %v5445, %v5613
    %v5615 = vpop.f32.mrf.mxu0
    %v5616 = vadd.f32 %v5447, %v5615
    %5617 = vmatmul.bf16.gmra.mxu0 %v4987
    %v5618 = vpop.f32.mrf.mxu0
    %v5619 = vadd.f32 %v5450, %v5618
    %v5620 = vpop.f32.mrf.mxu0
    %v5621 = vadd.f32 %v5452, %v5620
    %5622 = vmatmul.bf16.gmra.mxu0 %v4991
    %v5623 = vpop.f32.mrf.mxu0
    %v5624 = vadd.f32 %v5455, %v5623
    %v5625 = vpop.f32.mrf.mxu0
    %v5626 = vadd.f32 %v5457, %v5625
    %5627 = vdwg.mxu0
    %5628 = vmatpush.bf16.msra.mxu0 %v4352
    %5629 = vmatpush.bf16.msra.mxu0 %v4351
    %5630 = vmatpush.bf16.msra.mxu0 %v4350
    %5631 = vmatpush.bf16.msra.mxu0 %v4349
    %5632 = vmatpush.bf16.msra.mxu0 %v4348
    %5633 = vmatpush.bf16.msra.mxu0 %v4347
    %5634 = vmatpush.bf16.msra.mxu0 %v4346
    %5635 = vmatpush.bf16.msra.mxu0 %v4345
    %5636 = vmatmul.bf16.gmra.mxu0 %v4868
    %v5637 = vpop.f32.mrf.mxu0
    %v5638 = vadd.f32 %v5469, %v5637
    %v5639 = vpop.f32.mrf.mxu0
    %v5640 = vadd.f32 %v5471, %v5639
    %5641 = vmatmul.bf16.gmra.mxu0 %v4872
    %v5642 = vpop.f32.mrf.mxu0
    %v5643 = vadd.f32 %v5474, %v5642
    %v5644 = vpop.f32.mrf.mxu0
    %v5645 = vadd.f32 %v5476, %v5644
    %5646 = vmatmul.bf16.gmra.mxu0 %v4876
    %v5647 = vpop.f32.mrf.mxu0
    %v5648 = vadd.f32 %v5479, %v5647
    %v5649 = vpop.f32.mrf.mxu0
    %v5650 = vadd.f32 %v5481, %v5649
    %5651 = vmatmul.bf16.gmra.mxu0 %v4880
    %v5652 = vpop.f32.mrf.mxu0
    %v5653 = vadd.f32 %v5484, %v5652
    %v5654 = vpop.f32.mrf.mxu0
    %v5655 = vadd.f32 %v5486, %v5654
    %5656 = vmatmul.bf16.gmra.mxu0 %v4884
    %v5657 = vpop.f32.mrf.mxu0
    %v5658 = vadd.f32 %v5489, %v5657
    %v5659 = vpop.f32.mrf.mxu0
    %v5660 = vadd.f32 %v5491, %v5659
    %5661 = vmatmul.bf16.gmra.mxu0 %v4888
    %v5662 = vpop.f32.mrf.mxu0
    %v5663 = vadd.f32 %v5494, %v5662
    %v5664 = vpop.f32.mrf.mxu0
    %v5665 = vadd.f32 %v5496, %v5664
    %5666 = vmatmul.bf16.gmra.mxu0 %v4892
    %v5667 = vpop.f32.mrf.mxu0
    %v5668 = vadd.f32 %v5499, %v5667
    %v5669 = vpop.f32.mrf.mxu0
    %v5670 = vadd.f32 %v5501, %v5669
    %5671 = vmatmul.bf16.gmra.mxu0 %v4896
    %v5672 = vpop.f32.mrf.mxu0
    %v5673 = vadd.f32 %v5504, %v5672
    %v5674 = vpop.f32.mrf.mxu0
    %v5675 = vadd.f32 %v5506, %v5674
    %5676 = vmatmul.bf16.gmra.mxu0 %v4900
    %v5677 = vpop.f32.mrf.mxu0
    %v5678 = vadd.f32 %v5509, %v5677
    %v5679 = vpop.f32.mrf.mxu0
    %v5680 = vadd.f32 %v5511, %v5679
    %5681 = vmatmul.bf16.gmra.mxu0 %v4904
    %v5682 = vpop.f32.mrf.mxu0
    %v5683 = vadd.f32 %v5514, %v5682
    %v5684 = vpop.f32.mrf.mxu0
    %v5685 = vadd.f32 %v5516, %v5684
    %5686 = vmatmul.bf16.gmra.mxu0 %v4908
    %v5687 = vpop.f32.mrf.mxu0
    %v5688 = vadd.f32 %v5519, %v5687
    %v5689 = vpop.f32.mrf.mxu0
    %v5690 = vadd.f32 %v5521, %v5689
    %5691 = vmatmul.bf16.gmra.mxu0 %v4912
    %v5692 = vpop.f32.mrf.mxu0
    %v5693 = vadd.f32 %v5524, %v5692
    %v5694 = vpop.f32.mrf.mxu0
    %v5695 = vadd.f32 %v5526, %v5694
    %5696 = vmatmul.bf16.gmra.mxu0 %v4916
    %v5697 = vpop.f32.mrf.mxu0
    %v5698 = vadd.f32 %v5529, %v5697
    %v5699 = vpop.f32.mrf.mxu0
    %v5700 = vadd.f32 %v5531, %v5699
    %5701 = vmatmul.bf16.gmra.mxu0 %v4920
    %v5702 = vpop.f32.mrf.mxu0
    %v5703 = vadd.f32 %v5534, %v5702
    %v5704 = vpop.f32.mrf.mxu0
    %v5705 = vadd.f32 %v5536, %v5704
    %5706 = vmatmul.bf16.gmra.mxu0 %v4924
    %v5707 = vpop.f32.mrf.mxu0
    %v5708 = vadd.f32 %v5539, %v5707
    %v5709 = vpop.f32.mrf.mxu0
    %v5710 = vadd.f32 %v5541, %v5709
    %5711 = vmatmul.bf16.gmra.mxu0 %v4928
    %v5712 = vpop.f32.mrf.mxu0
    %v5713 = vadd.f32 %v5544, %v5712
    %v5714 = vpop.f32.mrf.mxu0
    %v5715 = vadd.f32 %v5546, %v5714
    %5716 = vmatmul.bf16.gmra.mxu0 %v4932
    %v5717 = vpop.f32.mrf.mxu0
    %v5718 = vadd.f32 %v5549, %v5717
    %v5719 = vpop.f32.mrf.mxu0
    %v5720 = vadd.f32 %v5551, %v5719
    %5721 = vmatmul.bf16.gmra.mxu0 %v4936
    %v5722 = vpop.f32.mrf.mxu0
    %v5723 = vadd.f32 %v5554, %v5722
    %v5724 = vpop.f32.mrf.mxu0
    %v5725 = vadd.f32 %v5556, %v5724
    %5726 = vmatmul.bf16.gmra.mxu0 %v4940
    %v5727 = vpop.f32.mrf.mxu0
    %v5728 = vadd.f32 %v5559, %v5727
    %v5729 = vpop.f32.mrf.mxu0
    %v5730 = vadd.f32 %v5561, %v5729
    %5731 = vmatmul.bf16.gmra.mxu0 %v4944
    %v5732 = vpop.f32.mrf.mxu0
    %v5733 = vadd.f32 %v5564, %v5732
    %v5734 = vpop.f32.mrf.mxu0
    %v5735 = vadd.f32 %v5566, %v5734
    %5736 = vmatmul.bf16.gmra.mxu0 %v4948
    %v5737 = vpop.f32.mrf.mxu0
    %v5738 = vadd.f32 %v5569, %v5737
    %v5739 = vpop.f32.mrf.mxu0
    %v5740 = vadd.f32 %v5571, %v5739
    %5741 = vmatmul.bf16.gmra.mxu0 %v4952
    %v5742 = vpop.f32.mrf.mxu0
    %v5743 = vadd.f32 %v5574, %v5742
    %v5744 = vpop.f32.mrf.mxu0
    %v5745 = vadd.f32 %v5576, %v5744
    %5746 = vmatmul.bf16.gmra.mxu0 %v4956
    %v5747 = vpop.f32.mrf.mxu0
    %v5748 = vadd.f32 %v5579, %v5747
    %v5749 = vpop.f32.mrf.mxu0
    %v5750 = vadd.f32 %v5581, %v5749
    %5751 = vmatmul.bf16.gmra.mxu0 %v4960
    %v5752 = vpop.f32.mrf.mxu0
    %v5753 = vadd.f32 %v5584, %v5752
    %v5754 = vpop.f32.mrf.mxu0
    %v5755 = vadd.f32 %v5586, %v5754
    %5756 = vmatmul.bf16.gmra.mxu0 %v4964
    %v5757 = vpop.f32.mrf.mxu0
    %v5758 = vadd.f32 %v5589, %v5757
    %v5759 = vpop.f32.mrf.mxu0
    %v5760 = vadd.f32 %v5591, %v5759
    %5761 = vmatmul.bf16.gmra.mxu0 %v4968
    %v5762 = vpop.f32.mrf.mxu0
    %v5763 = vadd.f32 %v5594, %v5762
    %v5764 = vpop.f32.mrf.mxu0
    %v5765 = vadd.f32 %v5596, %v5764
    %5766 = vmatmul.bf16.gmra.mxu0 %v4972
    %v5767 = vpop.f32.mrf.mxu0
    %v5768 = vadd.f32 %v5599, %v5767
    %v5769 = vpop.f32.mrf.mxu0
    %v5770 = vadd.f32 %v5601, %v5769
    %5771 = vmatmul.bf16.gmra.mxu0 %v4976
    %v5772 = vpop.f32.mrf.mxu0
    %v5773 = vadd.f32 %v5604, %v5772
    %v5774 = vpop.f32.mrf.mxu0
    %v5775 = vadd.f32 %v5606, %v5774
    %5776 = vmatmul.bf16.gmra.mxu0 %v4980
    %v5777 = vpop.f32.mrf.mxu0
    %v5778 = vadd.f32 %v5609, %v5777
    %v5779 = vpop.f32.mrf.mxu0
    %v5780 = vadd.f32 %v5611, %v5779
    %5781 = vmatmul.bf16.gmra.mxu0 %v4984
    %v5782 = vpop.f32.mrf.mxu0
    %v5783 = vadd.f32 %v5614, %v5782
    %v5784 = vpop.f32.mrf.mxu0
    %v5785 = vadd.f32 %v5616, %v5784
    %5786 = vmatmul.bf16.gmra.mxu0 %v4988
    %v5787 = vpop.f32.mrf.mxu0
    %v5788 = vadd.f32 %v5619, %v5787
    %v5789 = vpop.f32.mrf.mxu0
    %v5790 = vadd.f32 %v5621, %v5789
    %5791 = vmatmul.bf16.gmra.mxu0 %v4992
    %v5792 = vpop.f32.mrf.mxu0
    %v5793 = vadd.f32 %v5624, %v5792
    %v5794 = vpop.f32.mrf.mxu0
    %v5795 = vadd.f32 %v5626, %v5794
    %5796 = vdwg.mxu0
    %v5797 = vpack.c.bf16 %v5640, %v5638
    %v5798 = vpack.c.bf16 %v5645, %v5643
    %v5799 = vpack.c.bf16 %v5650, %v5648
    %v5800 = vpack.c.bf16 %v5655, %v5653
    %v5801 = vpack.c.bf16 %v5660, %v5658
    %v5802 = vpack.c.bf16 %v5665, %v5663
    %v5803 = vpack.c.bf16 %v5670, %v5668
    %v5804 = vpack.c.bf16 %v5675, %v5673
    %v5805 = vpack.c.bf16 %v5680, %v5678
    %v5806 = vpack.c.bf16 %v5685, %v5683
    %v5807 = vpack.c.bf16 %v5690, %v5688
    %v5808 = vpack.c.bf16 %v5695, %v5693
    %v5809 = vpack.c.bf16 %v5700, %v5698
    %v5810 = vpack.c.bf16 %v5705, %v5703
    %v5811 = vpack.c.bf16 %v5710, %v5708
    %v5812 = vpack.c.bf16 %v5715, %v5713
    %v5813 = vpack.c.bf16 %v5720, %v5718
    %v5814 = vpack.c.bf16 %v5725, %v5723
    %v5815 = vpack.c.bf16 %v5730, %v5728
    %v5816 = vpack.c.bf16 %v5735, %v5733
    %v5817 = vpack.c.bf16 %v5740, %v5738
    %v5818 = vpack.c.bf16 %v5745, %v5743
    %v5819 = vpack.c.bf16 %v5750, %v5748
    %v5820 = vpack.c.bf16 %v5755, %v5753
    %v5821 = vpack.c.bf16 %v5760, %v5758
    %v5822 = vpack.c.bf16 %v5765, %v5763
    %v5823 = vpack.c.bf16 %v5770, %v5768
    %v5824 = vpack.c.bf16 %v5775, %v5773
    %v5825 = vpack.c.bf16 %v5780, %v5778
    %v5826 = vpack.c.bf16 %v5785, %v5783
    %v5827 = vpack.c.bf16 %v5790, %v5788
    %v5828 = vpack.c.bf16 %v5795, %v5793
    %s5829 = scalar_lea.vmem [#allocation9], 128
    %v5830 = vld [vmem:[%s5829] sm:$0xf]
    %v5831 = vld [vmem:[%s5829 + $0x4] sm:$0xf]
    %v5832 = vld [vmem:[%s5829 + $0x8] sm:$0xf]
    %v5833 = vld [vmem:[%s5829 + $0xc] sm:$0xf]
    %v5834 = vld [vmem:[%s5829 + $0x10] sm:$0xf]
    %v5835 = vld [vmem:[%s5829 + $0x14] sm:$0xf]
    %v5836 = vld [vmem:[%s5829 + $0x18] sm:$0xf]
    %v5837 = vld [vmem:[%s5829 + $0x1c] sm:$0xf]
    %v5838 = vld [vmem:[%s5829 + $0x20] sm:$0xf]
    %v5839 = vld [vmem:[%s5829 + $0x24] sm:$0xf]
    %v5840 = vld [vmem:[%s5829 + $0x28] sm:$0xf]
    %v5841 = vld [vmem:[%s5829 + $0x2c] sm:$0xf]
    %v5842 = vld [vmem:[%s5829 + $0x30] sm:$0xf]
    %v5843 = vld [vmem:[%s5829 + $0x34] sm:$0xf]
    %v5844 = vld [vmem:[%s5829 + $0x38] sm:$0xf]
    %v5845 = vld [vmem:[%s5829 + $0x3c] sm:$0xf]
    %s5846 = scalar_lea.vmem %s4, 2
    %v5847 = vld [vmem:[%s5846] sm:$0x1]
    %v5849 = vperm.slane %v5847, 0
    %v5867 = vunpack.c.l.b16 %v5830
    %v5868 = vunpack.c.l.b16 %v5831
    %v5869 = vunpack.c.l.b16 %v5832
    %v5870 = vunpack.c.l.b16 %v5833
    %v5871 = vunpack.c.l.b16 %v5834
    %v5872 = vunpack.c.l.b16 %v5835
    %v5873 = vunpack.c.l.b16 %v5836
    %v5874 = vunpack.c.l.b16 %v5837
    %v5875 = vunpack.c.l.b16 %v5838
    %v5876 = vunpack.c.l.b16 %v5839
    %v5877 = vunpack.c.l.b16 %v5840
    %v5878 = vunpack.c.l.b16 %v5841
    %v5879 = vunpack.c.l.b16 %v5842
    %v5880 = vunpack.c.l.b16 %v5843
    %v5881 = vunpack.c.l.b16 %v5844
    %v5882 = vunpack.c.l.b16 %v5845
    %v5883 = vpack.c.b16 %v5868, %v5867
    %v5884 = vpack.c.b16 %v5870, %v5869
    %v5885 = vpack.c.b16 %v5872, %v5871
    %v5886 = vpack.c.b16 %v5874, %v5873
    %v5887 = vpack.c.b16 %v5876, %v5875
    %v5888 = vpack.c.b16 %v5878, %v5877
    %v5889 = vpack.c.b16 %v5880, %v5879
    %v5890 = vpack.c.b16 %v5882, %v5881
    %5899 = vmatpush.bf16.msra.mxu0 %v5890
    %5900 = vmatpush.bf16.msra.mxu0 %v5889
    %5901 = vmatpush.bf16.msra.mxu0 %v5888
    %5902 = vmatpush.bf16.msra.mxu0 %v5887
    %5903 = vmatpush.bf16.msra.mxu0 %v5886
    %5904 = vmatpush.bf16.msra.mxu0 %v5885
    %5905 = vmatpush.bf16.msra.mxu0 %v5884
    %5906 = vmatpush.bf16.msra.mxu0 %v5883
    %5907 = vmatmul.bf16.gmra.mxu0 %v5797
    %v5908 = vpop.f32.mrf.mxu0
    %v5909 = vadd.f32 %v5849, %v5908
    %v5910 = vpop.f32.mrf.mxu0
    %v5911 = vadd.f32 %v5849, %v5910
    %5912 = vmatmul.bf16.gmra.mxu0 %v5798
    %v5913 = vpop.f32.mrf.mxu0
    %v5914 = vadd.f32 %v5849, %v5913
    %v5915 = vpop.f32.mrf.mxu0
    %v5916 = vadd.f32 %v5849, %v5915
    %5917 = vmatmul.bf16.gmra.mxu0 %v5799
    %v5918 = vpop.f32.mrf.mxu0
    %v5919 = vadd.f32 %v5849, %v5918
    %v5920 = vpop.f32.mrf.mxu0
    %v5921 = vadd.f32 %v5849, %v5920
    %5922 = vmatmul.bf16.gmra.mxu0 %v5800
    %v5923 = vpop.f32.mrf.mxu0
    %v5924 = vadd.f32 %v5849, %v5923
    %v5925 = vpop.f32.mrf.mxu0
    %v5926 = vadd.f32 %v5849, %v5925
    %5927 = vmatmul.bf16.gmra.mxu0 %v5801
    %v5928 = vpop.f32.mrf.mxu0
    %v5929 = vadd.f32 %v5849, %v5928
    %v5930 = vpop.f32.mrf.mxu0
    %v5931 = vadd.f32 %v5849, %v5930
    %5932 = vmatmul.bf16.gmra.mxu0 %v5802
    %v5933 = vpop.f32.mrf.mxu0
    %v5934 = vadd.f32 %v5849, %v5933
    %v5935 = vpop.f32.mrf.mxu0
    %v5936 = vadd.f32 %v5849, %v5935
    %5937 = vmatmul.bf16.gmra.mxu0 %v5803
    %v5938 = vpop.f32.mrf.mxu0
    %v5939 = vadd.f32 %v5849, %v5938
    %v5940 = vpop.f32.mrf.mxu0
    %v5941 = vadd.f32 %v5849, %v5940
    %5942 = vmatmul.bf16.gmra.mxu0 %v5804
    %v5943 = vpop.f32.mrf.mxu0
    %v5944 = vadd.f32 %v5849, %v5943
    %v5945 = vpop.f32.mrf.mxu0
    %v5946 = vadd.f32 %v5849, %v5945
    %5947 = vmatmul.bf16.gmra.mxu0 %v5805
    %v5948 = vpop.f32.mrf.mxu0
    %v5949 = vadd.f32 %v5849, %v5948
    %v5950 = vpop.f32.mrf.mxu0
    %v5951 = vadd.f32 %v5849, %v5950
    %5952 = vmatmul.bf16.gmra.mxu0 %v5806
    %v5953 = vpop.f32.mrf.mxu0
    %v5954 = vadd.f32 %v5849, %v5953
    %v5955 = vpop.f32.mrf.mxu0
    %v5956 = vadd.f32 %v5849, %v5955
    %5957 = vmatmul.bf16.gmra.mxu0 %v5807
    %v5958 = vpop.f32.mrf.mxu0
    %v5959 = vadd.f32 %v5849, %v5958
    %v5960 = vpop.f32.mrf.mxu0
    %v5961 = vadd.f32 %v5849, %v5960
    %5962 = vmatmul.bf16.gmra.mxu0 %v5808
    %v5963 = vpop.f32.mrf.mxu0
    %v5964 = vadd.f32 %v5849, %v5963
    %v5965 = vpop.f32.mrf.mxu0
    %v5966 = vadd.f32 %v5849, %v5965
    %5967 = vmatmul.bf16.gmra.mxu0 %v5809
    %v5968 = vpop.f32.mrf.mxu0
    %v5969 = vadd.f32 %v5849, %v5968
    %v5970 = vpop.f32.mrf.mxu0
    %v5971 = vadd.f32 %v5849, %v5970
    %5972 = vmatmul.bf16.gmra.mxu0 %v5810
    %v5973 = vpop.f32.mrf.mxu0
    %v5974 = vadd.f32 %v5849, %v5973
    %v5975 = vpop.f32.mrf.mxu0
    %v5976 = vadd.f32 %v5849, %v5975
    %5977 = vmatmul.bf16.gmra.mxu0 %v5811
    %v5978 = vpop.f32.mrf.mxu0
    %v5979 = vadd.f32 %v5849, %v5978
    %v5980 = vpop.f32.mrf.mxu0
    %v5981 = vadd.f32 %v5849, %v5980
    %5982 = vmatmul.bf16.gmra.mxu0 %v5812
    %v5983 = vpop.f32.mrf.mxu0
    %v5984 = vadd.f32 %v5849, %v5983
    %v5985 = vpop.f32.mrf.mxu0
    %v5986 = vadd.f32 %v5849, %v5985
    %5987 = vmatmul.bf16.gmra.mxu0 %v5813
    %v5988 = vpop.f32.mrf.mxu0
    %v5989 = vadd.f32 %v5849, %v5988
    %v5990 = vpop.f32.mrf.mxu0
    %v5991 = vadd.f32 %v5849, %v5990
    %5992 = vmatmul.bf16.gmra.mxu0 %v5814
    %v5993 = vpop.f32.mrf.mxu0
    %v5994 = vadd.f32 %v5849, %v5993
    %v5995 = vpop.f32.mrf.mxu0
    %v5996 = vadd.f32 %v5849, %v5995
    %5997 = vmatmul.bf16.gmra.mxu0 %v5815
    %v5998 = vpop.f32.mrf.mxu0
    %v5999 = vadd.f32 %v5849, %v5998
    %v6000 = vpop.f32.mrf.mxu0
    %v6001 = vadd.f32 %v5849, %v6000
    %6002 = vmatmul.bf16.gmra.mxu0 %v5816
    %v6003 = vpop.f32.mrf.mxu0
    %v6004 = vadd.f32 %v5849, %v6003
    %v6005 = vpop.f32.mrf.mxu0
    %v6006 = vadd.f32 %v5849, %v6005
    %6007 = vmatmul.bf16.gmra.mxu0 %v5817
    %v6008 = vpop.f32.mrf.mxu0
    %v6009 = vadd.f32 %v5849, %v6008
    %v6010 = vpop.f32.mrf.mxu0
    %v6011 = vadd.f32 %v5849, %v6010
    %6012 = vmatmul.bf16.gmra.mxu0 %v5818
    %v6013 = vpop.f32.mrf.mxu0
    %v6014 = vadd.f32 %v5849, %v6013
    %v6015 = vpop.f32.mrf.mxu0
    %v6016 = vadd.f32 %v5849, %v6015
    %6017 = vmatmul.bf16.gmra.mxu0 %v5819
    %v6018 = vpop.f32.mrf.mxu0
    %v6019 = vadd.f32 %v5849, %v6018
    %v6020 = vpop.f32.mrf.mxu0
    %v6021 = vadd.f32 %v5849, %v6020
    %6022 = vmatmul.bf16.gmra.mxu0 %v5820
    %v6023 = vpop.f32.mrf.mxu0
    %v6024 = vadd.f32 %v5849, %v6023
    %v6025 = vpop.f32.mrf.mxu0
    %v6026 = vadd.f32 %v5849, %v6025
    %6027 = vmatmul.bf16.gmra.mxu0 %v5821
    %v6028 = vpop.f32.mrf.mxu0
    %v6029 = vadd.f32 %v5849, %v6028
    %v6030 = vpop.f32.mrf.mxu0
    %v6031 = vadd.f32 %v5849, %v6030
    %6032 = vmatmul.bf16.gmra.mxu0 %v5822
    %v6033 = vpop.f32.mrf.mxu0
    %v6034 = vadd.f32 %v5849, %v6033
    %v6035 = vpop.f32.mrf.mxu0
    %v6036 = vadd.f32 %v5849, %v6035
    %6037 = vmatmul.bf16.gmra.mxu0 %v5823
    %v6038 = vpop.f32.mrf.mxu0
    %v6039 = vadd.f32 %v5849, %v6038
    %v6040 = vpop.f32.mrf.mxu0
    %v6041 = vadd.f32 %v5849, %v6040
    %6042 = vmatmul.bf16.gmra.mxu0 %v5824
    %v6043 = vpop.f32.mrf.mxu0
    %v6044 = vadd.f32 %v5849, %v6043
    %v6045 = vpop.f32.mrf.mxu0
    %v6046 = vadd.f32 %v5849, %v6045
    %6047 = vmatmul.bf16.gmra.mxu0 %v5825
    %v6048 = vpop.f32.mrf.mxu0
    %v6049 = vadd.f32 %v5849, %v6048
    %v6050 = vpop.f32.mrf.mxu0
    %v6051 = vadd.f32 %v5849, %v6050
    %6052 = vmatmul.bf16.gmra.mxu0 %v5826
    %v6053 = vpop.f32.mrf.mxu0
    %v6054 = vadd.f32 %v5849, %v6053
    %v6055 = vpop.f32.mrf.mxu0
    %v6056 = vadd.f32 %v5849, %v6055
    %6057 = vmatmul.bf16.gmra.mxu0 %v5827
    %v6058 = vpop.f32.mrf.mxu0
    %v6059 = vadd.f32 %v5849, %v6058
    %v6060 = vpop.f32.mrf.mxu0
    %v6061 = vadd.f32 %v5849, %v6060
    %6062 = vmatmul.bf16.gmra.mxu0 %v5828
    %v6063 = vpop.f32.mrf.mxu0
    %v6064 = vadd.f32 %v5849, %v6063
    %v6065 = vpop.f32.mrf.mxu0
    %v6066 = vadd.f32 %v5849, %v6065
    %6067 = vdwg.mxu0
    %v6068 = vmax.f32 %v5909, 0.0
    %v6069 = vmax.f32 %v5911, 0.0
    %v6070 = vmax.f32 %v5914, 0.0
    %v6071 = vmax.f32 %v5916, 0.0
    %v6072 = vmax.f32 %v5919, 0.0
    %v6073 = vmax.f32 %v5921, 0.0
    %v6074 = vmax.f32 %v5924, 0.0
    %v6075 = vmax.f32 %v5926, 0.0
    %v6076 = vmax.f32 %v5929, 0.0
    %v6077 = vmax.f32 %v5931, 0.0
    %v6078 = vmax.f32 %v5934, 0.0
    %v6079 = vmax.f32 %v5936, 0.0
    %v6080 = vmax.f32 %v5939, 0.0
    %v6081 = vmax.f32 %v5941, 0.0
    %v6082 = vmax.f32 %v5944, 0.0
    %v6083 = vmax.f32 %v5946, 0.0
    %v6084 = vmax.f32 %v5949, 0.0
    %v6085 = vmax.f32 %v5951, 0.0
    %v6086 = vmax.f32 %v5954, 0.0
    %v6087 = vmax.f32 %v5956, 0.0
    %v6088 = vmax.f32 %v5959, 0.0
    %v6089 = vmax.f32 %v5961, 0.0
    %v6090 = vmax.f32 %v5964, 0.0
    %v6091 = vmax.f32 %v5966, 0.0
    %v6092 = vmax.f32 %v5969, 0.0
    %v6093 = vmax.f32 %v5971, 0.0
    %v6094 = vmax.f32 %v5974, 0.0
    %v6095 = vmax.f32 %v5976, 0.0
    %v6096 = vmax.f32 %v5979, 0.0
    %v6097 = vmax.f32 %v5981, 0.0
    %v6098 = vmax.f32 %v5984, 0.0
    %v6099 = vmax.f32 %v5986, 0.0
    %v6100 = vmax.f32 %v5989, 0.0
    %v6101 = vmax.f32 %v5991, 0.0
    %v6102 = vmax.f32 %v5994, 0.0
    %v6103 = vmax.f32 %v5996, 0.0
    %v6104 = vmax.f32 %v5999, 0.0
    %v6105 = vmax.f32 %v6001, 0.0
    %v6106 = vmax.f32 %v6004, 0.0
    %v6107 = vmax.f32 %v6006, 0.0
    %v6108 = vmax.f32 %v6009, 0.0
    %v6109 = vmax.f32 %v6011, 0.0
    %v6110 = vmax.f32 %v6014, 0.0
    %v6111 = vmax.f32 %v6016, 0.0
    %v6112 = vmax.f32 %v6019, 0.0
    %v6113 = vmax.f32 %v6021, 0.0
    %v6114 = vmax.f32 %v6024, 0.0
    %v6115 = vmax.f32 %v6026, 0.0
    %v6116 = vmax.f32 %v6029, 0.0
    %v6117 = vmax.f32 %v6031, 0.0
    %v6118 = vmax.f32 %v6034, 0.0
    %v6119 = vmax.f32 %v6036, 0.0
    %v6120 = vmax.f32 %v6039, 0.0
    %v6121 = vmax.f32 %v6041, 0.0
    %v6122 = vmax.f32 %v6044, 0.0
    %v6123 = vmax.f32 %v6046, 0.0
    %v6124 = vmax.f32 %v6049, 0.0
    %v6125 = vmax.f32 %v6051, 0.0
    %v6126 = vmax.f32 %v6054, 0.0
    %v6127 = vmax.f32 %v6056, 0.0
    %v6128 = vmax.f32 %v6059, 0.0
    %v6129 = vmax.f32 %v6061, 0.0
    %v6130 = vmax.f32 %v6064, 0.0
    %v6131 = vmax.f32 %v6066, 0.0
    %v6132 = vadd.f32 %v6068, %v4257
    %v6133 = vadd.f32 %v6069, %v4258
    %v6134 = vadd.f32 %v6070, %v4259
    %v6135 = vadd.f32 %v6071, %v4260
    %v6136 = vadd.f32 %v6072, %v4261
    %v6137 = vadd.f32 %v6073, %v4262
    %v6138 = vadd.f32 %v6074, %v4263
    %v6139 = vadd.f32 %v6075, %v4264
    %v6140 = vadd.f32 %v6076, %v4265
    %v6141 = vadd.f32 %v6077, %v4266
    %v6142 = vadd.f32 %v6078, %v4267
    %v6143 = vadd.f32 %v6079, %v4268
    %v6144 = vadd.f32 %v6080, %v4269
    %v6145 = vadd.f32 %v6081, %v4270
    %v6146 = vadd.f32 %v6082, %v4271
    %v6147 = vadd.f32 %v6083, %v4272
    %v6148 = vadd.f32 %v6084, %v4273
    %v6149 = vadd.f32 %v6085, %v4274
    %v6150 = vadd.f32 %v6086, %v4275
    %v6151 = vadd.f32 %v6087, %v4276
    %v6152 = vadd.f32 %v6088, %v4277
    %v6153 = vadd.f32 %v6089, %v4278
    %v6154 = vadd.f32 %v6090, %v4279
    %v6155 = vadd.f32 %v6091, %v4280
    %v6156 = vadd.f32 %v6092, %v4281
    %v6157 = vadd.f32 %v6093, %v4282
    %v6158 = vadd.f32 %v6094, %v4283
    %v6159 = vadd.f32 %v6095, %v4284
    %v6160 = vadd.f32 %v6096, %v4285
    %v6161 = vadd.f32 %v6097, %v4286
    %v6162 = vadd.f32 %v6098, %v4287
    %v6163 = vadd.f32 %v6099, %v4288
    %v6164 = vadd.f32 %v6100, %v4289
    %v6165 = vadd.f32 %v6101, %v4290
    %v6166 = vadd.f32 %v6102, %v4291
    %v6167 = vadd.f32 %v6103, %v4292
    %v6168 = vadd.f32 %v6104, %v4293
    %v6169 = vadd.f32 %v6105, %v4294
    %v6170 = vadd.f32 %v6106, %v4295
    %v6171 = vadd.f32 %v6107, %v4296
    %v6172 = vadd.f32 %v6108, %v4297
    %v6173 = vadd.f32 %v6109, %v4298
    %v6174 = vadd.f32 %v6110, %v4299
    %v6175 = vadd.f32 %v6111, %v4300
    %v6176 = vadd.f32 %v6112, %v4301
    %v6177 = vadd.f32 %v6113, %v4302
    %v6178 = vadd.f32 %v6114, %v4303
    %v6179 = vadd.f32 %v6115, %v4304
    %v6180 = vadd.f32 %v6116, %v4305
    %v6181 = vadd.f32 %v6117, %v4306
    %v6182 = vadd.f32 %v6118, %v4307
    %v6183 = vadd.f32 %v6119, %v4308
    %v6184 = vadd.f32 %v6120, %v4309
    %v6185 = vadd.f32 %v6121, %v4310
    %v6186 = vadd.f32 %v6122, %v4311
    %v6187 = vadd.f32 %v6123, %v4312
    %v6188 = vadd.f32 %v6124, %v4313
    %v6189 = vadd.f32 %v6125, %v4314
    %v6190 = vadd.f32 %v6126, %v4315
    %v6191 = vadd.f32 %v6127, %v4316
    %v6192 = vadd.f32 %v6128, %v4317
    %v6193 = vadd.f32 %v6129, %v4318
    %v6194 = vadd.f32 %v6130, %v4319
    %v6195 = vadd.f32 %v6131, %v4320
    %6196 = vst [vmem:[#allocation2] sm:$0xff] %v6132
    %6197 = vst [vmem:[#allocation2 + $0x8] sm:$0xff] %v6133
    %6198 = vst [vmem:[#allocation2 + $0x10] sm:$0xff] %v6134
    %6199 = vst [vmem:[#allocation2 + $0x18] sm:$0xff] %v6135
    %6200 = vst [vmem:[#allocation2 + $0x20] sm:$0xff] %v6136
    %6201 = vst [vmem:[#allocation2 + $0x28] sm:$0xff] %v6137
    %6202 = vst [vmem:[#allocation2 + $0x30] sm:$0xff] %v6138
    %6203 = vst [vmem:[#allocation2 + $0x38] sm:$0xff] %v6139
    %6204 = vst [vmem:[#allocation2 + $0x40] sm:$0xff] %v6140
    %6205 = vst [vmem:[#allocation2 + $0x48] sm:$0xff] %v6141
    %6206 = vst [vmem:[#allocation2 + $0x50] sm:$0xff] %v6142
    %6207 = vst [vmem:[#allocation2 + $0x58] sm:$0xff] %v6143
    %6208 = vst [vmem:[#allocation2 + $0x60] sm:$0xff] %v6144
    %6209 = vst [vmem:[#allocation2 + $0x68] sm:$0xff] %v6145
    %6210 = vst [vmem:[#allocation2 + $0x70] sm:$0xff] %v6146
    %6211 = vst [vmem:[#allocation2 + $0x78] sm:$0xff] %v6147
    %6212 = vst [vmem:[#allocation2 + $0x80] sm:$0xff] %v6148
    %6213 = vst [vmem:[#allocation2 + $0x88] sm:$0xff] %v6149
    %6214 = vst [vmem:[#allocation2 + $0x90] sm:$0xff] %v6150
    %6215 = vst [vmem:[#allocation2 + $0x98] sm:$0xff] %v6151
    %6216 = vst [vmem:[#allocation2 + $0xa0] sm:$0xff] %v6152
    %6217 = vst [vmem:[#allocation2 + $0xa8] sm:$0xff] %v6153
    %6218 = vst [vmem:[#allocation2 + $0xb0] sm:$0xff] %v6154
    %6219 = vst [vmem:[#allocation2 + $0xb8] sm:$0xff] %v6155
    %6220 = vst [vmem:[#allocation2 + $0xc0] sm:$0xff] %v6156
    %6221 = vst [vmem:[#allocation2 + $0xc8] sm:$0xff] %v6157
    %6222 = vst [vmem:[#allocation2 + $0xd0] sm:$0xff] %v6158
    %6223 = vst [vmem:[#allocation2 + $0xd8] sm:$0xff] %v6159
    %6224 = vst [vmem:[#allocation2 + $0xe0] sm:$0xff] %v6160
    %6225 = vst [vmem:[#allocation2 + $0xe8] sm:$0xff] %v6161
    %6226 = vst [vmem:[#allocation2 + $0xf0] sm:$0xff] %v6162
    %6227 = vst [vmem:[#allocation2 + $0xf8] sm:$0xff] %v6163
    %6228 = vst [vmem:[#allocation2 + $0x100] sm:$0xff] %v6164
    %6229 = vst [vmem:[#allocation2 + $0x108] sm:$0xff] %v6165
    %6230 = vst [vmem:[#allocation2 + $0x110] sm:$0xff] %v6166
    %6231 = vst [vmem:[#allocation2 + $0x118] sm:$0xff] %v6167
    %6232 = vst [vmem:[#allocation2 + $0x120] sm:$0xff] %v6168
    %6233 = vst [vmem:[#allocation2 + $0x128] sm:$0xff] %v6169
    %6234 = vst [vmem:[#allocation2 + $0x130] sm:$0xff] %v6170
    %6235 = vst [vmem:[#allocation2 + $0x138] sm:$0xff] %v6171
    %6236 = vst [vmem:[#allocation2 + $0x140] sm:$0xff] %v6172
    %6237 = vst [vmem:[#allocation2 + $0x148] sm:$0xff] %v6173
    %6238 = vst [vmem:[#allocation2 + $0x150] sm:$0xff] %v6174
    %6239 = vst [vmem:[#allocation2 + $0x158] sm:$0xff] %v6175
    %6240 = vst [vmem:[#allocation2 + $0x160] sm:$0xff] %v6176
    %6241 = vst [vmem:[#allocation2 + $0x168] sm:$0xff] %v6177
    %6242 = vst [vmem:[#allocation2 + $0x170] sm:$0xff] %v6178
    %6243 = vst [vmem:[#allocation2 + $0x178] sm:$0xff] %v6179
    %6244 = vst [vmem:[#allocation2 + $0x180] sm:$0xff] %v6180
    %6245 = vst [vmem:[#allocation2 + $0x188] sm:$0xff] %v6181
    %6246 = vst [vmem:[#allocation2 + $0x190] sm:$0xff] %v6182
    %6247 = vst [vmem:[#allocation2 + $0x198] sm:$0xff] %v6183
    %6248 = vst [vmem:[#allocation2 + $0x1a0] sm:$0xff] %v6184
    %6249 = vst [vmem:[#allocation2 + $0x1a8] sm:$0xff] %v6185
    %6250 = vst [vmem:[#allocation2 + $0x1b0] sm:$0xff] %v6186
    %6251 = vst [vmem:[#allocation2 + $0x1b8] sm:$0xff] %v6187
    %6252 = vst [vmem:[#allocation2 + $0x1c0] sm:$0xff] %v6188
    %6253 = vst [vmem:[#allocation2 + $0x1c8] sm:$0xff] %v6189
    %6254 = vst [vmem:[#allocation2 + $0x1d0] sm:$0xff] %v6190
    %6255 = vst [vmem:[#allocation2 + $0x1d8] sm:$0xff] %v6191
    %6256 = vst [vmem:[#allocation2 + $0x1e0] sm:$0xff] %v6192
    %6257 = vst [vmem:[#allocation2 + $0x1e8] sm:$0xff] %v6193
    %6258 = vst [vmem:[#allocation2 + $0x1f0] sm:$0xff] %v6194
    %6259 = vst [vmem:[#allocation2 + $0x1f8] sm:$0xff] %v6195
    %v6260 = vld [vmem:[#allocation2] sm:$0xff]
    %v6261 = vld [vmem:[#allocation2 + $0x8] sm:$0xff]
    %v6262 = vld [vmem:[#allocation2 + $0x10] sm:$0xff]
    %v6263 = vld [vmem:[#allocation2 + $0x18] sm:$0xff]
    %v6264 = vld [vmem:[#allocation2 + $0x20] sm:$0xff]
    %v6265 = vld [vmem:[#allocation2 + $0x28] sm:$0xff]
    %v6266 = vld [vmem:[#allocation2 + $0x30] sm:$0xff]
    %v6267 = vld [vmem:[#allocation2 + $0x38] sm:$0xff]
    %v6268 = vld [vmem:[#allocation2 + $0x40] sm:$0xff]
    %v6269 = vld [vmem:[#allocation2 + $0x48] sm:$0xff]
    %v6270 = vld [vmem:[#allocation2 + $0x50] sm:$0xff]
    %v6271 = vld [vmem:[#allocation2 + $0x58] sm:$0xff]
    %v6272 = vld [vmem:[#allocation2 + $0x60] sm:$0xff]
    %v6273 = vld [vmem:[#allocation2 + $0x68] sm:$0xff]
    %v6274 = vld [vmem:[#allocation2 + $0x70] sm:$0xff]
    %v6275 = vld [vmem:[#allocation2 + $0x78] sm:$0xff]
    %v6276 = vld [vmem:[#allocation2 + $0x80] sm:$0xff]
    %v6277 = vld [vmem:[#allocation2 + $0x88] sm:$0xff]
    %v6278 = vld [vmem:[#allocation2 + $0x90] sm:$0xff]
    %v6279 = vld [vmem:[#allocation2 + $0x98] sm:$0xff]
    %v6280 = vld [vmem:[#allocation2 + $0xa0] sm:$0xff]
    %v6281 = vld [vmem:[#allocation2 + $0xa8] sm:$0xff]
    %v6282 = vld [vmem:[#allocation2 + $0xb0] sm:$0xff]
    %v6283 = vld [vmem:[#allocation2 + $0xb8] sm:$0xff]
    %v6284 = vld [vmem:[#allocation2 + $0xc0] sm:$0xff]
    %v6285 = vld [vmem:[#allocation2 + $0xc8] sm:$0xff]
    %v6286 = vld [vmem:[#allocation2 + $0xd0] sm:$0xff]
    %v6287 = vld [vmem:[#allocation2 + $0xd8] sm:$0xff]
    %v6288 = vld [vmem:[#allocation2 + $0xe0] sm:$0xff]
    %v6289 = vld [vmem:[#allocation2 + $0xe8] sm:$0xff]
    %v6290 = vld [vmem:[#allocation2 + $0xf0] sm:$0xff]
    %v6291 = vld [vmem:[#allocation2 + $0xf8] sm:$0xff]
    %v6292 = vld [vmem:[#allocation2 + $0x100] sm:$0xff]
    %v6293 = vld [vmem:[#allocation2 + $0x108] sm:$0xff]
    %v6294 = vld [vmem:[#allocation2 + $0x110] sm:$0xff]
    %v6295 = vld [vmem:[#allocation2 + $0x118] sm:$0xff]
    %v6296 = vld [vmem:[#allocation2 + $0x120] sm:$0xff]
    %v6297 = vld [vmem:[#allocation2 + $0x128] sm:$0xff]
    %v6298 = vld [vmem:[#allocation2 + $0x130] sm:$0xff]
    %v6299 = vld [vmem:[#allocation2 + $0x138] sm:$0xff]
    %v6300 = vld [vmem:[#allocation2 + $0x140] sm:$0xff]
    %v6301 = vld [vmem:[#allocation2 + $0x148] sm:$0xff]
    %v6302 = vld [vmem:[#allocation2 + $0x150] sm:$0xff]
    %v6303 = vld [vmem:[#allocation2 + $0x158] sm:$0xff]
    %v6304 = vld [vmem:[#allocation2 + $0x160] sm:$0xff]
    %v6305 = vld [vmem:[#allocation2 + $0x168] sm:$0xff]
    %v6306 = vld [vmem:[#allocation2 + $0x170] sm:$0xff]
    %v6307 = vld [vmem:[#allocation2 + $0x178] sm:$0xff]
    %v6308 = vld [vmem:[#allocation2 + $0x180] sm:$0xff]
    %v6309 = vld [vmem:[#allocation2 + $0x188] sm:$0xff]
    %v6310 = vld [vmem:[#allocation2 + $0x190] sm:$0xff]
    %v6311 = vld [vmem:[#allocation2 + $0x198] sm:$0xff]
    %v6312 = vld [vmem:[#allocation2 + $0x1a0] sm:$0xff]
    %v6313 = vld [vmem:[#allocation2 + $0x1a8] sm:$0xff]
    %v6314 = vld [vmem:[#allocation2 + $0x1b0] sm:$0xff]
    %v6315 = vld [vmem:[#allocation2 + $0x1b8] sm:$0xff]
    %v6316 = vld [vmem:[#allocation2 + $0x1c0] sm:$0xff]
    %v6317 = vld [vmem:[#allocation2 + $0x1c8] sm:$0xff]
    %v6318 = vld [vmem:[#allocation2 + $0x1d0] sm:$0xff]
    %v6319 = vld [vmem:[#allocation2 + $0x1d8] sm:$0xff]
    %v6320 = vld [vmem:[#allocation2 + $0x1e0] sm:$0xff]
    %v6321 = vld [vmem:[#allocation2 + $0x1e8] sm:$0xff]
    %v6322 = vld [vmem:[#allocation2 + $0x1f0] sm:$0xff]
    %v6323 = vld [vmem:[#allocation2 + $0x1f8] sm:$0xff]
    %v6324 = vpack.c.bf16 %v6261, %v6260
    %v6325 = vpack.c.bf16 %v6263, %v6262
    %v6326 = vpack.c.bf16 %v6265, %v6264
    %v6327 = vpack.c.bf16 %v6267, %v6266
    %v6328 = vpack.c.bf16 %v6269, %v6268
    %v6329 = vpack.c.bf16 %v6271, %v6270
    %v6330 = vpack.c.bf16 %v6273, %v6272
    %v6331 = vpack.c.bf16 %v6275, %v6274
    %v6332 = vpack.c.bf16 %v6277, %v6276
    %v6333 = vpack.c.bf16 %v6279, %v6278
    %v6334 = vpack.c.bf16 %v6281, %v6280
    %v6335 = vpack.c.bf16 %v6283, %v6282
    %v6336 = vpack.c.bf16 %v6285, %v6284
    %v6337 = vpack.c.bf16 %v6287, %v6286
    %v6338 = vpack.c.bf16 %v6289, %v6288
    %v6339 = vpack.c.bf16 %v6291, %v6290
    %v6340 = vpack.c.bf16 %v6293, %v6292
    %v6341 = vpack.c.bf16 %v6295, %v6294
    %v6342 = vpack.c.bf16 %v6297, %v6296
    %v6343 = vpack.c.bf16 %v6299, %v6298
    %v6344 = vpack.c.bf16 %v6301, %v6300
    %v6345 = vpack.c.bf16 %v6303, %v6302
    %v6346 = vpack.c.bf16 %v6305, %v6304
    %v6347 = vpack.c.bf16 %v6307, %v6306
    %v6348 = vpack.c.bf16 %v6309, %v6308
    %v6349 = vpack.c.bf16 %v6311, %v6310
    %v6350 = vpack.c.bf16 %v6313, %v6312
    %v6351 = vpack.c.bf16 %v6315, %v6314
    %v6352 = vpack.c.bf16 %v6317, %v6316
    %v6353 = vpack.c.bf16 %v6319, %v6318
    %v6354 = vpack.c.bf16 %v6321, %v6320
    %v6355 = vpack.c.bf16 %v6323, %v6322
    %v6356 = vld [vmem:[#allocation8] sm:$0xff]
    %v6357 = vld [vmem:[#allocation8 + $0x8] sm:$0xff]
    %v6360 = vunpack.c.l.b16 %v6356
    %v6361 = vunpack.c.h.b16 %v6356
    %v6362 = vunpack.c.l.b16 %v6357
    %v6363 = vunpack.c.h.b16 %v6357
    %v6364 = vpack.c.b16 %v6360, %v6360
    %v6365 = vpack.c.b16 %v6361, %v6361
    %v6366 = vpack.c.b16 %v6362, %v6362
    %v6367 = vpack.c.b16 %v6363, %v6363
    %6372 = vmatpush.bf16.msra.mxu0 %v6331
    %6373 = vmatpush.bf16.msra.mxu0 %v6330
    %6374 = vmatpush.bf16.msra.mxu0 %v6329
    %6375 = vmatpush.bf16.msra.mxu0 %v6328
    %6376 = vmatpush.bf16.msra.mxu0 %v6327
    %6377 = vmatpush.bf16.msra.mxu0 %v6326
    %6378 = vmatpush.bf16.msra.mxu0 %v6325
    %6379 = vmatpush.bf16.msra.mxu0 %v6324
    %6380 = vmatmul.bf16.gmra.mxu0 %v6364
    %v6381 = vpop.f32.mrf.mxu0
    %v6382 = vadd.f32 0.0, %v6381
    %v6383 = vpop.f32.mrf.mxu0
    %6384 = vdwg.mxu0
    %6385 = vmatpush.bf16.msra.mxu0 %v6339
    %6386 = vmatpush.bf16.msra.mxu0 %v6338
    %6387 = vmatpush.bf16.msra.mxu0 %v6337
    %6388 = vmatpush.bf16.msra.mxu0 %v6336
    %6389 = vmatpush.bf16.msra.mxu0 %v6335
    %6390 = vmatpush.bf16.msra.mxu0 %v6334
    %6391 = vmatpush.bf16.msra.mxu0 %v6333
    %6392 = vmatpush.bf16.msra.mxu0 %v6332
    %6393 = vmatmul.bf16.gmra.mxu0 %v6365
    %v6394 = vpop.f32.mrf.mxu0
    %v6395 = vadd.f32 %v6382, %v6394
    %v6396 = vpop.f32.mrf.mxu0
    %6397 = vdwg.mxu0
    %6398 = vmatpush.bf16.msra.mxu0 %v6347
    %6399 = vmatpush.bf16.msra.mxu0 %v6346
    %6400 = vmatpush.bf16.msra.mxu0 %v6345
    %6401 = vmatpush.bf16.msra.mxu0 %v6344
    %6402 = vmatpush.bf16.msra.mxu0 %v6343
    %6403 = vmatpush.bf16.msra.mxu0 %v6342
    %6404 = vmatpush.bf16.msra.mxu0 %v6341
    %6405 = vmatpush.bf16.msra.mxu0 %v6340
    %6406 = vmatmul.bf16.gmra.mxu0 %v6366
    %v6407 = vpop.f32.mrf.mxu0
    %v6408 = vadd.f32 %v6395, %v6407
    %v6409 = vpop.f32.mrf.mxu0
    %6410 = vdwg.mxu0
    %6411 = vmatpush.bf16.msra.mxu0 %v6355
    %6412 = vmatpush.bf16.msra.mxu0 %v6354
    %6413 = vmatpush.bf16.msra.mxu0 %v6353
    %6414 = vmatpush.bf16.msra.mxu0 %v6352
    %6415 = vmatpush.bf16.msra.mxu0 %v6351
    %6416 = vmatpush.bf16.msra.mxu0 %v6350
    %6417 = vmatpush.bf16.msra.mxu0 %v6349
    %6418 = vmatpush.bf16.msra.mxu0 %v6348
    %6419 = vmatmul.bf16.gmra.mxu0 %v6367
    %v6420 = vpop.f32.mrf.mxu0
    %v6421 = vadd.f32 %v6408, %v6420
    %v6422 = vpop.f32.mrf.mxu0
    %6423 = vdwg.mxu0
    %v6424 = vpack.c.bf16 %v6421, %v6421
    %v6425 = vld [vmem:[#allocation11] sm:$0xf]
    %v6426 = vld [vmem:[#allocation11 + $0x4] sm:$0xf]
    %v6427 = vld [vmem:[#allocation11 + $0x8] sm:$0xf]
    %v6428 = vld [vmem:[#allocation11 + $0xc] sm:$0xf]
    %v6429 = vld [vmem:[#allocation11 + $0x10] sm:$0xf]
    %v6430 = vld [vmem:[#allocation11 + $0x14] sm:$0xf]
    %v6431 = vld [vmem:[#allocation11 + $0x18] sm:$0xf]
    %v6432 = vld [vmem:[#allocation11 + $0x1c] sm:$0xf]
    %v6433 = vld [vmem:[#allocation11 + $0x20] sm:$0xf]
    %v6434 = vld [vmem:[#allocation11 + $0x24] sm:$0xf]
    %v6435 = vld [vmem:[#allocation11 + $0x28] sm:$0xf]
    %v6436 = vld [vmem:[#allocation11 + $0x2c] sm:$0xf]
    %v6437 = vld [vmem:[#allocation11 + $0x30] sm:$0xf]
    %v6438 = vld [vmem:[#allocation11 + $0x34] sm:$0xf]
    %v6439 = vld [vmem:[#allocation11 + $0x38] sm:$0xf]
    %v6440 = vld [vmem:[#allocation11 + $0x3c] sm:$0xf]
    %v6441 = vld [vmem:[%s6] sm:$0x1]
    %v6443 = vperm.slane %v6441, 0
    %v6461 = vunpack.c.l.b16 %v6425
    %v6462 = vunpack.c.l.b16 %v6426
    %v6463 = vunpack.c.l.b16 %v6427
    %v6464 = vunpack.c.l.b16 %v6428
    %v6465 = vunpack.c.l.b16 %v6429
    %v6466 = vunpack.c.l.b16 %v6430
    %v6467 = vunpack.c.l.b16 %v6431
    %v6468 = vunpack.c.l.b16 %v6432
    %v6469 = vunpack.c.l.b16 %v6433
    %v6470 = vunpack.c.l.b16 %v6434
    %v6471 = vunpack.c.l.b16 %v6435
    %v6472 = vunpack.c.l.b16 %v6436
    %v6473 = vunpack.c.l.b16 %v6437
    %v6474 = vunpack.c.l.b16 %v6438
    %v6475 = vunpack.c.l.b16 %v6439
    %v6476 = vunpack.c.l.b16 %v6440
    %v6477 = vpack.c.b16 %v6462, %v6461
    %v6478 = vpack.c.b16 %v6464, %v6463
    %v6479 = vpack.c.b16 %v6466, %v6465
    %v6480 = vpack.c.b16 %v6468, %v6467
    %v6481 = vpack.c.b16 %v6470, %v6469
    %v6482 = vpack.c.b16 %v6472, %v6471
    %v6483 = vpack.c.b16 %v6474, %v6473
    %v6484 = vpack.c.b16 %v6476, %v6475
    %6493 = vmatpush.bf16.msra.mxu0 %v6484
    %6494 = vmatpush.bf16.msra.mxu0 %v6483
    %6495 = vmatpush.bf16.msra.mxu0 %v6482
    %6496 = vmatpush.bf16.msra.mxu0 %v6481
    %6497 = vmatpush.bf16.msra.mxu0 %v6480
    %6498 = vmatpush.bf16.msra.mxu0 %v6479
    %6499 = vmatpush.bf16.msra.mxu0 %v6478
    %6500 = vmatpush.bf16.msra.mxu0 %v6477
    %6501 = vmatmul.bf16.gmra.mxu0 %v6424
    %v6502 = vpop.f32.mrf.mxu0
    %v6503 = vadd.f32 %v6443, %v6502
    %v6504 = vpop.f32.mrf.mxu0
    %6505 = vdwg.mxu0
    %v6506 = vmax.f32 %v6503, 0.0
    %v6507 = vpack.c.bf16 %v6506, %v6506
    %v6508 = vld [vmem:[#allocation12] sm:$0xf]
    %v6509 = vld [vmem:[#allocation12 + $0x4] sm:$0xf]
    %v6510 = vld [vmem:[#allocation12 + $0x8] sm:$0xf]
    %v6511 = vld [vmem:[#allocation12 + $0xc] sm:$0xf]
    %v6512 = vld [vmem:[#allocation12 + $0x10] sm:$0xf]
    %v6513 = vld [vmem:[#allocation12 + $0x14] sm:$0xf]
    %v6514 = vld [vmem:[#allocation12 + $0x18] sm:$0xf]
    %v6515 = vld [vmem:[#allocation12 + $0x1c] sm:$0xf]
    %v6516 = vld [vmem:[#allocation12 + $0x20] sm:$0xf]
    %v6517 = vld [vmem:[#allocation12 + $0x24] sm:$0xf]
    %v6518 = vld [vmem:[#allocation12 + $0x28] sm:$0xf]
    %v6519 = vld [vmem:[#allocation12 + $0x2c] sm:$0xf]
    %v6520 = vld [vmem:[#allocation12 + $0x30] sm:$0xf]
    %v6521 = vld [vmem:[#allocation12 + $0x34] sm:$0xf]
    %v6522 = vld [vmem:[#allocation12 + $0x38] sm:$0xf]
    %v6523 = vld [vmem:[#allocation12 + $0x3c] sm:$0xf]
    %v6524 = vld [vmem:[%s8] sm:$0x1]
    %v6526 = vperm.slane %v6524, 0
    %v6544 = vunpack.c.l.b16 %v6508
    %v6545 = vunpack.c.l.b16 %v6509
    %v6546 = vunpack.c.l.b16 %v6510
    %v6547 = vunpack.c.l.b16 %v6511
    %v6548 = vunpack.c.l.b16 %v6512
    %v6549 = vunpack.c.l.b16 %v6513
    %v6550 = vunpack.c.l.b16 %v6514
    %v6551 = vunpack.c.l.b16 %v6515
    %v6552 = vunpack.c.l.b16 %v6516
    %v6553 = vunpack.c.l.b16 %v6517
    %v6554 = vunpack.c.l.b16 %v6518
    %v6555 = vunpack.c.l.b16 %v6519
    %v6556 = vunpack.c.l.b16 %v6520
    %v6557 = vunpack.c.l.b16 %v6521
    %v6558 = vunpack.c.l.b16 %v6522
    %v6559 = vunpack.c.l.b16 %v6523
    %v6560 = vpack.c.b16 %v6545, %v6544
    %v6561 = vpack.c.b16 %v6547, %v6546
    %v6562 = vpack.c.b16 %v6549, %v6548
    %v6563 = vpack.c.b16 %v6551, %v6550
    %v6564 = vpack.c.b16 %v6553, %v6552
    %v6565 = vpack.c.b16 %v6555, %v6554
    %v6566 = vpack.c.b16 %v6557, %v6556
    %v6567 = vpack.c.b16 %v6559, %v6558
    %6576 = vmatpush.bf16.msra.mxu0 %v6567
    %6577 = vmatpush.bf16.msra.mxu0 %v6566
    %6578 = vmatpush.bf16.msra.mxu0 %v6565
    %6579 = vmatpush.bf16.msra.mxu0 %v6564
    %6580 = vmatpush.bf16.msra.mxu0 %v6563
    %6581 = vmatpush.bf16.msra.mxu0 %v6562
    %6582 = vmatpush.bf16.msra.mxu0 %v6561
    %6583 = vmatpush.bf16.msra.mxu0 %v6560
    %6584 = vmatmul.bf16.gmra.mxu0 %v6507
    %v6585 = vpop.f32.mrf.mxu0
    %v6586 = vadd.f32 %v6526, %v6585
    %v6587 = vpop.f32.mrf.mxu0
    %6588 = vdwg.mxu0
    %6589 = vst [vmem:[#allocation14] sm:$0xff] %v6586
    // Predicated region
    $region62: #{gnn_forward.1} parent=1 // pred_check
      _
    $region63: #{gnn_forward.1} parent=1 // pred_check_branch
      %6591 = sbr.rel (0) target = $region65
    $region64: #{gnn_forward.1} parent=1 // pred_region
      %6593 = vsyncadd [#allocation5], 0
      %s6595 = sshll.u32 [#allocation14], 4
      %s6596 = int_to_ptr.vmem [resolvable:$true] %s6595
      %s6597 = sshll.u32 %s9, 4
      %s6598 = int_to_ptr.hbm [resolvable:$true] %s6597
      %6600 = dma.vmem_to_hbm [thread:$0]  %s6596, 128, %s6598, [#allocation5]
    $region65: #{gnn_forward.1} parent=1 // pred_fallthru
      _
    // Predicated region
    $region66: #{gnn_forward.1} parent=1 // pred_check
      _
    $region67: #{gnn_forward.1} parent=1 // pred_check_branch
      %6602 = sbr.rel (0) target = $region69
    $region68: #{gnn_forward.1} parent=1 // pred_region
      %6604 = dma.done [#allocation5], 128
    $region69: #{gnn_forward.1} parent=1 // pred_fallthru
      _
    %6605 = vsyncpa [#allocation4], 1
    %6606 = vsyncpa [#allocation7], 1
    %6607 = vsyncpa [#allocation10], 1
    %6608 = vsyncpa [#allocation13], 1
    %6609 = vsyncpa [#allocation5], 1

</llo_original>
